<compile_context>
chip_gen: v5e
topology: v5e:2x2
jax: 0.10.0
libtpu: 0.0.40
codegen_flags: <defaults>
</compile_context>

<pallas_src>
import math

import numpy as np

import jax
import jax.numpy as jnp
from jax.experimental import pallas as pl

jax.config.update("jax_default_matmul_precision", "highest")

# ---- hyperparameters (MambaConfig(dim=16, d_state=4, d_conv=4), expand=2) ----
B = 2
L = 8
D = 16
D_STATE = 4
D_CONV = 4
EXPAND = 2
D_INNER = EXPAND * D                  # 32
DT_RANK = math.ceil(D / 16)           # mamba_ssm Mamba default dt_rank ("auto") = 1
D_FF = 4 * D                          # 64
EPS = 1e-5                            # nn.LayerNorm default eps

BL = B * L                            # 16 rows of (batch, time)
NSTREAM = 2 * B                       # 4 streams: b0-fwd, b0-bwd, b1-fwd, b1-bwd
NSL = NSTREAM * L                     # 32 rows of (stream, time)
SR = NSTREAM * D_STATE                # 16 fused state rows per scan step
NFULL = L * SR                        # 128 rows of (time, stream, state)

# ---- packed-weight slab layout (static row offsets, 64 f32 lanes wide) -------
SLAB_COLS = 64
R_VEC = 0          # rows 0..8 : g_in, b_in, g_out, b_out, b_conv, b_dt, D, b2, b1
R_WINX = 16        # (D, D_INNER)        in_proj, x half
R_WINZ = 32        # (D, D_INNER)        in_proj, z half
R_WCONV = 48       # (D_CONV, D_INNER)   depthwise conv taps
R_AT = 56          # (D_STATE, D_INNER)  A^T = -exp(A_log)^T (folded on host)
R_WDBC = 64        # (D_INNER, D_INNER + 2*D_STATE): [w_delta | w_B | w_C]
R_WOUT = 96        # (D_INNER, D)
R_W1 = 128         # (D, D_FF)
R_W2 = 144         # (D_FF, D)
R_EXP4 = 208       # (NSL, BL)  0/1 matrix: build 4-stream (fwd + flipped) rows
R_SCOMB = 240      # (BL, NSL)  0/1 matrix: fwd + un-flipped bwd recombination
SLAB_ROWS = 256


# ----------------------------- math helpers ----------------------------------
def _silu(x):
    return x * (1.0 / (1.0 + jnp.exp(-x)))


def _softplus(x):
    return jnp.maximum(x, 0.0) + jnp.log(1.0 + jnp.exp(-jnp.abs(x)))


def _gelu_tanh(x):
    # TODO(synk): nn.GELU() default is the exact erf formulation; using the tanh
    # approximation since erf has no guaranteed Mosaic lowering.
    c = math.sqrt(2.0 / math.pi)
    return 0.5 * x * (1.0 + jnp.tanh(c * (x + 0.044715 * x * x * x)))


def _layernorm(x, g, b):
    mu = jnp.mean(x, axis=-1, keepdims=True)
    xc = x - mu
    var = jnp.mean(xc * xc, axis=-1, keepdims=True)
    return xc * jax.lax.rsqrt(var + EPS) * g + b


# ------------------------------ Pallas kernel ---------------------------------
def bimamba_kernel(x_ref, slab_ref, o_ref):
    f32 = jnp.float32
    x = x_ref[...]                                            # (BL, D)

    # --- static slices of the packed weight slab ------------------------------
    g_in = slab_ref[0:1, 0:D]
    b_in = slab_ref[1:2, 0:D]
    g_out = slab_ref[2:3, 0:D]
    b_out = slab_ref[3:4, 0:D]
    b_conv = slab_ref[4:5, 0:D_INNER]
    b_dt = slab_ref[5:6, 0:D_INNER]
    d_skip = slab_ref[6:7, 0:D_INNER]
    b2 = slab_ref[7:8, 0:D]
    b1 = slab_ref[8:9, 0:D_FF]
    w_in_x = slab_ref[R_WINX:R_WINX + D, 0:D_INNER]
    w_in_z = slab_ref[R_WINZ:R_WINZ + D, 0:D_INNER]
    w_conv = slab_ref[R_WCONV:R_WCONV + D_CONV, 0:D_INNER]
    a_t = slab_ref[R_AT:R_AT + D_STATE, 0:D_INNER]
    w_delta = slab_ref[R_WDBC:R_WDBC + D_INNER, 0:D_INNER]
    w_b = slab_ref[R_WDBC:R_WDBC + D_INNER, D_INNER:D_INNER + D_STATE]
    w_c = slab_ref[R_WDBC:R_WDBC + D_INNER,
                   D_INNER + D_STATE:D_INNER + 2 * D_STATE]
    w_out = slab_ref[R_WOUT:R_WOUT + D_INNER, 0:D]
    w1 = slab_ref[R_W1:R_W1 + D, 0:D_FF]
    w2 = slab_ref[R_W2:R_W2 + D_FF, 0:D]
    expand4 = slab_ref[R_EXP4:R_EXP4 + NSL, 0:BL]
    s_comb = slab_ref[R_SCOMB:R_SCOMB + BL, 0:NSL]

    dot = lambda a, b: jnp.dot(a, b, preferred_element_type=f32)

    # --- norm_in, then expand to the 4-stream (stream, time) row layout -------
    xn = _layernorm(x, g_in, b_in)                            # (BL, D)
    xn4 = dot(expand4, xn)                                    # (NSL, D)

    # --- shared Mamba in-projection (position-wise -> flip-invariant) ---------
    xp = dot(xn4, w_in_x)                                     # (NSL, D_INNER)
    z = dot(xn4, w_in_z)                                      # (NSL, D_INNER)

    # --- depthwise causal conv within each 8-row time group -------------------
    rowmod = jnp.bitwise_and(
        jax.lax.broadcasted_iota(jnp.int32, (NSL, D_INNER), 0), L - 1)
    acc = w_conv[D_CONV - 1:D_CONV, :] * xp                   # tap offset j = 0
    for j in range(1, D_CONV):
        shifted = jnp.concatenate(
            [jnp.zeros((j, D_INNER), f32), xp[:NSL - j, :]], axis=0)
        shifted = jnp.where(rowmod >= j, shifted, 0.0)        # stop group leak
        acc = acc + w_conv[D_CONV - 1 - j:D_CONV - j, :] * shifted
    xc = _silu(acc + b_conv)                                  # (NSL, D_INNER)

    # --- x-projection (dt_rank=1 folded into w_delta on the host) -------------
    delta = _softplus(dot(xc, w_delta) + b_dt)                # (NSL, D_INNER)
    bm = dot(xc, w_b)                                         # (NSL, D_STATE)
    cm = dot(xc, w_c)                                         # (NSL, D_STATE)

    # --- 0/1 selector constants (iota-built, no gathers / transposes) ---------
    # "full" row index r = 16*t + 4*g + s  ->  source row src(r) = 8*g + t
    def src_of(r):
        g = jnp.bitwise_and(jnp.right_shift(r, 2), NSTREAM - 1)
        t = jnp.right_shift(r, 4)
        return g * L + t

    r_p = jax.lax.broadcasted_iota(jnp.int32, (NFULL, NSL), 0)
    c_p = jax.lax.broadcasted_iota(jnp.int32, (NFULL, NSL), 1)
    p_mat = jnp.where(c_p == src_of(r_p), 1.0, 0.0).astype(f32)   # (128, 32)
    r_t = jax.lax.broadcasted_iota(jnp.int32, (NSL, NFULL), 0)
    c_t = jax.lax.broadcasted_iota(jnp.int32, (NSL, NFULL), 1)
    pt_mat = jnp.where(r_t == src_of(c_t), 1.0, 0.0).astype(f32)  # (32, 128)
    r_s = jax.lax.broadcasted_iota(jnp.int32, (NFULL, D_STATE), 0)
    c_s = jax.lax.broadcasted_iota(jnp.int32, (NFULL, D_STATE), 1)
    smask = jnp.where(jnp.bitwise_and(r_s, D_STATE - 1) == c_s,
                      1.0, 0.0).astype(f32)                       # (128, 4)

    # --- batched scan-operand precompute: exp / B*(delta*u) / C broadcasts ----
    # --- are hoisted entirely off the serial recurrence ------------------------
    delta_p = dot(p_mat, delta)                               # (NFULL, D_INNER)
    dxu_p = dot(p_mat, delta * xc)                            # (NFULL, D_INNER)
    bm_p = dot(p_mat, bm)                                     # (NFULL, D_STATE)
    cm_p = dot(p_mat, cm)                                     # (NFULL, D_STATE)
    a_rep = dot(smask, a_t)                                   # (NFULL, D_INNER)
    ones_sd = jnp.ones((D_STATE, D_INNER), f32)
    b_bc = dot(bm_p * smask, ones_sd)                         # (NFULL, D_INNER)
    c_bc = dot(cm_p * smask, ones_sd)                         # (NFULL, D_INNER)
    da = jnp.exp(delta_p * a_rep)                             # (NFULL, D_INNER)
    dbx = b_bc * dxu_p                                        # (NFULL, D_INNER)

    # --- selective scan: 8 joint FMA steps on a fused (16, 32) state ----------
    h = jnp.zeros((SR, D_INNER), f32)
    hs = []
    for t in range(L):
        h = da[t * SR:(t + 1) * SR, :] * h + dbx[t * SR:(t + 1) * SR, :]
        hs.append(h)
    h_all = jnp.concatenate(hs, axis=0)                       # (NFULL, D_INNER)

    # --- y = sum_s C*h in one matmul, skip, gate, out-projection --------------
    y = dot(pt_mat, c_bc * h_all)                             # (NSL, D_INNER)
    y = y + d_skip * xc
    y = y * _silu(z)
    out_m = dot(y, w_out)                                     # (NSL, D)

    # --- fwd + (time-reversed) bwd recombination per batch element ------------
    mo = dot(s_comb, out_m)                                   # (BL, D)

    # --- norm_out + feed-forward + residual ------------------------------------
    mn = _layernorm(mo, g_out, b_out)
    h1 = _gelu_tanh(dot(mn, w1) + b1)
    ff = dot(h1, w2) + b2
    o_ref[...] = (ff + x).astype(o_ref.dtype)


@jax.jit
def bimamba_block(x, slab):
    out = pl.pallas_call(
        bimamba_kernel,
        out_shape=jax.ShapeDtypeStruct((BL, D), jnp.float32),
    )(x.reshape(BL, D), slab)
    return out.reshape(B, L, D)


# --------------------------- host-side weight packing -------------------------
def _expand4_matrix():
    e = np.zeros((NSL, BL), np.float32)
    for b in range(B):
        for l in range(L):
            e[(2 * b) * L + l, b * L + l] = 1.0                 # fwd stream
            e[(2 * b + 1) * L + l, b * L + (L - 1 - l)] = 1.0   # flipped stream
    return jnp.asarray(e)


def _scomb_matrix():
    s = np.zeros((BL, NSL), np.float32)
    for b in range(B):
        for l in range(L):
            s[b * L + l, (2 * b) * L + l] = 1.0                 # fwd output
            s[b * L + l, (2 * b + 1) * L + (L - 1 - l)] = 1.0   # un-flipped bwd
    return jnp.asarray(s)


def pack_params(p):
    """Fold + pack every module weight into one (SLAB_ROWS, SLAB_COLS) f32 slab."""
    w_x = p["w_x"]
    w_delta = w_x[:, :DT_RANK] @ p["w_dt"]                    # fold rank-1 dt proj
    w_b = w_x[:, DT_RANK:DT_RANK + D_STATE]
    w_c = w_x[:, DT_RANK + D_STATE:DT_RANK + 2 * D_STATE]
    a_t = -jnp.exp(p["a_log_t"])                              # A^T folded on host

    slab = jnp.zeros((SLAB_ROWS, SLAB_COLS), jnp.float32)

    def put(s, r, c, a):
        a = jnp.asarray(a, jnp.float32)
        return s.at[r:r + a.shape[0], c:c + a.shape[1]].set(a)

    slab = put(slab, 0, 0, p["g_in"])
    slab = put(slab, 1, 0, p["b_in"])
    slab = put(slab, 2, 0, p["g_out"])
    slab = put(slab, 3, 0, p["b_out"])
    slab = put(slab, 4, 0, p["b_conv"])
    slab = put(slab, 5, 0, p["b_dt"])
    slab = put(slab, 6, 0, p["d_param"])
    slab = put(slab, 7, 0, p["b2"])
    slab = put(slab, 8, 0, p["b1"])
    slab = put(slab, R_WINX, 0, p["w_in"][:, :D_INNER])
    slab = put(slab, R_WINZ, 0, p["w_in"][:, D_INNER:])
    slab = put(slab, R_WCONV, 0, p["w_conv"])
    slab = put(slab, R_AT, 0, a_t)
    slab = put(slab, R_WDBC, 0, w_delta)
    slab = put(slab, R_WDBC, D_INNER, w_b)
    slab = put(slab, R_WDBC, D_INNER + D_STATE, w_c)
    slab = put(slab, R_WOUT, 0, p["w_out"])
    slab = put(slab, R_W1, 0, p["w1"])
    slab = put(slab, R_W2, 0, p["w2"])
    slab = put(slab, R_EXP4, 0, _expand4_matrix())
    slab = put(slab, R_SCOMB, 0, _scomb_matrix())
    return slab


# --------------------------- deterministic params -----------------------------
def init_params(key):
    ks = jax.random.split(key, 12)

    def rn(k, shape, scale):
        return (scale * jax.random.normal(k, shape)).astype(jnp.float32)

    p = {}
    p["g_in"] = jnp.ones((1, D), jnp.float32)
    p["b_in"] = jnp.zeros((1, D), jnp.float32)
    p["w_in"] = rn(ks[0], (D, 2 * D_INNER), 1.0 / math.sqrt(D))          # in_proj.weight.T
    p["w_conv"] = rn(ks[1], (D_CONV, D_INNER), 1.0 / math.sqrt(D_CONV))  # depthwise conv taps
    p["b_conv"] = rn(ks[2], (1, D_INNER), 0.1)
    p["w_x"] = rn(ks[3], (D_INNER, DT_RANK + 2 * D_STATE), 1.0 / math.sqrt(D_INNER))
    p["w_dt"] = rn(ks[4], (DT_RANK, D_INNER), 1.0 / math.sqrt(max(DT_RANK, 1)))
    p["b_dt"] = rn(ks[5], (1, D_INNER), 0.1)
    # mamba_ssm A init: A[d, n] = n + 1 ; stored transposed as (D_STATE, D_INNER)
    a = jnp.tile(jnp.arange(1, D_STATE + 1, dtype=jnp.float32)[:, None], (1, D_INNER))
    p["a_log_t"] = jnp.log(a)
    p["d_param"] = jnp.ones((1, D_INNER), jnp.float32)
    p["w_out"] = rn(ks[6], (D_INNER, D), 1.0 / math.sqrt(D_INNER))       # out_proj.weight.T
    p["g_out"] = jnp.ones((1, D), jnp.float32)
    p["b_out"] = jnp.zeros((1, D), jnp.float32)
    p["w1"] = rn(ks[7], (D, D_FF), 1.0 / math.sqrt(D))
    p["b1"] = rn(ks[8], (1, D_FF), 0.1)
    p["w2"] = rn(ks[9], (D_FF, D), 1.0 / math.sqrt(D_FF))
    p["b2"] = rn(ks[10], (1, D), 0.1)
    return p


# ---------------------- pure-JAX reference (flip-based) -----------------------
def _mamba_ref(xn, p):
    xz = xn @ p["w_in"]
    xp, z = xz[:, :D_INNER], xz[:, D_INNER:]
    xpad = jnp.concatenate([jnp.zeros((D_CONV - 1, D_INNER), jnp.float32), xp], axis=0)
    xc = sum(p["w_conv"][k][None, :] * xpad[k:k + L] for k in range(D_CONV)) + p["b_conv"]
    xc = _silu(xc)
    x_dbl = xc @ p["w_x"]
    dt = x_dbl[:, :DT_RANK]
    Bm = x_dbl[:, DT_RANK:DT_RANK + D_STATE]
    Cm = x_dbl[:, DT_RANK + D_STATE:]
    delta = _softplus(dt @ p["w_dt"] + p["b_dt"])
    A = -jnp.exp(jnp.transpose(p["a_log_t"]))                 # (D_INNER, D_STATE)

    def step(h, inp):
        d_t, x_t, B_t, C_t = inp
        h = jnp.exp(d_t[:, None] * A) * h + (d_t * x_t)[:, None] * B_t[None, :]
        y = jnp.sum(h * C_t[None, :], axis=-1) + p["d_param"][0] * x_t
        return h, y

    _, ys = jax.lax.scan(step, jnp.zeros((D_INNER, D_STATE), jnp.float32),
                         (delta, xc, Bm, Cm))
    return (ys * _silu(z)) @ p["w_out"]


def bimamba_ref(x, p):
    def one(xb):
        xn = _layernorm(xb, p["g_in"], p["b_in"])
        fwd = _mamba_ref(xn, p)
        bwd = jnp.flip(_mamba_ref(jnp.flip(xn, axis=0), p), axis=0)
        m = _layernorm(fwd + bwd, p["g_out"], p["b_out"])
        ff = _gelu_tanh(m @ p["w1"] + p["b1"]) @ p["w2"] + p["b2"]
        return ff + xb
    return jax.vmap(one)(x)


# ----------------------------------- main --------------------------------------
if __name__ == "__main__":
    key = jax.random.PRNGKey(0)
    kx, kp = jax.random.split(key)
    x = jax.random.normal(kx, (B, L, D), dtype=jnp.float32)
    params = init_params(kp)
    slab = jax.block_until_ready(pack_params(params))

    out = jax.block_until_ready(bimamba_block(x, slab))
    ref = jax.block_until_ready(bimamba_ref(x, params))

    assert out.shape == x.shape and out.dtype == x.dtype
    err = float(jnp.max(jnp.abs(out - ref)))
    assert err < 5e-4, f"kernel/reference mismatch: max abs err = {err}"
    print("KERNEL_OK")
</pallas_src>

<mosaic_0001>
module attributes {stable_mosaic.version = 11 : i64} {
  func.func @bimamba_kernel(%arg0: memref<16x16xf32, #tpu.memory_space<vmem>>, %arg1: memref<256x64xf32, #tpu.memory_space<vmem>>, %arg2: memref<16x16xf32, #tpu.memory_space<vmem>>) attributes {dimension_semantics = [], scalar_prefetch = 0 : i64, scratch_operands = 0 : i64, tpu.core_type = #tpu.core_type<tc>} {
    %c0 = arith.constant 0 : index
    %c0_0 = arith.constant 0 : index
    %0 = vector.load %arg0[%c0, %c0_0] : memref<16x16xf32, #tpu.memory_space<vmem>>, vector<16x16xf32>
    %c0_1 = arith.constant 0 : index
    %c0_2 = arith.constant 0 : index
    %1 = vector.load %arg1[%c0_1, %c0_2] : memref<256x64xf32, #tpu.memory_space<vmem>>, vector<1x16xf32>
    %c1 = arith.constant 1 : index
    %c0_3 = arith.constant 0 : index
    %2 = vector.load %arg1[%c1, %c0_3] : memref<256x64xf32, #tpu.memory_space<vmem>>, vector<1x16xf32>
    %c2 = arith.constant 2 : index
    %c0_4 = arith.constant 0 : index
    %3 = vector.load %arg1[%c2, %c0_4] : memref<256x64xf32, #tpu.memory_space<vmem>>, vector<1x16xf32>
    %c3 = arith.constant 3 : index
    %c0_5 = arith.constant 0 : index
    %4 = vector.load %arg1[%c3, %c0_5] : memref<256x64xf32, #tpu.memory_space<vmem>>, vector<1x16xf32>
    %c4 = arith.constant 4 : index
    %c0_6 = arith.constant 0 : index
    %5 = vector.load %arg1[%c4, %c0_6] : memref<256x64xf32, #tpu.memory_space<vmem>>, vector<1x32xf32>
    %c5 = arith.constant 5 : index
    %c0_7 = arith.constant 0 : index
    %6 = vector.load %arg1[%c5, %c0_7] : memref<256x64xf32, #tpu.memory_space<vmem>>, vector<1x32xf32>
    %c6 = arith.constant 6 : index
    %c0_8 = arith.constant 0 : index
    %7 = vector.load %arg1[%c6, %c0_8] : memref<256x64xf32, #tpu.memory_space<vmem>>, vector<1x32xf32>
    %c7 = arith.constant 7 : index
    %c0_9 = arith.constant 0 : index
    %8 = vector.load %arg1[%c7, %c0_9] : memref<256x64xf32, #tpu.memory_space<vmem>>, vector<1x16xf32>
    %c8 = arith.constant 8 : index
    %c0_10 = arith.constant 0 : index
    %9 = vector.load %arg1[%c8, %c0_10] : memref<256x64xf32, #tpu.memory_space<vmem>>, vector<1x64xf32>
    %c16 = arith.constant 16 : index
    %c0_11 = arith.constant 0 : index
    %10 = vector.load %arg1[%c16, %c0_11] : memref<256x64xf32, #tpu.memory_space<vmem>>, vector<16x32xf32>
    %c32 = arith.constant 32 : index
    %c0_12 = arith.constant 0 : index
    %11 = vector.load %arg1[%c32, %c0_12] : memref<256x64xf32, #tpu.memory_space<vmem>>, vector<16x32xf32>
    %c48 = arith.constant 48 : index
    %c0_13 = arith.constant 0 : index
    %12 = vector.load %arg1[%c48, %c0_13] : memref<256x64xf32, #tpu.memory_space<vmem>>, vector<4x32xf32>
    %c56 = arith.constant 56 : index
    %c0_14 = arith.constant 0 : index
    %13 = vector.load %arg1[%c56, %c0_14] : memref<256x64xf32, #tpu.memory_space<vmem>>, vector<4x32xf32>
    %c64 = arith.constant 64 : index
    %c0_15 = arith.constant 0 : index
    %14 = vector.load %arg1[%c64, %c0_15] : memref<256x64xf32, #tpu.memory_space<vmem>>, vector<32x32xf32>
    %c64_16 = arith.constant 64 : index
    %c32_17 = arith.constant 32 : index
    %15 = vector.load %arg1[%c64_16, %c32_17] : memref<256x64xf32, #tpu.memory_space<vmem>>, vector<32x4xf32>
    %c64_18 = arith.constant 64 : index
    %c36 = arith.constant 36 : index
    %16 = vector.load %arg1[%c64_18, %c36] : memref<256x64xf32, #tpu.memory_space<vmem>>, vector<32x4xf32>
    %c96 = arith.constant 96 : index
    %c0_19 = arith.constant 0 : index
    %17 = vector.load %arg1[%c96, %c0_19] : memref<256x64xf32, #tpu.memory_space<vmem>>, vector<32x16xf32>
    %c128 = arith.constant 128 : index
    %c0_20 = arith.constant 0 : index
    %18 = vector.load %arg1[%c128, %c0_20] : memref<256x64xf32, #tpu.memory_space<vmem>>, vector<16x64xf32>
    %c144 = arith.constant 144 : index
    %c0_21 = arith.constant 0 : index
    %19 = vector.load %arg1[%c144, %c0_21] : memref<256x64xf32, #tpu.memory_space<vmem>>, vector<64x16xf32>
    %c208 = arith.constant 208 : index
    %c0_22 = arith.constant 0 : index
    %20 = vector.load %arg1[%c208, %c0_22] : memref<256x64xf32, #tpu.memory_space<vmem>>, vector<32x16xf32>
    %c240 = arith.constant 240 : index
    %c0_23 = arith.constant 0 : index
    %21 = vector.load %arg1[%c240, %c0_23] : memref<256x64xf32, #tpu.memory_space<vmem>>, vector<16x32xf32>
    %cst = arith.constant dense<0.000000e+00> : vector<16xf32>
    %22 = vector.multi_reduction <add>, %0, %cst [1] : vector<16x16xf32> to vector<16xf32>
    %23 = vector.shape_cast %22 : vector<16xf32> to vector<16x1xf32>
    %cst_24 = arith.constant 1.600000e+01 : f32
    %24 = vector.broadcast %cst_24 : f32 to vector<16x1xf32>
    %25 = arith.divf %23, %24 : vector<16x1xf32>
    %26 = vector.broadcast %25 : vector<16x1xf32> to vector<16x16xf32>
    %27 = arith.subf %0, %26 : vector<16x16xf32>
    %28 = arith.mulf %27, %27 : vector<16x16xf32>
    %cst_25 = arith.constant dense<0.000000e+00> : vector<16xf32>
    %29 = vector.multi_reduction <add>, %28, %cst_25 [1] : vector<16x16xf32> to vector<16xf32>
    %30 = vector.shape_cast %29 : vector<16xf32> to vector<16x1xf32>
    %cst_26 = arith.constant 1.600000e+01 : f32
    %31 = vector.broadcast %cst_26 : f32 to vector<16x1xf32>
    %32 = arith.divf %30, %31 : vector<16x1xf32>
    %cst_27 = arith.constant 9.99999974E-6 : f32
    %33 = vector.broadcast %cst_27 : f32 to vector<16x1xf32>
    %34 = arith.addf %32, %33 : vector<16x1xf32>
    %35 = math.rsqrt %34 : vector<16x1xf32>
    %36 = vector.broadcast %35 : vector<16x1xf32> to vector<16x16xf32>
    %37 = arith.mulf %27, %36 : vector<16x16xf32>
    %38 = vector.broadcast %1 : vector<1x16xf32> to vector<16x16xf32>
    %39 = arith.mulf %37, %38 : vector<16x16xf32>
    %40 = vector.broadcast %2 : vector<1x16xf32> to vector<16x16xf32>
    %41 = arith.addf %39, %40 : vector<16x16xf32>
    %cst_28 = arith.constant dense<0.000000e+00> : vector<32x16xf32>
    %42 = tpu.matmul %20, %41, %cst_28 {dimension_numbers = #tpu.dot_dimension_numbers<[1], [0], [0], [1], [0, 0, 1, 1], [], []>, precision = #tpu.contract_precision<fp32>} : vector<32x16xf32>, vector<16x16xf32>, vector<32x16xf32> -> vector<32x16xf32>
    %cst_29 = arith.constant dense<0.000000e+00> : vector<32x32xf32>
    %43 = tpu.matmul %42, %10, %cst_29 {dimension_numbers = #tpu.dot_dimension_numbers<[1], [0], [0], [1], [0, 0, 1, 1], [], []>, precision = #tpu.contract_precision<fp32>} : vector<32x16xf32>, vector<16x32xf32>, vector<32x32xf32> -> vector<32x32xf32>
    %cst_30 = arith.constant dense<0.000000e+00> : vector<32x32xf32>
    %44 = tpu.matmul %42, %11, %cst_30 {dimension_numbers = #tpu.dot_dimension_numbers<[1], [0], [0], [1], [0, 0, 1, 1], [], []>, precision = #tpu.contract_precision<fp32>} : vector<32x16xf32>, vector<16x32xf32>, vector<32x32xf32> -> vector<32x32xf32>
    %45 = tpu.iota {dimensions = array<i32: 0>} : vector<32x32xi32>
    %c7_i32 = arith.constant 7 : i32
    %46 = vector.broadcast %c7_i32 : i32 to vector<32x32xi32>
    %47 = arith.andi %45, %46 : vector<32x32xi32>
    %48 = vector.extract_strided_slice %12 {offsets = [3, 0], sizes = [1, 32], strides = [1, 1]} : vector<4x32xf32> to vector<1x32xf32>
    %49 = vector.broadcast %48 : vector<1x32xf32> to vector<32x32xf32>
    %50 = arith.mulf %49, %43 : vector<32x32xf32>
    %cst_31 = arith.constant 0.000000e+00 : f32
    %51 = vector.broadcast %cst_31 : f32 to vector<1x32xf32>
    %52 = vector.extract_strided_slice %43 {offsets = [0, 0], sizes = [31, 32], strides = [1, 1]} : vector<32x32xf32> to vector<31x32xf32>
    %53 = tpu.concatenate %51, %52 in 0 : vector<1x32xf32>, vector<31x32xf32> -> vector<32x32xf32>
    %c1_i32 = arith.constant 1 : i32
    %54 = vector.broadcast %c1_i32 : i32 to vector<32x32xi32>
    %55 = arith.cmpi sge, %47, %54 : vector<32x32xi32>
    %cst_32 = arith.constant 0.000000e+00 : f32
    %56 = vector.broadcast %cst_32 : f32 to vector<32x32xf32>
    %57 = arith.select %55, %53, %56 : vector<32x32xi1>, vector<32x32xf32>
    %58 = vector.extract_strided_slice %12 {offsets = [2, 0], sizes = [1, 32], strides = [1, 1]} : vector<4x32xf32> to vector<1x32xf32>
    %59 = vector.broadcast %58 : vector<1x32xf32> to vector<32x32xf32>
    %60 = arith.mulf %59, %57 : vector<32x32xf32>
    %61 = arith.addf %50, %60 : vector<32x32xf32>
    %cst_33 = arith.constant 0.000000e+00 : f32
    %62 = vector.broadcast %cst_33 : f32 to vector<2x32xf32>
    %63 = vector.extract_strided_slice %43 {offsets = [0, 0], sizes = [30, 32], strides = [1, 1]} : vector<32x32xf32> to vector<30x32xf32>
    %64 = tpu.concatenate %62, %63 in 0 : vector<2x32xf32>, vector<30x32xf32> -> vector<32x32xf32>
    %c2_i32 = arith.constant 2 : i32
    %65 = vector.broadcast %c2_i32 : i32 to vector<32x32xi32>
    %66 = arith.cmpi sge, %47, %65 : vector<32x32xi32>
    %cst_34 = arith.constant 0.000000e+00 : f32
    %67 = vector.broadcast %cst_34 : f32 to vector<32x32xf32>
    %68 = arith.select %66, %64, %67 : vector<32x32xi1>, vector<32x32xf32>
    %69 = vector.extract_strided_slice %12 {offsets = [1, 0], sizes = [1, 32], strides = [1, 1]} : vector<4x32xf32> to vector<1x32xf32>
    %70 = vector.broadcast %69 : vector<1x32xf32> to vector<32x32xf32>
    %71 = arith.mulf %70, %68 : vector<32x32xf32>
    %72 = arith.addf %61, %71 : vector<32x32xf32>
    %cst_35 = arith.constant 0.000000e+00 : f32
    %73 = vector.broadcast %cst_35 : f32 to vector<3x32xf32>
    %74 = vector.extract_strided_slice %43 {offsets = [0, 0], sizes = [29, 32], strides = [1, 1]} : vector<32x32xf32> to vector<29x32xf32>
    %75 = tpu.concatenate %73, %74 in 0 : vector<3x32xf32>, vector<29x32xf32> -> vector<32x32xf32>
    %c3_i32 = arith.constant 3 : i32
    %76 = vector.broadcast %c3_i32 : i32 to vector<32x32xi32>
    %77 = arith.cmpi sge, %47, %76 : vector<32x32xi32>
    %cst_36 = arith.constant 0.000000e+00 : f32
    %78 = vector.broadcast %cst_36 : f32 to vector<32x32xf32>
    %79 = arith.select %77, %75, %78 : vector<32x32xi1>, vector<32x32xf32>
    %80 = vector.extract_strided_slice %12 {offsets = [0, 0], sizes = [1, 32], strides = [1, 1]} : vector<4x32xf32> to vector<1x32xf32>
    %81 = vector.broadcast %80 : vector<1x32xf32> to vector<32x32xf32>
    %82 = arith.mulf %81, %79 : vector<32x32xf32>
    %83 = arith.addf %72, %82 : vector<32x32xf32>
    %84 = vector.broadcast %5 : vector<1x32xf32> to vector<32x32xf32>
    %85 = arith.addf %83, %84 : vector<32x32xf32>
    %cst_37 = arith.constant 0.000000e+00 : f32
    %86 = vector.broadcast %cst_37 : f32 to vector<32x32xf32>
    %87 = arith.subf %86, %85 : vector<32x32xf32>
    %88 = math.exp %87 : vector<32x32xf32>
    %cst_38 = arith.constant 1.000000e+00 : f32
    %89 = vector.broadcast %cst_38 : f32 to vector<32x32xf32>
    %90 = arith.addf %89, %88 : vector<32x32xf32>
    %cst_39 = arith.constant 1.000000e+00 : f32
    %91 = vector.broadcast %cst_39 : f32 to vector<32x32xf32>
    %92 = arith.divf %91, %90 : vector<32x32xf32>
    %93 = arith.mulf %85, %92 : vector<32x32xf32>
    %cst_40 = arith.constant dense<0.000000e+00> : vector<32x32xf32>
    %94 = tpu.matmul %93, %14, %cst_40 {dimension_numbers = #tpu.dot_dimension_numbers<[1], [0], [0], [1], [0, 0, 1, 1], [], []>, precision = #tpu.contract_precision<fp32>} : vector<32x32xf32>, vector<32x32xf32>, vector<32x32xf32> -> vector<32x32xf32>
    %95 = vector.broadcast %6 : vector<1x32xf32> to vector<32x32xf32>
    %96 = arith.addf %94, %95 : vector<32x32xf32>
    %cst_41 = arith.constant 0.000000e+00 : f32
    %97 = vector.broadcast %cst_41 : f32 to vector<32x32xf32>
    %98 = arith.maximumf %96, %97 : vector<32x32xf32>
    %99 = math.absf %96 : vector<32x32xf32>
    %cst_42 = arith.constant 0.000000e+00 : f32
    %100 = vector.broadcast %cst_42 : f32 to vector<32x32xf32>
    %101 = arith.subf %100, %99 : vector<32x32xf32>
    %102 = math.exp %101 : vector<32x32xf32>
    %cst_43 = arith.constant 1.000000e+00 : f32
    %103 = vector.broadcast %cst_43 : f32 to vector<32x32xf32>
    %104 = arith.addf %103, %102 : vector<32x32xf32>
    %105 = math.log %104 : vector<32x32xf32>
    %106 = arith.addf %98, %105 : vector<32x32xf32>
    %cst_44 = arith.constant dense<0.000000e+00> : vector<32x4xf32>
    %107 = tpu.matmul %93, %15, %cst_44 {dimension_numbers = #tpu.dot_dimension_numbers<[1], [0], [0], [1], [0, 0, 1, 1], [], []>, precision = #tpu.contract_precision<fp32>} : vector<32x32xf32>, vector<32x4xf32>, vector<32x4xf32> -> vector<32x4xf32>
    %cst_45 = arith.constant dense<0.000000e+00> : vector<32x4xf32>
    %108 = tpu.matmul %93, %16, %cst_45 {dimension_numbers = #tpu.dot_dimension_numbers<[1], [0], [0], [1], [0, 0, 1, 1], [], []>, precision = #tpu.contract_precision<fp32>} : vector<32x32xf32>, vector<32x4xf32>, vector<32x4xf32> -> vector<32x4xf32>
    %109 = tpu.iota {dimensions = array<i32: 0>} : vector<128x32xi32>
    %110 = tpu.iota {dimensions = array<i32: 1>} : vector<128x32xi32>
    %c2_i32_46 = arith.constant 2 : i32
    %111 = vector.broadcast %c2_i32_46 : i32 to vector<128x32xi32>
    %112 = arith.shrsi %109, %111 : vector<128x32xi32>
    %c3_i32_47 = arith.constant 3 : i32
    %113 = vector.broadcast %c3_i32_47 : i32 to vector<128x32xi32>
    %114 = arith.andi %112, %113 : vector<128x32xi32>
    %c4_i32 = arith.constant 4 : i32
    %115 = vector.broadcast %c4_i32 : i32 to vector<128x32xi32>
    %116 = arith.shrsi %109, %115 : vector<128x32xi32>
    %c8_i32 = arith.constant 8 : i32
    %117 = vector.broadcast %c8_i32 : i32 to vector<128x32xi32>
    %118 = arith.muli %114, %117 : vector<128x32xi32>
    %119 = arith.addi %118, %116 : vector<128x32xi32>
    %120 = arith.cmpi eq, %110, %119 : vector<128x32xi32>
    %cst_48 = arith.constant 1.000000e+00 : f32
    %cst_49 = arith.constant 0.000000e+00 : f32
    %121 = vector.broadcast %cst_48 : f32 to vector<128x32xf32>
    %122 = vector.broadcast %cst_49 : f32 to vector<128x32xf32>
    %123 = arith.select %120, %121, %122 : vector<128x32xi1>, vector<128x32xf32>
    %124 = tpu.iota {dimensions = array<i32: 0>} : vector<32x128xi32>
    %125 = tpu.iota {dimensions = array<i32: 1>} : vector<32x128xi32>
    %c2_i32_50 = arith.constant 2 : i32
    %126 = vector.broadcast %c2_i32_50 : i32 to vector<32x128xi32>
    %127 = arith.shrsi %125, %126 : vector<32x128xi32>
    %c3_i32_51 = arith.constant 3 : i32
    %128 = vector.broadcast %c3_i32_51 : i32 to vector<32x128xi32>
    %129 = arith.andi %127, %128 : vector<32x128xi32>
    %c4_i32_52 = arith.constant 4 : i32
    %130 = vector.broadcast %c4_i32_52 : i32 to vector<32x128xi32>
    %131 = arith.shrsi %125, %130 : vector<32x128xi32>
    %c8_i32_53 = arith.constant 8 : i32
    %132 = vector.broadcast %c8_i32_53 : i32 to vector<32x128xi32>
    %133 = arith.muli %129, %132 : vector<32x128xi32>
    %134 = arith.addi %133, %131 : vector<32x128xi32>
    %135 = arith.cmpi eq, %124, %134 : vector<32x128xi32>
    %cst_54 = arith.constant 1.000000e+00 : f32
    %cst_55 = arith.constant 0.000000e+00 : f32
    %136 = vector.broadcast %cst_54 : f32 to vector<32x128xf32>
    %137 = vector.broadcast %cst_55 : f32 to vector<32x128xf32>
    %138 = arith.select %135, %136, %137 : vector<32x128xi1>, vector<32x128xf32>
    %139 = tpu.iota {dimensions = array<i32: 0>} : vector<128x4xi32>
    %140 = tpu.iota {dimensions = array<i32: 1>} : vector<128x4xi32>
    %c3_i32_56 = arith.constant 3 : i32
    %141 = vector.broadcast %c3_i32_56 : i32 to vector<128x4xi32>
    %142 = arith.andi %139, %141 : vector<128x4xi32>
    %143 = arith.cmpi eq, %142, %140 : vector<128x4xi32>
    %cst_57 = arith.constant 1.000000e+00 : f32
    %cst_58 = arith.constant 0.000000e+00 : f32
    %144 = vector.broadcast %cst_57 : f32 to vector<128x4xf32>
    %145 = vector.broadcast %cst_58 : f32 to vector<128x4xf32>
    %146 = arith.select %143, %144, %145 : vector<128x4xi1>, vector<128x4xf32>
    %cst_59 = arith.constant dense<0.000000e+00> : vector<128x32xf32>
    %147 = tpu.matmul %123, %106, %cst_59 {dimension_numbers = #tpu.dot_dimension_numbers<[1], [0], [0], [1], [0, 0, 1, 1], [], []>, precision = #tpu.contract_precision<fp32>} : vector<128x32xf32>, vector<32x32xf32>, vector<128x32xf32> -> vector<128x32xf32>
    %148 = arith.mulf %106, %93 : vector<32x32xf32>
    %cst_60 = arith.constant dense<0.000000e+00> : vector<128x32xf32>
    %149 = tpu.matmul %123, %148, %cst_60 {dimension_numbers = #tpu.dot_dimension_numbers<[1], [0], [0], [1], [0, 0, 1, 1], [], []>, precision = #tpu.contract_precision<fp32>} : vector<128x32xf32>, vector<32x32xf32>, vector<128x32xf32> -> vector<128x32xf32>
    %cst_61 = arith.constant dense<0.000000e+00> : vector<128x4xf32>
    %150 = tpu.matmul %123, %107, %cst_61 {dimension_numbers = #tpu.dot_dimension_numbers<[1], [0], [0], [1], [0, 0, 1, 1], [], []>, precision = #tpu.contract_precision<fp32>} : vector<128x32xf32>, vector<32x4xf32>, vector<128x4xf32> -> vector<128x4xf32>
    %cst_62 = arith.constant dense<0.000000e+00> : vector<128x4xf32>
    %151 = tpu.matmul %123, %108, %cst_62 {dimension_numbers = #tpu.dot_dimension_numbers<[1], [0], [0], [1], [0, 0, 1, 1], [], []>, precision = #tpu.contract_precision<fp32>} : vector<128x32xf32>, vector<32x4xf32>, vector<128x4xf32> -> vector<128x4xf32>
    %cst_63 = arith.constant dense<0.000000e+00> : vector<128x32xf32>
    %152 = tpu.matmul %146, %13, %cst_63 {dimension_numbers = #tpu.dot_dimension_numbers<[1], [0], [0], [1], [0, 0, 1, 1], [], []>, precision = #tpu.contract_precision<fp32>} : vector<128x4xf32>, vector<4x32xf32>, vector<128x32xf32> -> vector<128x32xf32>
    %cst_64 = arith.constant 1.000000e+00 : f32
    %153 = vector.broadcast %cst_64 : f32 to vector<4x32xf32>
    %154 = arith.mulf %150, %146 : vector<128x4xf32>
    %cst_65 = arith.constant dense<0.000000e+00> : vector<128x32xf32>
    %155 = tpu.matmul %154, %153, %cst_65 {dimension_numbers = #tpu.dot_dimension_numbers<[1], [0], [0], [1], [0, 0, 1, 1], [], []>, precision = #tpu.contract_precision<fp32>} : vector<128x4xf32>, vector<4x32xf32>, vector<128x32xf32> -> vector<128x32xf32>
    %156 = arith.mulf %151, %146 : vector<128x4xf32>
    %cst_66 = arith.constant dense<0.000000e+00> : vector<128x32xf32>
    %157 = tpu.matmul %156, %153, %cst_66 {dimension_numbers = #tpu.dot_dimension_numbers<[1], [0], [0], [1], [0, 0, 1, 1], [], []>, precision = #tpu.contract_precision<fp32>} : vector<128x4xf32>, vector<4x32xf32>, vector<128x32xf32> -> vector<128x32xf32>
    %158 = arith.mulf %147, %152 : vector<128x32xf32>
    %159 = math.exp %158 : vector<128x32xf32>
    %160 = arith.mulf %155, %149 : vector<128x32xf32>
    %cst_67 = arith.constant 0.000000e+00 : f32
    %161 = vector.broadcast %cst_67 : f32 to vector<16x32xf32>
    %162 = vector.extract_strided_slice %159 {offsets = [0, 0], sizes = [16, 32], strides = [1, 1]} : vector<128x32xf32> to vector<16x32xf32>
    %163 = arith.mulf %162, %161 : vector<16x32xf32>
    %164 = vector.extract_strided_slice %160 {offsets = [0, 0], sizes = [16, 32], strides = [1, 1]} : vector<128x32xf32> to vector<16x32xf32>
    %165 = arith.addf %163, %164 : vector<16x32xf32>
    %166 = vector.extract_strided_slice %159 {offsets = [16, 0], sizes = [16, 32], strides = [1, 1]} : vector<128x32xf32> to vector<16x32xf32>
    %167 = arith.mulf %166, %165 : vector<16x32xf32>
    %168 = vector.extract_strided_slice %160 {offsets = [16, 0], sizes = [16, 32], strides = [1, 1]} : vector<128x32xf32> to vector<16x32xf32>
    %169 = arith.addf %167, %168 : vector<16x32xf32>
    %170 = vector.extract_strided_slice %159 {offsets = [32, 0], sizes = [16, 32], strides = [1, 1]} : vector<128x32xf32> to vector<16x32xf32>
    %171 = arith.mulf %170, %169 : vector<16x32xf32>
    %172 = vector.extract_strided_slice %160 {offsets = [32, 0], sizes = [16, 32], strides = [1, 1]} : vector<128x32xf32> to vector<16x32xf32>
    %173 = arith.addf %171, %172 : vector<16x32xf32>
    %174 = vector.extract_strided_slice %159 {offsets = [48, 0], sizes = [16, 32], strides = [1, 1]} : vector<128x32xf32> to vector<16x32xf32>
    %175 = arith.mulf %174, %173 : vector<16x32xf32>
    %176 = vector.extract_strided_slice %160 {offsets = [48, 0], sizes = [16, 32], strides = [1, 1]} : vector<128x32xf32> to vector<16x32xf32>
    %177 = arith.addf %175, %176 : vector<16x32xf32>
    %178 = vector.extract_strided_slice %159 {offsets = [64, 0], sizes = [16, 32], strides = [1, 1]} : vector<128x32xf32> to vector<16x32xf32>
    %179 = arith.mulf %178, %177 : vector<16x32xf32>
    %180 = vector.extract_strided_slice %160 {offsets = [64, 0], sizes = [16, 32], strides = [1, 1]} : vector<128x32xf32> to vector<16x32xf32>
    %181 = arith.addf %179, %180 : vector<16x32xf32>
    %182 = vector.extract_strided_slice %159 {offsets = [80, 0], sizes = [16, 32], strides = [1, 1]} : vector<128x32xf32> to vector<16x32xf32>
    %183 = arith.mulf %182, %181 : vector<16x32xf32>
    %184 = vector.extract_strided_slice %160 {offsets = [80, 0], sizes = [16, 32], strides = [1, 1]} : vector<128x32xf32> to vector<16x32xf32>
    %185 = arith.addf %183, %184 : vector<16x32xf32>
    %186 = vector.extract_strided_slice %159 {offsets = [96, 0], sizes = [16, 32], strides = [1, 1]} : vector<128x32xf32> to vector<16x32xf32>
    %187 = arith.mulf %186, %185 : vector<16x32xf32>
    %188 = vector.extract_strided_slice %160 {offsets = [96, 0], sizes = [16, 32], strides = [1, 1]} : vector<128x32xf32> to vector<16x32xf32>
    %189 = arith.addf %187, %188 : vector<16x32xf32>
    %190 = vector.extract_strided_slice %159 {offsets = [112, 0], sizes = [16, 32], strides = [1, 1]} : vector<128x32xf32> to vector<16x32xf32>
    %191 = arith.mulf %190, %189 : vector<16x32xf32>
    %192 = vector.extract_strided_slice %160 {offsets = [112, 0], sizes = [16, 32], strides = [1, 1]} : vector<128x32xf32> to vector<16x32xf32>
    %193 = arith.addf %191, %192 : vector<16x32xf32>
    %194 = tpu.concatenate %165, %169, %173, %177, %181, %185, %189, %193 in 0 : vector<16x32xf32>, vector<16x32xf32>, vector<16x32xf32>, vector<16x32xf32>, vector<16x32xf32>, vector<16x32xf32>, vector<16x32xf32>, vector<16x32xf32> -> vector<128x32xf32>
    %195 = arith.mulf %157, %194 : vector<128x32xf32>
    %cst_68 = arith.constant dense<0.000000e+00> : vector<32x32xf32>
    %196 = tpu.matmul %138, %195, %cst_68 {dimension_numbers = #tpu.dot_dimension_numbers<[1], [0], [0], [1], [0, 0, 1, 1], [], []>, precision = #tpu.contract_precision<fp32>} : vector<32x128xf32>, vector<128x32xf32>, vector<32x32xf32> -> vector<32x32xf32>
    %197 = vector.broadcast %7 : vector<1x32xf32> to vector<32x32xf32>
    %198 = arith.mulf %197, %93 : vector<32x32xf32>
    %199 = arith.addf %196, %198 : vector<32x32xf32>
    %cst_69 = arith.constant 0.000000e+00 : f32
    %200 = vector.broadcast %cst_69 : f32 to vector<32x32xf32>
    %201 = arith.subf %200, %44 : vector<32x32xf32>
    %202 = math.exp %201 : vector<32x32xf32>
    %cst_70 = arith.constant 1.000000e+00 : f32
    %203 = vector.broadcast %cst_70 : f32 to vector<32x32xf32>
    %204 = arith.addf %203, %202 : vector<32x32xf32>
    %cst_71 = arith.constant 1.000000e+00 : f32
    %205 = vector.broadcast %cst_71 : f32 to vector<32x32xf32>
    %206 = arith.divf %205, %204 : vector<32x32xf32>
    %207 = arith.mulf %44, %206 : vector<32x32xf32>
    %208 = arith.mulf %199, %207 : vector<32x32xf32>
    %cst_72 = arith.constant dense<0.000000e+00> : vector<32x16xf32>
    %209 = tpu.matmul %208, %17, %cst_72 {dimension_numbers = #tpu.dot_dimension_numbers<[1], [0], [0], [1], [0, 0, 1, 1], [], []>, precision = #tpu.contract_precision<fp32>} : vector<32x32xf32>, vector<32x16xf32>, vector<32x16xf32> -> vector<32x16xf32>
    %cst_73 = arith.constant dense<0.000000e+00> : vector<16x16xf32>
    %210 = tpu.matmul %21, %209, %cst_73 {dimension_numbers = #tpu.dot_dimension_numbers<[1], [0], [0], [1], [0, 0, 1, 1], [], []>, precision = #tpu.contract_precision<fp32>} : vector<16x32xf32>, vector<32x16xf32>, vector<16x16xf32> -> vector<16x16xf32>
    %cst_74 = arith.constant dense<0.000000e+00> : vector<16xf32>
    %211 = vector.multi_reduction <add>, %210, %cst_74 [1] : vector<16x16xf32> to vector<16xf32>
    %212 = vector.shape_cast %211 : vector<16xf32> to vector<16x1xf32>
    %cst_75 = arith.constant 1.600000e+01 : f32
    %213 = vector.broadcast %cst_75 : f32 to vector<16x1xf32>
    %214 = arith.divf %212, %213 : vector<16x1xf32>
    %215 = vector.broadcast %214 : vector<16x1xf32> to vector<16x16xf32>
    %216 = arith.subf %210, %215 : vector<16x16xf32>
    %217 = arith.mulf %216, %216 : vector<16x16xf32>
    %cst_76 = arith.constant dense<0.000000e+00> : vector<16xf32>
    %218 = vector.multi_reduction <add>, %217, %cst_76 [1] : vector<16x16xf32> to vector<16xf32>
    %219 = vector.shape_cast %218 : vector<16xf32> to vector<16x1xf32>
    %cst_77 = arith.constant 1.600000e+01 : f32
    %220 = vector.broadcast %cst_77 : f32 to vector<16x1xf32>
    %221 = arith.divf %219, %220 : vector<16x1xf32>
    %cst_78 = arith.constant 9.99999974E-6 : f32
    %222 = vector.broadcast %cst_78 : f32 to vector<16x1xf32>
    %223 = arith.addf %221, %222 : vector<16x1xf32>
    %224 = math.rsqrt %223 : vector<16x1xf32>
    %225 = vector.broadcast %224 : vector<16x1xf32> to vector<16x16xf32>
    %226 = arith.mulf %216, %225 : vector<16x16xf32>
    %227 = vector.broadcast %3 : vector<1x16xf32> to vector<16x16xf32>
    %228 = arith.mulf %226, %227 : vector<16x16xf32>
    %229 = vector.broadcast %4 : vector<1x16xf32> to vector<16x16xf32>
    %230 = arith.addf %228, %229 : vector<16x16xf32>
    %cst_79 = arith.constant dense<0.000000e+00> : vector<16x64xf32>
    %231 = tpu.matmul %230, %18, %cst_79 {dimension_numbers = #tpu.dot_dimension_numbers<[1], [0], [0], [1], [0, 0, 1, 1], [], []>, precision = #tpu.contract_precision<fp32>} : vector<16x16xf32>, vector<16x64xf32>, vector<16x64xf32> -> vector<16x64xf32>
    %232 = vector.broadcast %9 : vector<1x64xf32> to vector<16x64xf32>
    %233 = arith.addf %231, %232 : vector<16x64xf32>
    %cst_80 = arith.constant 5.000000e-01 : f32
    %234 = vector.broadcast %cst_80 : f32 to vector<16x64xf32>
    %235 = arith.mulf %234, %233 : vector<16x64xf32>
    %cst_81 = arith.constant 4.471500e-02 : f32
    %236 = vector.broadcast %cst_81 : f32 to vector<16x64xf32>
    %237 = arith.mulf %236, %233 : vector<16x64xf32>
    %238 = arith.mulf %237, %233 : vector<16x64xf32>
    %239 = arith.mulf %238, %233 : vector<16x64xf32>
    %240 = arith.addf %233, %239 : vector<16x64xf32>
    %cst_82 = arith.constant 0.797884583 : f32
    %241 = vector.broadcast %cst_82 : f32 to vector<16x64xf32>
    %242 = arith.mulf %241, %240 : vector<16x64xf32>
    %243 = math.tanh %242 : vector<16x64xf32>
    %cst_83 = arith.constant 1.000000e+00 : f32
    %244 = vector.broadcast %cst_83 : f32 to vector<16x64xf32>
    %245 = arith.addf %244, %243 : vector<16x64xf32>
    %246 = arith.mulf %235, %245 : vector<16x64xf32>
    %cst_84 = arith.constant dense<0.000000e+00> : vector<16x16xf32>
    %247 = tpu.matmul %246, %19, %cst_84 {dimension_numbers = #tpu.dot_dimension_numbers<[1], [0], [0], [1], [0, 0, 1, 1], [], []>, precision = #tpu.contract_precision<fp32>} : vector<16x64xf32>, vector<64x16xf32>, vector<16x16xf32> -> vector<16x16xf32>
    %248 = vector.broadcast %8 : vector<1x16xf32> to vector<16x16xf32>
    %249 = arith.addf %247, %248 : vector<16x16xf32>
    %250 = arith.addf %249, %0 : vector<16x16xf32>
    %c0_85 = arith.constant 0 : index
    %c0_86 = arith.constant 0 : index
    %251 = vector.load %arg2[%c0_85, %c0_86] : memref<16x16xf32, #tpu.memory_space<vmem>>, vector<16x16xf32>
    tpu.vector_store %arg2[%c0_85, %c0_86], %250 {strides = array<i32>} : memref<16x16xf32, #tpu.memory_space<vmem>>, vector<16x16xf32>,
    return
  }
}

</mosaic_0001>

<llo_original>
// kernel: bimamba_block.1
$region0: #{bimamba_block.1}
  #allocation0 [shape = 'u32[]', space=smem, size = 0x4, offset = 0x4, fixed_abs, tag = 'smem constant byte address 0x4 - core index']
  #allocation1 [shape = 'u32[72,128]{1,0:T(1,128)}', space=vmem, size = 0x9000, scoped, tag = 'internal scratch']
  %s0 = inlined_call_operand.vmem [shape: f32[16,16], index: 0, kind: input, shape index: {}]
  %s1 = inlined_call_operand.vmem [shape: f32[256,64], index: 1, kind: input, shape index: {}]
  %s2 = inlined_call_operand.hbm [shape: f32[16,16], index: 2, kind: output, shape index: {}]
  %s3 = sld [smem:[#allocation0]]
  $region18: #{bimamba_block.1} parent=0
    _
  %s5 = ssub.s32 1, %s3
  %s6 = scalar_select 0, %s5, %s3
  $region1: #{bimamba_block.1} parent=0
    #allocation2 [shape = 'u8[8192]{0}', space=vmem, size = 0x2000, scoped, tag = 'output window, operand 0, single buffered']
    #allocation3 [shape = 's32[1]{0}', space=sflag, size = 0x4, scoped, tag = 'scoped memory for bimamba_block.1']
    %7 = vsyncpa [#allocation3], 0
    // Predicated region
    $region2: #{bimamba_block.1} parent=1 // pred_check
      _
    $region3: #{bimamba_block.1} parent=1 // pred_check_branch
      %9 = sbr.rel (0) target = $region5
    $region4: #{bimamba_block.1} parent=1 // pred_region
      _
    $region5: #{bimamba_block.1} parent=1 // pred_fallthru
      _
    // Predicated region
    $region6: #{bimamba_block.1} parent=1 // pred_check
      _
    $region7: #{bimamba_block.1} parent=1 // pred_check_branch
      %11 = sbr.rel (0) target = $region9
    $region8: #{bimamba_block.1} parent=1 // pred_region
      _
    $region9: #{bimamba_block.1} parent=1 // pred_fallthru
      _
    %v12 = vld [vmem:[%s0] sm:$0xff]
    %v13 = vld [vmem:[%s0 + $0x8] sm:$0xff]
    %v14 = vld [vmem:[%s1] sm:$0x1]
    %v15 = vld [vmem:[%s1 + $0x1] sm:$0x1]
    %v16 = vld [vmem:[%s1 + $0x2] sm:$0x1]
    %v17 = vld [vmem:[%s1 + $0x3] sm:$0x1]
    %v18 = vld [vmem:[%s1 + $0x4] sm:$0x1]
    %v19 = vld [vmem:[%s1 + $0x5] sm:$0x1]
    %v20 = vld [vmem:[%s1 + $0x6] sm:$0x1]
    %v21 = vld [vmem:[%s1 + $0x7] sm:$0x1]
    %v22 = vld [vmem:[%s1 + $0x8] sm:$0x1]
    %v23 = vld [vmem:[%s1 + $0x10] sm:$0xff]
    %v24 = vld [vmem:[%s1 + $0x18] sm:$0xff]
    %v25 = vld [vmem:[%s1 + $0x20] sm:$0xff]
    %v26 = vld [vmem:[%s1 + $0x28] sm:$0xff]
    %v27 = vld [vmem:[%s1 + $0x30] sm:$0xf]
    %v28 = vld [vmem:[%s1 + $0x38] sm:$0xf]
    %v29 = vld [vmem:[%s1 + $0x40] sm:$0xff]
    %v30 = vld [vmem:[%s1 + $0x48] sm:$0xff]
    %v31 = vld [vmem:[%s1 + $0x50] sm:$0xff]
    %v32 = vld [vmem:[%s1 + $0x58] sm:$0xff]
    %v33 = vld [vmem:[%s1 + $0x60] sm:$0xff]
    %v34 = vld [vmem:[%s1 + $0x68] sm:$0xff]
    %v35 = vld [vmem:[%s1 + $0x70] sm:$0xff]
    %v36 = vld [vmem:[%s1 + $0x78] sm:$0xff]
    %v37 = vld [vmem:[%s1 + $0x80] sm:$0xff]
    %v38 = vld [vmem:[%s1 + $0x88] sm:$0xff]
    %v39 = vld [vmem:[%s1 + $0x90] sm:$0xff]
    %v40 = vld [vmem:[%s1 + $0x98] sm:$0xff]
    %v41 = vld [vmem:[%s1 + $0xa0] sm:$0xff]
    %v42 = vld [vmem:[%s1 + $0xa8] sm:$0xff]
    %v43 = vld [vmem:[%s1 + $0xb0] sm:$0xff]
    %v44 = vld [vmem:[%s1 + $0xb8] sm:$0xff]
    %v45 = vld [vmem:[%s1 + $0xc0] sm:$0xff]
    %v46 = vld [vmem:[%s1 + $0xc8] sm:$0xff]
    %v47 = vld [vmem:[%s1 + $0xd0] sm:$0xff]
    %v48 = vld [vmem:[%s1 + $0xd8] sm:$0xff]
    %v49 = vld [vmem:[%s1 + $0xe0] sm:$0xff]
    %v50 = vld [vmem:[%s1 + $0xe8] sm:$0xff]
    %v51 = vld [vmem:[%s1 + $0xf0] sm:$0xff]
    %v52 = vld [vmem:[%s1 + $0xf8] sm:$0xff]
    %vm53 = vcmask 130048
    %v54 = vsel %vm53, %v12, 0.0
    %55 = vadd.xlane.f32.xlu0 %v54
    %v56 = vpop.xlane.xlu0 %55
    %v57 = vsel %vm53, %v13, 0.0
    %58 = vadd.xlane.f32.xlu0 %v57
    %v59 = vpop.xlane.xlu0 %58
    %v60 = vrcp.pop 16.0
    %v61 = vmul.f32 16.0, %v60
    %v62 = vsub.f32 1.0, %v61
    %v63 = vmul.f32 %v60, %v62
    %v64 = vadd.f32 %v60, %v63
    %vm65 = vweird.f32 %v60
    %v66 = vsel %vm65, %v60, %v64
    %v67 = vmul.f32 %v56, %v66
    %v68 = vmul.f32 %v59, %v66
    %v69 = vsub.f32 %v12, %v67
    %v70 = vsub.f32 %v13, %v68
    %v71 = vmul.f32 %v69, %v69
    %v72 = vmul.f32 %v70, %v70
    %v73 = vsel %vm53, %v71, 0.0
    %74 = vadd.xlane.f32.xlu0 %v73
    %v75 = vpop.xlane.xlu0 %74
    %v76 = vsel %vm53, %v72, 0.0
    %77 = vadd.xlane.f32.xlu0 %v76
    %v78 = vpop.xlane.xlu0 %77
    %v79 = vmul.f32 %v75, %v66
    %v80 = vmul.f32 %v78, %v66
    %v81 = vadd.f32 %v79, 1e-05
    %v82 = vadd.f32 %v80, 1e-05
    %v83 = vrsqrt.pop %v81
    %v84 = vmul.f32 %v83, %v81
    %v85 = vmul.f32 %v84, %v83
    %v86 = vmul.f32 0.5, %v85
    %v87 = vsub.f32 1.5, %v86
    %v88 = vmul.f32 %v83, %v87
    %vm89 = vweird.f32 %v81
    %vm90 = vweird.f32 %v83
    %vm91 = vmor %vm89, %vm90
    %v92 = vsel %vm91, %v83, %v88
    %v93 = vrsqrt.pop %v82
    %v94 = vmul.f32 %v93, %v82
    %v95 = vmul.f32 %v94, %v93
    %v96 = vmul.f32 0.5, %v95
    %v97 = vsub.f32 1.5, %v96
    %v98 = vmul.f32 %v93, %v97
    %vm99 = vweird.f32 %v82
    %vm100 = vweird.f32 %v93
    %vm101 = vmor %vm99, %vm100
    %v102 = vsel %vm101, %v93, %v98
    %v103 = vmul.f32 %v69, %v92
    %v104 = vmul.f32 %v70, %v102
    %v105 = vperm.slane %v14, 0
    %v106 = vmul.f32 %v103, %v105
    %v107 = vmul.f32 %v104, %v105
    %v108 = vperm.slane %v15, 0
    %v109 = vadd.f32 %v106, %v108
    %v110 = vadd.f32 %v107, %v108
    %v112 = vsel %vm53, %v47, 0
    %v115 = vsel %vm53, %v48, 0
    %v118 = vsel %vm53, %v49, 0
    %v121 = vsel %vm53, %v50, 0
    %123 = vmatpush.msra.mxu0 0.0
    %124 = vmatpush.msra.mxu0 0.0
    %125 = vmatpush.msra.mxu0 0.0
    %126 = vmatpush.msra.mxu0 0.0
    %127 = vmatpush.msra.mxu0 0.0
    %128 = vmatpush.msra.mxu0 0.0
    %129 = vmatpush.msra.mxu0 0.0
    %130 = vmatpush.msra.mxu0 0.0
    %131 = vmatpush.msra.mxu0 0.0
    %132 = vmatpush.msra.mxu0 0.0
    %133 = vmatpush.msra.mxu0 0.0
    %134 = vmatpush.msra.mxu0 0.0
    %135 = vmatpush.msra.mxu0 0.0
    %136 = vmatpush.msra.mxu0 0.0
    %v137 = vand.u32 %v110, 4294901760
    %138 = vmatpush.msra.mxu0 %v137
    %v139 = vand.u32 %v109, 4294901760
    %140 = vmatpush.msra.mxu0 %v139
    %v141 = vand.u32 %v112, 4294901760
    %v142 = vsub.f32 %v112, %v141
    %v143 = vand.u32 %v142, 4294901760
    %v144 = vsub.f32 %v142, %v143
    %v145 = vand.u32 %v144, 4294901760
    %146 = vmatmul.f32.gmra.mxu0 %v145
    %v147 = vpop.f32.mrf.mxu0
    %v148 = vadd.f32 0.0, %v147
    %v149 = vand.u32 %v115, 4294901760
    %v150 = vsub.f32 %v115, %v149
    %v151 = vand.u32 %v150, 4294901760
    %v152 = vsub.f32 %v150, %v151
    %v153 = vand.u32 %v152, 4294901760
    %154 = vmatmul.f32.gmra.mxu0 %v153
    %v155 = vpop.f32.mrf.mxu0
    %v156 = vadd.f32 0.0, %v155
    %v157 = vand.u32 %v118, 4294901760
    %v158 = vsub.f32 %v118, %v157
    %v159 = vand.u32 %v158, 4294901760
    %v160 = vsub.f32 %v158, %v159
    %v161 = vand.u32 %v160, 4294901760
    %162 = vmatmul.f32.gmra.mxu0 %v161
    %v163 = vpop.f32.mrf.mxu0
    %v164 = vadd.f32 0.0, %v163
    %v165 = vand.u32 %v121, 4294901760
    %v166 = vsub.f32 %v121, %v165
    %v167 = vand.u32 %v166, 4294901760
    %v168 = vsub.f32 %v166, %v167
    %v169 = vand.u32 %v168, 4294901760
    %170 = vmatmul.f32.gmra.mxu0 %v169
    %v171 = vpop.f32.mrf.mxu0
    %v172 = vadd.f32 0.0, %v171
    %173 = vdwg.mxu0
    %174 = vmatpush.msra.mxu0 0.0
    %175 = vmatpush.msra.mxu0 0.0
    %176 = vmatpush.msra.mxu0 0.0
    %177 = vmatpush.msra.mxu0 0.0
    %178 = vmatpush.msra.mxu0 0.0
    %179 = vmatpush.msra.mxu0 0.0
    %180 = vmatpush.msra.mxu0 0.0
    %181 = vmatpush.msra.mxu0 0.0
    %182 = vmatpush.msra.mxu0 0.0
    %183 = vmatpush.msra.mxu0 0.0
    %184 = vmatpush.msra.mxu0 0.0
    %185 = vmatpush.msra.mxu0 0.0
    %186 = vmatpush.msra.mxu0 0.0
    %187 = vmatpush.msra.mxu0 0.0
    %v188 = vand.u32 %v110, 4294901760
    %v189 = vsub.f32 %v110, %v188
    %v190 = vand.u32 %v189, 4294901760
    %v191 = vsub.f32 %v189, %v190
    %v192 = vand.u32 %v191, 4294901760
    %193 = vmatpush.msra.mxu0 %v192
    %v194 = vand.u32 %v109, 4294901760
    %v195 = vsub.f32 %v109, %v194
    %v196 = vand.u32 %v195, 4294901760
    %v197 = vsub.f32 %v195, %v196
    %v198 = vand.u32 %v197, 4294901760
    %199 = vmatpush.msra.mxu0 %v198
    %v200 = vand.u32 %v112, 4294901760
    %201 = vmatmul.f32.gmra.mxu0 %v200
    %v202 = vpop.f32.mrf.mxu0
    %v203 = vadd.f32 %v148, %v202
    %v204 = vand.u32 %v115, 4294901760
    %205 = vmatmul.f32.gmra.mxu0 %v204
    %v206 = vpop.f32.mrf.mxu0
    %v207 = vadd.f32 %v156, %v206
    %v208 = vand.u32 %v118, 4294901760
    %209 = vmatmul.f32.gmra.mxu0 %v208
    %v210 = vpop.f32.mrf.mxu0
    %v211 = vadd.f32 %v164, %v210
    %v212 = vand.u32 %v121, 4294901760
    %213 = vmatmul.f32.gmra.mxu0 %v212
    %v214 = vpop.f32.mrf.mxu0
    %v215 = vadd.f32 %v172, %v214
    %216 = vdwg.mxu0
    %217 = vmatpush.msra.mxu0 0.0
    %218 = vmatpush.msra.mxu0 0.0
    %219 = vmatpush.msra.mxu0 0.0
    %220 = vmatpush.msra.mxu0 0.0
    %221 = vmatpush.msra.mxu0 0.0
    %222 = vmatpush.msra.mxu0 0.0
    %223 = vmatpush.msra.mxu0 0.0
    %224 = vmatpush.msra.mxu0 0.0
    %225 = vmatpush.msra.mxu0 0.0
    %226 = vmatpush.msra.mxu0 0.0
    %227 = vmatpush.msra.mxu0 0.0
    %228 = vmatpush.msra.mxu0 0.0
    %229 = vmatpush.msra.mxu0 0.0
    %230 = vmatpush.msra.mxu0 0.0
    %v231 = vand.u32 %v110, 4294901760
    %v232 = vsub.f32 %v110, %v231
    %233 = vmatpush.msra.mxu0 %v232
    %v234 = vand.u32 %v109, 4294901760
    %v235 = vsub.f32 %v109, %v234
    %236 = vmatpush.msra.mxu0 %v235
    %v237 = vand.u32 %v112, 4294901760
    %v238 = vsub.f32 %v112, %v237
    %239 = vmatmul.f32.gmra.mxu0 %v238
    %v240 = vpop.f32.mrf.mxu0
    %v241 = vadd.f32 %v203, %v240
    %v242 = vand.u32 %v115, 4294901760
    %v243 = vsub.f32 %v115, %v242
    %244 = vmatmul.f32.gmra.mxu0 %v243
    %v245 = vpop.f32.mrf.mxu0
    %v246 = vadd.f32 %v207, %v245
    %v247 = vand.u32 %v118, 4294901760
    %v248 = vsub.f32 %v118, %v247
    %249 = vmatmul.f32.gmra.mxu0 %v248
    %v250 = vpop.f32.mrf.mxu0
    %v251 = vadd.f32 %v211, %v250
    %v252 = vand.u32 %v121, 4294901760
    %v253 = vsub.f32 %v121, %v252
    %254 = vmatmul.f32.gmra.mxu0 %v253
    %v255 = vpop.f32.mrf.mxu0
    %v256 = vadd.f32 %v215, %v255
    %257 = vdwg.mxu0
    %258 = vmatpush.msra.mxu0 0.0
    %259 = vmatpush.msra.mxu0 0.0
    %260 = vmatpush.msra.mxu0 0.0
    %261 = vmatpush.msra.mxu0 0.0
    %262 = vmatpush.msra.mxu0 0.0
    %263 = vmatpush.msra.mxu0 0.0
    %264 = vmatpush.msra.mxu0 0.0
    %265 = vmatpush.msra.mxu0 0.0
    %266 = vmatpush.msra.mxu0 0.0
    %267 = vmatpush.msra.mxu0 0.0
    %268 = vmatpush.msra.mxu0 0.0
    %269 = vmatpush.msra.mxu0 0.0
    %270 = vmatpush.msra.mxu0 0.0
    %271 = vmatpush.msra.mxu0 0.0
    %v272 = vand.u32 %v110, 4294901760
    %273 = vmatpush.msra.mxu0 %v272
    %v274 = vand.u32 %v109, 4294901760
    %275 = vmatpush.msra.mxu0 %v274
    %v276 = vand.u32 %v112, 4294901760
    %v277 = vsub.f32 %v112, %v276
    %v278 = vand.u32 %v277, 4294901760
    %279 = vmatmul.f32.gmra.mxu0 %v278
    %v280 = vpop.f32.mrf.mxu0
    %v281 = vadd.f32 %v241, %v280
    %v282 = vand.u32 %v115, 4294901760
    %v283 = vsub.f32 %v115, %v282
    %v284 = vand.u32 %v283, 4294901760
    %285 = vmatmul.f32.gmra.mxu0 %v284
    %v286 = vpop.f32.mrf.mxu0
    %v287 = vadd.f32 %v246, %v286
    %v288 = vand.u32 %v118, 4294901760
    %v289 = vsub.f32 %v118, %v288
    %v290 = vand.u32 %v289, 4294901760
    %291 = vmatmul.f32.gmra.mxu0 %v290
    %v292 = vpop.f32.mrf.mxu0
    %v293 = vadd.f32 %v251, %v292
    %v294 = vand.u32 %v121, 4294901760
    %v295 = vsub.f32 %v121, %v294
    %v296 = vand.u32 %v295, 4294901760
    %297 = vmatmul.f32.gmra.mxu0 %v296
    %v298 = vpop.f32.mrf.mxu0
    %v299 = vadd.f32 %v256, %v298
    %300 = vdwg.mxu0
    %301 = vmatpush.msra.mxu0 0.0
    %302 = vmatpush.msra.mxu0 0.0
    %303 = vmatpush.msra.mxu0 0.0
    %304 = vmatpush.msra.mxu0 0.0
    %305 = vmatpush.msra.mxu0 0.0
    %306 = vmatpush.msra.mxu0 0.0
    %307 = vmatpush.msra.mxu0 0.0
    %308 = vmatpush.msra.mxu0 0.0
    %309 = vmatpush.msra.mxu0 0.0
    %310 = vmatpush.msra.mxu0 0.0
    %311 = vmatpush.msra.mxu0 0.0
    %312 = vmatpush.msra.mxu0 0.0
    %313 = vmatpush.msra.mxu0 0.0
    %314 = vmatpush.msra.mxu0 0.0
    %v315 = vand.u32 %v110, 4294901760
    %v316 = vsub.f32 %v110, %v315
    %v317 = vand.u32 %v316, 4294901760
    %318 = vmatpush.msra.mxu0 %v317
    %v319 = vand.u32 %v109, 4294901760
    %v320 = vsub.f32 %v109, %v319
    %v321 = vand.u32 %v320, 4294901760
    %322 = vmatpush.msra.mxu0 %v321
    %v323 = vand.u32 %v112, 4294901760
    %324 = vmatmul.f32.gmra.mxu0 %v323
    %v325 = vpop.f32.mrf.mxu0
    %v326 = vadd.f32 %v281, %v325
    %v327 = vand.u32 %v115, 4294901760
    %328 = vmatmul.f32.gmra.mxu0 %v327
    %v329 = vpop.f32.mrf.mxu0
    %v330 = vadd.f32 %v287, %v329
    %v331 = vand.u32 %v118, 4294901760
    %332 = vmatmul.f32.gmra.mxu0 %v331
    %v333 = vpop.f32.mrf.mxu0
    %v334 = vadd.f32 %v293, %v333
    %v335 = vand.u32 %v121, 4294901760
    %336 = vmatmul.f32.gmra.mxu0 %v335
    %v337 = vpop.f32.mrf.mxu0
    %v338 = vadd.f32 %v299, %v337
    %339 = vdwg.mxu0
    %340 = vmatpush.msra.mxu0 0.0
    %341 = vmatpush.msra.mxu0 0.0
    %342 = vmatpush.msra.mxu0 0.0
    %343 = vmatpush.msra.mxu0 0.0
    %344 = vmatpush.msra.mxu0 0.0
    %345 = vmatpush.msra.mxu0 0.0
    %346 = vmatpush.msra.mxu0 0.0
    %347 = vmatpush.msra.mxu0 0.0
    %348 = vmatpush.msra.mxu0 0.0
    %349 = vmatpush.msra.mxu0 0.0
    %350 = vmatpush.msra.mxu0 0.0
    %351 = vmatpush.msra.mxu0 0.0
    %352 = vmatpush.msra.mxu0 0.0
    %353 = vmatpush.msra.mxu0 0.0
    %v354 = vand.u32 %v110, 4294901760
    %355 = vmatpush.msra.mxu0 %v354
    %v356 = vand.u32 %v109, 4294901760
    %357 = vmatpush.msra.mxu0 %v356
    %v358 = vand.u32 %v112, 4294901760
    %359 = vmatmul.f32.gmra.mxu0 %v358
    %v360 = vpop.f32.mrf.mxu0
    %v361 = vadd.f32 %v326, %v360
    %v362 = vand.u32 %v115, 4294901760
    %363 = vmatmul.f32.gmra.mxu0 %v362
    %v364 = vpop.f32.mrf.mxu0
    %v365 = vadd.f32 %v330, %v364
    %v366 = vand.u32 %v118, 4294901760
    %367 = vmatmul.f32.gmra.mxu0 %v366
    %v368 = vpop.f32.mrf.mxu0
    %v369 = vadd.f32 %v334, %v368
    %v370 = vand.u32 %v121, 4294901760
    %371 = vmatmul.f32.gmra.mxu0 %v370
    %v372 = vpop.f32.mrf.mxu0
    %v373 = vadd.f32 %v338, %v372
    %374 = vdwg.mxu0
    %v376 = vsel %vm53, %v361, 0
    %v379 = vsel %vm53, %v365, 0
    %v382 = vsel %vm53, %v369, 0
    %v385 = vsel %vm53, %v373, 0
    %387 = vmatpush.msra.mxu0 0.0
    %388 = vmatpush.msra.mxu0 0.0
    %389 = vmatpush.msra.mxu0 0.0
    %390 = vmatpush.msra.mxu0 0.0
    %391 = vmatpush.msra.mxu0 0.0
    %392 = vmatpush.msra.mxu0 0.0
    %393 = vmatpush.msra.mxu0 0.0
    %394 = vmatpush.msra.mxu0 0.0
    %395 = vmatpush.msra.mxu0 0.0
    %396 = vmatpush.msra.mxu0 0.0
    %397 = vmatpush.msra.mxu0 0.0
    %398 = vmatpush.msra.mxu0 0.0
    %399 = vmatpush.msra.mxu0 0.0
    %400 = vmatpush.msra.mxu0 0.0
    %v401 = vand.u32 %v24, 4294901760
    %402 = vmatpush.msra.mxu0 %v401
    %v403 = vand.u32 %v23, 4294901760
    %404 = vmatpush.msra.mxu0 %v403
    %v405 = vand.u32 %v376, 4294901760
    %v406 = vsub.f32 %v376, %v405
    %v407 = vand.u32 %v406, 4294901760
    %v408 = vsub.f32 %v406, %v407
    %v409 = vand.u32 %v408, 4294901760
    %410 = vmatmul.f32.gmra.mxu0 %v409
    %v411 = vpop.f32.mrf.mxu0
    %v412 = vadd.f32 0.0, %v411
    %v413 = vand.u32 %v379, 4294901760
    %v414 = vsub.f32 %v379, %v413
    %v415 = vand.u32 %v414, 4294901760
    %v416 = vsub.f32 %v414, %v415
    %v417 = vand.u32 %v416, 4294901760
    %418 = vmatmul.f32.gmra.mxu0 %v417
    %v419 = vpop.f32.mrf.mxu0
    %v420 = vadd.f32 0.0, %v419
    %v421 = vand.u32 %v382, 4294901760
    %v422 = vsub.f32 %v382, %v421
    %v423 = vand.u32 %v422, 4294901760
    %v424 = vsub.f32 %v422, %v423
    %v425 = vand.u32 %v424, 4294901760
    %426 = vmatmul.f32.gmra.mxu0 %v425
    %v427 = vpop.f32.mrf.mxu0
    %v428 = vadd.f32 0.0, %v427
    %v429 = vand.u32 %v385, 4294901760
    %v430 = vsub.f32 %v385, %v429
    %v431 = vand.u32 %v430, 4294901760
    %v432 = vsub.f32 %v430, %v431
    %v433 = vand.u32 %v432, 4294901760
    %434 = vmatmul.f32.gmra.mxu0 %v433
    %v435 = vpop.f32.mrf.mxu0
    %v436 = vadd.f32 0.0, %v435
    %437 = vdwg.mxu0
    %438 = vmatpush.msra.mxu0 0.0
    %439 = vmatpush.msra.mxu0 0.0
    %440 = vmatpush.msra.mxu0 0.0
    %441 = vmatpush.msra.mxu0 0.0
    %442 = vmatpush.msra.mxu0 0.0
    %443 = vmatpush.msra.mxu0 0.0
    %444 = vmatpush.msra.mxu0 0.0
    %445 = vmatpush.msra.mxu0 0.0
    %446 = vmatpush.msra.mxu0 0.0
    %447 = vmatpush.msra.mxu0 0.0
    %448 = vmatpush.msra.mxu0 0.0
    %449 = vmatpush.msra.mxu0 0.0
    %450 = vmatpush.msra.mxu0 0.0
    %451 = vmatpush.msra.mxu0 0.0
    %v452 = vand.u32 %v24, 4294901760
    %v453 = vsub.f32 %v24, %v452
    %v454 = vand.u32 %v453, 4294901760
    %v455 = vsub.f32 %v453, %v454
    %v456 = vand.u32 %v455, 4294901760
    %457 = vmatpush.msra.mxu0 %v456
    %v458 = vand.u32 %v23, 4294901760
    %v459 = vsub.f32 %v23, %v458
    %v460 = vand.u32 %v459, 4294901760
    %v461 = vsub.f32 %v459, %v460
    %v462 = vand.u32 %v461, 4294901760
    %463 = vmatpush.msra.mxu0 %v462
    %v464 = vand.u32 %v376, 4294901760
    %465 = vmatmul.f32.gmra.mxu0 %v464
    %v466 = vpop.f32.mrf.mxu0
    %v467 = vadd.f32 %v412, %v466
    %v468 = vand.u32 %v379, 4294901760
    %469 = vmatmul.f32.gmra.mxu0 %v468
    %v470 = vpop.f32.mrf.mxu0
    %v471 = vadd.f32 %v420, %v470
    %v472 = vand.u32 %v382, 4294901760
    %473 = vmatmul.f32.gmra.mxu0 %v472
    %v474 = vpop.f32.mrf.mxu0
    %v475 = vadd.f32 %v428, %v474
    %v476 = vand.u32 %v385, 4294901760
    %477 = vmatmul.f32.gmra.mxu0 %v476
    %v478 = vpop.f32.mrf.mxu0
    %v479 = vadd.f32 %v436, %v478
    %480 = vdwg.mxu0
    %481 = vmatpush.msra.mxu0 0.0
    %482 = vmatpush.msra.mxu0 0.0
    %483 = vmatpush.msra.mxu0 0.0
    %484 = vmatpush.msra.mxu0 0.0
    %485 = vmatpush.msra.mxu0 0.0
    %486 = vmatpush.msra.mxu0 0.0
    %487 = vmatpush.msra.mxu0 0.0
    %488 = vmatpush.msra.mxu0 0.0
    %489 = vmatpush.msra.mxu0 0.0
    %490 = vmatpush.msra.mxu0 0.0
    %491 = vmatpush.msra.mxu0 0.0
    %492 = vmatpush.msra.mxu0 0.0
    %493 = vmatpush.msra.mxu0 0.0
    %494 = vmatpush.msra.mxu0 0.0
    %v495 = vand.u32 %v24, 4294901760
    %v496 = vsub.f32 %v24, %v495
    %497 = vmatpush.msra.mxu0 %v496
    %v498 = vand.u32 %v23, 4294901760
    %v499 = vsub.f32 %v23, %v498
    %500 = vmatpush.msra.mxu0 %v499
    %v501 = vand.u32 %v376, 4294901760
    %v502 = vsub.f32 %v376, %v501
    %503 = vmatmul.f32.gmra.mxu0 %v502
    %v504 = vpop.f32.mrf.mxu0
    %v505 = vadd.f32 %v467, %v504
    %v506 = vand.u32 %v379, 4294901760
    %v507 = vsub.f32 %v379, %v506
    %508 = vmatmul.f32.gmra.mxu0 %v507
    %v509 = vpop.f32.mrf.mxu0
    %v510 = vadd.f32 %v471, %v509
    %v511 = vand.u32 %v382, 4294901760
    %v512 = vsub.f32 %v382, %v511
    %513 = vmatmul.f32.gmra.mxu0 %v512
    %v514 = vpop.f32.mrf.mxu0
    %v515 = vadd.f32 %v475, %v514
    %v516 = vand.u32 %v385, 4294901760
    %v517 = vsub.f32 %v385, %v516
    %518 = vmatmul.f32.gmra.mxu0 %v517
    %v519 = vpop.f32.mrf.mxu0
    %v520 = vadd.f32 %v479, %v519
    %521 = vdwg.mxu0
    %522 = vmatpush.msra.mxu0 0.0
    %523 = vmatpush.msra.mxu0 0.0
    %524 = vmatpush.msra.mxu0 0.0
    %525 = vmatpush.msra.mxu0 0.0
    %526 = vmatpush.msra.mxu0 0.0
    %527 = vmatpush.msra.mxu0 0.0
    %528 = vmatpush.msra.mxu0 0.0
    %529 = vmatpush.msra.mxu0 0.0
    %530 = vmatpush.msra.mxu0 0.0
    %531 = vmatpush.msra.mxu0 0.0
    %532 = vmatpush.msra.mxu0 0.0
    %533 = vmatpush.msra.mxu0 0.0
    %534 = vmatpush.msra.mxu0 0.0
    %535 = vmatpush.msra.mxu0 0.0
    %v536 = vand.u32 %v24, 4294901760
    %537 = vmatpush.msra.mxu0 %v536
    %v538 = vand.u32 %v23, 4294901760
    %539 = vmatpush.msra.mxu0 %v538
    %v540 = vand.u32 %v376, 4294901760
    %v541 = vsub.f32 %v376, %v540
    %v542 = vand.u32 %v541, 4294901760
    %543 = vmatmul.f32.gmra.mxu0 %v542
    %v544 = vpop.f32.mrf.mxu0
    %v545 = vadd.f32 %v505, %v544
    %v546 = vand.u32 %v379, 4294901760
    %v547 = vsub.f32 %v379, %v546
    %v548 = vand.u32 %v547, 4294901760
    %549 = vmatmul.f32.gmra.mxu0 %v548
    %v550 = vpop.f32.mrf.mxu0
    %v551 = vadd.f32 %v510, %v550
    %v552 = vand.u32 %v382, 4294901760
    %v553 = vsub.f32 %v382, %v552
    %v554 = vand.u32 %v553, 4294901760
    %555 = vmatmul.f32.gmra.mxu0 %v554
    %v556 = vpop.f32.mrf.mxu0
    %v557 = vadd.f32 %v515, %v556
    %v558 = vand.u32 %v385, 4294901760
    %v559 = vsub.f32 %v385, %v558
    %v560 = vand.u32 %v559, 4294901760
    %561 = vmatmul.f32.gmra.mxu0 %v560
    %v562 = vpop.f32.mrf.mxu0
    %v563 = vadd.f32 %v520, %v562
    %564 = vdwg.mxu0
    %565 = vmatpush.msra.mxu0 0.0
    %566 = vmatpush.msra.mxu0 0.0
    %567 = vmatpush.msra.mxu0 0.0
    %568 = vmatpush.msra.mxu0 0.0
    %569 = vmatpush.msra.mxu0 0.0
    %570 = vmatpush.msra.mxu0 0.0
    %571 = vmatpush.msra.mxu0 0.0
    %572 = vmatpush.msra.mxu0 0.0
    %573 = vmatpush.msra.mxu0 0.0
    %574 = vmatpush.msra.mxu0 0.0
    %575 = vmatpush.msra.mxu0 0.0
    %576 = vmatpush.msra.mxu0 0.0
    %577 = vmatpush.msra.mxu0 0.0
    %578 = vmatpush.msra.mxu0 0.0
    %v579 = vand.u32 %v24, 4294901760
    %v580 = vsub.f32 %v24, %v579
    %v581 = vand.u32 %v580, 4294901760
    %582 = vmatpush.msra.mxu0 %v581
    %v583 = vand.u32 %v23, 4294901760
    %v584 = vsub.f32 %v23, %v583
    %v585 = vand.u32 %v584, 4294901760
    %586 = vmatpush.msra.mxu0 %v585
    %v587 = vand.u32 %v376, 4294901760
    %588 = vmatmul.f32.gmra.mxu0 %v587
    %v589 = vpop.f32.mrf.mxu0
    %v590 = vadd.f32 %v545, %v589
    %v591 = vand.u32 %v379, 4294901760
    %592 = vmatmul.f32.gmra.mxu0 %v591
    %v593 = vpop.f32.mrf.mxu0
    %v594 = vadd.f32 %v551, %v593
    %v595 = vand.u32 %v382, 4294901760
    %596 = vmatmul.f32.gmra.mxu0 %v595
    %v597 = vpop.f32.mrf.mxu0
    %v598 = vadd.f32 %v557, %v597
    %v599 = vand.u32 %v385, 4294901760
    %600 = vmatmul.f32.gmra.mxu0 %v599
    %v601 = vpop.f32.mrf.mxu0
    %v602 = vadd.f32 %v563, %v601
    %603 = vdwg.mxu0
    %604 = vmatpush.msra.mxu0 0.0
    %605 = vmatpush.msra.mxu0 0.0
    %606 = vmatpush.msra.mxu0 0.0
    %607 = vmatpush.msra.mxu0 0.0
    %608 = vmatpush.msra.mxu0 0.0
    %609 = vmatpush.msra.mxu0 0.0
    %610 = vmatpush.msra.mxu0 0.0
    %611 = vmatpush.msra.mxu0 0.0
    %612 = vmatpush.msra.mxu0 0.0
    %613 = vmatpush.msra.mxu0 0.0
    %614 = vmatpush.msra.mxu0 0.0
    %615 = vmatpush.msra.mxu0 0.0
    %616 = vmatpush.msra.mxu0 0.0
    %617 = vmatpush.msra.mxu0 0.0
    %v618 = vand.u32 %v24, 4294901760
    %619 = vmatpush.msra.mxu0 %v618
    %v620 = vand.u32 %v23, 4294901760
    %621 = vmatpush.msra.mxu0 %v620
    %v622 = vand.u32 %v376, 4294901760
    %623 = vmatmul.f32.gmra.mxu0 %v622
    %v624 = vpop.f32.mrf.mxu0
    %v625 = vadd.f32 %v590, %v624
    %v626 = vand.u32 %v379, 4294901760
    %627 = vmatmul.f32.gmra.mxu0 %v626
    %v628 = vpop.f32.mrf.mxu0
    %v629 = vadd.f32 %v594, %v628
    %v630 = vand.u32 %v382, 4294901760
    %631 = vmatmul.f32.gmra.mxu0 %v630
    %v632 = vpop.f32.mrf.mxu0
    %v633 = vadd.f32 %v598, %v632
    %v634 = vand.u32 %v385, 4294901760
    %635 = vmatmul.f32.gmra.mxu0 %v634
    %v636 = vpop.f32.mrf.mxu0
    %v637 = vadd.f32 %v602, %v636
    %638 = vdwg.mxu0
    %639 = vmatpush.msra.mxu0 0.0
    %640 = vmatpush.msra.mxu0 0.0
    %641 = vmatpush.msra.mxu0 0.0
    %642 = vmatpush.msra.mxu0 0.0
    %643 = vmatpush.msra.mxu0 0.0
    %644 = vmatpush.msra.mxu0 0.0
    %645 = vmatpush.msra.mxu0 0.0
    %646 = vmatpush.msra.mxu0 0.0
    %647 = vmatpush.msra.mxu0 0.0
    %648 = vmatpush.msra.mxu0 0.0
    %649 = vmatpush.msra.mxu0 0.0
    %650 = vmatpush.msra.mxu0 0.0
    %651 = vmatpush.msra.mxu0 0.0
    %652 = vmatpush.msra.mxu0 0.0
    %v653 = vand.u32 %v26, 4294901760
    %654 = vmatpush.msra.mxu0 %v653
    %v655 = vand.u32 %v25, 4294901760
    %656 = vmatpush.msra.mxu0 %v655
    %v657 = vand.u32 %v376, 4294901760
    %v658 = vsub.f32 %v376, %v657
    %v659 = vand.u32 %v658, 4294901760
    %v660 = vsub.f32 %v658, %v659
    %v661 = vand.u32 %v660, 4294901760
    %662 = vmatmul.f32.gmra.mxu0 %v661
    %v663 = vpop.f32.mrf.mxu0
    %v664 = vadd.f32 0.0, %v663
    %v665 = vand.u32 %v379, 4294901760
    %v666 = vsub.f32 %v379, %v665
    %v667 = vand.u32 %v666, 4294901760
    %v668 = vsub.f32 %v666, %v667
    %v669 = vand.u32 %v668, 4294901760
    %670 = vmatmul.f32.gmra.mxu0 %v669
    %v671 = vpop.f32.mrf.mxu0
    %v672 = vadd.f32 0.0, %v671
    %v673 = vand.u32 %v382, 4294901760
    %v674 = vsub.f32 %v382, %v673
    %v675 = vand.u32 %v674, 4294901760
    %v676 = vsub.f32 %v674, %v675
    %v677 = vand.u32 %v676, 4294901760
    %678 = vmatmul.f32.gmra.mxu0 %v677
    %v679 = vpop.f32.mrf.mxu0
    %v680 = vadd.f32 0.0, %v679
    %v681 = vand.u32 %v385, 4294901760
    %v682 = vsub.f32 %v385, %v681
    %v683 = vand.u32 %v682, 4294901760
    %v684 = vsub.f32 %v682, %v683
    %v685 = vand.u32 %v684, 4294901760
    %686 = vmatmul.f32.gmra.mxu0 %v685
    %v687 = vpop.f32.mrf.mxu0
    %v688 = vadd.f32 0.0, %v687
    %689 = vdwg.mxu0
    %690 = vmatpush.msra.mxu0 0.0
    %691 = vmatpush.msra.mxu0 0.0
    %692 = vmatpush.msra.mxu0 0.0
    %693 = vmatpush.msra.mxu0 0.0
    %694 = vmatpush.msra.mxu0 0.0
    %695 = vmatpush.msra.mxu0 0.0
    %696 = vmatpush.msra.mxu0 0.0
    %697 = vmatpush.msra.mxu0 0.0
    %698 = vmatpush.msra.mxu0 0.0
    %699 = vmatpush.msra.mxu0 0.0
    %700 = vmatpush.msra.mxu0 0.0
    %701 = vmatpush.msra.mxu0 0.0
    %702 = vmatpush.msra.mxu0 0.0
    %703 = vmatpush.msra.mxu0 0.0
    %v704 = vand.u32 %v26, 4294901760
    %v705 = vsub.f32 %v26, %v704
    %v706 = vand.u32 %v705, 4294901760
    %v707 = vsub.f32 %v705, %v706
    %v708 = vand.u32 %v707, 4294901760
    %709 = vmatpush.msra.mxu0 %v708
    %v710 = vand.u32 %v25, 4294901760
    %v711 = vsub.f32 %v25, %v710
    %v712 = vand.u32 %v711, 4294901760
    %v713 = vsub.f32 %v711, %v712
    %v714 = vand.u32 %v713, 4294901760
    %715 = vmatpush.msra.mxu0 %v714
    %v716 = vand.u32 %v376, 4294901760
    %717 = vmatmul.f32.gmra.mxu0 %v716
    %v718 = vpop.f32.mrf.mxu0
    %v719 = vadd.f32 %v664, %v718
    %v720 = vand.u32 %v379, 4294901760
    %721 = vmatmul.f32.gmra.mxu0 %v720
    %v722 = vpop.f32.mrf.mxu0
    %v723 = vadd.f32 %v672, %v722
    %v724 = vand.u32 %v382, 4294901760
    %725 = vmatmul.f32.gmra.mxu0 %v724
    %v726 = vpop.f32.mrf.mxu0
    %v727 = vadd.f32 %v680, %v726
    %v728 = vand.u32 %v385, 4294901760
    %729 = vmatmul.f32.gmra.mxu0 %v728
    %v730 = vpop.f32.mrf.mxu0
    %v731 = vadd.f32 %v688, %v730
    %732 = vdwg.mxu0
    %733 = vmatpush.msra.mxu0 0.0
    %734 = vmatpush.msra.mxu0 0.0
    %735 = vmatpush.msra.mxu0 0.0
    %736 = vmatpush.msra.mxu0 0.0
    %737 = vmatpush.msra.mxu0 0.0
    %738 = vmatpush.msra.mxu0 0.0
    %739 = vmatpush.msra.mxu0 0.0
    %740 = vmatpush.msra.mxu0 0.0
    %741 = vmatpush.msra.mxu0 0.0
    %742 = vmatpush.msra.mxu0 0.0
    %743 = vmatpush.msra.mxu0 0.0
    %744 = vmatpush.msra.mxu0 0.0
    %745 = vmatpush.msra.mxu0 0.0
    %746 = vmatpush.msra.mxu0 0.0
    %v747 = vand.u32 %v26, 4294901760
    %v748 = vsub.f32 %v26, %v747
    %749 = vmatpush.msra.mxu0 %v748
    %v750 = vand.u32 %v25, 4294901760
    %v751 = vsub.f32 %v25, %v750
    %752 = vmatpush.msra.mxu0 %v751
    %v753 = vand.u32 %v376, 4294901760
    %v754 = vsub.f32 %v376, %v753
    %755 = vmatmul.f32.gmra.mxu0 %v754
    %v756 = vpop.f32.mrf.mxu0
    %v757 = vadd.f32 %v719, %v756
    %v758 = vand.u32 %v379, 4294901760
    %v759 = vsub.f32 %v379, %v758
    %760 = vmatmul.f32.gmra.mxu0 %v759
    %v761 = vpop.f32.mrf.mxu0
    %v762 = vadd.f32 %v723, %v761
    %v763 = vand.u32 %v382, 4294901760
    %v764 = vsub.f32 %v382, %v763
    %765 = vmatmul.f32.gmra.mxu0 %v764
    %v766 = vpop.f32.mrf.mxu0
    %v767 = vadd.f32 %v727, %v766
    %v768 = vand.u32 %v385, 4294901760
    %v769 = vsub.f32 %v385, %v768
    %770 = vmatmul.f32.gmra.mxu0 %v769
    %v771 = vpop.f32.mrf.mxu0
    %v772 = vadd.f32 %v731, %v771
    %773 = vdwg.mxu0
    %774 = vmatpush.msra.mxu0 0.0
    %775 = vmatpush.msra.mxu0 0.0
    %776 = vmatpush.msra.mxu0 0.0
    %777 = vmatpush.msra.mxu0 0.0
    %778 = vmatpush.msra.mxu0 0.0
    %779 = vmatpush.msra.mxu0 0.0
    %780 = vmatpush.msra.mxu0 0.0
    %781 = vmatpush.msra.mxu0 0.0
    %782 = vmatpush.msra.mxu0 0.0
    %783 = vmatpush.msra.mxu0 0.0
    %784 = vmatpush.msra.mxu0 0.0
    %785 = vmatpush.msra.mxu0 0.0
    %786 = vmatpush.msra.mxu0 0.0
    %787 = vmatpush.msra.mxu0 0.0
    %v788 = vand.u32 %v26, 4294901760
    %789 = vmatpush.msra.mxu0 %v788
    %v790 = vand.u32 %v25, 4294901760
    %791 = vmatpush.msra.mxu0 %v790
    %v792 = vand.u32 %v376, 4294901760
    %v793 = vsub.f32 %v376, %v792
    %v794 = vand.u32 %v793, 4294901760
    %795 = vmatmul.f32.gmra.mxu0 %v794
    %v796 = vpop.f32.mrf.mxu0
    %v797 = vadd.f32 %v757, %v796
    %v798 = vand.u32 %v379, 4294901760
    %v799 = vsub.f32 %v379, %v798
    %v800 = vand.u32 %v799, 4294901760
    %801 = vmatmul.f32.gmra.mxu0 %v800
    %v802 = vpop.f32.mrf.mxu0
    %v803 = vadd.f32 %v762, %v802
    %v804 = vand.u32 %v382, 4294901760
    %v805 = vsub.f32 %v382, %v804
    %v806 = vand.u32 %v805, 4294901760
    %807 = vmatmul.f32.gmra.mxu0 %v806
    %v808 = vpop.f32.mrf.mxu0
    %v809 = vadd.f32 %v767, %v808
    %v810 = vand.u32 %v385, 4294901760
    %v811 = vsub.f32 %v385, %v810
    %v812 = vand.u32 %v811, 4294901760
    %813 = vmatmul.f32.gmra.mxu0 %v812
    %v814 = vpop.f32.mrf.mxu0
    %v815 = vadd.f32 %v772, %v814
    %816 = vdwg.mxu0
    %817 = vmatpush.msra.mxu0 0.0
    %818 = vmatpush.msra.mxu0 0.0
    %819 = vmatpush.msra.mxu0 0.0
    %820 = vmatpush.msra.mxu0 0.0
    %821 = vmatpush.msra.mxu0 0.0
    %822 = vmatpush.msra.mxu0 0.0
    %823 = vmatpush.msra.mxu0 0.0
    %824 = vmatpush.msra.mxu0 0.0
    %825 = vmatpush.msra.mxu0 0.0
    %826 = vmatpush.msra.mxu0 0.0
    %827 = vmatpush.msra.mxu0 0.0
    %828 = vmatpush.msra.mxu0 0.0
    %829 = vmatpush.msra.mxu0 0.0
    %830 = vmatpush.msra.mxu0 0.0
    %v831 = vand.u32 %v26, 4294901760
    %v832 = vsub.f32 %v26, %v831
    %v833 = vand.u32 %v832, 4294901760
    %834 = vmatpush.msra.mxu0 %v833
    %v835 = vand.u32 %v25, 4294901760
    %v836 = vsub.f32 %v25, %v835
    %v837 = vand.u32 %v836, 4294901760
    %838 = vmatpush.msra.mxu0 %v837
    %v839 = vand.u32 %v376, 4294901760
    %840 = vmatmul.f32.gmra.mxu0 %v839
    %v841 = vpop.f32.mrf.mxu0
    %v842 = vadd.f32 %v797, %v841
    %v843 = vand.u32 %v379, 4294901760
    %844 = vmatmul.f32.gmra.mxu0 %v843
    %v845 = vpop.f32.mrf.mxu0
    %v846 = vadd.f32 %v803, %v845
    %v847 = vand.u32 %v382, 4294901760
    %848 = vmatmul.f32.gmra.mxu0 %v847
    %v849 = vpop.f32.mrf.mxu0
    %v850 = vadd.f32 %v809, %v849
    %v851 = vand.u32 %v385, 4294901760
    %852 = vmatmul.f32.gmra.mxu0 %v851
    %v853 = vpop.f32.mrf.mxu0
    %v854 = vadd.f32 %v815, %v853
    %855 = vdwg.mxu0
    %856 = vmatpush.msra.mxu0 0.0
    %857 = vmatpush.msra.mxu0 0.0
    %858 = vmatpush.msra.mxu0 0.0
    %859 = vmatpush.msra.mxu0 0.0
    %860 = vmatpush.msra.mxu0 0.0
    %861 = vmatpush.msra.mxu0 0.0
    %862 = vmatpush.msra.mxu0 0.0
    %863 = vmatpush.msra.mxu0 0.0
    %864 = vmatpush.msra.mxu0 0.0
    %865 = vmatpush.msra.mxu0 0.0
    %866 = vmatpush.msra.mxu0 0.0
    %867 = vmatpush.msra.mxu0 0.0
    %868 = vmatpush.msra.mxu0 0.0
    %869 = vmatpush.msra.mxu0 0.0
    %v870 = vand.u32 %v26, 4294901760
    %871 = vmatpush.msra.mxu0 %v870
    %v872 = vand.u32 %v25, 4294901760
    %873 = vmatpush.msra.mxu0 %v872
    %v874 = vand.u32 %v376, 4294901760
    %875 = vmatmul.f32.gmra.mxu0 %v874
    %v876 = vpop.f32.mrf.mxu0
    %v877 = vadd.f32 %v842, %v876
    %v878 = vand.u32 %v379, 4294901760
    %879 = vmatmul.f32.gmra.mxu0 %v878
    %v880 = vpop.f32.mrf.mxu0
    %v881 = vadd.f32 %v846, %v880
    %v882 = vand.u32 %v382, 4294901760
    %883 = vmatmul.f32.gmra.mxu0 %v882
    %v884 = vpop.f32.mrf.mxu0
    %v885 = vadd.f32 %v850, %v884
    %v886 = vand.u32 %v385, 4294901760
    %887 = vmatmul.f32.gmra.mxu0 %v886
    %v888 = vpop.f32.mrf.mxu0
    %v889 = vadd.f32 %v854, %v888
    %890 = vdwg.mxu0
    %v891 = vlaneseq
    %v892 = vshrl.u32 %v891, 7
    %v893 = vadd.s32 %v892, 8
    %v894 = vadd.s32 %v892, 16
    %v895 = vadd.s32 %v892, 24
    %v896 = vand.u32 %v892, 7
    %v897 = vand.u32 %v893, 7
    %v898 = vand.u32 %v894, 7
    %v899 = vand.u32 %v895, 7
    %v900 = vperm.slane %v27, 3
    %v901 = vmul.f32 %v900, %v625
    %v902 = vmul.f32 %v900, %v629
    %v903 = vmul.f32 %v900, %v633
    %v904 = vmul.f32 %v900, %v637
    %vm909 = vcmask 1040384
    %v910 = vrot.slane %v625, 7
    %v911 = vrot.slane %v629, 7
    %v912 = vsel %vm909, %v910, %v911
    %v913 = vrot.slane %v633, 7
    %v914 = vsel %vm909, %v911, %v913
    %v915 = vrot.slane %v637, 7
    %v916 = vsel %vm909, %v913, %v915
    %v921 = vsel %vm909, 0.0, %v910
    %vm922 = vcmp.ge.s32.totalorder %v896, 1
    %vm923 = vcmp.ge.s32.totalorder %v897, 1
    %vm924 = vcmp.ge.s32.totalorder %v898, 1
    %vm925 = vcmp.ge.s32.totalorder %v899, 1
    %v926 = vsel %vm922, %v921, 0.0
    %v927 = vsel %vm923, %v912, 0.0
    %v928 = vsel %vm924, %v914, 0.0
    %v929 = vsel %vm925, %v916, 0.0
    %v930 = vperm.slane %v27, 2
    %v931 = vmul.f32 %v930, %v926
    %v932 = vmul.f32 %v930, %v927
    %v933 = vmul.f32 %v930, %v928
    %v934 = vmul.f32 %v930, %v929
    %v935 = vadd.f32 %v901, %v931
    %v936 = vadd.f32 %v902, %v932
    %v937 = vadd.f32 %v903, %v933
    %v938 = vadd.f32 %v904, %v934
    %vm939 = vcmask 1041408
    %v940 = vrot.slane %v625, 6
    %v941 = vrot.slane %v629, 6
    %v942 = vsel %vm939, %v940, %v941
    %v943 = vrot.slane %v633, 6
    %v944 = vsel %vm939, %v941, %v943
    %v945 = vrot.slane %v637, 6
    %v946 = vsel %vm939, %v943, %v945
    %v951 = vsel %vm939, 0.0, %v940
    %vm952 = vcmp.ge.s32.totalorder %v896, 2
    %vm953 = vcmp.ge.s32.totalorder %v897, 2
    %vm954 = vcmp.ge.s32.totalorder %v898, 2
    %vm955 = vcmp.ge.s32.totalorder %v899, 2
    %v956 = vsel %vm952, %v951, 0.0
    %v957 = vsel %vm953, %v942, 0.0
    %v958 = vsel %vm954, %v944, 0.0
    %v959 = vsel %vm955, %v946, 0.0
    %v960 = vperm.slane %v27, 1
    %v961 = vmul.f32 %v960, %v956
    %v962 = vmul.f32 %v960, %v957
    %v963 = vmul.f32 %v960, %v958
    %v964 = vmul.f32 %v960, %v959
    %v965 = vadd.f32 %v935, %v961
    %v966 = vadd.f32 %v936, %v962
    %v967 = vadd.f32 %v937, %v963
    %v968 = vadd.f32 %v938, %v964
    %vm969 = vcmask 1042432
    %v970 = vrot.slane %v625, 5
    %v971 = vrot.slane %v629, 5
    %v972 = vsel %vm969, %v970, %v971
    %v973 = vrot.slane %v633, 5
    %v974 = vsel %vm969, %v971, %v973
    %v975 = vrot.slane %v637, 5
    %v976 = vsel %vm969, %v973, %v975
    %v981 = vsel %vm969, 0.0, %v970
    %vm982 = vcmp.ge.s32.totalorder %v896, 3
    %vm983 = vcmp.ge.s32.totalorder %v897, 3
    %vm984 = vcmp.ge.s32.totalorder %v898, 3
    %vm985 = vcmp.ge.s32.totalorder %v899, 3
    %v986 = vsel %vm982, %v981, 0.0
    %v987 = vsel %vm983, %v972, 0.0
    %v988 = vsel %vm984, %v974, 0.0
    %v989 = vsel %vm985, %v976, 0.0
    %v990 = vperm.slane %v27, 0
    %v991 = vmul.f32 %v990, %v986
    %v992 = vmul.f32 %v990, %v987
    %v993 = vmul.f32 %v990, %v988
    %v994 = vmul.f32 %v990, %v989
    %v995 = vadd.f32 %v965, %v991
    %v996 = vadd.f32 %v966, %v992
    %v997 = vadd.f32 %v967, %v993
    %v998 = vadd.f32 %v968, %v994
    %v999 = vperm.slane %v18, 0
    %v1000 = vadd.f32 %v995, %v999
    %v1001 = vadd.f32 %v996, %v999
    %v1002 = vadd.f32 %v997, %v999
    %v1003 = vadd.f32 %v998, %v999
    %v1004 = vsub.f32 0.0, %v1000
    %v1005 = vsub.f32 0.0, %v1001
    %v1006 = vsub.f32 0.0, %v1002
    %v1007 = vsub.f32 0.0, %v1003
    %v1008 = vmul.f32 %v1004, 1.442695
    %v1009 = vpow.pop %v1008
    %v1010 = vmul.f32 %v1005, 1.442695
    %v1011 = vpow.pop %v1010
    %v1012 = vmul.f32 %v1006, 1.442695
    %v1013 = vpow.pop %v1012
    %v1014 = vmul.f32 %v1007, 1.442695
    %v1015 = vpow.pop %v1014
    %v1016 = vadd.f32 %v1009, 1.0
    %v1017 = vadd.f32 %v1011, 1.0
    %v1018 = vadd.f32 %v1013, 1.0
    %v1019 = vadd.f32 %v1015, 1.0
    %v1020 = vrcp.pop %v1016
    %v1021 = vmul.f32 %v1016, %v1020
    %v1022 = vsub.f32 1.0, %v1021
    %v1023 = vmul.f32 %v1020, %v1022
    %v1024 = vadd.f32 %v1020, %v1023
    %vm1025 = vweird.f32 %v1016
    %vm1026 = vweird.f32 %v1020
    %vm1027 = vmor %vm1025, %vm1026
    %v1028 = vsel %vm1027, %v1020, %v1024
    %v1029 = vand.u32 2147483647, %v1016
    %vm1030 = vcmp.eq.f32.partialorder %v1029, 8.507059e+37
    %v1031 = vand.u32 %v1016, 2147483648
    %v1032 = vor.u32 1.1754944e-38, %v1031
    %v1033 = vsel %vm1030, %v1032, %v1028
    %v1034 = vmul.f32 1.0, %v1033
    %v1035 = vrcp.pop %v1017
    %v1036 = vmul.f32 %v1017, %v1035
    %v1037 = vsub.f32 1.0, %v1036
    %v1038 = vmul.f32 %v1035, %v1037
    %v1039 = vadd.f32 %v1035, %v1038
    %vm1040 = vweird.f32 %v1017
    %vm1041 = vweird.f32 %v1035
    %vm1042 = vmor %vm1040, %vm1041
    %v1043 = vsel %vm1042, %v1035, %v1039
    %v1044 = vand.u32 2147483647, %v1017
    %vm1045 = vcmp.eq.f32.partialorder %v1044, 8.507059e+37
    %v1046 = vand.u32 %v1017, 2147483648
    %v1047 = vor.u32 1.1754944e-38, %v1046
    %v1048 = vsel %vm1045, %v1047, %v1043
    %v1049 = vmul.f32 1.0, %v1048
    %v1050 = vrcp.pop %v1018
    %v1051 = vmul.f32 %v1018, %v1050
    %v1052 = vsub.f32 1.0, %v1051
    %v1053 = vmul.f32 %v1050, %v1052
    %v1054 = vadd.f32 %v1050, %v1053
    %vm1055 = vweird.f32 %v1018
    %vm1056 = vweird.f32 %v1050
    %vm1057 = vmor %vm1055, %vm1056
    %v1058 = vsel %vm1057, %v1050, %v1054
    %v1059 = vand.u32 2147483647, %v1018
    %vm1060 = vcmp.eq.f32.partialorder %v1059, 8.507059e+37
    %v1061 = vand.u32 %v1018, 2147483648
    %v1062 = vor.u32 1.1754944e-38, %v1061
    %v1063 = vsel %vm1060, %v1062, %v1058
    %v1064 = vmul.f32 1.0, %v1063
    %v1065 = vrcp.pop %v1019
    %v1066 = vmul.f32 %v1019, %v1065
    %v1067 = vsub.f32 1.0, %v1066
    %v1068 = vmul.f32 %v1065, %v1067
    %v1069 = vadd.f32 %v1065, %v1068
    %vm1070 = vweird.f32 %v1019
    %vm1071 = vweird.f32 %v1065
    %vm1072 = vmor %vm1070, %vm1071
    %v1073 = vsel %vm1072, %v1065, %v1069
    %v1074 = vand.u32 2147483647, %v1019
    %vm1075 = vcmp.eq.f32.partialorder %v1074, 8.507059e+37
    %v1076 = vand.u32 %v1019, 2147483648
    %v1077 = vor.u32 1.1754944e-38, %v1076
    %v1078 = vsel %vm1075, %v1077, %v1073
    %v1079 = vmul.f32 1.0, %v1078
    %v1080 = vmul.f32 %v1000, %v1034
    %v1081 = vmul.f32 %v1001, %v1049
    %v1082 = vmul.f32 %v1002, %v1064
    %v1083 = vmul.f32 %v1003, %v1079
    %v1084 = vperm.slane %v19, 0
    %vm1085 = vcmask 261120
    %v1087 = vsel %vm1085, %v1080, 0
    %v1090 = vsel %vm1085, %v1081, 0
    %v1093 = vsel %vm1085, %v1082, 0
    %v1096 = vsel %vm1085, %v1083, 0
    %1098 = vmatpush.msra.mxu0 0.0
    %1099 = vmatpush.msra.mxu0 0.0
    %1100 = vmatpush.msra.mxu0 0.0
    %1101 = vmatpush.msra.mxu0 0.0
    %1102 = vmatpush.msra.mxu0 0.0
    %1103 = vmatpush.msra.mxu0 0.0
    %1104 = vmatpush.msra.mxu0 0.0
    %1105 = vmatpush.msra.mxu0 0.0
    %1106 = vmatpush.msra.mxu0 0.0
    %1107 = vmatpush.msra.mxu0 0.0
    %1108 = vmatpush.msra.mxu0 0.0
    %1109 = vmatpush.msra.mxu0 0.0
    %v1110 = vand.u32 %v32, 4294901760
    %1111 = vmatpush.msra.mxu0 %v1110
    %v1112 = vand.u32 %v31, 4294901760
    %1113 = vmatpush.msra.mxu0 %v1112
    %v1114 = vand.u32 %v30, 4294901760
    %1115 = vmatpush.msra.mxu0 %v1114
    %v1116 = vand.u32 %v29, 4294901760
    %1117 = vmatpush.msra.mxu0 %v1116
    %v1118 = vand.u32 %v1087, 4294901760
    %v1119 = vsub.f32 %v1087, %v1118
    %v1120 = vand.u32 %v1119, 4294901760
    %v1121 = vsub.f32 %v1119, %v1120
    %v1122 = vand.u32 %v1121, 4294901760
    %1123 = vmatmul.f32.gmra.mxu0 %v1122
    %v1124 = vpop.f32.mrf.mxu0
    %v1125 = vadd.f32 %v1084, %v1124
    %v1126 = vand.u32 %v1090, 4294901760
    %v1127 = vsub.f32 %v1090, %v1126
    %v1128 = vand.u32 %v1127, 4294901760
    %v1129 = vsub.f32 %v1127, %v1128
    %v1130 = vand.u32 %v1129, 4294901760
    %1131 = vmatmul.f32.gmra.mxu0 %v1130
    %v1132 = vpop.f32.mrf.mxu0
    %v1133 = vadd.f32 %v1084, %v1132
    %v1134 = vand.u32 %v1093, 4294901760
    %v1135 = vsub.f32 %v1093, %v1134
    %v1136 = vand.u32 %v1135, 4294901760
    %v1137 = vsub.f32 %v1135, %v1136
    %v1138 = vand.u32 %v1137, 4294901760
    %1139 = vmatmul.f32.gmra.mxu0 %v1138
    %v1140 = vpop.f32.mrf.mxu0
    %v1141 = vadd.f32 %v1084, %v1140
    %v1142 = vand.u32 %v1096, 4294901760
    %v1143 = vsub.f32 %v1096, %v1142
    %v1144 = vand.u32 %v1143, 4294901760
    %v1145 = vsub.f32 %v1143, %v1144
    %v1146 = vand.u32 %v1145, 4294901760
    %1147 = vmatmul.f32.gmra.mxu0 %v1146
    %v1148 = vpop.f32.mrf.mxu0
    %v1149 = vadd.f32 %v1084, %v1148
    %1150 = vdwg.mxu0
    %1151 = vmatpush.msra.mxu0 0.0
    %1152 = vmatpush.msra.mxu0 0.0
    %1153 = vmatpush.msra.mxu0 0.0
    %1154 = vmatpush.msra.mxu0 0.0
    %1155 = vmatpush.msra.mxu0 0.0
    %1156 = vmatpush.msra.mxu0 0.0
    %1157 = vmatpush.msra.mxu0 0.0
    %1158 = vmatpush.msra.mxu0 0.0
    %1159 = vmatpush.msra.mxu0 0.0
    %1160 = vmatpush.msra.mxu0 0.0
    %1161 = vmatpush.msra.mxu0 0.0
    %1162 = vmatpush.msra.mxu0 0.0
    %v1163 = vand.u32 %v32, 4294901760
    %v1164 = vsub.f32 %v32, %v1163
    %v1165 = vand.u32 %v1164, 4294901760
    %v1166 = vsub.f32 %v1164, %v1165
    %v1167 = vand.u32 %v1166, 4294901760
    %1168 = vmatpush.msra.mxu0 %v1167
    %v1169 = vand.u32 %v31, 4294901760
    %v1170 = vsub.f32 %v31, %v1169
    %v1171 = vand.u32 %v1170, 4294901760
    %v1172 = vsub.f32 %v1170, %v1171
    %v1173 = vand.u32 %v1172, 4294901760
    %1174 = vmatpush.msra.mxu0 %v1173
    %v1175 = vand.u32 %v30, 4294901760
    %v1176 = vsub.f32 %v30, %v1175
    %v1177 = vand.u32 %v1176, 4294901760
    %v1178 = vsub.f32 %v1176, %v1177
    %v1179 = vand.u32 %v1178, 4294901760
    %1180 = vmatpush.msra.mxu0 %v1179
    %v1181 = vand.u32 %v29, 4294901760
    %v1182 = vsub.f32 %v29, %v1181
    %v1183 = vand.u32 %v1182, 4294901760
    %v1184 = vsub.f32 %v1182, %v1183
    %v1185 = vand.u32 %v1184, 4294901760
    %1186 = vmatpush.msra.mxu0 %v1185
    %v1187 = vand.u32 %v1087, 4294901760
    %1188 = vmatmul.f32.gmra.mxu0 %v1187
    %v1189 = vpop.f32.mrf.mxu0
    %v1190 = vadd.f32 %v1125, %v1189
    %v1191 = vand.u32 %v1090, 4294901760
    %1192 = vmatmul.f32.gmra.mxu0 %v1191
    %v1193 = vpop.f32.mrf.mxu0
    %v1194 = vadd.f32 %v1133, %v1193
    %v1195 = vand.u32 %v1093, 4294901760
    %1196 = vmatmul.f32.gmra.mxu0 %v1195
    %v1197 = vpop.f32.mrf.mxu0
    %v1198 = vadd.f32 %v1141, %v1197
    %v1199 = vand.u32 %v1096, 4294901760
    %1200 = vmatmul.f32.gmra.mxu0 %v1199
    %v1201 = vpop.f32.mrf.mxu0
    %v1202 = vadd.f32 %v1149, %v1201
    %1203 = vdwg.mxu0
    %1204 = vmatpush.msra.mxu0 0.0
    %1205 = vmatpush.msra.mxu0 0.0
    %1206 = vmatpush.msra.mxu0 0.0
    %1207 = vmatpush.msra.mxu0 0.0
    %1208 = vmatpush.msra.mxu0 0.0
    %1209 = vmatpush.msra.mxu0 0.0
    %1210 = vmatpush.msra.mxu0 0.0
    %1211 = vmatpush.msra.mxu0 0.0
    %1212 = vmatpush.msra.mxu0 0.0
    %1213 = vmatpush.msra.mxu0 0.0
    %1214 = vmatpush.msra.mxu0 0.0
    %1215 = vmatpush.msra.mxu0 0.0
    %v1216 = vand.u32 %v32, 4294901760
    %v1217 = vsub.f32 %v32, %v1216
    %1218 = vmatpush.msra.mxu0 %v1217
    %v1219 = vand.u32 %v31, 4294901760
    %v1220 = vsub.f32 %v31, %v1219
    %1221 = vmatpush.msra.mxu0 %v1220
    %v1222 = vand.u32 %v30, 4294901760
    %v1223 = vsub.f32 %v30, %v1222
    %1224 = vmatpush.msra.mxu0 %v1223
    %v1225 = vand.u32 %v29, 4294901760
    %v1226 = vsub.f32 %v29, %v1225
    %1227 = vmatpush.msra.mxu0 %v1226
    %v1228 = vand.u32 %v1087, 4294901760
    %v1229 = vsub.f32 %v1087, %v1228
    %1230 = vmatmul.f32.gmra.mxu0 %v1229
    %v1231 = vpop.f32.mrf.mxu0
    %v1232 = vadd.f32 %v1190, %v1231
    %v1233 = vand.u32 %v1090, 4294901760
    %v1234 = vsub.f32 %v1090, %v1233
    %1235 = vmatmul.f32.gmra.mxu0 %v1234
    %v1236 = vpop.f32.mrf.mxu0
    %v1237 = vadd.f32 %v1194, %v1236
    %v1238 = vand.u32 %v1093, 4294901760
    %v1239 = vsub.f32 %v1093, %v1238
    %1240 = vmatmul.f32.gmra.mxu0 %v1239
    %v1241 = vpop.f32.mrf.mxu0
    %v1242 = vadd.f32 %v1198, %v1241
    %v1243 = vand.u32 %v1096, 4294901760
    %v1244 = vsub.f32 %v1096, %v1243
    %1245 = vmatmul.f32.gmra.mxu0 %v1244
    %v1246 = vpop.f32.mrf.mxu0
    %v1247 = vadd.f32 %v1202, %v1246
    %1248 = vdwg.mxu0
    %1249 = vmatpush.msra.mxu0 0.0
    %1250 = vmatpush.msra.mxu0 0.0
    %1251 = vmatpush.msra.mxu0 0.0
    %1252 = vmatpush.msra.mxu0 0.0
    %1253 = vmatpush.msra.mxu0 0.0
    %1254 = vmatpush.msra.mxu0 0.0
    %1255 = vmatpush.msra.mxu0 0.0
    %1256 = vmatpush.msra.mxu0 0.0
    %1257 = vmatpush.msra.mxu0 0.0
    %1258 = vmatpush.msra.mxu0 0.0
    %1259 = vmatpush.msra.mxu0 0.0
    %1260 = vmatpush.msra.mxu0 0.0
    %v1261 = vand.u32 %v32, 4294901760
    %1262 = vmatpush.msra.mxu0 %v1261
    %v1263 = vand.u32 %v31, 4294901760
    %1264 = vmatpush.msra.mxu0 %v1263
    %v1265 = vand.u32 %v30, 4294901760
    %1266 = vmatpush.msra.mxu0 %v1265
    %v1267 = vand.u32 %v29, 4294901760
    %1268 = vmatpush.msra.mxu0 %v1267
    %v1269 = vand.u32 %v1087, 4294901760
    %v1270 = vsub.f32 %v1087, %v1269
    %v1271 = vand.u32 %v1270, 4294901760
    %1272 = vmatmul.f32.gmra.mxu0 %v1271
    %v1273 = vpop.f32.mrf.mxu0
    %v1274 = vadd.f32 %v1232, %v1273
    %v1275 = vand.u32 %v1090, 4294901760
    %v1276 = vsub.f32 %v1090, %v1275
    %v1277 = vand.u32 %v1276, 4294901760
    %1278 = vmatmul.f32.gmra.mxu0 %v1277
    %v1279 = vpop.f32.mrf.mxu0
    %v1280 = vadd.f32 %v1237, %v1279
    %v1281 = vand.u32 %v1093, 4294901760
    %v1282 = vsub.f32 %v1093, %v1281
    %v1283 = vand.u32 %v1282, 4294901760
    %1284 = vmatmul.f32.gmra.mxu0 %v1283
    %v1285 = vpop.f32.mrf.mxu0
    %v1286 = vadd.f32 %v1242, %v1285
    %v1287 = vand.u32 %v1096, 4294901760
    %v1288 = vsub.f32 %v1096, %v1287
    %v1289 = vand.u32 %v1288, 4294901760
    %1290 = vmatmul.f32.gmra.mxu0 %v1289
    %v1291 = vpop.f32.mrf.mxu0
    %v1292 = vadd.f32 %v1247, %v1291
    %1293 = vdwg.mxu0
    %1294 = vmatpush.msra.mxu0 0.0
    %1295 = vmatpush.msra.mxu0 0.0
    %1296 = vmatpush.msra.mxu0 0.0
    %1297 = vmatpush.msra.mxu0 0.0
    %1298 = vmatpush.msra.mxu0 0.0
    %1299 = vmatpush.msra.mxu0 0.0
    %1300 = vmatpush.msra.mxu0 0.0
    %1301 = vmatpush.msra.mxu0 0.0
    %1302 = vmatpush.msra.mxu0 0.0
    %1303 = vmatpush.msra.mxu0 0.0
    %1304 = vmatpush.msra.mxu0 0.0
    %1305 = vmatpush.msra.mxu0 0.0
    %v1306 = vand.u32 %v32, 4294901760
    %v1307 = vsub.f32 %v32, %v1306
    %v1308 = vand.u32 %v1307, 4294901760
    %1309 = vmatpush.msra.mxu0 %v1308
    %v1310 = vand.u32 %v31, 4294901760
    %v1311 = vsub.f32 %v31, %v1310
    %v1312 = vand.u32 %v1311, 4294901760
    %1313 = vmatpush.msra.mxu0 %v1312
    %v1314 = vand.u32 %v30, 4294901760
    %v1315 = vsub.f32 %v30, %v1314
    %v1316 = vand.u32 %v1315, 4294901760
    %1317 = vmatpush.msra.mxu0 %v1316
    %v1318 = vand.u32 %v29, 4294901760
    %v1319 = vsub.f32 %v29, %v1318
    %v1320 = vand.u32 %v1319, 4294901760
    %1321 = vmatpush.msra.mxu0 %v1320
    %v1322 = vand.u32 %v1087, 4294901760
    %1323 = vmatmul.f32.gmra.mxu0 %v1322
    %v1324 = vpop.f32.mrf.mxu0
    %v1325 = vadd.f32 %v1274, %v1324
    %v1326 = vand.u32 %v1090, 4294901760
    %1327 = vmatmul.f32.gmra.mxu0 %v1326
    %v1328 = vpop.f32.mrf.mxu0
    %v1329 = vadd.f32 %v1280, %v1328
    %v1330 = vand.u32 %v1093, 4294901760
    %1331 = vmatmul.f32.gmra.mxu0 %v1330
    %v1332 = vpop.f32.mrf.mxu0
    %v1333 = vadd.f32 %v1286, %v1332
    %v1334 = vand.u32 %v1096, 4294901760
    %1335 = vmatmul.f32.gmra.mxu0 %v1334
    %v1336 = vpop.f32.mrf.mxu0
    %v1337 = vadd.f32 %v1292, %v1336
    %1338 = vdwg.mxu0
    %1339 = vmatpush.msra.mxu0 0.0
    %1340 = vmatpush.msra.mxu0 0.0
    %1341 = vmatpush.msra.mxu0 0.0
    %1342 = vmatpush.msra.mxu0 0.0
    %1343 = vmatpush.msra.mxu0 0.0
    %1344 = vmatpush.msra.mxu0 0.0
    %1345 = vmatpush.msra.mxu0 0.0
    %1346 = vmatpush.msra.mxu0 0.0
    %1347 = vmatpush.msra.mxu0 0.0
    %1348 = vmatpush.msra.mxu0 0.0
    %1349 = vmatpush.msra.mxu0 0.0
    %1350 = vmatpush.msra.mxu0 0.0
    %v1351 = vand.u32 %v32, 4294901760
    %1352 = vmatpush.msra.mxu0 %v1351
    %v1353 = vand.u32 %v31, 4294901760
    %1354 = vmatpush.msra.mxu0 %v1353
    %v1355 = vand.u32 %v30, 4294901760
    %1356 = vmatpush.msra.mxu0 %v1355
    %v1357 = vand.u32 %v29, 4294901760
    %1358 = vmatpush.msra.mxu0 %v1357
    %v1359 = vand.u32 %v1087, 4294901760
    %1360 = vmatmul.f32.gmra.mxu0 %v1359
    %v1361 = vpop.f32.mrf.mxu0
    %v1362 = vadd.f32 %v1325, %v1361
    %v1363 = vand.u32 %v1090, 4294901760
    %1364 = vmatmul.f32.gmra.mxu0 %v1363
    %v1365 = vpop.f32.mrf.mxu0
    %v1366 = vadd.f32 %v1329, %v1365
    %v1367 = vand.u32 %v1093, 4294901760
    %1368 = vmatmul.f32.gmra.mxu0 %v1367
    %v1369 = vpop.f32.mrf.mxu0
    %v1370 = vadd.f32 %v1333, %v1369
    %v1371 = vand.u32 %v1096, 4294901760
    %1372 = vmatmul.f32.gmra.mxu0 %v1371
    %v1373 = vpop.f32.mrf.mxu0
    %v1374 = vadd.f32 %v1337, %v1373
    %1375 = vdwg.mxu0
    %v1376 = vmax.f32 %v1362, 0.0
    %v1377 = vmax.f32 %v1366, 0.0
    %v1378 = vmax.f32 %v1370, 0.0
    %v1379 = vmax.f32 %v1374, 0.0
    %v1380 = vand.u32 2147483647, %v1362
    %v1381 = vand.u32 2147483647, %v1366
    %v1382 = vand.u32 2147483647, %v1370
    %v1383 = vand.u32 2147483647, %v1374
    %v1384 = vsub.f32 0.0, %v1380
    %v1385 = vsub.f32 0.0, %v1381
    %v1386 = vsub.f32 0.0, %v1382
    %v1387 = vsub.f32 0.0, %v1383
    %v1388 = vmul.f32 %v1384, 1.442695
    %v1389 = vpow.pop %v1388
    %v1390 = vmul.f32 %v1385, 1.442695
    %v1391 = vpow.pop %v1390
    %v1392 = vmul.f32 %v1386, 1.442695
    %v1393 = vpow.pop %v1392
    %v1394 = vmul.f32 %v1387, 1.442695
    %v1395 = vpow.pop %v1394
    %v1396 = vadd.f32 %v1389, 1.0
    %v1397 = vadd.f32 %v1391, 1.0
    %v1398 = vadd.f32 %v1393, 1.0
    %v1399 = vadd.f32 %v1395, 1.0
    %v1400 = vlog2.pop %v1396
    %v1401 = vmul.f32 %v1400, 0.6931472
    %v1402 = vlog2.pop %v1397
    %v1403 = vmul.f32 %v1402, 0.6931472
    %v1404 = vlog2.pop %v1398
    %v1405 = vmul.f32 %v1404, 0.6931472
    %v1406 = vlog2.pop %v1399
    %v1407 = vmul.f32 %v1406, 0.6931472
    %v1408 = vadd.f32 %v1376, %v1401
    %v1409 = vadd.f32 %v1377, %v1403
    %v1410 = vadd.f32 %v1378, %v1405
    %v1411 = vadd.f32 %v1379, %v1407
    %1416 = vrot.lane.b32.xlu0 %v29, 96
    %v1417 = vpop.permute.xlu0 %1416
    %1418 = vrot.lane.b32.xlu0 %v30, 96
    %v1419 = vpop.permute.xlu0 %1418
    %1420 = vrot.lane.b32.xlu0 %v31, 96
    %v1421 = vpop.permute.xlu0 %1420
    %1422 = vrot.lane.b32.xlu0 %v32, 96
    %v1423 = vpop.permute.xlu0 %1422
    %1428 = vmatpush.msra.mxu0 0.0
    %1429 = vmatpush.msra.mxu0 0.0
    %1430 = vmatpush.msra.mxu0 0.0
    %1431 = vmatpush.msra.mxu0 0.0
    %1432 = vmatpush.msra.mxu0 0.0
    %1433 = vmatpush.msra.mxu0 0.0
    %1434 = vmatpush.msra.mxu0 0.0
    %1435 = vmatpush.msra.mxu0 0.0
    %1436 = vmatpush.msra.mxu0 0.0
    %1437 = vmatpush.msra.mxu0 0.0
    %1438 = vmatpush.msra.mxu0 0.0
    %1439 = vmatpush.msra.mxu0 0.0
    %v1440 = vand.u32 %v1423, 4294901760
    %1441 = vmatpush.msra.mxu0 %v1440
    %v1442 = vand.u32 %v1421, 4294901760
    %1443 = vmatpush.msra.mxu0 %v1442
    %v1444 = vand.u32 %v1419, 4294901760
    %1445 = vmatpush.msra.mxu0 %v1444
    %v1446 = vand.u32 %v1417, 4294901760
    %1447 = vmatpush.msra.mxu0 %v1446
    %v1448 = vand.u32 %v1087, 4294901760
    %v1449 = vsub.f32 %v1087, %v1448
    %v1450 = vand.u32 %v1449, 4294901760
    %v1451 = vsub.f32 %v1449, %v1450
    %v1452 = vand.u32 %v1451, 4294901760
    %1453 = vmatmul.f32.gmra.mxu0 %v1452
    %v1454 = vpop.f32.mrf.mxu0
    %v1455 = vadd.f32 0.0, %v1454
    %v1456 = vand.u32 %v1090, 4294901760
    %v1457 = vsub.f32 %v1090, %v1456
    %v1458 = vand.u32 %v1457, 4294901760
    %v1459 = vsub.f32 %v1457, %v1458
    %v1460 = vand.u32 %v1459, 4294901760
    %1461 = vmatmul.f32.gmra.mxu0 %v1460
    %v1462 = vpop.f32.mrf.mxu0
    %v1463 = vadd.f32 0.0, %v1462
    %v1464 = vand.u32 %v1093, 4294901760
    %v1465 = vsub.f32 %v1093, %v1464
    %v1466 = vand.u32 %v1465, 4294901760
    %v1467 = vsub.f32 %v1465, %v1466
    %v1468 = vand.u32 %v1467, 4294901760
    %1469 = vmatmul.f32.gmra.mxu0 %v1468
    %v1470 = vpop.f32.mrf.mxu0
    %v1471 = vadd.f32 0.0, %v1470
    %v1472 = vand.u32 %v1096, 4294901760
    %v1473 = vsub.f32 %v1096, %v1472
    %v1474 = vand.u32 %v1473, 4294901760
    %v1475 = vsub.f32 %v1473, %v1474
    %v1476 = vand.u32 %v1475, 4294901760
    %1477 = vmatmul.f32.gmra.mxu0 %v1476
    %v1478 = vpop.f32.mrf.mxu0
    %v1479 = vadd.f32 0.0, %v1478
    %1480 = vdwg.mxu0
    %1481 = vmatpush.msra.mxu0 0.0
    %1482 = vmatpush.msra.mxu0 0.0
    %1483 = vmatpush.msra.mxu0 0.0
    %1484 = vmatpush.msra.mxu0 0.0
    %1485 = vmatpush.msra.mxu0 0.0
    %1486 = vmatpush.msra.mxu0 0.0
    %1487 = vmatpush.msra.mxu0 0.0
    %1488 = vmatpush.msra.mxu0 0.0
    %1489 = vmatpush.msra.mxu0 0.0
    %1490 = vmatpush.msra.mxu0 0.0
    %1491 = vmatpush.msra.mxu0 0.0
    %1492 = vmatpush.msra.mxu0 0.0
    %v1493 = vand.u32 %v1423, 4294901760
    %v1494 = vsub.f32 %v1423, %v1493
    %v1495 = vand.u32 %v1494, 4294901760
    %v1496 = vsub.f32 %v1494, %v1495
    %v1497 = vand.u32 %v1496, 4294901760
    %1498 = vmatpush.msra.mxu0 %v1497
    %v1499 = vand.u32 %v1421, 4294901760
    %v1500 = vsub.f32 %v1421, %v1499
    %v1501 = vand.u32 %v1500, 4294901760
    %v1502 = vsub.f32 %v1500, %v1501
    %v1503 = vand.u32 %v1502, 4294901760
    %1504 = vmatpush.msra.mxu0 %v1503
    %v1505 = vand.u32 %v1419, 4294901760
    %v1506 = vsub.f32 %v1419, %v1505
    %v1507 = vand.u32 %v1506, 4294901760
    %v1508 = vsub.f32 %v1506, %v1507
    %v1509 = vand.u32 %v1508, 4294901760
    %1510 = vmatpush.msra.mxu0 %v1509
    %v1511 = vand.u32 %v1417, 4294901760
    %v1512 = vsub.f32 %v1417, %v1511
    %v1513 = vand.u32 %v1512, 4294901760
    %v1514 = vsub.f32 %v1512, %v1513
    %v1515 = vand.u32 %v1514, 4294901760
    %1516 = vmatpush.msra.mxu0 %v1515
    %v1517 = vand.u32 %v1087, 4294901760
    %1518 = vmatmul.f32.gmra.mxu0 %v1517
    %v1519 = vpop.f32.mrf.mxu0
    %v1520 = vadd.f32 %v1455, %v1519
    %v1521 = vand.u32 %v1090, 4294901760
    %1522 = vmatmul.f32.gmra.mxu0 %v1521
    %v1523 = vpop.f32.mrf.mxu0
    %v1524 = vadd.f32 %v1463, %v1523
    %v1525 = vand.u32 %v1093, 4294901760
    %1526 = vmatmul.f32.gmra.mxu0 %v1525
    %v1527 = vpop.f32.mrf.mxu0
    %v1528 = vadd.f32 %v1471, %v1527
    %v1529 = vand.u32 %v1096, 4294901760
    %1530 = vmatmul.f32.gmra.mxu0 %v1529
    %v1531 = vpop.f32.mrf.mxu0
    %v1532 = vadd.f32 %v1479, %v1531
    %1533 = vdwg.mxu0
    %1534 = vmatpush.msra.mxu0 0.0
    %1535 = vmatpush.msra.mxu0 0.0
    %1536 = vmatpush.msra.mxu0 0.0
    %1537 = vmatpush.msra.mxu0 0.0
    %1538 = vmatpush.msra.mxu0 0.0
    %1539 = vmatpush.msra.mxu0 0.0
    %1540 = vmatpush.msra.mxu0 0.0
    %1541 = vmatpush.msra.mxu0 0.0
    %1542 = vmatpush.msra.mxu0 0.0
    %1543 = vmatpush.msra.mxu0 0.0
    %1544 = vmatpush.msra.mxu0 0.0
    %1545 = vmatpush.msra.mxu0 0.0
    %v1546 = vand.u32 %v1423, 4294901760
    %v1547 = vsub.f32 %v1423, %v1546
    %1548 = vmatpush.msra.mxu0 %v1547
    %v1549 = vand.u32 %v1421, 4294901760
    %v1550 = vsub.f32 %v1421, %v1549
    %1551 = vmatpush.msra.mxu0 %v1550
    %v1552 = vand.u32 %v1419, 4294901760
    %v1553 = vsub.f32 %v1419, %v1552
    %1554 = vmatpush.msra.mxu0 %v1553
    %v1555 = vand.u32 %v1417, 4294901760
    %v1556 = vsub.f32 %v1417, %v1555
    %1557 = vmatpush.msra.mxu0 %v1556
    %v1558 = vand.u32 %v1087, 4294901760
    %v1559 = vsub.f32 %v1087, %v1558
    %1560 = vmatmul.f32.gmra.mxu0 %v1559
    %v1561 = vpop.f32.mrf.mxu0
    %v1562 = vadd.f32 %v1520, %v1561
    %v1563 = vand.u32 %v1090, 4294901760
    %v1564 = vsub.f32 %v1090, %v1563
    %1565 = vmatmul.f32.gmra.mxu0 %v1564
    %v1566 = vpop.f32.mrf.mxu0
    %v1567 = vadd.f32 %v1524, %v1566
    %v1568 = vand.u32 %v1093, 4294901760
    %v1569 = vsub.f32 %v1093, %v1568
    %1570 = vmatmul.f32.gmra.mxu0 %v1569
    %v1571 = vpop.f32.mrf.mxu0
    %v1572 = vadd.f32 %v1528, %v1571
    %v1573 = vand.u32 %v1096, 4294901760
    %v1574 = vsub.f32 %v1096, %v1573
    %1575 = vmatmul.f32.gmra.mxu0 %v1574
    %v1576 = vpop.f32.mrf.mxu0
    %v1577 = vadd.f32 %v1532, %v1576
    %1578 = vdwg.mxu0
    %1579 = vmatpush.msra.mxu0 0.0
    %1580 = vmatpush.msra.mxu0 0.0
    %1581 = vmatpush.msra.mxu0 0.0
    %1582 = vmatpush.msra.mxu0 0.0
    %1583 = vmatpush.msra.mxu0 0.0
    %1584 = vmatpush.msra.mxu0 0.0
    %1585 = vmatpush.msra.mxu0 0.0
    %1586 = vmatpush.msra.mxu0 0.0
    %1587 = vmatpush.msra.mxu0 0.0
    %1588 = vmatpush.msra.mxu0 0.0
    %1589 = vmatpush.msra.mxu0 0.0
    %1590 = vmatpush.msra.mxu0 0.0
    %v1591 = vand.u32 %v1423, 4294901760
    %1592 = vmatpush.msra.mxu0 %v1591
    %v1593 = vand.u32 %v1421, 4294901760
    %1594 = vmatpush.msra.mxu0 %v1593
    %v1595 = vand.u32 %v1419, 4294901760
    %1596 = vmatpush.msra.mxu0 %v1595
    %v1597 = vand.u32 %v1417, 4294901760
    %1598 = vmatpush.msra.mxu0 %v1597
    %v1599 = vand.u32 %v1087, 4294901760
    %v1600 = vsub.f32 %v1087, %v1599
    %v1601 = vand.u32 %v1600, 4294901760
    %1602 = vmatmul.f32.gmra.mxu0 %v1601
    %v1603 = vpop.f32.mrf.mxu0
    %v1604 = vadd.f32 %v1562, %v1603
    %v1605 = vand.u32 %v1090, 4294901760
    %v1606 = vsub.f32 %v1090, %v1605
    %v1607 = vand.u32 %v1606, 4294901760
    %1608 = vmatmul.f32.gmra.mxu0 %v1607
    %v1609 = vpop.f32.mrf.mxu0
    %v1610 = vadd.f32 %v1567, %v1609
    %v1611 = vand.u32 %v1093, 4294901760
    %v1612 = vsub.f32 %v1093, %v1611
    %v1613 = vand.u32 %v1612, 4294901760
    %1614 = vmatmul.f32.gmra.mxu0 %v1613
    %v1615 = vpop.f32.mrf.mxu0
    %v1616 = vadd.f32 %v1572, %v1615
    %v1617 = vand.u32 %v1096, 4294901760
    %v1618 = vsub.f32 %v1096, %v1617
    %v1619 = vand.u32 %v1618, 4294901760
    %1620 = vmatmul.f32.gmra.mxu0 %v1619
    %v1621 = vpop.f32.mrf.mxu0
    %v1622 = vadd.f32 %v1577, %v1621
    %1623 = vdwg.mxu0
    %1624 = vmatpush.msra.mxu0 0.0
    %1625 = vmatpush.msra.mxu0 0.0
    %1626 = vmatpush.msra.mxu0 0.0
    %1627 = vmatpush.msra.mxu0 0.0
    %1628 = vmatpush.msra.mxu0 0.0
    %1629 = vmatpush.msra.mxu0 0.0
    %1630 = vmatpush.msra.mxu0 0.0
    %1631 = vmatpush.msra.mxu0 0.0
    %1632 = vmatpush.msra.mxu0 0.0
    %1633 = vmatpush.msra.mxu0 0.0
    %1634 = vmatpush.msra.mxu0 0.0
    %1635 = vmatpush.msra.mxu0 0.0
    %v1636 = vand.u32 %v1423, 4294901760
    %v1637 = vsub.f32 %v1423, %v1636
    %v1638 = vand.u32 %v1637, 4294901760
    %1639 = vmatpush.msra.mxu0 %v1638
    %v1640 = vand.u32 %v1421, 4294901760
    %v1641 = vsub.f32 %v1421, %v1640
    %v1642 = vand.u32 %v1641, 4294901760
    %1643 = vmatpush.msra.mxu0 %v1642
    %v1644 = vand.u32 %v1419, 4294901760
    %v1645 = vsub.f32 %v1419, %v1644
    %v1646 = vand.u32 %v1645, 4294901760
    %1647 = vmatpush.msra.mxu0 %v1646
    %v1648 = vand.u32 %v1417, 4294901760
    %v1649 = vsub.f32 %v1417, %v1648
    %v1650 = vand.u32 %v1649, 4294901760
    %1651 = vmatpush.msra.mxu0 %v1650
    %v1652 = vand.u32 %v1087, 4294901760
    %1653 = vmatmul.f32.gmra.mxu0 %v1652
    %v1654 = vpop.f32.mrf.mxu0
    %v1655 = vadd.f32 %v1604, %v1654
    %v1656 = vand.u32 %v1090, 4294901760
    %1657 = vmatmul.f32.gmra.mxu0 %v1656
    %v1658 = vpop.f32.mrf.mxu0
    %v1659 = vadd.f32 %v1610, %v1658
    %v1660 = vand.u32 %v1093, 4294901760
    %1661 = vmatmul.f32.gmra.mxu0 %v1660
    %v1662 = vpop.f32.mrf.mxu0
    %v1663 = vadd.f32 %v1616, %v1662
    %v1664 = vand.u32 %v1096, 4294901760
    %1665 = vmatmul.f32.gmra.mxu0 %v1664
    %v1666 = vpop.f32.mrf.mxu0
    %v1667 = vadd.f32 %v1622, %v1666
    %1668 = vdwg.mxu0
    %1669 = vmatpush.msra.mxu0 0.0
    %1670 = vmatpush.msra.mxu0 0.0
    %1671 = vmatpush.msra.mxu0 0.0
    %1672 = vmatpush.msra.mxu0 0.0
    %1673 = vmatpush.msra.mxu0 0.0
    %1674 = vmatpush.msra.mxu0 0.0
    %1675 = vmatpush.msra.mxu0 0.0
    %1676 = vmatpush.msra.mxu0 0.0
    %1677 = vmatpush.msra.mxu0 0.0
    %1678 = vmatpush.msra.mxu0 0.0
    %1679 = vmatpush.msra.mxu0 0.0
    %1680 = vmatpush.msra.mxu0 0.0
    %v1681 = vand.u32 %v1423, 4294901760
    %1682 = vmatpush.msra.mxu0 %v1681
    %v1683 = vand.u32 %v1421, 4294901760
    %1684 = vmatpush.msra.mxu0 %v1683
    %v1685 = vand.u32 %v1419, 4294901760
    %1686 = vmatpush.msra.mxu0 %v1685
    %v1687 = vand.u32 %v1417, 4294901760
    %1688 = vmatpush.msra.mxu0 %v1687
    %v1689 = vand.u32 %v1087, 4294901760
    %1690 = vmatmul.f32.gmra.mxu0 %v1689
    %v1691 = vpop.f32.mrf.mxu0
    %v1692 = vadd.f32 %v1655, %v1691
    %v1693 = vand.u32 %v1090, 4294901760
    %1694 = vmatmul.f32.gmra.mxu0 %v1693
    %v1695 = vpop.f32.mrf.mxu0
    %v1696 = vadd.f32 %v1659, %v1695
    %v1697 = vand.u32 %v1093, 4294901760
    %1698 = vmatmul.f32.gmra.mxu0 %v1697
    %v1699 = vpop.f32.mrf.mxu0
    %v1700 = vadd.f32 %v1663, %v1699
    %v1701 = vand.u32 %v1096, 4294901760
    %1702 = vmatmul.f32.gmra.mxu0 %v1701
    %v1703 = vpop.f32.mrf.mxu0
    %v1704 = vadd.f32 %v1667, %v1703
    %1705 = vdwg.mxu0
    %1706 = vrot.lane.b32.xlu0 %v29, 92
    %v1707 = vpop.permute.xlu0 %1706
    %1708 = vrot.lane.b32.xlu0 %v30, 92
    %v1709 = vpop.permute.xlu0 %1708
    %1710 = vrot.lane.b32.xlu0 %v31, 92
    %v1711 = vpop.permute.xlu0 %1710
    %1712 = vrot.lane.b32.xlu0 %v32, 92
    %v1713 = vpop.permute.xlu0 %1712
    %1718 = vmatpush.msra.mxu0 0.0
    %1719 = vmatpush.msra.mxu0 0.0
    %1720 = vmatpush.msra.mxu0 0.0
    %1721 = vmatpush.msra.mxu0 0.0
    %1722 = vmatpush.msra.mxu0 0.0
    %1723 = vmatpush.msra.mxu0 0.0
    %1724 = vmatpush.msra.mxu0 0.0
    %1725 = vmatpush.msra.mxu0 0.0
    %1726 = vmatpush.msra.mxu0 0.0
    %1727 = vmatpush.msra.mxu0 0.0
    %1728 = vmatpush.msra.mxu0 0.0
    %1729 = vmatpush.msra.mxu0 0.0
    %v1730 = vand.u32 %v1713, 4294901760
    %1731 = vmatpush.msra.mxu0 %v1730
    %v1732 = vand.u32 %v1711, 4294901760
    %1733 = vmatpush.msra.mxu0 %v1732
    %v1734 = vand.u32 %v1709, 4294901760
    %1735 = vmatpush.msra.mxu0 %v1734
    %v1736 = vand.u32 %v1707, 4294901760
    %1737 = vmatpush.msra.mxu0 %v1736
    %v1738 = vand.u32 %v1087, 4294901760
    %v1739 = vsub.f32 %v1087, %v1738
    %v1740 = vand.u32 %v1739, 4294901760
    %v1741 = vsub.f32 %v1739, %v1740
    %v1742 = vand.u32 %v1741, 4294901760
    %1743 = vmatmul.f32.gmra.mxu0 %v1742
    %v1744 = vpop.f32.mrf.mxu0
    %v1745 = vadd.f32 0.0, %v1744
    %v1746 = vand.u32 %v1090, 4294901760
    %v1747 = vsub.f32 %v1090, %v1746
    %v1748 = vand.u32 %v1747, 4294901760
    %v1749 = vsub.f32 %v1747, %v1748
    %v1750 = vand.u32 %v1749, 4294901760
    %1751 = vmatmul.f32.gmra.mxu0 %v1750
    %v1752 = vpop.f32.mrf.mxu0
    %v1753 = vadd.f32 0.0, %v1752
    %v1754 = vand.u32 %v1093, 4294901760
    %v1755 = vsub.f32 %v1093, %v1754
    %v1756 = vand.u32 %v1755, 4294901760
    %v1757 = vsub.f32 %v1755, %v1756
    %v1758 = vand.u32 %v1757, 4294901760
    %1759 = vmatmul.f32.gmra.mxu0 %v1758
    %v1760 = vpop.f32.mrf.mxu0
    %v1761 = vadd.f32 0.0, %v1760
    %v1762 = vand.u32 %v1096, 4294901760
    %v1763 = vsub.f32 %v1096, %v1762
    %v1764 = vand.u32 %v1763, 4294901760
    %v1765 = vsub.f32 %v1763, %v1764
    %v1766 = vand.u32 %v1765, 4294901760
    %1767 = vmatmul.f32.gmra.mxu0 %v1766
    %v1768 = vpop.f32.mrf.mxu0
    %v1769 = vadd.f32 0.0, %v1768
    %1770 = vdwg.mxu0
    %1771 = vmatpush.msra.mxu0 0.0
    %1772 = vmatpush.msra.mxu0 0.0
    %1773 = vmatpush.msra.mxu0 0.0
    %1774 = vmatpush.msra.mxu0 0.0
    %1775 = vmatpush.msra.mxu0 0.0
    %1776 = vmatpush.msra.mxu0 0.0
    %1777 = vmatpush.msra.mxu0 0.0
    %1778 = vmatpush.msra.mxu0 0.0
    %1779 = vmatpush.msra.mxu0 0.0
    %1780 = vmatpush.msra.mxu0 0.0
    %1781 = vmatpush.msra.mxu0 0.0
    %1782 = vmatpush.msra.mxu0 0.0
    %v1783 = vand.u32 %v1713, 4294901760
    %v1784 = vsub.f32 %v1713, %v1783
    %v1785 = vand.u32 %v1784, 4294901760
    %v1786 = vsub.f32 %v1784, %v1785
    %v1787 = vand.u32 %v1786, 4294901760
    %1788 = vmatpush.msra.mxu0 %v1787
    %v1789 = vand.u32 %v1711, 4294901760
    %v1790 = vsub.f32 %v1711, %v1789
    %v1791 = vand.u32 %v1790, 4294901760
    %v1792 = vsub.f32 %v1790, %v1791
    %v1793 = vand.u32 %v1792, 4294901760
    %1794 = vmatpush.msra.mxu0 %v1793
    %v1795 = vand.u32 %v1709, 4294901760
    %v1796 = vsub.f32 %v1709, %v1795
    %v1797 = vand.u32 %v1796, 4294901760
    %v1798 = vsub.f32 %v1796, %v1797
    %v1799 = vand.u32 %v1798, 4294901760
    %1800 = vmatpush.msra.mxu0 %v1799
    %v1801 = vand.u32 %v1707, 4294901760
    %v1802 = vsub.f32 %v1707, %v1801
    %v1803 = vand.u32 %v1802, 4294901760
    %v1804 = vsub.f32 %v1802, %v1803
    %v1805 = vand.u32 %v1804, 4294901760
    %1806 = vmatpush.msra.mxu0 %v1805
    %v1807 = vand.u32 %v1087, 4294901760
    %1808 = vmatmul.f32.gmra.mxu0 %v1807
    %v1809 = vpop.f32.mrf.mxu0
    %v1810 = vadd.f32 %v1745, %v1809
    %v1811 = vand.u32 %v1090, 4294901760
    %1812 = vmatmul.f32.gmra.mxu0 %v1811
    %v1813 = vpop.f32.mrf.mxu0
    %v1814 = vadd.f32 %v1753, %v1813
    %v1815 = vand.u32 %v1093, 4294901760
    %1816 = vmatmul.f32.gmra.mxu0 %v1815
    %v1817 = vpop.f32.mrf.mxu0
    %v1818 = vadd.f32 %v1761, %v1817
    %v1819 = vand.u32 %v1096, 4294901760
    %1820 = vmatmul.f32.gmra.mxu0 %v1819
    %v1821 = vpop.f32.mrf.mxu0
    %v1822 = vadd.f32 %v1769, %v1821
    %1823 = vdwg.mxu0
    %1824 = vmatpush.msra.mxu0 0.0
    %1825 = vmatpush.msra.mxu0 0.0
    %1826 = vmatpush.msra.mxu0 0.0
    %1827 = vmatpush.msra.mxu0 0.0
    %1828 = vmatpush.msra.mxu0 0.0
    %1829 = vmatpush.msra.mxu0 0.0
    %1830 = vmatpush.msra.mxu0 0.0
    %1831 = vmatpush.msra.mxu0 0.0
    %1832 = vmatpush.msra.mxu0 0.0
    %1833 = vmatpush.msra.mxu0 0.0
    %1834 = vmatpush.msra.mxu0 0.0
    %1835 = vmatpush.msra.mxu0 0.0
    %v1836 = vand.u32 %v1713, 4294901760
    %v1837 = vsub.f32 %v1713, %v1836
    %1838 = vmatpush.msra.mxu0 %v1837
    %v1839 = vand.u32 %v1711, 4294901760
    %v1840 = vsub.f32 %v1711, %v1839
    %1841 = vmatpush.msra.mxu0 %v1840
    %v1842 = vand.u32 %v1709, 4294901760
    %v1843 = vsub.f32 %v1709, %v1842
    %1844 = vmatpush.msra.mxu0 %v1843
    %v1845 = vand.u32 %v1707, 4294901760
    %v1846 = vsub.f32 %v1707, %v1845
    %1847 = vmatpush.msra.mxu0 %v1846
    %v1848 = vand.u32 %v1087, 4294901760
    %v1849 = vsub.f32 %v1087, %v1848
    %1850 = vmatmul.f32.gmra.mxu0 %v1849
    %v1851 = vpop.f32.mrf.mxu0
    %v1852 = vadd.f32 %v1810, %v1851
    %v1853 = vand.u32 %v1090, 4294901760
    %v1854 = vsub.f32 %v1090, %v1853
    %1855 = vmatmul.f32.gmra.mxu0 %v1854
    %v1856 = vpop.f32.mrf.mxu0
    %v1857 = vadd.f32 %v1814, %v1856
    %v1858 = vand.u32 %v1093, 4294901760
    %v1859 = vsub.f32 %v1093, %v1858
    %1860 = vmatmul.f32.gmra.mxu0 %v1859
    %v1861 = vpop.f32.mrf.mxu0
    %v1862 = vadd.f32 %v1818, %v1861
    %v1863 = vand.u32 %v1096, 4294901760
    %v1864 = vsub.f32 %v1096, %v1863
    %1865 = vmatmul.f32.gmra.mxu0 %v1864
    %v1866 = vpop.f32.mrf.mxu0
    %v1867 = vadd.f32 %v1822, %v1866
    %1868 = vdwg.mxu0
    %1869 = vmatpush.msra.mxu0 0.0
    %1870 = vmatpush.msra.mxu0 0.0
    %1871 = vmatpush.msra.mxu0 0.0
    %1872 = vmatpush.msra.mxu0 0.0
    %1873 = vmatpush.msra.mxu0 0.0
    %1874 = vmatpush.msra.mxu0 0.0
    %1875 = vmatpush.msra.mxu0 0.0
    %1876 = vmatpush.msra.mxu0 0.0
    %1877 = vmatpush.msra.mxu0 0.0
    %1878 = vmatpush.msra.mxu0 0.0
    %1879 = vmatpush.msra.mxu0 0.0
    %1880 = vmatpush.msra.mxu0 0.0
    %v1881 = vand.u32 %v1713, 4294901760
    %1882 = vmatpush.msra.mxu0 %v1881
    %v1883 = vand.u32 %v1711, 4294901760
    %1884 = vmatpush.msra.mxu0 %v1883
    %v1885 = vand.u32 %v1709, 4294901760
    %1886 = vmatpush.msra.mxu0 %v1885
    %v1887 = vand.u32 %v1707, 4294901760
    %1888 = vmatpush.msra.mxu0 %v1887
    %v1889 = vand.u32 %v1087, 4294901760
    %v1890 = vsub.f32 %v1087, %v1889
    %v1891 = vand.u32 %v1890, 4294901760
    %1892 = vmatmul.f32.gmra.mxu0 %v1891
    %v1893 = vpop.f32.mrf.mxu0
    %v1894 = vadd.f32 %v1852, %v1893
    %v1895 = vand.u32 %v1090, 4294901760
    %v1896 = vsub.f32 %v1090, %v1895
    %v1897 = vand.u32 %v1896, 4294901760
    %1898 = vmatmul.f32.gmra.mxu0 %v1897
    %v1899 = vpop.f32.mrf.mxu0
    %v1900 = vadd.f32 %v1857, %v1899
    %v1901 = vand.u32 %v1093, 4294901760
    %v1902 = vsub.f32 %v1093, %v1901
    %v1903 = vand.u32 %v1902, 4294901760
    %1904 = vmatmul.f32.gmra.mxu0 %v1903
    %v1905 = vpop.f32.mrf.mxu0
    %v1906 = vadd.f32 %v1862, %v1905
    %v1907 = vand.u32 %v1096, 4294901760
    %v1908 = vsub.f32 %v1096, %v1907
    %v1909 = vand.u32 %v1908, 4294901760
    %1910 = vmatmul.f32.gmra.mxu0 %v1909
    %v1911 = vpop.f32.mrf.mxu0
    %v1912 = vadd.f32 %v1867, %v1911
    %1913 = vdwg.mxu0
    %1914 = vmatpush.msra.mxu0 0.0
    %1915 = vmatpush.msra.mxu0 0.0
    %1916 = vmatpush.msra.mxu0 0.0
    %1917 = vmatpush.msra.mxu0 0.0
    %1918 = vmatpush.msra.mxu0 0.0
    %1919 = vmatpush.msra.mxu0 0.0
    %1920 = vmatpush.msra.mxu0 0.0
    %1921 = vmatpush.msra.mxu0 0.0
    %1922 = vmatpush.msra.mxu0 0.0
    %1923 = vmatpush.msra.mxu0 0.0
    %1924 = vmatpush.msra.mxu0 0.0
    %1925 = vmatpush.msra.mxu0 0.0
    %v1926 = vand.u32 %v1713, 4294901760
    %v1927 = vsub.f32 %v1713, %v1926
    %v1928 = vand.u32 %v1927, 4294901760
    %1929 = vmatpush.msra.mxu0 %v1928
    %v1930 = vand.u32 %v1711, 4294901760
    %v1931 = vsub.f32 %v1711, %v1930
    %v1932 = vand.u32 %v1931, 4294901760
    %1933 = vmatpush.msra.mxu0 %v1932
    %v1934 = vand.u32 %v1709, 4294901760
    %v1935 = vsub.f32 %v1709, %v1934
    %v1936 = vand.u32 %v1935, 4294901760
    %1937 = vmatpush.msra.mxu0 %v1936
    %v1938 = vand.u32 %v1707, 4294901760
    %v1939 = vsub.f32 %v1707, %v1938
    %v1940 = vand.u32 %v1939, 4294901760
    %1941 = vmatpush.msra.mxu0 %v1940
    %v1942 = vand.u32 %v1087, 4294901760
    %1943 = vmatmul.f32.gmra.mxu0 %v1942
    %v1944 = vpop.f32.mrf.mxu0
    %v1945 = vadd.f32 %v1894, %v1944
    %v1946 = vand.u32 %v1090, 4294901760
    %1947 = vmatmul.f32.gmra.mxu0 %v1946
    %v1948 = vpop.f32.mrf.mxu0
    %v1949 = vadd.f32 %v1900, %v1948
    %v1950 = vand.u32 %v1093, 4294901760
    %1951 = vmatmul.f32.gmra.mxu0 %v1950
    %v1952 = vpop.f32.mrf.mxu0
    %v1953 = vadd.f32 %v1906, %v1952
    %v1954 = vand.u32 %v1096, 4294901760
    %1955 = vmatmul.f32.gmra.mxu0 %v1954
    %v1956 = vpop.f32.mrf.mxu0
    %v1957 = vadd.f32 %v1912, %v1956
    %1958 = vdwg.mxu0
    %1959 = vmatpush.msra.mxu0 0.0
    %1960 = vmatpush.msra.mxu0 0.0
    %1961 = vmatpush.msra.mxu0 0.0
    %1962 = vmatpush.msra.mxu0 0.0
    %1963 = vmatpush.msra.mxu0 0.0
    %1964 = vmatpush.msra.mxu0 0.0
    %1965 = vmatpush.msra.mxu0 0.0
    %1966 = vmatpush.msra.mxu0 0.0
    %1967 = vmatpush.msra.mxu0 0.0
    %1968 = vmatpush.msra.mxu0 0.0
    %1969 = vmatpush.msra.mxu0 0.0
    %1970 = vmatpush.msra.mxu0 0.0
    %v1971 = vand.u32 %v1713, 4294901760
    %1972 = vmatpush.msra.mxu0 %v1971
    %v1973 = vand.u32 %v1711, 4294901760
    %1974 = vmatpush.msra.mxu0 %v1973
    %v1975 = vand.u32 %v1709, 4294901760
    %1976 = vmatpush.msra.mxu0 %v1975
    %v1977 = vand.u32 %v1707, 4294901760
    %1978 = vmatpush.msra.mxu0 %v1977
    %v1979 = vand.u32 %v1087, 4294901760
    %1980 = vmatmul.f32.gmra.mxu0 %v1979
    %v1981 = vpop.f32.mrf.mxu0
    %v1982 = vadd.f32 %v1945, %v1981
    %v1983 = vand.u32 %v1090, 4294901760
    %1984 = vmatmul.f32.gmra.mxu0 %v1983
    %v1985 = vpop.f32.mrf.mxu0
    %v1986 = vadd.f32 %v1949, %v1985
    %v1987 = vand.u32 %v1093, 4294901760
    %1988 = vmatmul.f32.gmra.mxu0 %v1987
    %v1989 = vpop.f32.mrf.mxu0
    %v1990 = vadd.f32 %v1953, %v1989
    %v1991 = vand.u32 %v1096, 4294901760
    %1992 = vmatmul.f32.gmra.mxu0 %v1991
    %v1993 = vpop.f32.mrf.mxu0
    %v1994 = vadd.f32 %v1957, %v1993
    %1995 = vdwg.mxu0
    %v1996 = vadd.s32 %v892, 32
    %v1997 = vadd.s32 %v892, 40
    %v1998 = vadd.s32 %v892, 48
    %v1999 = vadd.s32 %v892, 56
    %v2000 = vadd.s32 %v892, 64
    %v2001 = vadd.s32 %v892, 72
    %v2002 = vadd.s32 %v892, 80
    %v2003 = vadd.s32 %v892, 88
    %v2004 = vadd.s32 %v892, 96
    %v2005 = vadd.s32 %v892, 104
    %v2006 = vadd.s32 %v892, 112
    %v2007 = vadd.s32 %v892, 120
    %v2008 = vlaneseq
    %v2009 = vand.u32 %v2008, 127
    %v2010 = vshra.s32 %v892, 2
    %v2011 = vshra.s32 %v893, 2
    %v2012 = vshra.s32 %v894, 2
    %v2013 = vshra.s32 %v895, 2
    %v2014 = vshra.s32 %v1996, 2
    %v2015 = vshra.s32 %v1997, 2
    %v2016 = vshra.s32 %v1998, 2
    %v2017 = vshra.s32 %v1999, 2
    %v2018 = vshra.s32 %v2000, 2
    %v2019 = vshra.s32 %v2001, 2
    %v2020 = vshra.s32 %v2002, 2
    %v2021 = vshra.s32 %v2003, 2
    %v2022 = vshra.s32 %v2004, 2
    %v2023 = vshra.s32 %v2005, 2
    %v2024 = vshra.s32 %v2006, 2
    %v2025 = vshra.s32 %v2007, 2
    %v2026 = vand.u32 %v2010, 3
    %v2027 = vand.u32 %v2011, 3
    %v2028 = vand.u32 %v2012, 3
    %v2029 = vand.u32 %v2013, 3
    %v2030 = vand.u32 %v2014, 3
    %v2031 = vand.u32 %v2015, 3
    %v2032 = vand.u32 %v2016, 3
    %v2033 = vand.u32 %v2017, 3
    %v2034 = vand.u32 %v2018, 3
    %v2035 = vand.u32 %v2019, 3
    %v2036 = vand.u32 %v2020, 3
    %v2037 = vand.u32 %v2021, 3
    %v2038 = vand.u32 %v2022, 3
    %v2039 = vand.u32 %v2023, 3
    %v2040 = vand.u32 %v2024, 3
    %v2041 = vand.u32 %v2025, 3
    %v2042 = vshra.s32 %v892, 4
    %v2043 = vshra.s32 %v893, 4
    %v2044 = vshra.s32 %v894, 4
    %v2045 = vshra.s32 %v895, 4
    %v2046 = vshra.s32 %v1996, 4
    %v2047 = vshra.s32 %v1997, 4
    %v2048 = vshra.s32 %v1998, 4
    %v2049 = vshra.s32 %v1999, 4
    %v2050 = vshra.s32 %v2000, 4
    %v2051 = vshra.s32 %v2001, 4
    %v2052 = vshra.s32 %v2002, 4
    %v2053 = vshra.s32 %v2003, 4
    %v2054 = vshra.s32 %v2004, 4
    %v2055 = vshra.s32 %v2005, 4
    %v2056 = vshra.s32 %v2006, 4
    %v2057 = vshra.s32 %v2007, 4
    %v2058 = vmul.u32 %v2026, 8
    %v2059 = vmul.u32 %v2027, 8
    %v2060 = vmul.u32 %v2028, 8
    %v2061 = vmul.u32 %v2029, 8
    %v2062 = vmul.u32 %v2030, 8
    %v2063 = vmul.u32 %v2031, 8
    %v2064 = vmul.u32 %v2032, 8
    %v2065 = vmul.u32 %v2033, 8
    %v2066 = vmul.u32 %v2034, 8
    %v2067 = vmul.u32 %v2035, 8
    %v2068 = vmul.u32 %v2036, 8
    %v2069 = vmul.u32 %v2037, 8
    %v2070 = vmul.u32 %v2038, 8
    %v2071 = vmul.u32 %v2039, 8
    %v2072 = vmul.u32 %v2040, 8
    %v2073 = vmul.u32 %v2041, 8
    %v2074 = vadd.s32 %v2058, %v2042
    %v2075 = vadd.s32 %v2059, %v2043
    %v2076 = vadd.s32 %v2060, %v2044
    %v2077 = vadd.s32 %v2061, %v2045
    %v2078 = vadd.s32 %v2062, %v2046
    %v2079 = vadd.s32 %v2063, %v2047
    %v2080 = vadd.s32 %v2064, %v2048
    %v2081 = vadd.s32 %v2065, %v2049
    %v2082 = vadd.s32 %v2066, %v2050
    %v2083 = vadd.s32 %v2067, %v2051
    %v2084 = vadd.s32 %v2068, %v2052
    %v2085 = vadd.s32 %v2069, %v2053
    %v2086 = vadd.s32 %v2070, %v2054
    %v2087 = vadd.s32 %v2071, %v2055
    %v2088 = vadd.s32 %v2072, %v2056
    %v2089 = vadd.s32 %v2073, %v2057
    %vm2090 = vcmp.eq.s32.totalorder %v2009, %v2074
    %vm2091 = vcmp.eq.s32.totalorder %v2009, %v2075
    %vm2092 = vcmp.eq.s32.totalorder %v2009, %v2076
    %vm2093 = vcmp.eq.s32.totalorder %v2009, %v2077
    %vm2094 = vcmp.eq.s32.totalorder %v2009, %v2078
    %vm2095 = vcmp.eq.s32.totalorder %v2009, %v2079
    %vm2096 = vcmp.eq.s32.totalorder %v2009, %v2080
    %vm2097 = vcmp.eq.s32.totalorder %v2009, %v2081
    %vm2098 = vcmp.eq.s32.totalorder %v2009, %v2082
    %vm2099 = vcmp.eq.s32.totalorder %v2009, %v2083
    %vm2100 = vcmp.eq.s32.totalorder %v2009, %v2084
    %vm2101 = vcmp.eq.s32.totalorder %v2009, %v2085
    %vm2102 = vcmp.eq.s32.totalorder %v2009, %v2086
    %vm2103 = vcmp.eq.s32.totalorder %v2009, %v2087
    %vm2104 = vcmp.eq.s32.totalorder %v2009, %v2088
    %vm2105 = vcmp.eq.s32.totalorder %v2009, %v2089
    %v2106 = vsel %vm2090, 1.0, 0.0
    %v2107 = vsel %vm2091, 1.0, 0.0
    %v2108 = vsel %vm2092, 1.0, 0.0
    %v2109 = vsel %vm2093, 1.0, 0.0
    %v2110 = vsel %vm2094, 1.0, 0.0
    %v2111 = vsel %vm2095, 1.0, 0.0
    %v2112 = vsel %vm2096, 1.0, 0.0
    %v2113 = vsel %vm2097, 1.0, 0.0
    %v2114 = vsel %vm2098, 1.0, 0.0
    %v2115 = vsel %vm2099, 1.0, 0.0
    %v2116 = vsel %vm2100, 1.0, 0.0
    %v2117 = vsel %vm2101, 1.0, 0.0
    %v2118 = vsel %vm2102, 1.0, 0.0
    %v2119 = vsel %vm2103, 1.0, 0.0
    %v2120 = vsel %vm2104, 1.0, 0.0
    %v2121 = vsel %vm2105, 1.0, 0.0
    %v2122 = vshra.s32 %v2009, 2
    %v2123 = vand.u32 %v2122, 3
    %v2124 = vshra.s32 %v2009, 4
    %v2125 = vmul.u32 %v2123, 8
    %v2126 = vadd.s32 %v2125, %v2124
    %vm2127 = vcmp.eq.s32.totalorder %v892, %v2126
    %vm2128 = vcmp.eq.s32.totalorder %v893, %v2126
    %vm2129 = vcmp.eq.s32.totalorder %v894, %v2126
    %vm2130 = vcmp.eq.s32.totalorder %v895, %v2126
    %v2131 = vsel %vm2127, 1.0, 0.0
    %v2132 = vsel %vm2128, 1.0, 0.0
    %v2133 = vsel %vm2129, 1.0, 0.0
    %v2134 = vsel %vm2130, 1.0, 0.0
    %v2135 = vand.u32 %v892, 3
    %v2136 = vand.u32 %v893, 3
    %v2137 = vand.u32 %v894, 3
    %v2138 = vand.u32 %v895, 3
    %v2139 = vand.u32 %v1996, 3
    %v2140 = vand.u32 %v1997, 3
    %v2141 = vand.u32 %v1998, 3
    %v2142 = vand.u32 %v1999, 3
    %v2143 = vand.u32 %v2000, 3
    %v2144 = vand.u32 %v2001, 3
    %v2145 = vand.u32 %v2002, 3
    %v2146 = vand.u32 %v2003, 3
    %v2147 = vand.u32 %v2004, 3
    %v2148 = vand.u32 %v2005, 3
    %v2149 = vand.u32 %v2006, 3
    %v2150 = vand.u32 %v2007, 3
    %vm2151 = vcmp.eq.s32.totalorder %v2135, %v2009
    %vm2152 = vcmp.eq.s32.totalorder %v2136, %v2009
    %vm2153 = vcmp.eq.s32.totalorder %v2137, %v2009
    %vm2154 = vcmp.eq.s32.totalorder %v2138, %v2009
    %vm2155 = vcmp.eq.s32.totalorder %v2139, %v2009
    %vm2156 = vcmp.eq.s32.totalorder %v2140, %v2009
    %vm2157 = vcmp.eq.s32.totalorder %v2141, %v2009
    %vm2158 = vcmp.eq.s32.totalorder %v2142, %v2009
    %vm2159 = vcmp.eq.s32.totalorder %v2143, %v2009
    %vm2160 = vcmp.eq.s32.totalorder %v2144, %v2009
    %vm2161 = vcmp.eq.s32.totalorder %v2145, %v2009
    %vm2162 = vcmp.eq.s32.totalorder %v2146, %v2009
    %vm2163 = vcmp.eq.s32.totalorder %v2147, %v2009
    %vm2164 = vcmp.eq.s32.totalorder %v2148, %v2009
    %vm2165 = vcmp.eq.s32.totalorder %v2149, %v2009
    %vm2166 = vcmp.eq.s32.totalorder %v2150, %v2009
    %v2167 = vsel %vm2151, 1.0, 0.0
    %v2168 = vsel %vm2152, 1.0, 0.0
    %v2169 = vsel %vm2153, 1.0, 0.0
    %v2170 = vsel %vm2154, 1.0, 0.0
    %v2171 = vsel %vm2155, 1.0, 0.0
    %v2172 = vsel %vm2156, 1.0, 0.0
    %v2173 = vsel %vm2157, 1.0, 0.0
    %v2174 = vsel %vm2158, 1.0, 0.0
    %v2175 = vsel %vm2159, 1.0, 0.0
    %v2176 = vsel %vm2160, 1.0, 0.0
    %v2177 = vsel %vm2161, 1.0, 0.0
    %v2178 = vsel %vm2162, 1.0, 0.0
    %v2179 = vsel %vm2163, 1.0, 0.0
    %v2180 = vsel %vm2164, 1.0, 0.0
    %v2181 = vsel %vm2165, 1.0, 0.0
    %v2182 = vsel %vm2166, 1.0, 0.0
    %v2184 = vsel %vm1085, %v2106, 0
    %v2187 = vsel %vm1085, %v2107, 0
    %v2190 = vsel %vm1085, %v2108, 0
    %v2193 = vsel %vm1085, %v2109, 0
    %v2196 = vsel %vm1085, %v2110, 0
    %v2199 = vsel %vm1085, %v2111, 0
    %v2202 = vsel %vm1085, %v2112, 0
    %v2205 = vsel %vm1085, %v2113, 0
    %v2208 = vsel %vm1085, %v2114, 0
    %v2211 = vsel %vm1085, %v2115, 0
    %v2214 = vsel %vm1085, %v2116, 0
    %v2217 = vsel %vm1085, %v2117, 0
    %v2220 = vsel %vm1085, %v2118, 0
    %v2223 = vsel %vm1085, %v2119, 0
    %v2226 = vsel %vm1085, %v2120, 0
    %v2229 = vsel %vm1085, %v2121, 0
    %2231 = vmatpush.msra.mxu0 0.0
    %2232 = vmatpush.msra.mxu0 0.0
    %2233 = vmatpush.msra.mxu0 0.0
    %2234 = vmatpush.msra.mxu0 0.0
    %2235 = vmatpush.msra.mxu0 0.0
    %2236 = vmatpush.msra.mxu0 0.0
    %2237 = vmatpush.msra.mxu0 0.0
    %2238 = vmatpush.msra.mxu0 0.0
    %2239 = vmatpush.msra.mxu0 0.0
    %2240 = vmatpush.msra.mxu0 0.0
    %2241 = vmatpush.msra.mxu0 0.0
    %2242 = vmatpush.msra.mxu0 0.0
    %v2243 = vand.u32 %v1411, 4294901760
    %2244 = vmatpush.msra.mxu0 %v2243
    %v2245 = vand.u32 %v1410, 4294901760
    %2246 = vmatpush.msra.mxu0 %v2245
    %v2247 = vand.u32 %v1409, 4294901760
    %2248 = vmatpush.msra.mxu0 %v2247
    %v2249 = vand.u32 %v1408, 4294901760
    %2250 = vmatpush.msra.mxu0 %v2249
    %v2251 = vand.u32 %v2184, 4294901760
    %v2252 = vsub.f32 %v2184, %v2251
    %v2253 = vand.u32 %v2252, 4294901760
    %v2254 = vsub.f32 %v2252, %v2253
    %v2255 = vand.u32 %v2254, 4294901760
    %2256 = vmatmul.f32.gmra.mxu0 %v2255
    %v2257 = vpop.f32.mrf.mxu0
    %v2258 = vadd.f32 0.0, %v2257
    %v2259 = vand.u32 %v2187, 4294901760
    %v2260 = vsub.f32 %v2187, %v2259
    %v2261 = vand.u32 %v2260, 4294901760
    %v2262 = vsub.f32 %v2260, %v2261
    %v2263 = vand.u32 %v2262, 4294901760
    %2264 = vmatmul.f32.gmra.mxu0 %v2263
    %v2265 = vpop.f32.mrf.mxu0
    %v2266 = vadd.f32 0.0, %v2265
    %v2267 = vand.u32 %v2190, 4294901760
    %v2268 = vsub.f32 %v2190, %v2267
    %v2269 = vand.u32 %v2268, 4294901760
    %v2270 = vsub.f32 %v2268, %v2269
    %v2271 = vand.u32 %v2270, 4294901760
    %2272 = vmatmul.f32.gmra.mxu0 %v2271
    %v2273 = vpop.f32.mrf.mxu0
    %v2274 = vadd.f32 0.0, %v2273
    %v2275 = vand.u32 %v2193, 4294901760
    %v2276 = vsub.f32 %v2193, %v2275
    %v2277 = vand.u32 %v2276, 4294901760
    %v2278 = vsub.f32 %v2276, %v2277
    %v2279 = vand.u32 %v2278, 4294901760
    %2280 = vmatmul.f32.gmra.mxu0 %v2279
    %v2281 = vpop.f32.mrf.mxu0
    %v2282 = vadd.f32 0.0, %v2281
    %v2283 = vand.u32 %v2196, 4294901760
    %v2284 = vsub.f32 %v2196, %v2283
    %v2285 = vand.u32 %v2284, 4294901760
    %v2286 = vsub.f32 %v2284, %v2285
    %v2287 = vand.u32 %v2286, 4294901760
    %2288 = vmatmul.f32.gmra.mxu0 %v2287
    %v2289 = vpop.f32.mrf.mxu0
    %v2290 = vadd.f32 0.0, %v2289
    %v2291 = vand.u32 %v2199, 4294901760
    %v2292 = vsub.f32 %v2199, %v2291
    %v2293 = vand.u32 %v2292, 4294901760
    %v2294 = vsub.f32 %v2292, %v2293
    %v2295 = vand.u32 %v2294, 4294901760
    %2296 = vmatmul.f32.gmra.mxu0 %v2295
    %v2297 = vpop.f32.mrf.mxu0
    %v2298 = vadd.f32 0.0, %v2297
    %v2299 = vand.u32 %v2202, 4294901760
    %v2300 = vsub.f32 %v2202, %v2299
    %v2301 = vand.u32 %v2300, 4294901760
    %v2302 = vsub.f32 %v2300, %v2301
    %v2303 = vand.u32 %v2302, 4294901760
    %2304 = vmatmul.f32.gmra.mxu0 %v2303
    %v2305 = vpop.f32.mrf.mxu0
    %v2306 = vadd.f32 0.0, %v2305
    %v2307 = vand.u32 %v2205, 4294901760
    %v2308 = vsub.f32 %v2205, %v2307
    %v2309 = vand.u32 %v2308, 4294901760
    %v2310 = vsub.f32 %v2308, %v2309
    %v2311 = vand.u32 %v2310, 4294901760
    %2312 = vmatmul.f32.gmra.mxu0 %v2311
    %v2313 = vpop.f32.mrf.mxu0
    %v2314 = vadd.f32 0.0, %v2313
    %v2315 = vand.u32 %v2208, 4294901760
    %v2316 = vsub.f32 %v2208, %v2315
    %v2317 = vand.u32 %v2316, 4294901760
    %v2318 = vsub.f32 %v2316, %v2317
    %v2319 = vand.u32 %v2318, 4294901760
    %2320 = vmatmul.f32.gmra.mxu0 %v2319
    %v2321 = vpop.f32.mrf.mxu0
    %v2322 = vadd.f32 0.0, %v2321
    %v2323 = vand.u32 %v2211, 4294901760
    %v2324 = vsub.f32 %v2211, %v2323
    %v2325 = vand.u32 %v2324, 4294901760
    %v2326 = vsub.f32 %v2324, %v2325
    %v2327 = vand.u32 %v2326, 4294901760
    %2328 = vmatmul.f32.gmra.mxu0 %v2327
    %v2329 = vpop.f32.mrf.mxu0
    %v2330 = vadd.f32 0.0, %v2329
    %v2331 = vand.u32 %v2214, 4294901760
    %v2332 = vsub.f32 %v2214, %v2331
    %v2333 = vand.u32 %v2332, 4294901760
    %v2334 = vsub.f32 %v2332, %v2333
    %v2335 = vand.u32 %v2334, 4294901760
    %2336 = vmatmul.f32.gmra.mxu0 %v2335
    %v2337 = vpop.f32.mrf.mxu0
    %v2338 = vadd.f32 0.0, %v2337
    %v2339 = vand.u32 %v2217, 4294901760
    %v2340 = vsub.f32 %v2217, %v2339
    %v2341 = vand.u32 %v2340, 4294901760
    %v2342 = vsub.f32 %v2340, %v2341
    %v2343 = vand.u32 %v2342, 4294901760
    %2344 = vmatmul.f32.gmra.mxu0 %v2343
    %v2345 = vpop.f32.mrf.mxu0
    %v2346 = vadd.f32 0.0, %v2345
    %v2347 = vand.u32 %v2220, 4294901760
    %v2348 = vsub.f32 %v2220, %v2347
    %v2349 = vand.u32 %v2348, 4294901760
    %v2350 = vsub.f32 %v2348, %v2349
    %v2351 = vand.u32 %v2350, 4294901760
    %2352 = vmatmul.f32.gmra.mxu0 %v2351
    %v2353 = vpop.f32.mrf.mxu0
    %v2354 = vadd.f32 0.0, %v2353
    %v2355 = vand.u32 %v2223, 4294901760
    %v2356 = vsub.f32 %v2223, %v2355
    %v2357 = vand.u32 %v2356, 4294901760
    %v2358 = vsub.f32 %v2356, %v2357
    %v2359 = vand.u32 %v2358, 4294901760
    %2360 = vmatmul.f32.gmra.mxu0 %v2359
    %v2361 = vpop.f32.mrf.mxu0
    %v2362 = vadd.f32 0.0, %v2361
    %v2363 = vand.u32 %v2226, 4294901760
    %v2364 = vsub.f32 %v2226, %v2363
    %v2365 = vand.u32 %v2364, 4294901760
    %v2366 = vsub.f32 %v2364, %v2365
    %v2367 = vand.u32 %v2366, 4294901760
    %2368 = vmatmul.f32.gmra.mxu0 %v2367
    %v2369 = vpop.f32.mrf.mxu0
    %v2370 = vadd.f32 0.0, %v2369
    %v2371 = vand.u32 %v2229, 4294901760
    %v2372 = vsub.f32 %v2229, %v2371
    %v2373 = vand.u32 %v2372, 4294901760
    %v2374 = vsub.f32 %v2372, %v2373
    %v2375 = vand.u32 %v2374, 4294901760
    %2376 = vmatmul.f32.gmra.mxu0 %v2375
    %v2377 = vpop.f32.mrf.mxu0
    %v2378 = vadd.f32 0.0, %v2377
    %2379 = vdwg.mxu0
    %2380 = vmatpush.msra.mxu0 0.0
    %2381 = vmatpush.msra.mxu0 0.0
    %2382 = vmatpush.msra.mxu0 0.0
    %2383 = vmatpush.msra.mxu0 0.0
    %2384 = vmatpush.msra.mxu0 0.0
    %2385 = vmatpush.msra.mxu0 0.0
    %2386 = vmatpush.msra.mxu0 0.0
    %2387 = vmatpush.msra.mxu0 0.0
    %2388 = vmatpush.msra.mxu0 0.0
    %2389 = vmatpush.msra.mxu0 0.0
    %2390 = vmatpush.msra.mxu0 0.0
    %2391 = vmatpush.msra.mxu0 0.0
    %v2392 = vand.u32 %v1411, 4294901760
    %v2393 = vsub.f32 %v1411, %v2392
    %v2394 = vand.u32 %v2393, 4294901760
    %v2395 = vsub.f32 %v2393, %v2394
    %v2396 = vand.u32 %v2395, 4294901760
    %2397 = vmatpush.msra.mxu0 %v2396
    %v2398 = vand.u32 %v1410, 4294901760
    %v2399 = vsub.f32 %v1410, %v2398
    %v2400 = vand.u32 %v2399, 4294901760
    %v2401 = vsub.f32 %v2399, %v2400
    %v2402 = vand.u32 %v2401, 4294901760
    %2403 = vmatpush.msra.mxu0 %v2402
    %v2404 = vand.u32 %v1409, 4294901760
    %v2405 = vsub.f32 %v1409, %v2404
    %v2406 = vand.u32 %v2405, 4294901760
    %v2407 = vsub.f32 %v2405, %v2406
    %v2408 = vand.u32 %v2407, 4294901760
    %2409 = vmatpush.msra.mxu0 %v2408
    %v2410 = vand.u32 %v1408, 4294901760
    %v2411 = vsub.f32 %v1408, %v2410
    %v2412 = vand.u32 %v2411, 4294901760
    %v2413 = vsub.f32 %v2411, %v2412
    %v2414 = vand.u32 %v2413, 4294901760
    %2415 = vmatpush.msra.mxu0 %v2414
    %v2416 = vand.u32 %v2184, 4294901760
    %2417 = vmatmul.f32.gmra.mxu0 %v2416
    %v2418 = vpop.f32.mrf.mxu0
    %v2419 = vadd.f32 %v2258, %v2418
    %v2420 = vand.u32 %v2187, 4294901760
    %2421 = vmatmul.f32.gmra.mxu0 %v2420
    %v2422 = vpop.f32.mrf.mxu0
    %v2423 = vadd.f32 %v2266, %v2422
    %v2424 = vand.u32 %v2190, 4294901760
    %2425 = vmatmul.f32.gmra.mxu0 %v2424
    %v2426 = vpop.f32.mrf.mxu0
    %v2427 = vadd.f32 %v2274, %v2426
    %v2428 = vand.u32 %v2193, 4294901760
    %2429 = vmatmul.f32.gmra.mxu0 %v2428
    %v2430 = vpop.f32.mrf.mxu0
    %v2431 = vadd.f32 %v2282, %v2430
    %v2432 = vand.u32 %v2196, 4294901760
    %2433 = vmatmul.f32.gmra.mxu0 %v2432
    %v2434 = vpop.f32.mrf.mxu0
    %v2435 = vadd.f32 %v2290, %v2434
    %v2436 = vand.u32 %v2199, 4294901760
    %2437 = vmatmul.f32.gmra.mxu0 %v2436
    %v2438 = vpop.f32.mrf.mxu0
    %v2439 = vadd.f32 %v2298, %v2438
    %v2440 = vand.u32 %v2202, 4294901760
    %2441 = vmatmul.f32.gmra.mxu0 %v2440
    %v2442 = vpop.f32.mrf.mxu0
    %v2443 = vadd.f32 %v2306, %v2442
    %v2444 = vand.u32 %v2205, 4294901760
    %2445 = vmatmul.f32.gmra.mxu0 %v2444
    %v2446 = vpop.f32.mrf.mxu0
    %v2447 = vadd.f32 %v2314, %v2446
    %v2448 = vand.u32 %v2208, 4294901760
    %2449 = vmatmul.f32.gmra.mxu0 %v2448
    %v2450 = vpop.f32.mrf.mxu0
    %v2451 = vadd.f32 %v2322, %v2450
    %v2452 = vand.u32 %v2211, 4294901760
    %2453 = vmatmul.f32.gmra.mxu0 %v2452
    %v2454 = vpop.f32.mrf.mxu0
    %v2455 = vadd.f32 %v2330, %v2454
    %v2456 = vand.u32 %v2214, 4294901760
    %2457 = vmatmul.f32.gmra.mxu0 %v2456
    %v2458 = vpop.f32.mrf.mxu0
    %v2459 = vadd.f32 %v2338, %v2458
    %v2460 = vand.u32 %v2217, 4294901760
    %2461 = vmatmul.f32.gmra.mxu0 %v2460
    %v2462 = vpop.f32.mrf.mxu0
    %v2463 = vadd.f32 %v2346, %v2462
    %v2464 = vand.u32 %v2220, 4294901760
    %2465 = vmatmul.f32.gmra.mxu0 %v2464
    %v2466 = vpop.f32.mrf.mxu0
    %v2467 = vadd.f32 %v2354, %v2466
    %v2468 = vand.u32 %v2223, 4294901760
    %2469 = vmatmul.f32.gmra.mxu0 %v2468
    %v2470 = vpop.f32.mrf.mxu0
    %v2471 = vadd.f32 %v2362, %v2470
    %v2472 = vand.u32 %v2226, 4294901760
    %2473 = vmatmul.f32.gmra.mxu0 %v2472
    %v2474 = vpop.f32.mrf.mxu0
    %v2475 = vadd.f32 %v2370, %v2474
    %v2476 = vand.u32 %v2229, 4294901760
    %2477 = vmatmul.f32.gmra.mxu0 %v2476
    %v2478 = vpop.f32.mrf.mxu0
    %v2479 = vadd.f32 %v2378, %v2478
    %2480 = vdwg.mxu0
    %2481 = vmatpush.msra.mxu0 0.0
    %2482 = vmatpush.msra.mxu0 0.0
    %2483 = vmatpush.msra.mxu0 0.0
    %2484 = vmatpush.msra.mxu0 0.0
    %2485 = vmatpush.msra.mxu0 0.0
    %2486 = vmatpush.msra.mxu0 0.0
    %2487 = vmatpush.msra.mxu0 0.0
    %2488 = vmatpush.msra.mxu0 0.0
    %2489 = vmatpush.msra.mxu0 0.0
    %2490 = vmatpush.msra.mxu0 0.0
    %2491 = vmatpush.msra.mxu0 0.0
    %2492 = vmatpush.msra.mxu0 0.0
    %v2493 = vand.u32 %v1411, 4294901760
    %v2494 = vsub.f32 %v1411, %v2493
    %2495 = vmatpush.msra.mxu0 %v2494
    %v2496 = vand.u32 %v1410, 4294901760
    %v2497 = vsub.f32 %v1410, %v2496
    %2498 = vmatpush.msra.mxu0 %v2497
    %v2499 = vand.u32 %v1409, 4294901760
    %v2500 = vsub.f32 %v1409, %v2499
    %2501 = vmatpush.msra.mxu0 %v2500
    %v2502 = vand.u32 %v1408, 4294901760
    %v2503 = vsub.f32 %v1408, %v2502
    %2504 = vmatpush.msra.mxu0 %v2503
    %v2505 = vand.u32 %v2184, 4294901760
    %v2506 = vsub.f32 %v2184, %v2505
    %2507 = vmatmul.f32.gmra.mxu0 %v2506
    %v2508 = vpop.f32.mrf.mxu0
    %v2509 = vadd.f32 %v2419, %v2508
    %v2510 = vand.u32 %v2187, 4294901760
    %v2511 = vsub.f32 %v2187, %v2510
    %2512 = vmatmul.f32.gmra.mxu0 %v2511
    %v2513 = vpop.f32.mrf.mxu0
    %v2514 = vadd.f32 %v2423, %v2513
    %v2515 = vand.u32 %v2190, 4294901760
    %v2516 = vsub.f32 %v2190, %v2515
    %2517 = vmatmul.f32.gmra.mxu0 %v2516
    %v2518 = vpop.f32.mrf.mxu0
    %v2519 = vadd.f32 %v2427, %v2518
    %v2520 = vand.u32 %v2193, 4294901760
    %v2521 = vsub.f32 %v2193, %v2520
    %2522 = vmatmul.f32.gmra.mxu0 %v2521
    %v2523 = vpop.f32.mrf.mxu0
    %v2524 = vadd.f32 %v2431, %v2523
    %v2525 = vand.u32 %v2196, 4294901760
    %v2526 = vsub.f32 %v2196, %v2525
    %2527 = vmatmul.f32.gmra.mxu0 %v2526
    %v2528 = vpop.f32.mrf.mxu0
    %v2529 = vadd.f32 %v2435, %v2528
    %v2530 = vand.u32 %v2199, 4294901760
    %v2531 = vsub.f32 %v2199, %v2530
    %2532 = vmatmul.f32.gmra.mxu0 %v2531
    %v2533 = vpop.f32.mrf.mxu0
    %v2534 = vadd.f32 %v2439, %v2533
    %v2535 = vand.u32 %v2202, 4294901760
    %v2536 = vsub.f32 %v2202, %v2535
    %2537 = vmatmul.f32.gmra.mxu0 %v2536
    %v2538 = vpop.f32.mrf.mxu0
    %v2539 = vadd.f32 %v2443, %v2538
    %v2540 = vand.u32 %v2205, 4294901760
    %v2541 = vsub.f32 %v2205, %v2540
    %2542 = vmatmul.f32.gmra.mxu0 %v2541
    %v2543 = vpop.f32.mrf.mxu0
    %v2544 = vadd.f32 %v2447, %v2543
    %v2545 = vand.u32 %v2208, 4294901760
    %v2546 = vsub.f32 %v2208, %v2545
    %2547 = vmatmul.f32.gmra.mxu0 %v2546
    %v2548 = vpop.f32.mrf.mxu0
    %v2549 = vadd.f32 %v2451, %v2548
    %v2550 = vand.u32 %v2211, 4294901760
    %v2551 = vsub.f32 %v2211, %v2550
    %2552 = vmatmul.f32.gmra.mxu0 %v2551
    %v2553 = vpop.f32.mrf.mxu0
    %v2554 = vadd.f32 %v2455, %v2553
    %v2555 = vand.u32 %v2214, 4294901760
    %v2556 = vsub.f32 %v2214, %v2555
    %2557 = vmatmul.f32.gmra.mxu0 %v2556
    %v2558 = vpop.f32.mrf.mxu0
    %v2559 = vadd.f32 %v2459, %v2558
    %v2560 = vand.u32 %v2217, 4294901760
    %v2561 = vsub.f32 %v2217, %v2560
    %2562 = vmatmul.f32.gmra.mxu0 %v2561
    %v2563 = vpop.f32.mrf.mxu0
    %v2564 = vadd.f32 %v2463, %v2563
    %v2565 = vand.u32 %v2220, 4294901760
    %v2566 = vsub.f32 %v2220, %v2565
    %2567 = vmatmul.f32.gmra.mxu0 %v2566
    %v2568 = vpop.f32.mrf.mxu0
    %v2569 = vadd.f32 %v2467, %v2568
    %v2570 = vand.u32 %v2223, 4294901760
    %v2571 = vsub.f32 %v2223, %v2570
    %2572 = vmatmul.f32.gmra.mxu0 %v2571
    %v2573 = vpop.f32.mrf.mxu0
    %v2574 = vadd.f32 %v2471, %v2573
    %v2575 = vand.u32 %v2226, 4294901760
    %v2576 = vsub.f32 %v2226, %v2575
    %2577 = vmatmul.f32.gmra.mxu0 %v2576
    %v2578 = vpop.f32.mrf.mxu0
    %v2579 = vadd.f32 %v2475, %v2578
    %v2580 = vand.u32 %v2229, 4294901760
    %v2581 = vsub.f32 %v2229, %v2580
    %2582 = vmatmul.f32.gmra.mxu0 %v2581
    %v2583 = vpop.f32.mrf.mxu0
    %v2584 = vadd.f32 %v2479, %v2583
    %2585 = vdwg.mxu0
    %2586 = vmatpush.msra.mxu0 0.0
    %2587 = vmatpush.msra.mxu0 0.0
    %2588 = vmatpush.msra.mxu0 0.0
    %2589 = vmatpush.msra.mxu0 0.0
    %2590 = vmatpush.msra.mxu0 0.0
    %2591 = vmatpush.msra.mxu0 0.0
    %2592 = vmatpush.msra.mxu0 0.0
    %2593 = vmatpush.msra.mxu0 0.0
    %2594 = vmatpush.msra.mxu0 0.0
    %2595 = vmatpush.msra.mxu0 0.0
    %2596 = vmatpush.msra.mxu0 0.0
    %2597 = vmatpush.msra.mxu0 0.0
    %v2598 = vand.u32 %v1411, 4294901760
    %2599 = vmatpush.msra.mxu0 %v2598
    %v2600 = vand.u32 %v1410, 4294901760
    %2601 = vmatpush.msra.mxu0 %v2600
    %v2602 = vand.u32 %v1409, 4294901760
    %2603 = vmatpush.msra.mxu0 %v2602
    %v2604 = vand.u32 %v1408, 4294901760
    %2605 = vmatpush.msra.mxu0 %v2604
    %v2606 = vand.u32 %v2184, 4294901760
    %v2607 = vsub.f32 %v2184, %v2606
    %v2608 = vand.u32 %v2607, 4294901760
    %2609 = vmatmul.f32.gmra.mxu0 %v2608
    %v2610 = vpop.f32.mrf.mxu0
    %v2611 = vadd.f32 %v2509, %v2610
    %v2612 = vand.u32 %v2187, 4294901760
    %v2613 = vsub.f32 %v2187, %v2612
    %v2614 = vand.u32 %v2613, 4294901760
    %2615 = vmatmul.f32.gmra.mxu0 %v2614
    %v2616 = vpop.f32.mrf.mxu0
    %v2617 = vadd.f32 %v2514, %v2616
    %v2618 = vand.u32 %v2190, 4294901760
    %v2619 = vsub.f32 %v2190, %v2618
    %v2620 = vand.u32 %v2619, 4294901760
    %2621 = vmatmul.f32.gmra.mxu0 %v2620
    %v2622 = vpop.f32.mrf.mxu0
    %v2623 = vadd.f32 %v2519, %v2622
    %v2624 = vand.u32 %v2193, 4294901760
    %v2625 = vsub.f32 %v2193, %v2624
    %v2626 = vand.u32 %v2625, 4294901760
    %2627 = vmatmul.f32.gmra.mxu0 %v2626
    %v2628 = vpop.f32.mrf.mxu0
    %v2629 = vadd.f32 %v2524, %v2628
    %v2630 = vand.u32 %v2196, 4294901760
    %v2631 = vsub.f32 %v2196, %v2630
    %v2632 = vand.u32 %v2631, 4294901760
    %2633 = vmatmul.f32.gmra.mxu0 %v2632
    %v2634 = vpop.f32.mrf.mxu0
    %v2635 = vadd.f32 %v2529, %v2634
    %v2636 = vand.u32 %v2199, 4294901760
    %v2637 = vsub.f32 %v2199, %v2636
    %v2638 = vand.u32 %v2637, 4294901760
    %2639 = vmatmul.f32.gmra.mxu0 %v2638
    %v2640 = vpop.f32.mrf.mxu0
    %v2641 = vadd.f32 %v2534, %v2640
    %v2642 = vand.u32 %v2202, 4294901760
    %v2643 = vsub.f32 %v2202, %v2642
    %v2644 = vand.u32 %v2643, 4294901760
    %2645 = vmatmul.f32.gmra.mxu0 %v2644
    %v2646 = vpop.f32.mrf.mxu0
    %v2647 = vadd.f32 %v2539, %v2646
    %v2648 = vand.u32 %v2205, 4294901760
    %v2649 = vsub.f32 %v2205, %v2648
    %v2650 = vand.u32 %v2649, 4294901760
    %2651 = vmatmul.f32.gmra.mxu0 %v2650
    %v2652 = vpop.f32.mrf.mxu0
    %v2653 = vadd.f32 %v2544, %v2652
    %v2654 = vand.u32 %v2208, 4294901760
    %v2655 = vsub.f32 %v2208, %v2654
    %v2656 = vand.u32 %v2655, 4294901760
    %2657 = vmatmul.f32.gmra.mxu0 %v2656
    %v2658 = vpop.f32.mrf.mxu0
    %v2659 = vadd.f32 %v2549, %v2658
    %v2660 = vand.u32 %v2211, 4294901760
    %v2661 = vsub.f32 %v2211, %v2660
    %v2662 = vand.u32 %v2661, 4294901760
    %2663 = vmatmul.f32.gmra.mxu0 %v2662
    %v2664 = vpop.f32.mrf.mxu0
    %v2665 = vadd.f32 %v2554, %v2664
    %v2666 = vand.u32 %v2214, 4294901760
    %v2667 = vsub.f32 %v2214, %v2666
    %v2668 = vand.u32 %v2667, 4294901760
    %2669 = vmatmul.f32.gmra.mxu0 %v2668
    %v2670 = vpop.f32.mrf.mxu0
    %v2671 = vadd.f32 %v2559, %v2670
    %v2672 = vand.u32 %v2217, 4294901760
    %v2673 = vsub.f32 %v2217, %v2672
    %v2674 = vand.u32 %v2673, 4294901760
    %2675 = vmatmul.f32.gmra.mxu0 %v2674
    %v2676 = vpop.f32.mrf.mxu0
    %v2677 = vadd.f32 %v2564, %v2676
    %v2678 = vand.u32 %v2220, 4294901760
    %v2679 = vsub.f32 %v2220, %v2678
    %v2680 = vand.u32 %v2679, 4294901760
    %2681 = vmatmul.f32.gmra.mxu0 %v2680
    %v2682 = vpop.f32.mrf.mxu0
    %v2683 = vadd.f32 %v2569, %v2682
    %v2684 = vand.u32 %v2223, 4294901760
    %v2685 = vsub.f32 %v2223, %v2684
    %v2686 = vand.u32 %v2685, 4294901760
    %2687 = vmatmul.f32.gmra.mxu0 %v2686
    %v2688 = vpop.f32.mrf.mxu0
    %v2689 = vadd.f32 %v2574, %v2688
    %v2690 = vand.u32 %v2226, 4294901760
    %v2691 = vsub.f32 %v2226, %v2690
    %v2692 = vand.u32 %v2691, 4294901760
    %2693 = vmatmul.f32.gmra.mxu0 %v2692
    %v2694 = vpop.f32.mrf.mxu0
    %v2695 = vadd.f32 %v2579, %v2694
    %v2696 = vand.u32 %v2229, 4294901760
    %v2697 = vsub.f32 %v2229, %v2696
    %v2698 = vand.u32 %v2697, 4294901760
    %2699 = vmatmul.f32.gmra.mxu0 %v2698
    %v2700 = vpop.f32.mrf.mxu0
    %v2701 = vadd.f32 %v2584, %v2700
    %2702 = vdwg.mxu0
    %2703 = vmatpush.msra.mxu0 0.0
    %2704 = vmatpush.msra.mxu0 0.0
    %2705 = vmatpush.msra.mxu0 0.0
    %2706 = vmatpush.msra.mxu0 0.0
    %2707 = vmatpush.msra.mxu0 0.0
    %2708 = vmatpush.msra.mxu0 0.0
    %2709 = vmatpush.msra.mxu0 0.0
    %2710 = vmatpush.msra.mxu0 0.0
    %2711 = vmatpush.msra.mxu0 0.0
    %2712 = vmatpush.msra.mxu0 0.0
    %2713 = vmatpush.msra.mxu0 0.0
    %2714 = vmatpush.msra.mxu0 0.0
    %v2715 = vand.u32 %v1411, 4294901760
    %v2716 = vsub.f32 %v1411, %v2715
    %v2717 = vand.u32 %v2716, 4294901760
    %2718 = vmatpush.msra.mxu0 %v2717
    %v2719 = vand.u32 %v1410, 4294901760
    %v2720 = vsub.f32 %v1410, %v2719
    %v2721 = vand.u32 %v2720, 4294901760
    %2722 = vmatpush.msra.mxu0 %v2721
    %v2723 = vand.u32 %v1409, 4294901760
    %v2724 = vsub.f32 %v1409, %v2723
    %v2725 = vand.u32 %v2724, 4294901760
    %2726 = vmatpush.msra.mxu0 %v2725
    %v2727 = vand.u32 %v1408, 4294901760
    %v2728 = vsub.f32 %v1408, %v2727
    %v2729 = vand.u32 %v2728, 4294901760
    %2730 = vmatpush.msra.mxu0 %v2729
    %v2731 = vand.u32 %v2184, 4294901760
    %2732 = vmatmul.f32.gmra.mxu0 %v2731
    %v2733 = vpop.f32.mrf.mxu0
    %v2734 = vadd.f32 %v2611, %v2733
    %v2735 = vand.u32 %v2187, 4294901760
    %2736 = vmatmul.f32.gmra.mxu0 %v2735
    %v2737 = vpop.f32.mrf.mxu0
    %v2738 = vadd.f32 %v2617, %v2737
    %v2739 = vand.u32 %v2190, 4294901760
    %2740 = vmatmul.f32.gmra.mxu0 %v2739
    %v2741 = vpop.f32.mrf.mxu0
    %v2742 = vadd.f32 %v2623, %v2741
    %v2743 = vand.u32 %v2193, 4294901760
    %2744 = vmatmul.f32.gmra.mxu0 %v2743
    %v2745 = vpop.f32.mrf.mxu0
    %v2746 = vadd.f32 %v2629, %v2745
    %v2747 = vand.u32 %v2196, 4294901760
    %2748 = vmatmul.f32.gmra.mxu0 %v2747
    %v2749 = vpop.f32.mrf.mxu0
    %v2750 = vadd.f32 %v2635, %v2749
    %v2751 = vand.u32 %v2199, 4294901760
    %2752 = vmatmul.f32.gmra.mxu0 %v2751
    %v2753 = vpop.f32.mrf.mxu0
    %v2754 = vadd.f32 %v2641, %v2753
    %v2755 = vand.u32 %v2202, 4294901760
    %2756 = vmatmul.f32.gmra.mxu0 %v2755
    %v2757 = vpop.f32.mrf.mxu0
    %v2758 = vadd.f32 %v2647, %v2757
    %v2759 = vand.u32 %v2205, 4294901760
    %2760 = vmatmul.f32.gmra.mxu0 %v2759
    %v2761 = vpop.f32.mrf.mxu0
    %v2762 = vadd.f32 %v2653, %v2761
    %v2763 = vand.u32 %v2208, 4294901760
    %2764 = vmatmul.f32.gmra.mxu0 %v2763
    %v2765 = vpop.f32.mrf.mxu0
    %v2766 = vadd.f32 %v2659, %v2765
    %v2767 = vand.u32 %v2211, 4294901760
    %2768 = vmatmul.f32.gmra.mxu0 %v2767
    %v2769 = vpop.f32.mrf.mxu0
    %v2770 = vadd.f32 %v2665, %v2769
    %v2771 = vand.u32 %v2214, 4294901760
    %2772 = vmatmul.f32.gmra.mxu0 %v2771
    %v2773 = vpop.f32.mrf.mxu0
    %v2774 = vadd.f32 %v2671, %v2773
    %v2775 = vand.u32 %v2217, 4294901760
    %2776 = vmatmul.f32.gmra.mxu0 %v2775
    %v2777 = vpop.f32.mrf.mxu0
    %v2778 = vadd.f32 %v2677, %v2777
    %v2779 = vand.u32 %v2220, 4294901760
    %2780 = vmatmul.f32.gmra.mxu0 %v2779
    %v2781 = vpop.f32.mrf.mxu0
    %v2782 = vadd.f32 %v2683, %v2781
    %v2783 = vand.u32 %v2223, 4294901760
    %2784 = vmatmul.f32.gmra.mxu0 %v2783
    %v2785 = vpop.f32.mrf.mxu0
    %v2786 = vadd.f32 %v2689, %v2785
    %v2787 = vand.u32 %v2226, 4294901760
    %2788 = vmatmul.f32.gmra.mxu0 %v2787
    %v2789 = vpop.f32.mrf.mxu0
    %v2790 = vadd.f32 %v2695, %v2789
    %v2791 = vand.u32 %v2229, 4294901760
    %2792 = vmatmul.f32.gmra.mxu0 %v2791
    %v2793 = vpop.f32.mrf.mxu0
    %v2794 = vadd.f32 %v2701, %v2793
    %2795 = vdwg.mxu0
    %2796 = vmatpush.msra.mxu0 0.0
    %2797 = vmatpush.msra.mxu0 0.0
    %2798 = vmatpush.msra.mxu0 0.0
    %2799 = vmatpush.msra.mxu0 0.0
    %2800 = vmatpush.msra.mxu0 0.0
    %2801 = vmatpush.msra.mxu0 0.0
    %2802 = vmatpush.msra.mxu0 0.0
    %2803 = vmatpush.msra.mxu0 0.0
    %2804 = vmatpush.msra.mxu0 0.0
    %2805 = vmatpush.msra.mxu0 0.0
    %2806 = vmatpush.msra.mxu0 0.0
    %2807 = vmatpush.msra.mxu0 0.0
    %v2808 = vand.u32 %v1411, 4294901760
    %2809 = vmatpush.msra.mxu0 %v2808
    %v2810 = vand.u32 %v1410, 4294901760
    %2811 = vmatpush.msra.mxu0 %v2810
    %v2812 = vand.u32 %v1409, 4294901760
    %2813 = vmatpush.msra.mxu0 %v2812
    %v2814 = vand.u32 %v1408, 4294901760
    %2815 = vmatpush.msra.mxu0 %v2814
    %v2816 = vand.u32 %v2184, 4294901760
    %2817 = vmatmul.f32.gmra.mxu0 %v2816
    %v2818 = vpop.f32.mrf.mxu0
    %v2819 = vadd.f32 %v2734, %v2818
    %v2820 = vand.u32 %v2187, 4294901760
    %2821 = vmatmul.f32.gmra.mxu0 %v2820
    %v2822 = vpop.f32.mrf.mxu0
    %v2823 = vadd.f32 %v2738, %v2822
    %v2824 = vand.u32 %v2190, 4294901760
    %2825 = vmatmul.f32.gmra.mxu0 %v2824
    %v2826 = vpop.f32.mrf.mxu0
    %v2827 = vadd.f32 %v2742, %v2826
    %v2828 = vand.u32 %v2193, 4294901760
    %2829 = vmatmul.f32.gmra.mxu0 %v2828
    %v2830 = vpop.f32.mrf.mxu0
    %v2831 = vadd.f32 %v2746, %v2830
    %v2832 = vand.u32 %v2196, 4294901760
    %2833 = vmatmul.f32.gmra.mxu0 %v2832
    %v2834 = vpop.f32.mrf.mxu0
    %v2835 = vadd.f32 %v2750, %v2834
    %v2836 = vand.u32 %v2199, 4294901760
    %2837 = vmatmul.f32.gmra.mxu0 %v2836
    %v2838 = vpop.f32.mrf.mxu0
    %v2839 = vadd.f32 %v2754, %v2838
    %v2840 = vand.u32 %v2202, 4294901760
    %2841 = vmatmul.f32.gmra.mxu0 %v2840
    %v2842 = vpop.f32.mrf.mxu0
    %v2843 = vadd.f32 %v2758, %v2842
    %v2844 = vand.u32 %v2205, 4294901760
    %2845 = vmatmul.f32.gmra.mxu0 %v2844
    %v2846 = vpop.f32.mrf.mxu0
    %v2847 = vadd.f32 %v2762, %v2846
    %v2848 = vand.u32 %v2208, 4294901760
    %2849 = vmatmul.f32.gmra.mxu0 %v2848
    %v2850 = vpop.f32.mrf.mxu0
    %v2851 = vadd.f32 %v2766, %v2850
    %v2852 = vand.u32 %v2211, 4294901760
    %2853 = vmatmul.f32.gmra.mxu0 %v2852
    %v2854 = vpop.f32.mrf.mxu0
    %v2855 = vadd.f32 %v2770, %v2854
    %v2856 = vand.u32 %v2214, 4294901760
    %2857 = vmatmul.f32.gmra.mxu0 %v2856
    %v2858 = vpop.f32.mrf.mxu0
    %v2859 = vadd.f32 %v2774, %v2858
    %v2860 = vand.u32 %v2217, 4294901760
    %2861 = vmatmul.f32.gmra.mxu0 %v2860
    %v2862 = vpop.f32.mrf.mxu0
    %v2863 = vadd.f32 %v2778, %v2862
    %v2864 = vand.u32 %v2220, 4294901760
    %2865 = vmatmul.f32.gmra.mxu0 %v2864
    %v2866 = vpop.f32.mrf.mxu0
    %v2867 = vadd.f32 %v2782, %v2866
    %v2868 = vand.u32 %v2223, 4294901760
    %2869 = vmatmul.f32.gmra.mxu0 %v2868
    %v2870 = vpop.f32.mrf.mxu0
    %v2871 = vadd.f32 %v2786, %v2870
    %v2872 = vand.u32 %v2226, 4294901760
    %2873 = vmatmul.f32.gmra.mxu0 %v2872
    %v2874 = vpop.f32.mrf.mxu0
    %v2875 = vadd.f32 %v2790, %v2874
    %v2876 = vand.u32 %v2229, 4294901760
    %2877 = vmatmul.f32.gmra.mxu0 %v2876
    %v2878 = vpop.f32.mrf.mxu0
    %v2879 = vadd.f32 %v2794, %v2878
    %2880 = vdwg.mxu0
    %v2881 = vmul.f32 %v1408, %v1080
    %v2882 = vmul.f32 %v1409, %v1081
    %v2883 = vmul.f32 %v1410, %v1082
    %v2884 = vmul.f32 %v1411, %v1083
    %2885 = vmatpush.msra.mxu0 0.0
    %2886 = vmatpush.msra.mxu0 0.0
    %2887 = vmatpush.msra.mxu0 0.0
    %2888 = vmatpush.msra.mxu0 0.0
    %2889 = vmatpush.msra.mxu0 0.0
    %2890 = vmatpush.msra.mxu0 0.0
    %2891 = vmatpush.msra.mxu0 0.0
    %2892 = vmatpush.msra.mxu0 0.0
    %2893 = vmatpush.msra.mxu0 0.0
    %2894 = vmatpush.msra.mxu0 0.0
    %2895 = vmatpush.msra.mxu0 0.0
    %2896 = vmatpush.msra.mxu0 0.0
    %v2897 = vand.u32 %v2884, 4294901760
    %2898 = vmatpush.msra.mxu0 %v2897
    %v2899 = vand.u32 %v2883, 4294901760
    %2900 = vmatpush.msra.mxu0 %v2899
    %v2901 = vand.u32 %v2882, 4294901760
    %2902 = vmatpush.msra.mxu0 %v2901
    %v2903 = vand.u32 %v2881, 4294901760
    %2904 = vmatpush.msra.mxu0 %v2903
    %v2905 = vand.u32 %v2184, 4294901760
    %v2906 = vsub.f32 %v2184, %v2905
    %v2907 = vand.u32 %v2906, 4294901760
    %v2908 = vsub.f32 %v2906, %v2907
    %v2909 = vand.u32 %v2908, 4294901760
    %2910 = vmatmul.f32.gmra.mxu0 %v2909
    %v2911 = vpop.f32.mrf.mxu0
    %v2912 = vadd.f32 0.0, %v2911
    %v2913 = vand.u32 %v2187, 4294901760
    %v2914 = vsub.f32 %v2187, %v2913
    %v2915 = vand.u32 %v2914, 4294901760
    %v2916 = vsub.f32 %v2914, %v2915
    %v2917 = vand.u32 %v2916, 4294901760
    %2918 = vmatmul.f32.gmra.mxu0 %v2917
    %v2919 = vpop.f32.mrf.mxu0
    %v2920 = vadd.f32 0.0, %v2919
    %v2921 = vand.u32 %v2190, 4294901760
    %v2922 = vsub.f32 %v2190, %v2921
    %v2923 = vand.u32 %v2922, 4294901760
    %v2924 = vsub.f32 %v2922, %v2923
    %v2925 = vand.u32 %v2924, 4294901760
    %2926 = vmatmul.f32.gmra.mxu0 %v2925
    %v2927 = vpop.f32.mrf.mxu0
    %v2928 = vadd.f32 0.0, %v2927
    %v2929 = vand.u32 %v2193, 4294901760
    %v2930 = vsub.f32 %v2193, %v2929
    %v2931 = vand.u32 %v2930, 4294901760
    %v2932 = vsub.f32 %v2930, %v2931
    %v2933 = vand.u32 %v2932, 4294901760
    %2934 = vmatmul.f32.gmra.mxu0 %v2933
    %v2935 = vpop.f32.mrf.mxu0
    %v2936 = vadd.f32 0.0, %v2935
    %v2937 = vand.u32 %v2196, 4294901760
    %v2938 = vsub.f32 %v2196, %v2937
    %v2939 = vand.u32 %v2938, 4294901760
    %v2940 = vsub.f32 %v2938, %v2939
    %v2941 = vand.u32 %v2940, 4294901760
    %2942 = vmatmul.f32.gmra.mxu0 %v2941
    %v2943 = vpop.f32.mrf.mxu0
    %v2944 = vadd.f32 0.0, %v2943
    %v2945 = vand.u32 %v2199, 4294901760
    %v2946 = vsub.f32 %v2199, %v2945
    %v2947 = vand.u32 %v2946, 4294901760
    %v2948 = vsub.f32 %v2946, %v2947
    %v2949 = vand.u32 %v2948, 4294901760
    %2950 = vmatmul.f32.gmra.mxu0 %v2949
    %v2951 = vpop.f32.mrf.mxu0
    %v2952 = vadd.f32 0.0, %v2951
    %v2953 = vand.u32 %v2202, 4294901760
    %v2954 = vsub.f32 %v2202, %v2953
    %v2955 = vand.u32 %v2954, 4294901760
    %v2956 = vsub.f32 %v2954, %v2955
    %v2957 = vand.u32 %v2956, 4294901760
    %2958 = vmatmul.f32.gmra.mxu0 %v2957
    %v2959 = vpop.f32.mrf.mxu0
    %v2960 = vadd.f32 0.0, %v2959
    %v2961 = vand.u32 %v2205, 4294901760
    %v2962 = vsub.f32 %v2205, %v2961
    %v2963 = vand.u32 %v2962, 4294901760
    %v2964 = vsub.f32 %v2962, %v2963
    %v2965 = vand.u32 %v2964, 4294901760
    %2966 = vmatmul.f32.gmra.mxu0 %v2965
    %v2967 = vpop.f32.mrf.mxu0
    %v2968 = vadd.f32 0.0, %v2967
    %v2969 = vand.u32 %v2208, 4294901760
    %v2970 = vsub.f32 %v2208, %v2969
    %v2971 = vand.u32 %v2970, 4294901760
    %v2972 = vsub.f32 %v2970, %v2971
    %v2973 = vand.u32 %v2972, 4294901760
    %2974 = vmatmul.f32.gmra.mxu0 %v2973
    %v2975 = vpop.f32.mrf.mxu0
    %v2976 = vadd.f32 0.0, %v2975
    %v2977 = vand.u32 %v2211, 4294901760
    %v2978 = vsub.f32 %v2211, %v2977
    %v2979 = vand.u32 %v2978, 4294901760
    %v2980 = vsub.f32 %v2978, %v2979
    %v2981 = vand.u32 %v2980, 4294901760
    %2982 = vmatmul.f32.gmra.mxu0 %v2981
    %v2983 = vpop.f32.mrf.mxu0
    %v2984 = vadd.f32 0.0, %v2983
    %v2985 = vand.u32 %v2214, 4294901760
    %v2986 = vsub.f32 %v2214, %v2985
    %v2987 = vand.u32 %v2986, 4294901760
    %v2988 = vsub.f32 %v2986, %v2987
    %v2989 = vand.u32 %v2988, 4294901760
    %2990 = vmatmul.f32.gmra.mxu0 %v2989
    %v2991 = vpop.f32.mrf.mxu0
    %v2992 = vadd.f32 0.0, %v2991
    %v2993 = vand.u32 %v2217, 4294901760
    %v2994 = vsub.f32 %v2217, %v2993
    %v2995 = vand.u32 %v2994, 4294901760
    %v2996 = vsub.f32 %v2994, %v2995
    %v2997 = vand.u32 %v2996, 4294901760
    %2998 = vmatmul.f32.gmra.mxu0 %v2997
    %v2999 = vpop.f32.mrf.mxu0
    %v3000 = vadd.f32 0.0, %v2999
    %v3001 = vand.u32 %v2220, 4294901760
    %v3002 = vsub.f32 %v2220, %v3001
    %v3003 = vand.u32 %v3002, 4294901760
    %v3004 = vsub.f32 %v3002, %v3003
    %v3005 = vand.u32 %v3004, 4294901760
    %3006 = vmatmul.f32.gmra.mxu0 %v3005
    %v3007 = vpop.f32.mrf.mxu0
    %v3008 = vadd.f32 0.0, %v3007
    %v3009 = vand.u32 %v2223, 4294901760
    %v3010 = vsub.f32 %v2223, %v3009
    %v3011 = vand.u32 %v3010, 4294901760
    %v3012 = vsub.f32 %v3010, %v3011
    %v3013 = vand.u32 %v3012, 4294901760
    %3014 = vmatmul.f32.gmra.mxu0 %v3013
    %v3015 = vpop.f32.mrf.mxu0
    %v3016 = vadd.f32 0.0, %v3015
    %v3017 = vand.u32 %v2226, 4294901760
    %v3018 = vsub.f32 %v2226, %v3017
    %v3019 = vand.u32 %v3018, 4294901760
    %v3020 = vsub.f32 %v3018, %v3019
    %v3021 = vand.u32 %v3020, 4294901760
    %3022 = vmatmul.f32.gmra.mxu0 %v3021
    %v3023 = vpop.f32.mrf.mxu0
    %v3024 = vadd.f32 0.0, %v3023
    %v3025 = vand.u32 %v2229, 4294901760
    %v3026 = vsub.f32 %v2229, %v3025
    %v3027 = vand.u32 %v3026, 4294901760
    %v3028 = vsub.f32 %v3026, %v3027
    %v3029 = vand.u32 %v3028, 4294901760
    %3030 = vmatmul.f32.gmra.mxu0 %v3029
    %v3031 = vpop.f32.mrf.mxu0
    %v3032 = vadd.f32 0.0, %v3031
    %3033 = vdwg.mxu0
    %3034 = vmatpush.msra.mxu0 0.0
    %3035 = vmatpush.msra.mxu0 0.0
    %3036 = vmatpush.msra.mxu0 0.0
    %3037 = vmatpush.msra.mxu0 0.0
    %3038 = vmatpush.msra.mxu0 0.0
    %3039 = vmatpush.msra.mxu0 0.0
    %3040 = vmatpush.msra.mxu0 0.0
    %3041 = vmatpush.msra.mxu0 0.0
    %3042 = vmatpush.msra.mxu0 0.0
    %3043 = vmatpush.msra.mxu0 0.0
    %3044 = vmatpush.msra.mxu0 0.0
    %3045 = vmatpush.msra.mxu0 0.0
    %v3046 = vand.u32 %v2884, 4294901760
    %v3047 = vsub.f32 %v2884, %v3046
    %v3048 = vand.u32 %v3047, 4294901760
    %v3049 = vsub.f32 %v3047, %v3048
    %v3050 = vand.u32 %v3049, 4294901760
    %3051 = vmatpush.msra.mxu0 %v3050
    %v3052 = vand.u32 %v2883, 4294901760
    %v3053 = vsub.f32 %v2883, %v3052
    %v3054 = vand.u32 %v3053, 4294901760
    %v3055 = vsub.f32 %v3053, %v3054
    %v3056 = vand.u32 %v3055, 4294901760
    %3057 = vmatpush.msra.mxu0 %v3056
    %v3058 = vand.u32 %v2882, 4294901760
    %v3059 = vsub.f32 %v2882, %v3058
    %v3060 = vand.u32 %v3059, 4294901760
    %v3061 = vsub.f32 %v3059, %v3060
    %v3062 = vand.u32 %v3061, 4294901760
    %3063 = vmatpush.msra.mxu0 %v3062
    %v3064 = vand.u32 %v2881, 4294901760
    %v3065 = vsub.f32 %v2881, %v3064
    %v3066 = vand.u32 %v3065, 4294901760
    %v3067 = vsub.f32 %v3065, %v3066
    %v3068 = vand.u32 %v3067, 4294901760
    %3069 = vmatpush.msra.mxu0 %v3068
    %v3070 = vand.u32 %v2184, 4294901760
    %3071 = vmatmul.f32.gmra.mxu0 %v3070
    %v3072 = vpop.f32.mrf.mxu0
    %v3073 = vadd.f32 %v2912, %v3072
    %v3074 = vand.u32 %v2187, 4294901760
    %3075 = vmatmul.f32.gmra.mxu0 %v3074
    %v3076 = vpop.f32.mrf.mxu0
    %v3077 = vadd.f32 %v2920, %v3076
    %v3078 = vand.u32 %v2190, 4294901760
    %3079 = vmatmul.f32.gmra.mxu0 %v3078
    %v3080 = vpop.f32.mrf.mxu0
    %v3081 = vadd.f32 %v2928, %v3080
    %v3082 = vand.u32 %v2193, 4294901760
    %3083 = vmatmul.f32.gmra.mxu0 %v3082
    %v3084 = vpop.f32.mrf.mxu0
    %v3085 = vadd.f32 %v2936, %v3084
    %v3086 = vand.u32 %v2196, 4294901760
    %3087 = vmatmul.f32.gmra.mxu0 %v3086
    %v3088 = vpop.f32.mrf.mxu0
    %v3089 = vadd.f32 %v2944, %v3088
    %v3090 = vand.u32 %v2199, 4294901760
    %3091 = vmatmul.f32.gmra.mxu0 %v3090
    %v3092 = vpop.f32.mrf.mxu0
    %v3093 = vadd.f32 %v2952, %v3092
    %v3094 = vand.u32 %v2202, 4294901760
    %3095 = vmatmul.f32.gmra.mxu0 %v3094
    %v3096 = vpop.f32.mrf.mxu0
    %v3097 = vadd.f32 %v2960, %v3096
    %v3098 = vand.u32 %v2205, 4294901760
    %3099 = vmatmul.f32.gmra.mxu0 %v3098
    %v3100 = vpop.f32.mrf.mxu0
    %v3101 = vadd.f32 %v2968, %v3100
    %v3102 = vand.u32 %v2208, 4294901760
    %3103 = vmatmul.f32.gmra.mxu0 %v3102
    %v3104 = vpop.f32.mrf.mxu0
    %v3105 = vadd.f32 %v2976, %v3104
    %v3106 = vand.u32 %v2211, 4294901760
    %3107 = vmatmul.f32.gmra.mxu0 %v3106
    %v3108 = vpop.f32.mrf.mxu0
    %v3109 = vadd.f32 %v2984, %v3108
    %v3110 = vand.u32 %v2214, 4294901760
    %3111 = vmatmul.f32.gmra.mxu0 %v3110
    %v3112 = vpop.f32.mrf.mxu0
    %v3113 = vadd.f32 %v2992, %v3112
    %v3114 = vand.u32 %v2217, 4294901760
    %3115 = vmatmul.f32.gmra.mxu0 %v3114
    %v3116 = vpop.f32.mrf.mxu0
    %v3117 = vadd.f32 %v3000, %v3116
    %v3118 = vand.u32 %v2220, 4294901760
    %3119 = vmatmul.f32.gmra.mxu0 %v3118
    %v3120 = vpop.f32.mrf.mxu0
    %v3121 = vadd.f32 %v3008, %v3120
    %v3122 = vand.u32 %v2223, 4294901760
    %3123 = vmatmul.f32.gmra.mxu0 %v3122
    %v3124 = vpop.f32.mrf.mxu0
    %v3125 = vadd.f32 %v3016, %v3124
    %v3126 = vand.u32 %v2226, 4294901760
    %3127 = vmatmul.f32.gmra.mxu0 %v3126
    %v3128 = vpop.f32.mrf.mxu0
    %v3129 = vadd.f32 %v3024, %v3128
    %v3130 = vand.u32 %v2229, 4294901760
    %3131 = vmatmul.f32.gmra.mxu0 %v3130
    %v3132 = vpop.f32.mrf.mxu0
    %v3133 = vadd.f32 %v3032, %v3132
    %3134 = vdwg.mxu0
    %3135 = vmatpush.msra.mxu0 0.0
    %3136 = vmatpush.msra.mxu0 0.0
    %3137 = vmatpush.msra.mxu0 0.0
    %3138 = vmatpush.msra.mxu0 0.0
    %3139 = vmatpush.msra.mxu0 0.0
    %3140 = vmatpush.msra.mxu0 0.0
    %3141 = vmatpush.msra.mxu0 0.0
    %3142 = vmatpush.msra.mxu0 0.0
    %3143 = vmatpush.msra.mxu0 0.0
    %3144 = vmatpush.msra.mxu0 0.0
    %3145 = vmatpush.msra.mxu0 0.0
    %3146 = vmatpush.msra.mxu0 0.0
    %v3147 = vand.u32 %v2884, 4294901760
    %v3148 = vsub.f32 %v2884, %v3147
    %3149 = vmatpush.msra.mxu0 %v3148
    %v3150 = vand.u32 %v2883, 4294901760
    %v3151 = vsub.f32 %v2883, %v3150
    %3152 = vmatpush.msra.mxu0 %v3151
    %v3153 = vand.u32 %v2882, 4294901760
    %v3154 = vsub.f32 %v2882, %v3153
    %3155 = vmatpush.msra.mxu0 %v3154
    %v3156 = vand.u32 %v2881, 4294901760
    %v3157 = vsub.f32 %v2881, %v3156
    %3158 = vmatpush.msra.mxu0 %v3157
    %v3159 = vand.u32 %v2184, 4294901760
    %v3160 = vsub.f32 %v2184, %v3159
    %3161 = vmatmul.f32.gmra.mxu0 %v3160
    %v3162 = vpop.f32.mrf.mxu0
    %v3163 = vadd.f32 %v3073, %v3162
    %v3164 = vand.u32 %v2187, 4294901760
    %v3165 = vsub.f32 %v2187, %v3164
    %3166 = vmatmul.f32.gmra.mxu0 %v3165
    %v3167 = vpop.f32.mrf.mxu0
    %v3168 = vadd.f32 %v3077, %v3167
    %v3169 = vand.u32 %v2190, 4294901760
    %v3170 = vsub.f32 %v2190, %v3169
    %3171 = vmatmul.f32.gmra.mxu0 %v3170
    %v3172 = vpop.f32.mrf.mxu0
    %v3173 = vadd.f32 %v3081, %v3172
    %v3174 = vand.u32 %v2193, 4294901760
    %v3175 = vsub.f32 %v2193, %v3174
    %3176 = vmatmul.f32.gmra.mxu0 %v3175
    %v3177 = vpop.f32.mrf.mxu0
    %v3178 = vadd.f32 %v3085, %v3177
    %v3179 = vand.u32 %v2196, 4294901760
    %v3180 = vsub.f32 %v2196, %v3179
    %3181 = vmatmul.f32.gmra.mxu0 %v3180
    %v3182 = vpop.f32.mrf.mxu0
    %v3183 = vadd.f32 %v3089, %v3182
    %v3184 = vand.u32 %v2199, 4294901760
    %v3185 = vsub.f32 %v2199, %v3184
    %3186 = vmatmul.f32.gmra.mxu0 %v3185
    %v3187 = vpop.f32.mrf.mxu0
    %v3188 = vadd.f32 %v3093, %v3187
    %v3189 = vand.u32 %v2202, 4294901760
    %v3190 = vsub.f32 %v2202, %v3189
    %3191 = vmatmul.f32.gmra.mxu0 %v3190
    %v3192 = vpop.f32.mrf.mxu0
    %v3193 = vadd.f32 %v3097, %v3192
    %v3194 = vand.u32 %v2205, 4294901760
    %v3195 = vsub.f32 %v2205, %v3194
    %3196 = vmatmul.f32.gmra.mxu0 %v3195
    %v3197 = vpop.f32.mrf.mxu0
    %v3198 = vadd.f32 %v3101, %v3197
    %v3199 = vand.u32 %v2208, 4294901760
    %v3200 = vsub.f32 %v2208, %v3199
    %3201 = vmatmul.f32.gmra.mxu0 %v3200
    %v3202 = vpop.f32.mrf.mxu0
    %v3203 = vadd.f32 %v3105, %v3202
    %v3204 = vand.u32 %v2211, 4294901760
    %v3205 = vsub.f32 %v2211, %v3204
    %3206 = vmatmul.f32.gmra.mxu0 %v3205
    %v3207 = vpop.f32.mrf.mxu0
    %v3208 = vadd.f32 %v3109, %v3207
    %v3209 = vand.u32 %v2214, 4294901760
    %v3210 = vsub.f32 %v2214, %v3209
    %3211 = vmatmul.f32.gmra.mxu0 %v3210
    %v3212 = vpop.f32.mrf.mxu0
    %v3213 = vadd.f32 %v3113, %v3212
    %v3214 = vand.u32 %v2217, 4294901760
    %v3215 = vsub.f32 %v2217, %v3214
    %3216 = vmatmul.f32.gmra.mxu0 %v3215
    %v3217 = vpop.f32.mrf.mxu0
    %v3218 = vadd.f32 %v3117, %v3217
    %v3219 = vand.u32 %v2220, 4294901760
    %v3220 = vsub.f32 %v2220, %v3219
    %3221 = vmatmul.f32.gmra.mxu0 %v3220
    %v3222 = vpop.f32.mrf.mxu0
    %v3223 = vadd.f32 %v3121, %v3222
    %v3224 = vand.u32 %v2223, 4294901760
    %v3225 = vsub.f32 %v2223, %v3224
    %3226 = vmatmul.f32.gmra.mxu0 %v3225
    %v3227 = vpop.f32.mrf.mxu0
    %v3228 = vadd.f32 %v3125, %v3227
    %v3229 = vand.u32 %v2226, 4294901760
    %v3230 = vsub.f32 %v2226, %v3229
    %3231 = vmatmul.f32.gmra.mxu0 %v3230
    %v3232 = vpop.f32.mrf.mxu0
    %v3233 = vadd.f32 %v3129, %v3232
    %v3234 = vand.u32 %v2229, 4294901760
    %v3235 = vsub.f32 %v2229, %v3234
    %3236 = vmatmul.f32.gmra.mxu0 %v3235
    %v3237 = vpop.f32.mrf.mxu0
    %v3238 = vadd.f32 %v3133, %v3237
    %3239 = vdwg.mxu0
    %3240 = vmatpush.msra.mxu0 0.0
    %3241 = vmatpush.msra.mxu0 0.0
    %3242 = vmatpush.msra.mxu0 0.0
    %3243 = vmatpush.msra.mxu0 0.0
    %3244 = vmatpush.msra.mxu0 0.0
    %3245 = vmatpush.msra.mxu0 0.0
    %3246 = vmatpush.msra.mxu0 0.0
    %3247 = vmatpush.msra.mxu0 0.0
    %3248 = vmatpush.msra.mxu0 0.0
    %3249 = vmatpush.msra.mxu0 0.0
    %3250 = vmatpush.msra.mxu0 0.0
    %3251 = vmatpush.msra.mxu0 0.0
    %v3252 = vand.u32 %v2884, 4294901760
    %3253 = vmatpush.msra.mxu0 %v3252
    %v3254 = vand.u32 %v2883, 4294901760
    %3255 = vmatpush.msra.mxu0 %v3254
    %v3256 = vand.u32 %v2882, 4294901760
    %3257 = vmatpush.msra.mxu0 %v3256
    %v3258 = vand.u32 %v2881, 4294901760
    %3259 = vmatpush.msra.mxu0 %v3258
    %v3260 = vand.u32 %v2184, 4294901760
    %v3261 = vsub.f32 %v2184, %v3260
    %v3262 = vand.u32 %v3261, 4294901760
    %3263 = vmatmul.f32.gmra.mxu0 %v3262
    %v3264 = vpop.f32.mrf.mxu0
    %v3265 = vadd.f32 %v3163, %v3264
    %v3266 = vand.u32 %v2187, 4294901760
    %v3267 = vsub.f32 %v2187, %v3266
    %v3268 = vand.u32 %v3267, 4294901760
    %3269 = vmatmul.f32.gmra.mxu0 %v3268
    %v3270 = vpop.f32.mrf.mxu0
    %v3271 = vadd.f32 %v3168, %v3270
    %v3272 = vand.u32 %v2190, 4294901760
    %v3273 = vsub.f32 %v2190, %v3272
    %v3274 = vand.u32 %v3273, 4294901760
    %3275 = vmatmul.f32.gmra.mxu0 %v3274
    %v3276 = vpop.f32.mrf.mxu0
    %v3277 = vadd.f32 %v3173, %v3276
    %v3278 = vand.u32 %v2193, 4294901760
    %v3279 = vsub.f32 %v2193, %v3278
    %v3280 = vand.u32 %v3279, 4294901760
    %3281 = vmatmul.f32.gmra.mxu0 %v3280
    %v3282 = vpop.f32.mrf.mxu0
    %v3283 = vadd.f32 %v3178, %v3282
    %v3284 = vand.u32 %v2196, 4294901760
    %v3285 = vsub.f32 %v2196, %v3284
    %v3286 = vand.u32 %v3285, 4294901760
    %3287 = vmatmul.f32.gmra.mxu0 %v3286
    %v3288 = vpop.f32.mrf.mxu0
    %v3289 = vadd.f32 %v3183, %v3288
    %v3290 = vand.u32 %v2199, 4294901760
    %v3291 = vsub.f32 %v2199, %v3290
    %v3292 = vand.u32 %v3291, 4294901760
    %3293 = vmatmul.f32.gmra.mxu0 %v3292
    %v3294 = vpop.f32.mrf.mxu0
    %v3295 = vadd.f32 %v3188, %v3294
    %v3296 = vand.u32 %v2202, 4294901760
    %v3297 = vsub.f32 %v2202, %v3296
    %v3298 = vand.u32 %v3297, 4294901760
    %3299 = vmatmul.f32.gmra.mxu0 %v3298
    %v3300 = vpop.f32.mrf.mxu0
    %v3301 = vadd.f32 %v3193, %v3300
    %v3302 = vand.u32 %v2205, 4294901760
    %v3303 = vsub.f32 %v2205, %v3302
    %v3304 = vand.u32 %v3303, 4294901760
    %3305 = vmatmul.f32.gmra.mxu0 %v3304
    %v3306 = vpop.f32.mrf.mxu0
    %v3307 = vadd.f32 %v3198, %v3306
    %v3308 = vand.u32 %v2208, 4294901760
    %v3309 = vsub.f32 %v2208, %v3308
    %v3310 = vand.u32 %v3309, 4294901760
    %3311 = vmatmul.f32.gmra.mxu0 %v3310
    %v3312 = vpop.f32.mrf.mxu0
    %v3313 = vadd.f32 %v3203, %v3312
    %v3314 = vand.u32 %v2211, 4294901760
    %v3315 = vsub.f32 %v2211, %v3314
    %v3316 = vand.u32 %v3315, 4294901760
    %3317 = vmatmul.f32.gmra.mxu0 %v3316
    %v3318 = vpop.f32.mrf.mxu0
    %v3319 = vadd.f32 %v3208, %v3318
    %v3320 = vand.u32 %v2214, 4294901760
    %v3321 = vsub.f32 %v2214, %v3320
    %v3322 = vand.u32 %v3321, 4294901760
    %3323 = vmatmul.f32.gmra.mxu0 %v3322
    %v3324 = vpop.f32.mrf.mxu0
    %v3325 = vadd.f32 %v3213, %v3324
    %v3326 = vand.u32 %v2217, 4294901760
    %v3327 = vsub.f32 %v2217, %v3326
    %v3328 = vand.u32 %v3327, 4294901760
    %3329 = vmatmul.f32.gmra.mxu0 %v3328
    %v3330 = vpop.f32.mrf.mxu0
    %v3331 = vadd.f32 %v3218, %v3330
    %v3332 = vand.u32 %v2220, 4294901760
    %v3333 = vsub.f32 %v2220, %v3332
    %v3334 = vand.u32 %v3333, 4294901760
    %3335 = vmatmul.f32.gmra.mxu0 %v3334
    %v3336 = vpop.f32.mrf.mxu0
    %v3337 = vadd.f32 %v3223, %v3336
    %v3338 = vand.u32 %v2223, 4294901760
    %v3339 = vsub.f32 %v2223, %v3338
    %v3340 = vand.u32 %v3339, 4294901760
    %3341 = vmatmul.f32.gmra.mxu0 %v3340
    %v3342 = vpop.f32.mrf.mxu0
    %v3343 = vadd.f32 %v3228, %v3342
    %v3344 = vand.u32 %v2226, 4294901760
    %v3345 = vsub.f32 %v2226, %v3344
    %v3346 = vand.u32 %v3345, 4294901760
    %3347 = vmatmul.f32.gmra.mxu0 %v3346
    %v3348 = vpop.f32.mrf.mxu0
    %v3349 = vadd.f32 %v3233, %v3348
    %v3350 = vand.u32 %v2229, 4294901760
    %v3351 = vsub.f32 %v2229, %v3350
    %v3352 = vand.u32 %v3351, 4294901760
    %3353 = vmatmul.f32.gmra.mxu0 %v3352
    %v3354 = vpop.f32.mrf.mxu0
    %v3355 = vadd.f32 %v3238, %v3354
    %3356 = vdwg.mxu0
    %3357 = vmatpush.msra.mxu0 0.0
    %3358 = vmatpush.msra.mxu0 0.0
    %3359 = vmatpush.msra.mxu0 0.0
    %3360 = vmatpush.msra.mxu0 0.0
    %3361 = vmatpush.msra.mxu0 0.0
    %3362 = vmatpush.msra.mxu0 0.0
    %3363 = vmatpush.msra.mxu0 0.0
    %3364 = vmatpush.msra.mxu0 0.0
    %3365 = vmatpush.msra.mxu0 0.0
    %3366 = vmatpush.msra.mxu0 0.0
    %3367 = vmatpush.msra.mxu0 0.0
    %3368 = vmatpush.msra.mxu0 0.0
    %v3369 = vand.u32 %v2884, 4294901760
    %v3370 = vsub.f32 %v2884, %v3369
    %v3371 = vand.u32 %v3370, 4294901760
    %3372 = vmatpush.msra.mxu0 %v3371
    %v3373 = vand.u32 %v2883, 4294901760
    %v3374 = vsub.f32 %v2883, %v3373
    %v3375 = vand.u32 %v3374, 4294901760
    %3376 = vmatpush.msra.mxu0 %v3375
    %v3377 = vand.u32 %v2882, 4294901760
    %v3378 = vsub.f32 %v2882, %v3377
    %v3379 = vand.u32 %v3378, 4294901760
    %3380 = vmatpush.msra.mxu0 %v3379
    %v3381 = vand.u32 %v2881, 4294901760
    %v3382 = vsub.f32 %v2881, %v3381
    %v3383 = vand.u32 %v3382, 4294901760
    %3384 = vmatpush.msra.mxu0 %v3383
    %v3385 = vand.u32 %v2184, 4294901760
    %3386 = vmatmul.f32.gmra.mxu0 %v3385
    %v3387 = vpop.f32.mrf.mxu0
    %v3388 = vadd.f32 %v3265, %v3387
    %v3389 = vand.u32 %v2187, 4294901760
    %3390 = vmatmul.f32.gmra.mxu0 %v3389
    %v3391 = vpop.f32.mrf.mxu0
    %v3392 = vadd.f32 %v3271, %v3391
    %v3393 = vand.u32 %v2190, 4294901760
    %3394 = vmatmul.f32.gmra.mxu0 %v3393
    %v3395 = vpop.f32.mrf.mxu0
    %v3396 = vadd.f32 %v3277, %v3395
    %v3397 = vand.u32 %v2193, 4294901760
    %3398 = vmatmul.f32.gmra.mxu0 %v3397
    %v3399 = vpop.f32.mrf.mxu0
    %v3400 = vadd.f32 %v3283, %v3399
    %v3401 = vand.u32 %v2196, 4294901760
    %3402 = vmatmul.f32.gmra.mxu0 %v3401
    %v3403 = vpop.f32.mrf.mxu0
    %v3404 = vadd.f32 %v3289, %v3403
    %v3405 = vand.u32 %v2199, 4294901760
    %3406 = vmatmul.f32.gmra.mxu0 %v3405
    %v3407 = vpop.f32.mrf.mxu0
    %v3408 = vadd.f32 %v3295, %v3407
    %v3409 = vand.u32 %v2202, 4294901760
    %3410 = vmatmul.f32.gmra.mxu0 %v3409
    %v3411 = vpop.f32.mrf.mxu0
    %v3412 = vadd.f32 %v3301, %v3411
    %v3413 = vand.u32 %v2205, 4294901760
    %3414 = vmatmul.f32.gmra.mxu0 %v3413
    %v3415 = vpop.f32.mrf.mxu0
    %v3416 = vadd.f32 %v3307, %v3415
    %v3417 = vand.u32 %v2208, 4294901760
    %3418 = vmatmul.f32.gmra.mxu0 %v3417
    %v3419 = vpop.f32.mrf.mxu0
    %v3420 = vadd.f32 %v3313, %v3419
    %v3421 = vand.u32 %v2211, 4294901760
    %3422 = vmatmul.f32.gmra.mxu0 %v3421
    %v3423 = vpop.f32.mrf.mxu0
    %v3424 = vadd.f32 %v3319, %v3423
    %v3425 = vand.u32 %v2214, 4294901760
    %3426 = vmatmul.f32.gmra.mxu0 %v3425
    %v3427 = vpop.f32.mrf.mxu0
    %v3428 = vadd.f32 %v3325, %v3427
    %v3429 = vand.u32 %v2217, 4294901760
    %3430 = vmatmul.f32.gmra.mxu0 %v3429
    %v3431 = vpop.f32.mrf.mxu0
    %v3432 = vadd.f32 %v3331, %v3431
    %v3433 = vand.u32 %v2220, 4294901760
    %3434 = vmatmul.f32.gmra.mxu0 %v3433
    %v3435 = vpop.f32.mrf.mxu0
    %v3436 = vadd.f32 %v3337, %v3435
    %v3437 = vand.u32 %v2223, 4294901760
    %3438 = vmatmul.f32.gmra.mxu0 %v3437
    %v3439 = vpop.f32.mrf.mxu0
    %v3440 = vadd.f32 %v3343, %v3439
    %v3441 = vand.u32 %v2226, 4294901760
    %3442 = vmatmul.f32.gmra.mxu0 %v3441
    %v3443 = vpop.f32.mrf.mxu0
    %v3444 = vadd.f32 %v3349, %v3443
    %v3445 = vand.u32 %v2229, 4294901760
    %3446 = vmatmul.f32.gmra.mxu0 %v3445
    %v3447 = vpop.f32.mrf.mxu0
    %v3448 = vadd.f32 %v3355, %v3447
    %3449 = vdwg.mxu0
    %3450 = vmatpush.msra.mxu0 0.0
    %3451 = vmatpush.msra.mxu0 0.0
    %3452 = vmatpush.msra.mxu0 0.0
    %3453 = vmatpush.msra.mxu0 0.0
    %3454 = vmatpush.msra.mxu0 0.0
    %3455 = vmatpush.msra.mxu0 0.0
    %3456 = vmatpush.msra.mxu0 0.0
    %3457 = vmatpush.msra.mxu0 0.0
    %3458 = vmatpush.msra.mxu0 0.0
    %3459 = vmatpush.msra.mxu0 0.0
    %3460 = vmatpush.msra.mxu0 0.0
    %3461 = vmatpush.msra.mxu0 0.0
    %v3462 = vand.u32 %v2884, 4294901760
    %3463 = vmatpush.msra.mxu0 %v3462
    %v3464 = vand.u32 %v2883, 4294901760
    %3465 = vmatpush.msra.mxu0 %v3464
    %v3466 = vand.u32 %v2882, 4294901760
    %3467 = vmatpush.msra.mxu0 %v3466
    %v3468 = vand.u32 %v2881, 4294901760
    %3469 = vmatpush.msra.mxu0 %v3468
    %v3470 = vand.u32 %v2184, 4294901760
    %3471 = vmatmul.f32.gmra.mxu0 %v3470
    %v3472 = vpop.f32.mrf.mxu0
    %v3473 = vadd.f32 %v3388, %v3472
    %v3474 = vand.u32 %v2187, 4294901760
    %3475 = vmatmul.f32.gmra.mxu0 %v3474
    %v3476 = vpop.f32.mrf.mxu0
    %v3477 = vadd.f32 %v3392, %v3476
    %v3478 = vand.u32 %v2190, 4294901760
    %3479 = vmatmul.f32.gmra.mxu0 %v3478
    %v3480 = vpop.f32.mrf.mxu0
    %v3481 = vadd.f32 %v3396, %v3480
    %v3482 = vand.u32 %v2193, 4294901760
    %3483 = vmatmul.f32.gmra.mxu0 %v3482
    %v3484 = vpop.f32.mrf.mxu0
    %v3485 = vadd.f32 %v3400, %v3484
    %v3486 = vand.u32 %v2196, 4294901760
    %3487 = vmatmul.f32.gmra.mxu0 %v3486
    %v3488 = vpop.f32.mrf.mxu0
    %v3489 = vadd.f32 %v3404, %v3488
    %v3490 = vand.u32 %v2199, 4294901760
    %3491 = vmatmul.f32.gmra.mxu0 %v3490
    %v3492 = vpop.f32.mrf.mxu0
    %v3493 = vadd.f32 %v3408, %v3492
    %v3494 = vand.u32 %v2202, 4294901760
    %3495 = vmatmul.f32.gmra.mxu0 %v3494
    %v3496 = vpop.f32.mrf.mxu0
    %v3497 = vadd.f32 %v3412, %v3496
    %v3498 = vand.u32 %v2205, 4294901760
    %3499 = vmatmul.f32.gmra.mxu0 %v3498
    %v3500 = vpop.f32.mrf.mxu0
    %v3501 = vadd.f32 %v3416, %v3500
    %v3502 = vand.u32 %v2208, 4294901760
    %3503 = vmatmul.f32.gmra.mxu0 %v3502
    %v3504 = vpop.f32.mrf.mxu0
    %v3505 = vadd.f32 %v3420, %v3504
    %v3506 = vand.u32 %v2211, 4294901760
    %3507 = vmatmul.f32.gmra.mxu0 %v3506
    %v3508 = vpop.f32.mrf.mxu0
    %v3509 = vadd.f32 %v3424, %v3508
    %v3510 = vand.u32 %v2214, 4294901760
    %3511 = vmatmul.f32.gmra.mxu0 %v3510
    %v3512 = vpop.f32.mrf.mxu0
    %v3513 = vadd.f32 %v3428, %v3512
    %v3514 = vand.u32 %v2217, 4294901760
    %3515 = vmatmul.f32.gmra.mxu0 %v3514
    %v3516 = vpop.f32.mrf.mxu0
    %v3517 = vadd.f32 %v3432, %v3516
    %v3518 = vand.u32 %v2220, 4294901760
    %3519 = vmatmul.f32.gmra.mxu0 %v3518
    %v3520 = vpop.f32.mrf.mxu0
    %v3521 = vadd.f32 %v3436, %v3520
    %v3522 = vand.u32 %v2223, 4294901760
    %3523 = vmatmul.f32.gmra.mxu0 %v3522
    %v3524 = vpop.f32.mrf.mxu0
    %v3525 = vadd.f32 %v3440, %v3524
    %v3526 = vand.u32 %v2226, 4294901760
    %3527 = vmatmul.f32.gmra.mxu0 %v3526
    %v3528 = vpop.f32.mrf.mxu0
    %v3529 = vadd.f32 %v3444, %v3528
    %v3530 = vand.u32 %v2229, 4294901760
    %3531 = vmatmul.f32.gmra.mxu0 %v3530
    %v3532 = vpop.f32.mrf.mxu0
    %v3533 = vadd.f32 %v3448, %v3532
    %3534 = vdwg.mxu0
    %3535 = vmatpush.msra.mxu0 0.0
    %3536 = vmatpush.msra.mxu0 0.0
    %3537 = vmatpush.msra.mxu0 0.0
    %3538 = vmatpush.msra.mxu0 0.0
    %3539 = vmatpush.msra.mxu0 0.0
    %3540 = vmatpush.msra.mxu0 0.0
    %3541 = vmatpush.msra.mxu0 0.0
    %3542 = vmatpush.msra.mxu0 0.0
    %3543 = vmatpush.msra.mxu0 0.0
    %3544 = vmatpush.msra.mxu0 0.0
    %3545 = vmatpush.msra.mxu0 0.0
    %3546 = vmatpush.msra.mxu0 0.0
    %v3547 = vand.u32 %v1704, 4294901760
    %3548 = vmatpush.msra.mxu0 %v3547
    %v3549 = vand.u32 %v1700, 4294901760
    %3550 = vmatpush.msra.mxu0 %v3549
    %v3551 = vand.u32 %v1696, 4294901760
    %3552 = vmatpush.msra.mxu0 %v3551
    %v3553 = vand.u32 %v1692, 4294901760
    %3554 = vmatpush.msra.mxu0 %v3553
    %v3555 = vand.u32 %v2184, 4294901760
    %v3556 = vsub.f32 %v2184, %v3555
    %v3557 = vand.u32 %v3556, 4294901760
    %v3558 = vsub.f32 %v3556, %v3557
    %v3559 = vand.u32 %v3558, 4294901760
    %3560 = vmatmul.f32.gmra.mxu0 %v3559
    %v3561 = vpop.f32.mrf.mxu0
    %v3562 = vadd.f32 0.0, %v3561
    %v3563 = vand.u32 %v2187, 4294901760
    %v3564 = vsub.f32 %v2187, %v3563
    %v3565 = vand.u32 %v3564, 4294901760
    %v3566 = vsub.f32 %v3564, %v3565
    %v3567 = vand.u32 %v3566, 4294901760
    %3568 = vmatmul.f32.gmra.mxu0 %v3567
    %v3569 = vpop.f32.mrf.mxu0
    %v3570 = vadd.f32 0.0, %v3569
    %v3571 = vand.u32 %v2190, 4294901760
    %v3572 = vsub.f32 %v2190, %v3571
    %v3573 = vand.u32 %v3572, 4294901760
    %v3574 = vsub.f32 %v3572, %v3573
    %v3575 = vand.u32 %v3574, 4294901760
    %3576 = vmatmul.f32.gmra.mxu0 %v3575
    %v3577 = vpop.f32.mrf.mxu0
    %v3578 = vadd.f32 0.0, %v3577
    %v3579 = vand.u32 %v2193, 4294901760
    %v3580 = vsub.f32 %v2193, %v3579
    %v3581 = vand.u32 %v3580, 4294901760
    %v3582 = vsub.f32 %v3580, %v3581
    %v3583 = vand.u32 %v3582, 4294901760
    %3584 = vmatmul.f32.gmra.mxu0 %v3583
    %v3585 = vpop.f32.mrf.mxu0
    %v3586 = vadd.f32 0.0, %v3585
    %v3587 = vand.u32 %v2196, 4294901760
    %v3588 = vsub.f32 %v2196, %v3587
    %v3589 = vand.u32 %v3588, 4294901760
    %v3590 = vsub.f32 %v3588, %v3589
    %v3591 = vand.u32 %v3590, 4294901760
    %3592 = vmatmul.f32.gmra.mxu0 %v3591
    %v3593 = vpop.f32.mrf.mxu0
    %v3594 = vadd.f32 0.0, %v3593
    %v3595 = vand.u32 %v2199, 4294901760
    %v3596 = vsub.f32 %v2199, %v3595
    %v3597 = vand.u32 %v3596, 4294901760
    %v3598 = vsub.f32 %v3596, %v3597
    %v3599 = vand.u32 %v3598, 4294901760
    %3600 = vmatmul.f32.gmra.mxu0 %v3599
    %v3601 = vpop.f32.mrf.mxu0
    %v3602 = vadd.f32 0.0, %v3601
    %v3603 = vand.u32 %v2202, 4294901760
    %v3604 = vsub.f32 %v2202, %v3603
    %v3605 = vand.u32 %v3604, 4294901760
    %v3606 = vsub.f32 %v3604, %v3605
    %v3607 = vand.u32 %v3606, 4294901760
    %3608 = vmatmul.f32.gmra.mxu0 %v3607
    %v3609 = vpop.f32.mrf.mxu0
    %v3610 = vadd.f32 0.0, %v3609
    %v3611 = vand.u32 %v2205, 4294901760
    %v3612 = vsub.f32 %v2205, %v3611
    %v3613 = vand.u32 %v3612, 4294901760
    %v3614 = vsub.f32 %v3612, %v3613
    %v3615 = vand.u32 %v3614, 4294901760
    %3616 = vmatmul.f32.gmra.mxu0 %v3615
    %v3617 = vpop.f32.mrf.mxu0
    %v3618 = vadd.f32 0.0, %v3617
    %v3619 = vand.u32 %v2208, 4294901760
    %v3620 = vsub.f32 %v2208, %v3619
    %v3621 = vand.u32 %v3620, 4294901760
    %v3622 = vsub.f32 %v3620, %v3621
    %v3623 = vand.u32 %v3622, 4294901760
    %3624 = vmatmul.f32.gmra.mxu0 %v3623
    %v3625 = vpop.f32.mrf.mxu0
    %v3626 = vadd.f32 0.0, %v3625
    %v3627 = vand.u32 %v2211, 4294901760
    %v3628 = vsub.f32 %v2211, %v3627
    %v3629 = vand.u32 %v3628, 4294901760
    %v3630 = vsub.f32 %v3628, %v3629
    %v3631 = vand.u32 %v3630, 4294901760
    %3632 = vmatmul.f32.gmra.mxu0 %v3631
    %v3633 = vpop.f32.mrf.mxu0
    %v3634 = vadd.f32 0.0, %v3633
    %v3635 = vand.u32 %v2214, 4294901760
    %v3636 = vsub.f32 %v2214, %v3635
    %v3637 = vand.u32 %v3636, 4294901760
    %v3638 = vsub.f32 %v3636, %v3637
    %v3639 = vand.u32 %v3638, 4294901760
    %3640 = vmatmul.f32.gmra.mxu0 %v3639
    %v3641 = vpop.f32.mrf.mxu0
    %v3642 = vadd.f32 0.0, %v3641
    %v3643 = vand.u32 %v2217, 4294901760
    %v3644 = vsub.f32 %v2217, %v3643
    %v3645 = vand.u32 %v3644, 4294901760
    %v3646 = vsub.f32 %v3644, %v3645
    %v3647 = vand.u32 %v3646, 4294901760
    %3648 = vmatmul.f32.gmra.mxu0 %v3647
    %v3649 = vpop.f32.mrf.mxu0
    %v3650 = vadd.f32 0.0, %v3649
    %v3651 = vand.u32 %v2220, 4294901760
    %v3652 = vsub.f32 %v2220, %v3651
    %v3653 = vand.u32 %v3652, 4294901760
    %v3654 = vsub.f32 %v3652, %v3653
    %v3655 = vand.u32 %v3654, 4294901760
    %3656 = vmatmul.f32.gmra.mxu0 %v3655
    %v3657 = vpop.f32.mrf.mxu0
    %v3658 = vadd.f32 0.0, %v3657
    %v3659 = vand.u32 %v2223, 4294901760
    %v3660 = vsub.f32 %v2223, %v3659
    %v3661 = vand.u32 %v3660, 4294901760
    %v3662 = vsub.f32 %v3660, %v3661
    %v3663 = vand.u32 %v3662, 4294901760
    %3664 = vmatmul.f32.gmra.mxu0 %v3663
    %v3665 = vpop.f32.mrf.mxu0
    %v3666 = vadd.f32 0.0, %v3665
    %v3667 = vand.u32 %v2226, 4294901760
    %v3668 = vsub.f32 %v2226, %v3667
    %v3669 = vand.u32 %v3668, 4294901760
    %v3670 = vsub.f32 %v3668, %v3669
    %v3671 = vand.u32 %v3670, 4294901760
    %3672 = vmatmul.f32.gmra.mxu0 %v3671
    %v3673 = vpop.f32.mrf.mxu0
    %v3674 = vadd.f32 0.0, %v3673
    %v3675 = vand.u32 %v2229, 4294901760
    %v3676 = vsub.f32 %v2229, %v3675
    %v3677 = vand.u32 %v3676, 4294901760
    %v3678 = vsub.f32 %v3676, %v3677
    %v3679 = vand.u32 %v3678, 4294901760
    %3680 = vmatmul.f32.gmra.mxu0 %v3679
    %v3681 = vpop.f32.mrf.mxu0
    %v3682 = vadd.f32 0.0, %v3681
    %3683 = vdwg.mxu0
    %3684 = vmatpush.msra.mxu0 0.0
    %3685 = vmatpush.msra.mxu0 0.0
    %3686 = vmatpush.msra.mxu0 0.0
    %3687 = vmatpush.msra.mxu0 0.0
    %3688 = vmatpush.msra.mxu0 0.0
    %3689 = vmatpush.msra.mxu0 0.0
    %3690 = vmatpush.msra.mxu0 0.0
    %3691 = vmatpush.msra.mxu0 0.0
    %3692 = vmatpush.msra.mxu0 0.0
    %3693 = vmatpush.msra.mxu0 0.0
    %3694 = vmatpush.msra.mxu0 0.0
    %3695 = vmatpush.msra.mxu0 0.0
    %v3696 = vand.u32 %v1704, 4294901760
    %v3697 = vsub.f32 %v1704, %v3696
    %v3698 = vand.u32 %v3697, 4294901760
    %v3699 = vsub.f32 %v3697, %v3698
    %v3700 = vand.u32 %v3699, 4294901760
    %3701 = vmatpush.msra.mxu0 %v3700
    %v3702 = vand.u32 %v1700, 4294901760
    %v3703 = vsub.f32 %v1700, %v3702
    %v3704 = vand.u32 %v3703, 4294901760
    %v3705 = vsub.f32 %v3703, %v3704
    %v3706 = vand.u32 %v3705, 4294901760
    %3707 = vmatpush.msra.mxu0 %v3706
    %v3708 = vand.u32 %v1696, 4294901760
    %v3709 = vsub.f32 %v1696, %v3708
    %v3710 = vand.u32 %v3709, 4294901760
    %v3711 = vsub.f32 %v3709, %v3710
    %v3712 = vand.u32 %v3711, 4294901760
    %3713 = vmatpush.msra.mxu0 %v3712
    %v3714 = vand.u32 %v1692, 4294901760
    %v3715 = vsub.f32 %v1692, %v3714
    %v3716 = vand.u32 %v3715, 4294901760
    %v3717 = vsub.f32 %v3715, %v3716
    %v3718 = vand.u32 %v3717, 4294901760
    %3719 = vmatpush.msra.mxu0 %v3718
    %v3720 = vand.u32 %v2184, 4294901760
    %3721 = vmatmul.f32.gmra.mxu0 %v3720
    %v3722 = vpop.f32.mrf.mxu0
    %v3723 = vadd.f32 %v3562, %v3722
    %v3724 = vand.u32 %v2187, 4294901760
    %3725 = vmatmul.f32.gmra.mxu0 %v3724
    %v3726 = vpop.f32.mrf.mxu0
    %v3727 = vadd.f32 %v3570, %v3726
    %v3728 = vand.u32 %v2190, 4294901760
    %3729 = vmatmul.f32.gmra.mxu0 %v3728
    %v3730 = vpop.f32.mrf.mxu0
    %v3731 = vadd.f32 %v3578, %v3730
    %v3732 = vand.u32 %v2193, 4294901760
    %3733 = vmatmul.f32.gmra.mxu0 %v3732
    %v3734 = vpop.f32.mrf.mxu0
    %v3735 = vadd.f32 %v3586, %v3734
    %v3736 = vand.u32 %v2196, 4294901760
    %3737 = vmatmul.f32.gmra.mxu0 %v3736
    %v3738 = vpop.f32.mrf.mxu0
    %v3739 = vadd.f32 %v3594, %v3738
    %v3740 = vand.u32 %v2199, 4294901760
    %3741 = vmatmul.f32.gmra.mxu0 %v3740
    %v3742 = vpop.f32.mrf.mxu0
    %v3743 = vadd.f32 %v3602, %v3742
    %v3744 = vand.u32 %v2202, 4294901760
    %3745 = vmatmul.f32.gmra.mxu0 %v3744
    %v3746 = vpop.f32.mrf.mxu0
    %v3747 = vadd.f32 %v3610, %v3746
    %v3748 = vand.u32 %v2205, 4294901760
    %3749 = vmatmul.f32.gmra.mxu0 %v3748
    %v3750 = vpop.f32.mrf.mxu0
    %v3751 = vadd.f32 %v3618, %v3750
    %v3752 = vand.u32 %v2208, 4294901760
    %3753 = vmatmul.f32.gmra.mxu0 %v3752
    %v3754 = vpop.f32.mrf.mxu0
    %v3755 = vadd.f32 %v3626, %v3754
    %v3756 = vand.u32 %v2211, 4294901760
    %3757 = vmatmul.f32.gmra.mxu0 %v3756
    %v3758 = vpop.f32.mrf.mxu0
    %v3759 = vadd.f32 %v3634, %v3758
    %v3760 = vand.u32 %v2214, 4294901760
    %3761 = vmatmul.f32.gmra.mxu0 %v3760
    %v3762 = vpop.f32.mrf.mxu0
    %v3763 = vadd.f32 %v3642, %v3762
    %v3764 = vand.u32 %v2217, 4294901760
    %3765 = vmatmul.f32.gmra.mxu0 %v3764
    %v3766 = vpop.f32.mrf.mxu0
    %v3767 = vadd.f32 %v3650, %v3766
    %v3768 = vand.u32 %v2220, 4294901760
    %3769 = vmatmul.f32.gmra.mxu0 %v3768
    %v3770 = vpop.f32.mrf.mxu0
    %v3771 = vadd.f32 %v3658, %v3770
    %v3772 = vand.u32 %v2223, 4294901760
    %3773 = vmatmul.f32.gmra.mxu0 %v3772
    %v3774 = vpop.f32.mrf.mxu0
    %v3775 = vadd.f32 %v3666, %v3774
    %v3776 = vand.u32 %v2226, 4294901760
    %3777 = vmatmul.f32.gmra.mxu0 %v3776
    %v3778 = vpop.f32.mrf.mxu0
    %v3779 = vadd.f32 %v3674, %v3778
    %v3780 = vand.u32 %v2229, 4294901760
    %3781 = vmatmul.f32.gmra.mxu0 %v3780
    %v3782 = vpop.f32.mrf.mxu0
    %v3783 = vadd.f32 %v3682, %v3782
    %3784 = vdwg.mxu0
    %3785 = vmatpush.msra.mxu0 0.0
    %3786 = vmatpush.msra.mxu0 0.0
    %3787 = vmatpush.msra.mxu0 0.0
    %3788 = vmatpush.msra.mxu0 0.0
    %3789 = vmatpush.msra.mxu0 0.0
    %3790 = vmatpush.msra.mxu0 0.0
    %3791 = vmatpush.msra.mxu0 0.0
    %3792 = vmatpush.msra.mxu0 0.0
    %3793 = vmatpush.msra.mxu0 0.0
    %3794 = vmatpush.msra.mxu0 0.0
    %3795 = vmatpush.msra.mxu0 0.0
    %3796 = vmatpush.msra.mxu0 0.0
    %v3797 = vand.u32 %v1704, 4294901760
    %v3798 = vsub.f32 %v1704, %v3797
    %3799 = vmatpush.msra.mxu0 %v3798
    %v3800 = vand.u32 %v1700, 4294901760
    %v3801 = vsub.f32 %v1700, %v3800
    %3802 = vmatpush.msra.mxu0 %v3801
    %v3803 = vand.u32 %v1696, 4294901760
    %v3804 = vsub.f32 %v1696, %v3803
    %3805 = vmatpush.msra.mxu0 %v3804
    %v3806 = vand.u32 %v1692, 4294901760
    %v3807 = vsub.f32 %v1692, %v3806
    %3808 = vmatpush.msra.mxu0 %v3807
    %v3809 = vand.u32 %v2184, 4294901760
    %v3810 = vsub.f32 %v2184, %v3809
    %3811 = vmatmul.f32.gmra.mxu0 %v3810
    %v3812 = vpop.f32.mrf.mxu0
    %v3813 = vadd.f32 %v3723, %v3812
    %v3814 = vand.u32 %v2187, 4294901760
    %v3815 = vsub.f32 %v2187, %v3814
    %3816 = vmatmul.f32.gmra.mxu0 %v3815
    %v3817 = vpop.f32.mrf.mxu0
    %v3818 = vadd.f32 %v3727, %v3817
    %v3819 = vand.u32 %v2190, 4294901760
    %v3820 = vsub.f32 %v2190, %v3819
    %3821 = vmatmul.f32.gmra.mxu0 %v3820
    %v3822 = vpop.f32.mrf.mxu0
    %v3823 = vadd.f32 %v3731, %v3822
    %v3824 = vand.u32 %v2193, 4294901760
    %v3825 = vsub.f32 %v2193, %v3824
    %3826 = vmatmul.f32.gmra.mxu0 %v3825
    %v3827 = vpop.f32.mrf.mxu0
    %v3828 = vadd.f32 %v3735, %v3827
    %v3829 = vand.u32 %v2196, 4294901760
    %v3830 = vsub.f32 %v2196, %v3829
    %3831 = vmatmul.f32.gmra.mxu0 %v3830
    %v3832 = vpop.f32.mrf.mxu0
    %v3833 = vadd.f32 %v3739, %v3832
    %v3834 = vand.u32 %v2199, 4294901760
    %v3835 = vsub.f32 %v2199, %v3834
    %3836 = vmatmul.f32.gmra.mxu0 %v3835
    %v3837 = vpop.f32.mrf.mxu0
    %v3838 = vadd.f32 %v3743, %v3837
    %v3839 = vand.u32 %v2202, 4294901760
    %v3840 = vsub.f32 %v2202, %v3839
    %3841 = vmatmul.f32.gmra.mxu0 %v3840
    %v3842 = vpop.f32.mrf.mxu0
    %v3843 = vadd.f32 %v3747, %v3842
    %v3844 = vand.u32 %v2205, 4294901760
    %v3845 = vsub.f32 %v2205, %v3844
    %3846 = vmatmul.f32.gmra.mxu0 %v3845
    %v3847 = vpop.f32.mrf.mxu0
    %v3848 = vadd.f32 %v3751, %v3847
    %v3849 = vand.u32 %v2208, 4294901760
    %v3850 = vsub.f32 %v2208, %v3849
    %3851 = vmatmul.f32.gmra.mxu0 %v3850
    %v3852 = vpop.f32.mrf.mxu0
    %v3853 = vadd.f32 %v3755, %v3852
    %v3854 = vand.u32 %v2211, 4294901760
    %v3855 = vsub.f32 %v2211, %v3854
    %3856 = vmatmul.f32.gmra.mxu0 %v3855
    %v3857 = vpop.f32.mrf.mxu0
    %v3858 = vadd.f32 %v3759, %v3857
    %v3859 = vand.u32 %v2214, 4294901760
    %v3860 = vsub.f32 %v2214, %v3859
    %3861 = vmatmul.f32.gmra.mxu0 %v3860
    %v3862 = vpop.f32.mrf.mxu0
    %v3863 = vadd.f32 %v3763, %v3862
    %v3864 = vand.u32 %v2217, 4294901760
    %v3865 = vsub.f32 %v2217, %v3864
    %3866 = vmatmul.f32.gmra.mxu0 %v3865
    %v3867 = vpop.f32.mrf.mxu0
    %v3868 = vadd.f32 %v3767, %v3867
    %v3869 = vand.u32 %v2220, 4294901760
    %v3870 = vsub.f32 %v2220, %v3869
    %3871 = vmatmul.f32.gmra.mxu0 %v3870
    %v3872 = vpop.f32.mrf.mxu0
    %v3873 = vadd.f32 %v3771, %v3872
    %v3874 = vand.u32 %v2223, 4294901760
    %v3875 = vsub.f32 %v2223, %v3874
    %3876 = vmatmul.f32.gmra.mxu0 %v3875
    %v3877 = vpop.f32.mrf.mxu0
    %v3878 = vadd.f32 %v3775, %v3877
    %v3879 = vand.u32 %v2226, 4294901760
    %v3880 = vsub.f32 %v2226, %v3879
    %3881 = vmatmul.f32.gmra.mxu0 %v3880
    %v3882 = vpop.f32.mrf.mxu0
    %v3883 = vadd.f32 %v3779, %v3882
    %v3884 = vand.u32 %v2229, 4294901760
    %v3885 = vsub.f32 %v2229, %v3884
    %3886 = vmatmul.f32.gmra.mxu0 %v3885
    %v3887 = vpop.f32.mrf.mxu0
    %v3888 = vadd.f32 %v3783, %v3887
    %3889 = vdwg.mxu0
    %3890 = vmatpush.msra.mxu0 0.0
    %3891 = vmatpush.msra.mxu0 0.0
    %3892 = vmatpush.msra.mxu0 0.0
    %3893 = vmatpush.msra.mxu0 0.0
    %3894 = vmatpush.msra.mxu0 0.0
    %3895 = vmatpush.msra.mxu0 0.0
    %3896 = vmatpush.msra.mxu0 0.0
    %3897 = vmatpush.msra.mxu0 0.0
    %3898 = vmatpush.msra.mxu0 0.0
    %3899 = vmatpush.msra.mxu0 0.0
    %3900 = vmatpush.msra.mxu0 0.0
    %3901 = vmatpush.msra.mxu0 0.0
    %v3902 = vand.u32 %v1704, 4294901760
    %3903 = vmatpush.msra.mxu0 %v3902
    %v3904 = vand.u32 %v1700, 4294901760
    %3905 = vmatpush.msra.mxu0 %v3904
    %v3906 = vand.u32 %v1696, 4294901760
    %3907 = vmatpush.msra.mxu0 %v3906
    %v3908 = vand.u32 %v1692, 4294901760
    %3909 = vmatpush.msra.mxu0 %v3908
    %v3910 = vand.u32 %v2184, 4294901760
    %v3911 = vsub.f32 %v2184, %v3910
    %v3912 = vand.u32 %v3911, 4294901760
    %3913 = vmatmul.f32.gmra.mxu0 %v3912
    %v3914 = vpop.f32.mrf.mxu0
    %v3915 = vadd.f32 %v3813, %v3914
    %v3916 = vand.u32 %v2187, 4294901760
    %v3917 = vsub.f32 %v2187, %v3916
    %v3918 = vand.u32 %v3917, 4294901760
    %3919 = vmatmul.f32.gmra.mxu0 %v3918
    %v3920 = vpop.f32.mrf.mxu0
    %v3921 = vadd.f32 %v3818, %v3920
    %v3922 = vand.u32 %v2190, 4294901760
    %v3923 = vsub.f32 %v2190, %v3922
    %v3924 = vand.u32 %v3923, 4294901760
    %3925 = vmatmul.f32.gmra.mxu0 %v3924
    %v3926 = vpop.f32.mrf.mxu0
    %v3927 = vadd.f32 %v3823, %v3926
    %v3928 = vand.u32 %v2193, 4294901760
    %v3929 = vsub.f32 %v2193, %v3928
    %v3930 = vand.u32 %v3929, 4294901760
    %3931 = vmatmul.f32.gmra.mxu0 %v3930
    %v3932 = vpop.f32.mrf.mxu0
    %v3933 = vadd.f32 %v3828, %v3932
    %v3934 = vand.u32 %v2196, 4294901760
    %v3935 = vsub.f32 %v2196, %v3934
    %v3936 = vand.u32 %v3935, 4294901760
    %3937 = vmatmul.f32.gmra.mxu0 %v3936
    %v3938 = vpop.f32.mrf.mxu0
    %v3939 = vadd.f32 %v3833, %v3938
    %v3940 = vand.u32 %v2199, 4294901760
    %v3941 = vsub.f32 %v2199, %v3940
    %v3942 = vand.u32 %v3941, 4294901760
    %3943 = vmatmul.f32.gmra.mxu0 %v3942
    %v3944 = vpop.f32.mrf.mxu0
    %v3945 = vadd.f32 %v3838, %v3944
    %v3946 = vand.u32 %v2202, 4294901760
    %v3947 = vsub.f32 %v2202, %v3946
    %v3948 = vand.u32 %v3947, 4294901760
    %3949 = vmatmul.f32.gmra.mxu0 %v3948
    %v3950 = vpop.f32.mrf.mxu0
    %v3951 = vadd.f32 %v3843, %v3950
    %v3952 = vand.u32 %v2205, 4294901760
    %v3953 = vsub.f32 %v2205, %v3952
    %v3954 = vand.u32 %v3953, 4294901760
    %3955 = vmatmul.f32.gmra.mxu0 %v3954
    %v3956 = vpop.f32.mrf.mxu0
    %v3957 = vadd.f32 %v3848, %v3956
    %v3958 = vand.u32 %v2208, 4294901760
    %v3959 = vsub.f32 %v2208, %v3958
    %v3960 = vand.u32 %v3959, 4294901760
    %3961 = vmatmul.f32.gmra.mxu0 %v3960
    %v3962 = vpop.f32.mrf.mxu0
    %v3963 = vadd.f32 %v3853, %v3962
    %v3964 = vand.u32 %v2211, 4294901760
    %v3965 = vsub.f32 %v2211, %v3964
    %v3966 = vand.u32 %v3965, 4294901760
    %3967 = vmatmul.f32.gmra.mxu0 %v3966
    %v3968 = vpop.f32.mrf.mxu0
    %v3969 = vadd.f32 %v3858, %v3968
    %v3970 = vand.u32 %v2214, 4294901760
    %v3971 = vsub.f32 %v2214, %v3970
    %v3972 = vand.u32 %v3971, 4294901760
    %3973 = vmatmul.f32.gmra.mxu0 %v3972
    %v3974 = vpop.f32.mrf.mxu0
    %v3975 = vadd.f32 %v3863, %v3974
    %v3976 = vand.u32 %v2217, 4294901760
    %v3977 = vsub.f32 %v2217, %v3976
    %v3978 = vand.u32 %v3977, 4294901760
    %3979 = vmatmul.f32.gmra.mxu0 %v3978
    %v3980 = vpop.f32.mrf.mxu0
    %v3981 = vadd.f32 %v3868, %v3980
    %v3982 = vand.u32 %v2220, 4294901760
    %v3983 = vsub.f32 %v2220, %v3982
    %v3984 = vand.u32 %v3983, 4294901760
    %3985 = vmatmul.f32.gmra.mxu0 %v3984
    %v3986 = vpop.f32.mrf.mxu0
    %v3987 = vadd.f32 %v3873, %v3986
    %v3988 = vand.u32 %v2223, 4294901760
    %v3989 = vsub.f32 %v2223, %v3988
    %v3990 = vand.u32 %v3989, 4294901760
    %3991 = vmatmul.f32.gmra.mxu0 %v3990
    %v3992 = vpop.f32.mrf.mxu0
    %v3993 = vadd.f32 %v3878, %v3992
    %v3994 = vand.u32 %v2226, 4294901760
    %v3995 = vsub.f32 %v2226, %v3994
    %v3996 = vand.u32 %v3995, 4294901760
    %3997 = vmatmul.f32.gmra.mxu0 %v3996
    %v3998 = vpop.f32.mrf.mxu0
    %v3999 = vadd.f32 %v3883, %v3998
    %v4000 = vand.u32 %v2229, 4294901760
    %v4001 = vsub.f32 %v2229, %v4000
    %v4002 = vand.u32 %v4001, 4294901760
    %4003 = vmatmul.f32.gmra.mxu0 %v4002
    %v4004 = vpop.f32.mrf.mxu0
    %v4005 = vadd.f32 %v3888, %v4004
    %4006 = vdwg.mxu0
    %4007 = vmatpush.msra.mxu0 0.0
    %4008 = vmatpush.msra.mxu0 0.0
    %4009 = vmatpush.msra.mxu0 0.0
    %4010 = vmatpush.msra.mxu0 0.0
    %4011 = vmatpush.msra.mxu0 0.0
    %4012 = vmatpush.msra.mxu0 0.0
    %4013 = vmatpush.msra.mxu0 0.0
    %4014 = vmatpush.msra.mxu0 0.0
    %4015 = vmatpush.msra.mxu0 0.0
    %4016 = vmatpush.msra.mxu0 0.0
    %4017 = vmatpush.msra.mxu0 0.0
    %4018 = vmatpush.msra.mxu0 0.0
    %v4019 = vand.u32 %v1704, 4294901760
    %v4020 = vsub.f32 %v1704, %v4019
    %v4021 = vand.u32 %v4020, 4294901760
    %4022 = vmatpush.msra.mxu0 %v4021
    %v4023 = vand.u32 %v1700, 4294901760
    %v4024 = vsub.f32 %v1700, %v4023
    %v4025 = vand.u32 %v4024, 4294901760
    %4026 = vmatpush.msra.mxu0 %v4025
    %v4027 = vand.u32 %v1696, 4294901760
    %v4028 = vsub.f32 %v1696, %v4027
    %v4029 = vand.u32 %v4028, 4294901760
    %4030 = vmatpush.msra.mxu0 %v4029
    %v4031 = vand.u32 %v1692, 4294901760
    %v4032 = vsub.f32 %v1692, %v4031
    %v4033 = vand.u32 %v4032, 4294901760
    %4034 = vmatpush.msra.mxu0 %v4033
    %v4035 = vand.u32 %v2184, 4294901760
    %4036 = vmatmul.f32.gmra.mxu0 %v4035
    %v4037 = vpop.f32.mrf.mxu0
    %v4038 = vadd.f32 %v3915, %v4037
    %v4039 = vand.u32 %v2187, 4294901760
    %4040 = vmatmul.f32.gmra.mxu0 %v4039
    %v4041 = vpop.f32.mrf.mxu0
    %v4042 = vadd.f32 %v3921, %v4041
    %v4043 = vand.u32 %v2190, 4294901760
    %4044 = vmatmul.f32.gmra.mxu0 %v4043
    %v4045 = vpop.f32.mrf.mxu0
    %v4046 = vadd.f32 %v3927, %v4045
    %v4047 = vand.u32 %v2193, 4294901760
    %4048 = vmatmul.f32.gmra.mxu0 %v4047
    %v4049 = vpop.f32.mrf.mxu0
    %v4050 = vadd.f32 %v3933, %v4049
    %v4051 = vand.u32 %v2196, 4294901760
    %4052 = vmatmul.f32.gmra.mxu0 %v4051
    %v4053 = vpop.f32.mrf.mxu0
    %v4054 = vadd.f32 %v3939, %v4053
    %v4055 = vand.u32 %v2199, 4294901760
    %4056 = vmatmul.f32.gmra.mxu0 %v4055
    %v4057 = vpop.f32.mrf.mxu0
    %v4058 = vadd.f32 %v3945, %v4057
    %v4059 = vand.u32 %v2202, 4294901760
    %4060 = vmatmul.f32.gmra.mxu0 %v4059
    %v4061 = vpop.f32.mrf.mxu0
    %v4062 = vadd.f32 %v3951, %v4061
    %v4063 = vand.u32 %v2205, 4294901760
    %4064 = vmatmul.f32.gmra.mxu0 %v4063
    %v4065 = vpop.f32.mrf.mxu0
    %v4066 = vadd.f32 %v3957, %v4065
    %v4067 = vand.u32 %v2208, 4294901760
    %4068 = vmatmul.f32.gmra.mxu0 %v4067
    %v4069 = vpop.f32.mrf.mxu0
    %v4070 = vadd.f32 %v3963, %v4069
    %v4071 = vand.u32 %v2211, 4294901760
    %4072 = vmatmul.f32.gmra.mxu0 %v4071
    %v4073 = vpop.f32.mrf.mxu0
    %v4074 = vadd.f32 %v3969, %v4073
    %v4075 = vand.u32 %v2214, 4294901760
    %4076 = vmatmul.f32.gmra.mxu0 %v4075
    %v4077 = vpop.f32.mrf.mxu0
    %v4078 = vadd.f32 %v3975, %v4077
    %v4079 = vand.u32 %v2217, 4294901760
    %4080 = vmatmul.f32.gmra.mxu0 %v4079
    %v4081 = vpop.f32.mrf.mxu0
    %v4082 = vadd.f32 %v3981, %v4081
    %v4083 = vand.u32 %v2220, 4294901760
    %4084 = vmatmul.f32.gmra.mxu0 %v4083
    %v4085 = vpop.f32.mrf.mxu0
    %v4086 = vadd.f32 %v3987, %v4085
    %v4087 = vand.u32 %v2223, 4294901760
    %4088 = vmatmul.f32.gmra.mxu0 %v4087
    %v4089 = vpop.f32.mrf.mxu0
    %v4090 = vadd.f32 %v3993, %v4089
    %v4091 = vand.u32 %v2226, 4294901760
    %4092 = vmatmul.f32.gmra.mxu0 %v4091
    %v4093 = vpop.f32.mrf.mxu0
    %v4094 = vadd.f32 %v3999, %v4093
    %v4095 = vand.u32 %v2229, 4294901760
    %4096 = vmatmul.f32.gmra.mxu0 %v4095
    %v4097 = vpop.f32.mrf.mxu0
    %v4098 = vadd.f32 %v4005, %v4097
    %4099 = vdwg.mxu0
    %4100 = vmatpush.msra.mxu0 0.0
    %4101 = vmatpush.msra.mxu0 0.0
    %4102 = vmatpush.msra.mxu0 0.0
    %4103 = vmatpush.msra.mxu0 0.0
    %4104 = vmatpush.msra.mxu0 0.0
    %4105 = vmatpush.msra.mxu0 0.0
    %4106 = vmatpush.msra.mxu0 0.0
    %4107 = vmatpush.msra.mxu0 0.0
    %4108 = vmatpush.msra.mxu0 0.0
    %4109 = vmatpush.msra.mxu0 0.0
    %4110 = vmatpush.msra.mxu0 0.0
    %4111 = vmatpush.msra.mxu0 0.0
    %v4112 = vand.u32 %v1704, 4294901760
    %4113 = vmatpush.msra.mxu0 %v4112
    %v4114 = vand.u32 %v1700, 4294901760
    %4115 = vmatpush.msra.mxu0 %v4114
    %v4116 = vand.u32 %v1696, 4294901760
    %4117 = vmatpush.msra.mxu0 %v4116
    %v4118 = vand.u32 %v1692, 4294901760
    %4119 = vmatpush.msra.mxu0 %v4118
    %v4120 = vand.u32 %v2184, 4294901760
    %4121 = vmatmul.f32.gmra.mxu0 %v4120
    %v4122 = vpop.f32.mrf.mxu0
    %v4123 = vadd.f32 %v4038, %v4122
    %v4124 = vand.u32 %v2187, 4294901760
    %4125 = vmatmul.f32.gmra.mxu0 %v4124
    %v4126 = vpop.f32.mrf.mxu0
    %v4127 = vadd.f32 %v4042, %v4126
    %v4128 = vand.u32 %v2190, 4294901760
    %4129 = vmatmul.f32.gmra.mxu0 %v4128
    %v4130 = vpop.f32.mrf.mxu0
    %v4131 = vadd.f32 %v4046, %v4130
    %v4132 = vand.u32 %v2193, 4294901760
    %4133 = vmatmul.f32.gmra.mxu0 %v4132
    %v4134 = vpop.f32.mrf.mxu0
    %v4135 = vadd.f32 %v4050, %v4134
    %v4136 = vand.u32 %v2196, 4294901760
    %4137 = vmatmul.f32.gmra.mxu0 %v4136
    %v4138 = vpop.f32.mrf.mxu0
    %v4139 = vadd.f32 %v4054, %v4138
    %v4140 = vand.u32 %v2199, 4294901760
    %4141 = vmatmul.f32.gmra.mxu0 %v4140
    %v4142 = vpop.f32.mrf.mxu0
    %v4143 = vadd.f32 %v4058, %v4142
    %v4144 = vand.u32 %v2202, 4294901760
    %4145 = vmatmul.f32.gmra.mxu0 %v4144
    %v4146 = vpop.f32.mrf.mxu0
    %v4147 = vadd.f32 %v4062, %v4146
    %v4148 = vand.u32 %v2205, 4294901760
    %4149 = vmatmul.f32.gmra.mxu0 %v4148
    %v4150 = vpop.f32.mrf.mxu0
    %v4151 = vadd.f32 %v4066, %v4150
    %v4152 = vand.u32 %v2208, 4294901760
    %4153 = vmatmul.f32.gmra.mxu0 %v4152
    %v4154 = vpop.f32.mrf.mxu0
    %v4155 = vadd.f32 %v4070, %v4154
    %v4156 = vand.u32 %v2211, 4294901760
    %4157 = vmatmul.f32.gmra.mxu0 %v4156
    %v4158 = vpop.f32.mrf.mxu0
    %v4159 = vadd.f32 %v4074, %v4158
    %v4160 = vand.u32 %v2214, 4294901760
    %4161 = vmatmul.f32.gmra.mxu0 %v4160
    %v4162 = vpop.f32.mrf.mxu0
    %v4163 = vadd.f32 %v4078, %v4162
    %v4164 = vand.u32 %v2217, 4294901760
    %4165 = vmatmul.f32.gmra.mxu0 %v4164
    %v4166 = vpop.f32.mrf.mxu0
    %v4167 = vadd.f32 %v4082, %v4166
    %v4168 = vand.u32 %v2220, 4294901760
    %4169 = vmatmul.f32.gmra.mxu0 %v4168
    %v4170 = vpop.f32.mrf.mxu0
    %v4171 = vadd.f32 %v4086, %v4170
    %v4172 = vand.u32 %v2223, 4294901760
    %4173 = vmatmul.f32.gmra.mxu0 %v4172
    %v4174 = vpop.f32.mrf.mxu0
    %v4175 = vadd.f32 %v4090, %v4174
    %v4176 = vand.u32 %v2226, 4294901760
    %4177 = vmatmul.f32.gmra.mxu0 %v4176
    %v4178 = vpop.f32.mrf.mxu0
    %v4179 = vadd.f32 %v4094, %v4178
    %v4180 = vand.u32 %v2229, 4294901760
    %4181 = vmatmul.f32.gmra.mxu0 %v4180
    %v4182 = vpop.f32.mrf.mxu0
    %v4183 = vadd.f32 %v4098, %v4182
    %4184 = vdwg.mxu0
    %4185 = vmatpush.msra.mxu0 0.0
    %4186 = vmatpush.msra.mxu0 0.0
    %4187 = vmatpush.msra.mxu0 0.0
    %4188 = vmatpush.msra.mxu0 0.0
    %4189 = vmatpush.msra.mxu0 0.0
    %4190 = vmatpush.msra.mxu0 0.0
    %4191 = vmatpush.msra.mxu0 0.0
    %4192 = vmatpush.msra.mxu0 0.0
    %4193 = vmatpush.msra.mxu0 0.0
    %4194 = vmatpush.msra.mxu0 0.0
    %4195 = vmatpush.msra.mxu0 0.0
    %4196 = vmatpush.msra.mxu0 0.0
    %v4197 = vand.u32 %v1994, 4294901760
    %4198 = vmatpush.msra.mxu0 %v4197
    %v4199 = vand.u32 %v1990, 4294901760
    %4200 = vmatpush.msra.mxu0 %v4199
    %v4201 = vand.u32 %v1986, 4294901760
    %4202 = vmatpush.msra.mxu0 %v4201
    %v4203 = vand.u32 %v1982, 4294901760
    %4204 = vmatpush.msra.mxu0 %v4203
    %v4205 = vand.u32 %v2184, 4294901760
    %v4206 = vsub.f32 %v2184, %v4205
    %v4207 = vand.u32 %v4206, 4294901760
    %v4208 = vsub.f32 %v4206, %v4207
    %v4209 = vand.u32 %v4208, 4294901760
    %4210 = vmatmul.f32.gmra.mxu0 %v4209
    %v4211 = vpop.f32.mrf.mxu0
    %v4212 = vadd.f32 0.0, %v4211
    %v4213 = vand.u32 %v2187, 4294901760
    %v4214 = vsub.f32 %v2187, %v4213
    %v4215 = vand.u32 %v4214, 4294901760
    %v4216 = vsub.f32 %v4214, %v4215
    %v4217 = vand.u32 %v4216, 4294901760
    %4218 = vmatmul.f32.gmra.mxu0 %v4217
    %v4219 = vpop.f32.mrf.mxu0
    %v4220 = vadd.f32 0.0, %v4219
    %v4221 = vand.u32 %v2190, 4294901760
    %v4222 = vsub.f32 %v2190, %v4221
    %v4223 = vand.u32 %v4222, 4294901760
    %v4224 = vsub.f32 %v4222, %v4223
    %v4225 = vand.u32 %v4224, 4294901760
    %4226 = vmatmul.f32.gmra.mxu0 %v4225
    %v4227 = vpop.f32.mrf.mxu0
    %v4228 = vadd.f32 0.0, %v4227
    %v4229 = vand.u32 %v2193, 4294901760
    %v4230 = vsub.f32 %v2193, %v4229
    %v4231 = vand.u32 %v4230, 4294901760
    %v4232 = vsub.f32 %v4230, %v4231
    %v4233 = vand.u32 %v4232, 4294901760
    %4234 = vmatmul.f32.gmra.mxu0 %v4233
    %v4235 = vpop.f32.mrf.mxu0
    %v4236 = vadd.f32 0.0, %v4235
    %v4237 = vand.u32 %v2196, 4294901760
    %v4238 = vsub.f32 %v2196, %v4237
    %v4239 = vand.u32 %v4238, 4294901760
    %v4240 = vsub.f32 %v4238, %v4239
    %v4241 = vand.u32 %v4240, 4294901760
    %4242 = vmatmul.f32.gmra.mxu0 %v4241
    %v4243 = vpop.f32.mrf.mxu0
    %v4244 = vadd.f32 0.0, %v4243
    %v4245 = vand.u32 %v2199, 4294901760
    %v4246 = vsub.f32 %v2199, %v4245
    %v4247 = vand.u32 %v4246, 4294901760
    %v4248 = vsub.f32 %v4246, %v4247
    %v4249 = vand.u32 %v4248, 4294901760
    %4250 = vmatmul.f32.gmra.mxu0 %v4249
    %v4251 = vpop.f32.mrf.mxu0
    %v4252 = vadd.f32 0.0, %v4251
    %v4253 = vand.u32 %v2202, 4294901760
    %v4254 = vsub.f32 %v2202, %v4253
    %v4255 = vand.u32 %v4254, 4294901760
    %v4256 = vsub.f32 %v4254, %v4255
    %v4257 = vand.u32 %v4256, 4294901760
    %4258 = vmatmul.f32.gmra.mxu0 %v4257
    %v4259 = vpop.f32.mrf.mxu0
    %v4260 = vadd.f32 0.0, %v4259
    %v4261 = vand.u32 %v2205, 4294901760
    %v4262 = vsub.f32 %v2205, %v4261
    %v4263 = vand.u32 %v4262, 4294901760
    %v4264 = vsub.f32 %v4262, %v4263
    %v4265 = vand.u32 %v4264, 4294901760
    %4266 = vmatmul.f32.gmra.mxu0 %v4265
    %v4267 = vpop.f32.mrf.mxu0
    %v4268 = vadd.f32 0.0, %v4267
    %v4269 = vand.u32 %v2208, 4294901760
    %v4270 = vsub.f32 %v2208, %v4269
    %v4271 = vand.u32 %v4270, 4294901760
    %v4272 = vsub.f32 %v4270, %v4271
    %v4273 = vand.u32 %v4272, 4294901760
    %4274 = vmatmul.f32.gmra.mxu0 %v4273
    %v4275 = vpop.f32.mrf.mxu0
    %v4276 = vadd.f32 0.0, %v4275
    %v4277 = vand.u32 %v2211, 4294901760
    %v4278 = vsub.f32 %v2211, %v4277
    %v4279 = vand.u32 %v4278, 4294901760
    %v4280 = vsub.f32 %v4278, %v4279
    %v4281 = vand.u32 %v4280, 4294901760
    %4282 = vmatmul.f32.gmra.mxu0 %v4281
    %v4283 = vpop.f32.mrf.mxu0
    %v4284 = vadd.f32 0.0, %v4283
    %v4285 = vand.u32 %v2214, 4294901760
    %v4286 = vsub.f32 %v2214, %v4285
    %v4287 = vand.u32 %v4286, 4294901760
    %v4288 = vsub.f32 %v4286, %v4287
    %v4289 = vand.u32 %v4288, 4294901760
    %4290 = vmatmul.f32.gmra.mxu0 %v4289
    %v4291 = vpop.f32.mrf.mxu0
    %v4292 = vadd.f32 0.0, %v4291
    %v4293 = vand.u32 %v2217, 4294901760
    %v4294 = vsub.f32 %v2217, %v4293
    %v4295 = vand.u32 %v4294, 4294901760
    %v4296 = vsub.f32 %v4294, %v4295
    %v4297 = vand.u32 %v4296, 4294901760
    %4298 = vmatmul.f32.gmra.mxu0 %v4297
    %v4299 = vpop.f32.mrf.mxu0
    %v4300 = vadd.f32 0.0, %v4299
    %v4301 = vand.u32 %v2220, 4294901760
    %v4302 = vsub.f32 %v2220, %v4301
    %v4303 = vand.u32 %v4302, 4294901760
    %v4304 = vsub.f32 %v4302, %v4303
    %v4305 = vand.u32 %v4304, 4294901760
    %4306 = vmatmul.f32.gmra.mxu0 %v4305
    %v4307 = vpop.f32.mrf.mxu0
    %v4308 = vadd.f32 0.0, %v4307
    %v4309 = vand.u32 %v2223, 4294901760
    %v4310 = vsub.f32 %v2223, %v4309
    %v4311 = vand.u32 %v4310, 4294901760
    %v4312 = vsub.f32 %v4310, %v4311
    %v4313 = vand.u32 %v4312, 4294901760
    %4314 = vmatmul.f32.gmra.mxu0 %v4313
    %v4315 = vpop.f32.mrf.mxu0
    %v4316 = vadd.f32 0.0, %v4315
    %v4317 = vand.u32 %v2226, 4294901760
    %v4318 = vsub.f32 %v2226, %v4317
    %v4319 = vand.u32 %v4318, 4294901760
    %v4320 = vsub.f32 %v4318, %v4319
    %v4321 = vand.u32 %v4320, 4294901760
    %4322 = vmatmul.f32.gmra.mxu0 %v4321
    %v4323 = vpop.f32.mrf.mxu0
    %v4324 = vadd.f32 0.0, %v4323
    %v4325 = vand.u32 %v2229, 4294901760
    %v4326 = vsub.f32 %v2229, %v4325
    %v4327 = vand.u32 %v4326, 4294901760
    %v4328 = vsub.f32 %v4326, %v4327
    %v4329 = vand.u32 %v4328, 4294901760
    %4330 = vmatmul.f32.gmra.mxu0 %v4329
    %v4331 = vpop.f32.mrf.mxu0
    %v4332 = vadd.f32 0.0, %v4331
    %4333 = vdwg.mxu0
    %4334 = vmatpush.msra.mxu0 0.0
    %4335 = vmatpush.msra.mxu0 0.0
    %4336 = vmatpush.msra.mxu0 0.0
    %4337 = vmatpush.msra.mxu0 0.0
    %4338 = vmatpush.msra.mxu0 0.0
    %4339 = vmatpush.msra.mxu0 0.0
    %4340 = vmatpush.msra.mxu0 0.0
    %4341 = vmatpush.msra.mxu0 0.0
    %4342 = vmatpush.msra.mxu0 0.0
    %4343 = vmatpush.msra.mxu0 0.0
    %4344 = vmatpush.msra.mxu0 0.0
    %4345 = vmatpush.msra.mxu0 0.0
    %v4346 = vand.u32 %v1994, 4294901760
    %v4347 = vsub.f32 %v1994, %v4346
    %v4348 = vand.u32 %v4347, 4294901760
    %v4349 = vsub.f32 %v4347, %v4348
    %v4350 = vand.u32 %v4349, 4294901760
    %4351 = vmatpush.msra.mxu0 %v4350
    %v4352 = vand.u32 %v1990, 4294901760
    %v4353 = vsub.f32 %v1990, %v4352
    %v4354 = vand.u32 %v4353, 4294901760
    %v4355 = vsub.f32 %v4353, %v4354
    %v4356 = vand.u32 %v4355, 4294901760
    %4357 = vmatpush.msra.mxu0 %v4356
    %v4358 = vand.u32 %v1986, 4294901760
    %v4359 = vsub.f32 %v1986, %v4358
    %v4360 = vand.u32 %v4359, 4294901760
    %v4361 = vsub.f32 %v4359, %v4360
    %v4362 = vand.u32 %v4361, 4294901760
    %4363 = vmatpush.msra.mxu0 %v4362
    %v4364 = vand.u32 %v1982, 4294901760
    %v4365 = vsub.f32 %v1982, %v4364
    %v4366 = vand.u32 %v4365, 4294901760
    %v4367 = vsub.f32 %v4365, %v4366
    %v4368 = vand.u32 %v4367, 4294901760
    %4369 = vmatpush.msra.mxu0 %v4368
    %v4370 = vand.u32 %v2184, 4294901760
    %4371 = vmatmul.f32.gmra.mxu0 %v4370
    %v4372 = vpop.f32.mrf.mxu0
    %v4373 = vadd.f32 %v4212, %v4372
    %v4374 = vand.u32 %v2187, 4294901760
    %4375 = vmatmul.f32.gmra.mxu0 %v4374
    %v4376 = vpop.f32.mrf.mxu0
    %v4377 = vadd.f32 %v4220, %v4376
    %v4378 = vand.u32 %v2190, 4294901760
    %4379 = vmatmul.f32.gmra.mxu0 %v4378
    %v4380 = vpop.f32.mrf.mxu0
    %v4381 = vadd.f32 %v4228, %v4380
    %v4382 = vand.u32 %v2193, 4294901760
    %4383 = vmatmul.f32.gmra.mxu0 %v4382
    %v4384 = vpop.f32.mrf.mxu0
    %v4385 = vadd.f32 %v4236, %v4384
    %v4386 = vand.u32 %v2196, 4294901760
    %4387 = vmatmul.f32.gmra.mxu0 %v4386
    %v4388 = vpop.f32.mrf.mxu0
    %v4389 = vadd.f32 %v4244, %v4388
    %v4390 = vand.u32 %v2199, 4294901760
    %4391 = vmatmul.f32.gmra.mxu0 %v4390
    %v4392 = vpop.f32.mrf.mxu0
    %v4393 = vadd.f32 %v4252, %v4392
    %v4394 = vand.u32 %v2202, 4294901760
    %4395 = vmatmul.f32.gmra.mxu0 %v4394
    %v4396 = vpop.f32.mrf.mxu0
    %v4397 = vadd.f32 %v4260, %v4396
    %v4398 = vand.u32 %v2205, 4294901760
    %4399 = vmatmul.f32.gmra.mxu0 %v4398
    %v4400 = vpop.f32.mrf.mxu0
    %v4401 = vadd.f32 %v4268, %v4400
    %v4402 = vand.u32 %v2208, 4294901760
    %4403 = vmatmul.f32.gmra.mxu0 %v4402
    %v4404 = vpop.f32.mrf.mxu0
    %v4405 = vadd.f32 %v4276, %v4404
    %v4406 = vand.u32 %v2211, 4294901760
    %4407 = vmatmul.f32.gmra.mxu0 %v4406
    %v4408 = vpop.f32.mrf.mxu0
    %v4409 = vadd.f32 %v4284, %v4408
    %v4410 = vand.u32 %v2214, 4294901760
    %4411 = vmatmul.f32.gmra.mxu0 %v4410
    %v4412 = vpop.f32.mrf.mxu0
    %v4413 = vadd.f32 %v4292, %v4412
    %v4414 = vand.u32 %v2217, 4294901760
    %4415 = vmatmul.f32.gmra.mxu0 %v4414
    %v4416 = vpop.f32.mrf.mxu0
    %v4417 = vadd.f32 %v4300, %v4416
    %v4418 = vand.u32 %v2220, 4294901760
    %4419 = vmatmul.f32.gmra.mxu0 %v4418
    %v4420 = vpop.f32.mrf.mxu0
    %v4421 = vadd.f32 %v4308, %v4420
    %v4422 = vand.u32 %v2223, 4294901760
    %4423 = vmatmul.f32.gmra.mxu0 %v4422
    %v4424 = vpop.f32.mrf.mxu0
    %v4425 = vadd.f32 %v4316, %v4424
    %v4426 = vand.u32 %v2226, 4294901760
    %4427 = vmatmul.f32.gmra.mxu0 %v4426
    %v4428 = vpop.f32.mrf.mxu0
    %v4429 = vadd.f32 %v4324, %v4428
    %v4430 = vand.u32 %v2229, 4294901760
    %4431 = vmatmul.f32.gmra.mxu0 %v4430
    %v4432 = vpop.f32.mrf.mxu0
    %v4433 = vadd.f32 %v4332, %v4432
    %4434 = vdwg.mxu0
    %4435 = vmatpush.msra.mxu0 0.0
    %4436 = vmatpush.msra.mxu0 0.0
    %4437 = vmatpush.msra.mxu0 0.0
    %4438 = vmatpush.msra.mxu0 0.0
    %4439 = vmatpush.msra.mxu0 0.0
    %4440 = vmatpush.msra.mxu0 0.0
    %4441 = vmatpush.msra.mxu0 0.0
    %4442 = vmatpush.msra.mxu0 0.0
    %4443 = vmatpush.msra.mxu0 0.0
    %4444 = vmatpush.msra.mxu0 0.0
    %4445 = vmatpush.msra.mxu0 0.0
    %4446 = vmatpush.msra.mxu0 0.0
    %v4447 = vand.u32 %v1994, 4294901760
    %v4448 = vsub.f32 %v1994, %v4447
    %4449 = vmatpush.msra.mxu0 %v4448
    %v4450 = vand.u32 %v1990, 4294901760
    %v4451 = vsub.f32 %v1990, %v4450
    %4452 = vmatpush.msra.mxu0 %v4451
    %v4453 = vand.u32 %v1986, 4294901760
    %v4454 = vsub.f32 %v1986, %v4453
    %4455 = vmatpush.msra.mxu0 %v4454
    %v4456 = vand.u32 %v1982, 4294901760
    %v4457 = vsub.f32 %v1982, %v4456
    %4458 = vmatpush.msra.mxu0 %v4457
    %v4459 = vand.u32 %v2184, 4294901760
    %v4460 = vsub.f32 %v2184, %v4459
    %4461 = vmatmul.f32.gmra.mxu0 %v4460
    %v4462 = vpop.f32.mrf.mxu0
    %v4463 = vadd.f32 %v4373, %v4462
    %v4464 = vand.u32 %v2187, 4294901760
    %v4465 = vsub.f32 %v2187, %v4464
    %4466 = vmatmul.f32.gmra.mxu0 %v4465
    %v4467 = vpop.f32.mrf.mxu0
    %v4468 = vadd.f32 %v4377, %v4467
    %v4469 = vand.u32 %v2190, 4294901760
    %v4470 = vsub.f32 %v2190, %v4469
    %4471 = vmatmul.f32.gmra.mxu0 %v4470
    %v4472 = vpop.f32.mrf.mxu0
    %v4473 = vadd.f32 %v4381, %v4472
    %v4474 = vand.u32 %v2193, 4294901760
    %v4475 = vsub.f32 %v2193, %v4474
    %4476 = vmatmul.f32.gmra.mxu0 %v4475
    %v4477 = vpop.f32.mrf.mxu0
    %v4478 = vadd.f32 %v4385, %v4477
    %v4479 = vand.u32 %v2196, 4294901760
    %v4480 = vsub.f32 %v2196, %v4479
    %4481 = vmatmul.f32.gmra.mxu0 %v4480
    %v4482 = vpop.f32.mrf.mxu0
    %v4483 = vadd.f32 %v4389, %v4482
    %v4484 = vand.u32 %v2199, 4294901760
    %v4485 = vsub.f32 %v2199, %v4484
    %4486 = vmatmul.f32.gmra.mxu0 %v4485
    %v4487 = vpop.f32.mrf.mxu0
    %v4488 = vadd.f32 %v4393, %v4487
    %v4489 = vand.u32 %v2202, 4294901760
    %v4490 = vsub.f32 %v2202, %v4489
    %4491 = vmatmul.f32.gmra.mxu0 %v4490
    %v4492 = vpop.f32.mrf.mxu0
    %v4493 = vadd.f32 %v4397, %v4492
    %v4494 = vand.u32 %v2205, 4294901760
    %v4495 = vsub.f32 %v2205, %v4494
    %4496 = vmatmul.f32.gmra.mxu0 %v4495
    %v4497 = vpop.f32.mrf.mxu0
    %v4498 = vadd.f32 %v4401, %v4497
    %v4499 = vand.u32 %v2208, 4294901760
    %v4500 = vsub.f32 %v2208, %v4499
    %4501 = vmatmul.f32.gmra.mxu0 %v4500
    %v4502 = vpop.f32.mrf.mxu0
    %v4503 = vadd.f32 %v4405, %v4502
    %v4504 = vand.u32 %v2211, 4294901760
    %v4505 = vsub.f32 %v2211, %v4504
    %4506 = vmatmul.f32.gmra.mxu0 %v4505
    %v4507 = vpop.f32.mrf.mxu0
    %v4508 = vadd.f32 %v4409, %v4507
    %v4509 = vand.u32 %v2214, 4294901760
    %v4510 = vsub.f32 %v2214, %v4509
    %4511 = vmatmul.f32.gmra.mxu0 %v4510
    %v4512 = vpop.f32.mrf.mxu0
    %v4513 = vadd.f32 %v4413, %v4512
    %v4514 = vand.u32 %v2217, 4294901760
    %v4515 = vsub.f32 %v2217, %v4514
    %4516 = vmatmul.f32.gmra.mxu0 %v4515
    %v4517 = vpop.f32.mrf.mxu0
    %v4518 = vadd.f32 %v4417, %v4517
    %v4519 = vand.u32 %v2220, 4294901760
    %v4520 = vsub.f32 %v2220, %v4519
    %4521 = vmatmul.f32.gmra.mxu0 %v4520
    %v4522 = vpop.f32.mrf.mxu0
    %v4523 = vadd.f32 %v4421, %v4522
    %v4524 = vand.u32 %v2223, 4294901760
    %v4525 = vsub.f32 %v2223, %v4524
    %4526 = vmatmul.f32.gmra.mxu0 %v4525
    %v4527 = vpop.f32.mrf.mxu0
    %v4528 = vadd.f32 %v4425, %v4527
    %v4529 = vand.u32 %v2226, 4294901760
    %v4530 = vsub.f32 %v2226, %v4529
    %4531 = vmatmul.f32.gmra.mxu0 %v4530
    %v4532 = vpop.f32.mrf.mxu0
    %v4533 = vadd.f32 %v4429, %v4532
    %v4534 = vand.u32 %v2229, 4294901760
    %v4535 = vsub.f32 %v2229, %v4534
    %4536 = vmatmul.f32.gmra.mxu0 %v4535
    %v4537 = vpop.f32.mrf.mxu0
    %v4538 = vadd.f32 %v4433, %v4537
    %4539 = vdwg.mxu0
    %4540 = vmatpush.msra.mxu0 0.0
    %4541 = vmatpush.msra.mxu0 0.0
    %4542 = vmatpush.msra.mxu0 0.0
    %4543 = vmatpush.msra.mxu0 0.0
    %4544 = vmatpush.msra.mxu0 0.0
    %4545 = vmatpush.msra.mxu0 0.0
    %4546 = vmatpush.msra.mxu0 0.0
    %4547 = vmatpush.msra.mxu0 0.0
    %4548 = vmatpush.msra.mxu0 0.0
    %4549 = vmatpush.msra.mxu0 0.0
    %4550 = vmatpush.msra.mxu0 0.0
    %4551 = vmatpush.msra.mxu0 0.0
    %v4552 = vand.u32 %v1994, 4294901760
    %4553 = vmatpush.msra.mxu0 %v4552
    %v4554 = vand.u32 %v1990, 4294901760
    %4555 = vmatpush.msra.mxu0 %v4554
    %v4556 = vand.u32 %v1986, 4294901760
    %4557 = vmatpush.msra.mxu0 %v4556
    %v4558 = vand.u32 %v1982, 4294901760
    %4559 = vmatpush.msra.mxu0 %v4558
    %v4560 = vand.u32 %v2184, 4294901760
    %v4561 = vsub.f32 %v2184, %v4560
    %v4562 = vand.u32 %v4561, 4294901760
    %4563 = vmatmul.f32.gmra.mxu0 %v4562
    %v4564 = vpop.f32.mrf.mxu0
    %v4565 = vadd.f32 %v4463, %v4564
    %v4566 = vand.u32 %v2187, 4294901760
    %v4567 = vsub.f32 %v2187, %v4566
    %v4568 = vand.u32 %v4567, 4294901760
    %4569 = vmatmul.f32.gmra.mxu0 %v4568
    %v4570 = vpop.f32.mrf.mxu0
    %v4571 = vadd.f32 %v4468, %v4570
    %v4572 = vand.u32 %v2190, 4294901760
    %v4573 = vsub.f32 %v2190, %v4572
    %v4574 = vand.u32 %v4573, 4294901760
    %4575 = vmatmul.f32.gmra.mxu0 %v4574
    %v4576 = vpop.f32.mrf.mxu0
    %v4577 = vadd.f32 %v4473, %v4576
    %v4578 = vand.u32 %v2193, 4294901760
    %v4579 = vsub.f32 %v2193, %v4578
    %v4580 = vand.u32 %v4579, 4294901760
    %4581 = vmatmul.f32.gmra.mxu0 %v4580
    %v4582 = vpop.f32.mrf.mxu0
    %v4583 = vadd.f32 %v4478, %v4582
    %v4584 = vand.u32 %v2196, 4294901760
    %v4585 = vsub.f32 %v2196, %v4584
    %v4586 = vand.u32 %v4585, 4294901760
    %4587 = vmatmul.f32.gmra.mxu0 %v4586
    %v4588 = vpop.f32.mrf.mxu0
    %v4589 = vadd.f32 %v4483, %v4588
    %v4590 = vand.u32 %v2199, 4294901760
    %v4591 = vsub.f32 %v2199, %v4590
    %v4592 = vand.u32 %v4591, 4294901760
    %4593 = vmatmul.f32.gmra.mxu0 %v4592
    %v4594 = vpop.f32.mrf.mxu0
    %v4595 = vadd.f32 %v4488, %v4594
    %v4596 = vand.u32 %v2202, 4294901760
    %v4597 = vsub.f32 %v2202, %v4596
    %v4598 = vand.u32 %v4597, 4294901760
    %4599 = vmatmul.f32.gmra.mxu0 %v4598
    %v4600 = vpop.f32.mrf.mxu0
    %v4601 = vadd.f32 %v4493, %v4600
    %v4602 = vand.u32 %v2205, 4294901760
    %v4603 = vsub.f32 %v2205, %v4602
    %v4604 = vand.u32 %v4603, 4294901760
    %4605 = vmatmul.f32.gmra.mxu0 %v4604
    %v4606 = vpop.f32.mrf.mxu0
    %v4607 = vadd.f32 %v4498, %v4606
    %v4608 = vand.u32 %v2208, 4294901760
    %v4609 = vsub.f32 %v2208, %v4608
    %v4610 = vand.u32 %v4609, 4294901760
    %4611 = vmatmul.f32.gmra.mxu0 %v4610
    %v4612 = vpop.f32.mrf.mxu0
    %v4613 = vadd.f32 %v4503, %v4612
    %v4614 = vand.u32 %v2211, 4294901760
    %v4615 = vsub.f32 %v2211, %v4614
    %v4616 = vand.u32 %v4615, 4294901760
    %4617 = vmatmul.f32.gmra.mxu0 %v4616
    %v4618 = vpop.f32.mrf.mxu0
    %v4619 = vadd.f32 %v4508, %v4618
    %v4620 = vand.u32 %v2214, 4294901760
    %v4621 = vsub.f32 %v2214, %v4620
    %v4622 = vand.u32 %v4621, 4294901760
    %4623 = vmatmul.f32.gmra.mxu0 %v4622
    %v4624 = vpop.f32.mrf.mxu0
    %v4625 = vadd.f32 %v4513, %v4624
    %v4626 = vand.u32 %v2217, 4294901760
    %v4627 = vsub.f32 %v2217, %v4626
    %v4628 = vand.u32 %v4627, 4294901760
    %4629 = vmatmul.f32.gmra.mxu0 %v4628
    %v4630 = vpop.f32.mrf.mxu0
    %v4631 = vadd.f32 %v4518, %v4630
    %v4632 = vand.u32 %v2220, 4294901760
    %v4633 = vsub.f32 %v2220, %v4632
    %v4634 = vand.u32 %v4633, 4294901760
    %4635 = vmatmul.f32.gmra.mxu0 %v4634
    %v4636 = vpop.f32.mrf.mxu0
    %v4637 = vadd.f32 %v4523, %v4636
    %v4638 = vand.u32 %v2223, 4294901760
    %v4639 = vsub.f32 %v2223, %v4638
    %v4640 = vand.u32 %v4639, 4294901760
    %4641 = vmatmul.f32.gmra.mxu0 %v4640
    %v4642 = vpop.f32.mrf.mxu0
    %v4643 = vadd.f32 %v4528, %v4642
    %v4644 = vand.u32 %v2226, 4294901760
    %v4645 = vsub.f32 %v2226, %v4644
    %v4646 = vand.u32 %v4645, 4294901760
    %4647 = vmatmul.f32.gmra.mxu0 %v4646
    %v4648 = vpop.f32.mrf.mxu0
    %v4649 = vadd.f32 %v4533, %v4648
    %v4650 = vand.u32 %v2229, 4294901760
    %v4651 = vsub.f32 %v2229, %v4650
    %v4652 = vand.u32 %v4651, 4294901760
    %4653 = vmatmul.f32.gmra.mxu0 %v4652
    %v4654 = vpop.f32.mrf.mxu0
    %v4655 = vadd.f32 %v4538, %v4654
    %4656 = vdwg.mxu0
    %4657 = vmatpush.msra.mxu0 0.0
    %4658 = vmatpush.msra.mxu0 0.0
    %4659 = vmatpush.msra.mxu0 0.0
    %4660 = vmatpush.msra.mxu0 0.0
    %4661 = vmatpush.msra.mxu0 0.0
    %4662 = vmatpush.msra.mxu0 0.0
    %4663 = vmatpush.msra.mxu0 0.0
    %4664 = vmatpush.msra.mxu0 0.0
    %4665 = vmatpush.msra.mxu0 0.0
    %4666 = vmatpush.msra.mxu0 0.0
    %4667 = vmatpush.msra.mxu0 0.0
    %4668 = vmatpush.msra.mxu0 0.0
    %v4669 = vand.u32 %v1994, 4294901760
    %v4670 = vsub.f32 %v1994, %v4669
    %v4671 = vand.u32 %v4670, 4294901760
    %4672 = vmatpush.msra.mxu0 %v4671
    %v4673 = vand.u32 %v1990, 4294901760
    %v4674 = vsub.f32 %v1990, %v4673
    %v4675 = vand.u32 %v4674, 4294901760
    %4676 = vmatpush.msra.mxu0 %v4675
    %v4677 = vand.u32 %v1986, 4294901760
    %v4678 = vsub.f32 %v1986, %v4677
    %v4679 = vand.u32 %v4678, 4294901760
    %4680 = vmatpush.msra.mxu0 %v4679
    %v4681 = vand.u32 %v1982, 4294901760
    %v4682 = vsub.f32 %v1982, %v4681
    %v4683 = vand.u32 %v4682, 4294901760
    %4684 = vmatpush.msra.mxu0 %v4683
    %v4685 = vand.u32 %v2184, 4294901760
    %4686 = vmatmul.f32.gmra.mxu0 %v4685
    %v4687 = vpop.f32.mrf.mxu0
    %v4688 = vadd.f32 %v4565, %v4687
    %v4689 = vand.u32 %v2187, 4294901760
    %4690 = vmatmul.f32.gmra.mxu0 %v4689
    %v4691 = vpop.f32.mrf.mxu0
    %v4692 = vadd.f32 %v4571, %v4691
    %v4693 = vand.u32 %v2190, 4294901760
    %4694 = vmatmul.f32.gmra.mxu0 %v4693
    %v4695 = vpop.f32.mrf.mxu0
    %v4696 = vadd.f32 %v4577, %v4695
    %v4697 = vand.u32 %v2193, 4294901760
    %4698 = vmatmul.f32.gmra.mxu0 %v4697
    %v4699 = vpop.f32.mrf.mxu0
    %v4700 = vadd.f32 %v4583, %v4699
    %v4701 = vand.u32 %v2196, 4294901760
    %4702 = vmatmul.f32.gmra.mxu0 %v4701
    %v4703 = vpop.f32.mrf.mxu0
    %v4704 = vadd.f32 %v4589, %v4703
    %v4705 = vand.u32 %v2199, 4294901760
    %4706 = vmatmul.f32.gmra.mxu0 %v4705
    %v4707 = vpop.f32.mrf.mxu0
    %v4708 = vadd.f32 %v4595, %v4707
    %v4709 = vand.u32 %v2202, 4294901760
    %4710 = vmatmul.f32.gmra.mxu0 %v4709
    %v4711 = vpop.f32.mrf.mxu0
    %v4712 = vadd.f32 %v4601, %v4711
    %v4713 = vand.u32 %v2205, 4294901760
    %4714 = vmatmul.f32.gmra.mxu0 %v4713
    %v4715 = vpop.f32.mrf.mxu0
    %v4716 = vadd.f32 %v4607, %v4715
    %v4717 = vand.u32 %v2208, 4294901760
    %4718 = vmatmul.f32.gmra.mxu0 %v4717
    %v4719 = vpop.f32.mrf.mxu0
    %v4720 = vadd.f32 %v4613, %v4719
    %v4721 = vand.u32 %v2211, 4294901760
    %4722 = vmatmul.f32.gmra.mxu0 %v4721
    %v4723 = vpop.f32.mrf.mxu0
    %v4724 = vadd.f32 %v4619, %v4723
    %v4725 = vand.u32 %v2214, 4294901760
    %4726 = vmatmul.f32.gmra.mxu0 %v4725
    %v4727 = vpop.f32.mrf.mxu0
    %v4728 = vadd.f32 %v4625, %v4727
    %v4729 = vand.u32 %v2217, 4294901760
    %4730 = vmatmul.f32.gmra.mxu0 %v4729
    %v4731 = vpop.f32.mrf.mxu0
    %v4732 = vadd.f32 %v4631, %v4731
    %v4733 = vand.u32 %v2220, 4294901760
    %4734 = vmatmul.f32.gmra.mxu0 %v4733
    %v4735 = vpop.f32.mrf.mxu0
    %v4736 = vadd.f32 %v4637, %v4735
    %v4737 = vand.u32 %v2223, 4294901760
    %4738 = vmatmul.f32.gmra.mxu0 %v4737
    %v4739 = vpop.f32.mrf.mxu0
    %v4740 = vadd.f32 %v4643, %v4739
    %v4741 = vand.u32 %v2226, 4294901760
    %4742 = vmatmul.f32.gmra.mxu0 %v4741
    %v4743 = vpop.f32.mrf.mxu0
    %v4744 = vadd.f32 %v4649, %v4743
    %v4745 = vand.u32 %v2229, 4294901760
    %4746 = vmatmul.f32.gmra.mxu0 %v4745
    %v4747 = vpop.f32.mrf.mxu0
    %v4748 = vadd.f32 %v4655, %v4747
    %4749 = vdwg.mxu0
    %4750 = vmatpush.msra.mxu0 0.0
    %4751 = vmatpush.msra.mxu0 0.0
    %4752 = vmatpush.msra.mxu0 0.0
    %4753 = vmatpush.msra.mxu0 0.0
    %4754 = vmatpush.msra.mxu0 0.0
    %4755 = vmatpush.msra.mxu0 0.0
    %4756 = vmatpush.msra.mxu0 0.0
    %4757 = vmatpush.msra.mxu0 0.0
    %4758 = vmatpush.msra.mxu0 0.0
    %4759 = vmatpush.msra.mxu0 0.0
    %4760 = vmatpush.msra.mxu0 0.0
    %4761 = vmatpush.msra.mxu0 0.0
    %v4762 = vand.u32 %v1994, 4294901760
    %4763 = vmatpush.msra.mxu0 %v4762
    %v4764 = vand.u32 %v1990, 4294901760
    %4765 = vmatpush.msra.mxu0 %v4764
    %v4766 = vand.u32 %v1986, 4294901760
    %4767 = vmatpush.msra.mxu0 %v4766
    %v4768 = vand.u32 %v1982, 4294901760
    %4769 = vmatpush.msra.mxu0 %v4768
    %v4770 = vand.u32 %v2184, 4294901760
    %4771 = vmatmul.f32.gmra.mxu0 %v4770
    %v4772 = vpop.f32.mrf.mxu0
    %v4773 = vadd.f32 %v4688, %v4772
    %v4774 = vand.u32 %v2187, 4294901760
    %4775 = vmatmul.f32.gmra.mxu0 %v4774
    %v4776 = vpop.f32.mrf.mxu0
    %v4777 = vadd.f32 %v4692, %v4776
    %v4778 = vand.u32 %v2190, 4294901760
    %4779 = vmatmul.f32.gmra.mxu0 %v4778
    %v4780 = vpop.f32.mrf.mxu0
    %v4781 = vadd.f32 %v4696, %v4780
    %v4782 = vand.u32 %v2193, 4294901760
    %4783 = vmatmul.f32.gmra.mxu0 %v4782
    %v4784 = vpop.f32.mrf.mxu0
    %v4785 = vadd.f32 %v4700, %v4784
    %v4786 = vand.u32 %v2196, 4294901760
    %4787 = vmatmul.f32.gmra.mxu0 %v4786
    %v4788 = vpop.f32.mrf.mxu0
    %v4789 = vadd.f32 %v4704, %v4788
    %v4790 = vand.u32 %v2199, 4294901760
    %4791 = vmatmul.f32.gmra.mxu0 %v4790
    %v4792 = vpop.f32.mrf.mxu0
    %v4793 = vadd.f32 %v4708, %v4792
    %v4794 = vand.u32 %v2202, 4294901760
    %4795 = vmatmul.f32.gmra.mxu0 %v4794
    %v4796 = vpop.f32.mrf.mxu0
    %v4797 = vadd.f32 %v4712, %v4796
    %v4798 = vand.u32 %v2205, 4294901760
    %4799 = vmatmul.f32.gmra.mxu0 %v4798
    %v4800 = vpop.f32.mrf.mxu0
    %v4801 = vadd.f32 %v4716, %v4800
    %v4802 = vand.u32 %v2208, 4294901760
    %4803 = vmatmul.f32.gmra.mxu0 %v4802
    %v4804 = vpop.f32.mrf.mxu0
    %v4805 = vadd.f32 %v4720, %v4804
    %v4806 = vand.u32 %v2211, 4294901760
    %4807 = vmatmul.f32.gmra.mxu0 %v4806
    %v4808 = vpop.f32.mrf.mxu0
    %v4809 = vadd.f32 %v4724, %v4808
    %v4810 = vand.u32 %v2214, 4294901760
    %4811 = vmatmul.f32.gmra.mxu0 %v4810
    %v4812 = vpop.f32.mrf.mxu0
    %v4813 = vadd.f32 %v4728, %v4812
    %v4814 = vand.u32 %v2217, 4294901760
    %4815 = vmatmul.f32.gmra.mxu0 %v4814
    %v4816 = vpop.f32.mrf.mxu0
    %v4817 = vadd.f32 %v4732, %v4816
    %v4818 = vand.u32 %v2220, 4294901760
    %4819 = vmatmul.f32.gmra.mxu0 %v4818
    %v4820 = vpop.f32.mrf.mxu0
    %v4821 = vadd.f32 %v4736, %v4820
    %v4822 = vand.u32 %v2223, 4294901760
    %4823 = vmatmul.f32.gmra.mxu0 %v4822
    %v4824 = vpop.f32.mrf.mxu0
    %v4825 = vadd.f32 %v4740, %v4824
    %v4826 = vand.u32 %v2226, 4294901760
    %4827 = vmatmul.f32.gmra.mxu0 %v4826
    %v4828 = vpop.f32.mrf.mxu0
    %v4829 = vadd.f32 %v4744, %v4828
    %v4830 = vand.u32 %v2229, 4294901760
    %4831 = vmatmul.f32.gmra.mxu0 %v4830
    %v4832 = vpop.f32.mrf.mxu0
    %v4833 = vadd.f32 %v4748, %v4832
    %4834 = vdwg.mxu0
    %vm4835 = vcmask 31744
    %v4837 = vsel %vm4835, %v2167, 0
    %v4840 = vsel %vm4835, %v2168, 0
    %v4843 = vsel %vm4835, %v2169, 0
    %v4846 = vsel %vm4835, %v2170, 0
    %v4849 = vsel %vm4835, %v2171, 0
    %v4852 = vsel %vm4835, %v2172, 0
    %v4855 = vsel %vm4835, %v2173, 0
    %v4858 = vsel %vm4835, %v2174, 0
    %v4861 = vsel %vm4835, %v2175, 0
    %v4864 = vsel %vm4835, %v2176, 0
    %v4867 = vsel %vm4835, %v2177, 0
    %v4870 = vsel %vm4835, %v2178, 0
    %v4873 = vsel %vm4835, %v2179, 0
    %v4876 = vsel %vm4835, %v2180, 0
    %v4879 = vsel %vm4835, %v2181, 0
    %v4882 = vsel %vm4835, %v2182, 0
    %vm4884 = vcmask 1043456
    %v4886 = vsel %vm4884, %v28, 0
    %4888 = vmatpush.msra.mxu0 0.0
    %4889 = vmatpush.msra.mxu0 0.0
    %4890 = vmatpush.msra.mxu0 0.0
    %4891 = vmatpush.msra.mxu0 0.0
    %4892 = vmatpush.msra.mxu0 0.0
    %4893 = vmatpush.msra.mxu0 0.0
    %4894 = vmatpush.msra.mxu0 0.0
    %4895 = vmatpush.msra.mxu0 0.0
    %4896 = vmatpush.msra.mxu0 0.0
    %4897 = vmatpush.msra.mxu0 0.0
    %4898 = vmatpush.msra.mxu0 0.0
    %4899 = vmatpush.msra.mxu0 0.0
    %4900 = vmatpush.msra.mxu0 0.0
    %4901 = vmatpush.msra.mxu0 0.0
    %4902 = vmatpush.msra.mxu0 0.0
    %v4903 = vand.u32 %v4886, 4294901760
    %4904 = vmatpush.msra.mxu0 %v4903
    %v4905 = vand.u32 %v4837, 4294901760
    %v4906 = vsub.f32 %v4837, %v4905
    %v4907 = vand.u32 %v4906, 4294901760
    %v4908 = vsub.f32 %v4906, %v4907
    %v4909 = vand.u32 %v4908, 4294901760
    %4910 = vmatmul.f32.gmra.mxu0 %v4909
    %v4911 = vpop.f32.mrf.mxu0
    %v4912 = vadd.f32 0.0, %v4911
    %v4913 = vand.u32 %v4840, 4294901760
    %v4914 = vsub.f32 %v4840, %v4913
    %v4915 = vand.u32 %v4914, 4294901760
    %v4916 = vsub.f32 %v4914, %v4915
    %v4917 = vand.u32 %v4916, 4294901760
    %4918 = vmatmul.f32.gmra.mxu0 %v4917
    %v4919 = vpop.f32.mrf.mxu0
    %v4920 = vadd.f32 0.0, %v4919
    %v4921 = vand.u32 %v4843, 4294901760
    %v4922 = vsub.f32 %v4843, %v4921
    %v4923 = vand.u32 %v4922, 4294901760
    %v4924 = vsub.f32 %v4922, %v4923
    %v4925 = vand.u32 %v4924, 4294901760
    %4926 = vmatmul.f32.gmra.mxu0 %v4925
    %v4927 = vpop.f32.mrf.mxu0
    %v4928 = vadd.f32 0.0, %v4927
    %v4929 = vand.u32 %v4846, 4294901760
    %v4930 = vsub.f32 %v4846, %v4929
    %v4931 = vand.u32 %v4930, 4294901760
    %v4932 = vsub.f32 %v4930, %v4931
    %v4933 = vand.u32 %v4932, 4294901760
    %4934 = vmatmul.f32.gmra.mxu0 %v4933
    %v4935 = vpop.f32.mrf.mxu0
    %v4936 = vadd.f32 0.0, %v4935
    %v4937 = vand.u32 %v4849, 4294901760
    %v4938 = vsub.f32 %v4849, %v4937
    %v4939 = vand.u32 %v4938, 4294901760
    %v4940 = vsub.f32 %v4938, %v4939
    %v4941 = vand.u32 %v4940, 4294901760
    %4942 = vmatmul.f32.gmra.mxu0 %v4941
    %v4943 = vpop.f32.mrf.mxu0
    %v4944 = vadd.f32 0.0, %v4943
    %v4945 = vand.u32 %v4852, 4294901760
    %v4946 = vsub.f32 %v4852, %v4945
    %v4947 = vand.u32 %v4946, 4294901760
    %v4948 = vsub.f32 %v4946, %v4947
    %v4949 = vand.u32 %v4948, 4294901760
    %4950 = vmatmul.f32.gmra.mxu0 %v4949
    %v4951 = vpop.f32.mrf.mxu0
    %v4952 = vadd.f32 0.0, %v4951
    %v4953 = vand.u32 %v4855, 4294901760
    %v4954 = vsub.f32 %v4855, %v4953
    %v4955 = vand.u32 %v4954, 4294901760
    %v4956 = vsub.f32 %v4954, %v4955
    %v4957 = vand.u32 %v4956, 4294901760
    %4958 = vmatmul.f32.gmra.mxu0 %v4957
    %v4959 = vpop.f32.mrf.mxu0
    %v4960 = vadd.f32 0.0, %v4959
    %v4961 = vand.u32 %v4858, 4294901760
    %v4962 = vsub.f32 %v4858, %v4961
    %v4963 = vand.u32 %v4962, 4294901760
    %v4964 = vsub.f32 %v4962, %v4963
    %v4965 = vand.u32 %v4964, 4294901760
    %4966 = vmatmul.f32.gmra.mxu0 %v4965
    %v4967 = vpop.f32.mrf.mxu0
    %v4968 = vadd.f32 0.0, %v4967
    %v4969 = vand.u32 %v4861, 4294901760
    %v4970 = vsub.f32 %v4861, %v4969
    %v4971 = vand.u32 %v4970, 4294901760
    %v4972 = vsub.f32 %v4970, %v4971
    %v4973 = vand.u32 %v4972, 4294901760
    %4974 = vmatmul.f32.gmra.mxu0 %v4973
    %v4975 = vpop.f32.mrf.mxu0
    %v4976 = vadd.f32 0.0, %v4975
    %v4977 = vand.u32 %v4864, 4294901760
    %v4978 = vsub.f32 %v4864, %v4977
    %v4979 = vand.u32 %v4978, 4294901760
    %v4980 = vsub.f32 %v4978, %v4979
    %v4981 = vand.u32 %v4980, 4294901760
    %4982 = vmatmul.f32.gmra.mxu0 %v4981
    %v4983 = vpop.f32.mrf.mxu0
    %v4984 = vadd.f32 0.0, %v4983
    %v4985 = vand.u32 %v4867, 4294901760
    %v4986 = vsub.f32 %v4867, %v4985
    %v4987 = vand.u32 %v4986, 4294901760
    %v4988 = vsub.f32 %v4986, %v4987
    %v4989 = vand.u32 %v4988, 4294901760
    %4990 = vmatmul.f32.gmra.mxu0 %v4989
    %v4991 = vpop.f32.mrf.mxu0
    %v4992 = vadd.f32 0.0, %v4991
    %v4993 = vand.u32 %v4870, 4294901760
    %v4994 = vsub.f32 %v4870, %v4993
    %v4995 = vand.u32 %v4994, 4294901760
    %v4996 = vsub.f32 %v4994, %v4995
    %v4997 = vand.u32 %v4996, 4294901760
    %4998 = vmatmul.f32.gmra.mxu0 %v4997
    %v4999 = vpop.f32.mrf.mxu0
    %v5000 = vadd.f32 0.0, %v4999
    %v5001 = vand.u32 %v4873, 4294901760
    %v5002 = vsub.f32 %v4873, %v5001
    %v5003 = vand.u32 %v5002, 4294901760
    %v5004 = vsub.f32 %v5002, %v5003
    %v5005 = vand.u32 %v5004, 4294901760
    %5006 = vmatmul.f32.gmra.mxu0 %v5005
    %v5007 = vpop.f32.mrf.mxu0
    %v5008 = vadd.f32 0.0, %v5007
    %v5009 = vand.u32 %v4876, 4294901760
    %v5010 = vsub.f32 %v4876, %v5009
    %v5011 = vand.u32 %v5010, 4294901760
    %v5012 = vsub.f32 %v5010, %v5011
    %v5013 = vand.u32 %v5012, 4294901760
    %5014 = vmatmul.f32.gmra.mxu0 %v5013
    %v5015 = vpop.f32.mrf.mxu0
    %v5016 = vadd.f32 0.0, %v5015
    %v5017 = vand.u32 %v4879, 4294901760
    %v5018 = vsub.f32 %v4879, %v5017
    %v5019 = vand.u32 %v5018, 4294901760
    %v5020 = vsub.f32 %v5018, %v5019
    %v5021 = vand.u32 %v5020, 4294901760
    %5022 = vmatmul.f32.gmra.mxu0 %v5021
    %v5023 = vpop.f32.mrf.mxu0
    %v5024 = vadd.f32 0.0, %v5023
    %v5025 = vand.u32 %v4882, 4294901760
    %v5026 = vsub.f32 %v4882, %v5025
    %v5027 = vand.u32 %v5026, 4294901760
    %v5028 = vsub.f32 %v5026, %v5027
    %v5029 = vand.u32 %v5028, 4294901760
    %5030 = vmatmul.f32.gmra.mxu0 %v5029
    %v5031 = vpop.f32.mrf.mxu0
    %v5032 = vadd.f32 0.0, %v5031
    %5033 = vdwg.mxu0
    %5034 = vmatpush.msra.mxu0 0.0
    %5035 = vmatpush.msra.mxu0 0.0
    %5036 = vmatpush.msra.mxu0 0.0
    %5037 = vmatpush.msra.mxu0 0.0
    %5038 = vmatpush.msra.mxu0 0.0
    %5039 = vmatpush.msra.mxu0 0.0
    %5040 = vmatpush.msra.mxu0 0.0
    %5041 = vmatpush.msra.mxu0 0.0
    %5042 = vmatpush.msra.mxu0 0.0
    %5043 = vmatpush.msra.mxu0 0.0
    %5044 = vmatpush.msra.mxu0 0.0
    %5045 = vmatpush.msra.mxu0 0.0
    %5046 = vmatpush.msra.mxu0 0.0
    %5047 = vmatpush.msra.mxu0 0.0
    %5048 = vmatpush.msra.mxu0 0.0
    %v5049 = vand.u32 %v4886, 4294901760
    %v5050 = vsub.f32 %v4886, %v5049
    %v5051 = vand.u32 %v5050, 4294901760
    %v5052 = vsub.f32 %v5050, %v5051
    %v5053 = vand.u32 %v5052, 4294901760
    %5054 = vmatpush.msra.mxu0 %v5053
    %v5055 = vand.u32 %v4837, 4294901760
    %5056 = vmatmul.f32.gmra.mxu0 %v5055
    %v5057 = vpop.f32.mrf.mxu0
    %v5058 = vadd.f32 %v4912, %v5057
    %v5059 = vand.u32 %v4840, 4294901760
    %5060 = vmatmul.f32.gmra.mxu0 %v5059
    %v5061 = vpop.f32.mrf.mxu0
    %v5062 = vadd.f32 %v4920, %v5061
    %v5063 = vand.u32 %v4843, 4294901760
    %5064 = vmatmul.f32.gmra.mxu0 %v5063
    %v5065 = vpop.f32.mrf.mxu0
    %v5066 = vadd.f32 %v4928, %v5065
    %v5067 = vand.u32 %v4846, 4294901760
    %5068 = vmatmul.f32.gmra.mxu0 %v5067
    %v5069 = vpop.f32.mrf.mxu0
    %v5070 = vadd.f32 %v4936, %v5069
    %v5071 = vand.u32 %v4849, 4294901760
    %5072 = vmatmul.f32.gmra.mxu0 %v5071
    %v5073 = vpop.f32.mrf.mxu0
    %v5074 = vadd.f32 %v4944, %v5073
    %v5075 = vand.u32 %v4852, 4294901760
    %5076 = vmatmul.f32.gmra.mxu0 %v5075
    %v5077 = vpop.f32.mrf.mxu0
    %v5078 = vadd.f32 %v4952, %v5077
    %v5079 = vand.u32 %v4855, 4294901760
    %5080 = vmatmul.f32.gmra.mxu0 %v5079
    %v5081 = vpop.f32.mrf.mxu0
    %v5082 = vadd.f32 %v4960, %v5081
    %v5083 = vand.u32 %v4858, 4294901760
    %5084 = vmatmul.f32.gmra.mxu0 %v5083
    %v5085 = vpop.f32.mrf.mxu0
    %v5086 = vadd.f32 %v4968, %v5085
    %v5087 = vand.u32 %v4861, 4294901760
    %5088 = vmatmul.f32.gmra.mxu0 %v5087
    %v5089 = vpop.f32.mrf.mxu0
    %v5090 = vadd.f32 %v4976, %v5089
    %v5091 = vand.u32 %v4864, 4294901760
    %5092 = vmatmul.f32.gmra.mxu0 %v5091
    %v5093 = vpop.f32.mrf.mxu0
    %v5094 = vadd.f32 %v4984, %v5093
    %v5095 = vand.u32 %v4867, 4294901760
    %5096 = vmatmul.f32.gmra.mxu0 %v5095
    %v5097 = vpop.f32.mrf.mxu0
    %v5098 = vadd.f32 %v4992, %v5097
    %v5099 = vand.u32 %v4870, 4294901760
    %5100 = vmatmul.f32.gmra.mxu0 %v5099
    %v5101 = vpop.f32.mrf.mxu0
    %v5102 = vadd.f32 %v5000, %v5101
    %v5103 = vand.u32 %v4873, 4294901760
    %5104 = vmatmul.f32.gmra.mxu0 %v5103
    %v5105 = vpop.f32.mrf.mxu0
    %v5106 = vadd.f32 %v5008, %v5105
    %v5107 = vand.u32 %v4876, 4294901760
    %5108 = vmatmul.f32.gmra.mxu0 %v5107
    %v5109 = vpop.f32.mrf.mxu0
    %v5110 = vadd.f32 %v5016, %v5109
    %v5111 = vand.u32 %v4879, 4294901760
    %5112 = vmatmul.f32.gmra.mxu0 %v5111
    %v5113 = vpop.f32.mrf.mxu0
    %v5114 = vadd.f32 %v5024, %v5113
    %v5115 = vand.u32 %v4882, 4294901760
    %5116 = vmatmul.f32.gmra.mxu0 %v5115
    %v5117 = vpop.f32.mrf.mxu0
    %v5118 = vadd.f32 %v5032, %v5117
    %5119 = vdwg.mxu0
    %5120 = vmatpush.msra.mxu0 0.0
    %5121 = vmatpush.msra.mxu0 0.0
    %5122 = vmatpush.msra.mxu0 0.0
    %5123 = vmatpush.msra.mxu0 0.0
    %5124 = vmatpush.msra.mxu0 0.0
    %5125 = vmatpush.msra.mxu0 0.0
    %5126 = vmatpush.msra.mxu0 0.0
    %5127 = vmatpush.msra.mxu0 0.0
    %5128 = vmatpush.msra.mxu0 0.0
    %5129 = vmatpush.msra.mxu0 0.0
    %5130 = vmatpush.msra.mxu0 0.0
    %5131 = vmatpush.msra.mxu0 0.0
    %5132 = vmatpush.msra.mxu0 0.0
    %5133 = vmatpush.msra.mxu0 0.0
    %5134 = vmatpush.msra.mxu0 0.0
    %v5135 = vand.u32 %v4886, 4294901760
    %v5136 = vsub.f32 %v4886, %v5135
    %5137 = vmatpush.msra.mxu0 %v5136
    %v5138 = vand.u32 %v4837, 4294901760
    %v5139 = vsub.f32 %v4837, %v5138
    %5140 = vmatmul.f32.gmra.mxu0 %v5139
    %v5141 = vpop.f32.mrf.mxu0
    %v5142 = vadd.f32 %v5058, %v5141
    %v5143 = vand.u32 %v4840, 4294901760
    %v5144 = vsub.f32 %v4840, %v5143
    %5145 = vmatmul.f32.gmra.mxu0 %v5144
    %v5146 = vpop.f32.mrf.mxu0
    %v5147 = vadd.f32 %v5062, %v5146
    %v5148 = vand.u32 %v4843, 4294901760
    %v5149 = vsub.f32 %v4843, %v5148
    %5150 = vmatmul.f32.gmra.mxu0 %v5149
    %v5151 = vpop.f32.mrf.mxu0
    %v5152 = vadd.f32 %v5066, %v5151
    %v5153 = vand.u32 %v4846, 4294901760
    %v5154 = vsub.f32 %v4846, %v5153
    %5155 = vmatmul.f32.gmra.mxu0 %v5154
    %v5156 = vpop.f32.mrf.mxu0
    %v5157 = vadd.f32 %v5070, %v5156
    %v5158 = vand.u32 %v4849, 4294901760
    %v5159 = vsub.f32 %v4849, %v5158
    %5160 = vmatmul.f32.gmra.mxu0 %v5159
    %v5161 = vpop.f32.mrf.mxu0
    %v5162 = vadd.f32 %v5074, %v5161
    %v5163 = vand.u32 %v4852, 4294901760
    %v5164 = vsub.f32 %v4852, %v5163
    %5165 = vmatmul.f32.gmra.mxu0 %v5164
    %v5166 = vpop.f32.mrf.mxu0
    %v5167 = vadd.f32 %v5078, %v5166
    %v5168 = vand.u32 %v4855, 4294901760
    %v5169 = vsub.f32 %v4855, %v5168
    %5170 = vmatmul.f32.gmra.mxu0 %v5169
    %v5171 = vpop.f32.mrf.mxu0
    %v5172 = vadd.f32 %v5082, %v5171
    %v5173 = vand.u32 %v4858, 4294901760
    %v5174 = vsub.f32 %v4858, %v5173
    %5175 = vmatmul.f32.gmra.mxu0 %v5174
    %v5176 = vpop.f32.mrf.mxu0
    %v5177 = vadd.f32 %v5086, %v5176
    %v5178 = vand.u32 %v4861, 4294901760
    %v5179 = vsub.f32 %v4861, %v5178
    %5180 = vmatmul.f32.gmra.mxu0 %v5179
    %v5181 = vpop.f32.mrf.mxu0
    %v5182 = vadd.f32 %v5090, %v5181
    %v5183 = vand.u32 %v4864, 4294901760
    %v5184 = vsub.f32 %v4864, %v5183
    %5185 = vmatmul.f32.gmra.mxu0 %v5184
    %v5186 = vpop.f32.mrf.mxu0
    %v5187 = vadd.f32 %v5094, %v5186
    %v5188 = vand.u32 %v4867, 4294901760
    %v5189 = vsub.f32 %v4867, %v5188
    %5190 = vmatmul.f32.gmra.mxu0 %v5189
    %v5191 = vpop.f32.mrf.mxu0
    %v5192 = vadd.f32 %v5098, %v5191
    %v5193 = vand.u32 %v4870, 4294901760
    %v5194 = vsub.f32 %v4870, %v5193
    %5195 = vmatmul.f32.gmra.mxu0 %v5194
    %v5196 = vpop.f32.mrf.mxu0
    %v5197 = vadd.f32 %v5102, %v5196
    %v5198 = vand.u32 %v4873, 4294901760
    %v5199 = vsub.f32 %v4873, %v5198
    %5200 = vmatmul.f32.gmra.mxu0 %v5199
    %v5201 = vpop.f32.mrf.mxu0
    %v5202 = vadd.f32 %v5106, %v5201
    %v5203 = vand.u32 %v4876, 4294901760
    %v5204 = vsub.f32 %v4876, %v5203
    %5205 = vmatmul.f32.gmra.mxu0 %v5204
    %v5206 = vpop.f32.mrf.mxu0
    %v5207 = vadd.f32 %v5110, %v5206
    %v5208 = vand.u32 %v4879, 4294901760
    %v5209 = vsub.f32 %v4879, %v5208
    %5210 = vmatmul.f32.gmra.mxu0 %v5209
    %v5211 = vpop.f32.mrf.mxu0
    %v5212 = vadd.f32 %v5114, %v5211
    %v5213 = vand.u32 %v4882, 4294901760
    %v5214 = vsub.f32 %v4882, %v5213
    %5215 = vmatmul.f32.gmra.mxu0 %v5214
    %v5216 = vpop.f32.mrf.mxu0
    %v5217 = vadd.f32 %v5118, %v5216
    %5218 = vdwg.mxu0
    %5219 = vmatpush.msra.mxu0 0.0
    %5220 = vmatpush.msra.mxu0 0.0
    %5221 = vmatpush.msra.mxu0 0.0
    %5222 = vmatpush.msra.mxu0 0.0
    %5223 = vmatpush.msra.mxu0 0.0
    %5224 = vmatpush.msra.mxu0 0.0
    %5225 = vmatpush.msra.mxu0 0.0
    %5226 = vmatpush.msra.mxu0 0.0
    %5227 = vmatpush.msra.mxu0 0.0
    %5228 = vmatpush.msra.mxu0 0.0
    %5229 = vmatpush.msra.mxu0 0.0
    %5230 = vmatpush.msra.mxu0 0.0
    %5231 = vmatpush.msra.mxu0 0.0
    %5232 = vmatpush.msra.mxu0 0.0
    %5233 = vmatpush.msra.mxu0 0.0
    %v5234 = vand.u32 %v4886, 4294901760
    %5235 = vmatpush.msra.mxu0 %v5234
    %v5236 = vand.u32 %v4837, 4294901760
    %v5237 = vsub.f32 %v4837, %v5236
    %v5238 = vand.u32 %v5237, 4294901760
    %5239 = vmatmul.f32.gmra.mxu0 %v5238
    %v5240 = vpop.f32.mrf.mxu0
    %v5241 = vadd.f32 %v5142, %v5240
    %v5242 = vand.u32 %v4840, 4294901760
    %v5243 = vsub.f32 %v4840, %v5242
    %v5244 = vand.u32 %v5243, 4294901760
    %5245 = vmatmul.f32.gmra.mxu0 %v5244
    %v5246 = vpop.f32.mrf.mxu0
    %v5247 = vadd.f32 %v5147, %v5246
    %v5248 = vand.u32 %v4843, 4294901760
    %v5249 = vsub.f32 %v4843, %v5248
    %v5250 = vand.u32 %v5249, 4294901760
    %5251 = vmatmul.f32.gmra.mxu0 %v5250
    %v5252 = vpop.f32.mrf.mxu0
    %v5253 = vadd.f32 %v5152, %v5252
    %v5254 = vand.u32 %v4846, 4294901760
    %v5255 = vsub.f32 %v4846, %v5254
    %v5256 = vand.u32 %v5255, 4294901760
    %5257 = vmatmul.f32.gmra.mxu0 %v5256
    %v5258 = vpop.f32.mrf.mxu0
    %v5259 = vadd.f32 %v5157, %v5258
    %v5260 = vand.u32 %v4849, 4294901760
    %v5261 = vsub.f32 %v4849, %v5260
    %v5262 = vand.u32 %v5261, 4294901760
    %5263 = vmatmul.f32.gmra.mxu0 %v5262
    %v5264 = vpop.f32.mrf.mxu0
    %v5265 = vadd.f32 %v5162, %v5264
    %v5266 = vand.u32 %v4852, 4294901760
    %v5267 = vsub.f32 %v4852, %v5266
    %v5268 = vand.u32 %v5267, 4294901760
    %5269 = vmatmul.f32.gmra.mxu0 %v5268
    %v5270 = vpop.f32.mrf.mxu0
    %v5271 = vadd.f32 %v5167, %v5270
    %v5272 = vand.u32 %v4855, 4294901760
    %v5273 = vsub.f32 %v4855, %v5272
    %v5274 = vand.u32 %v5273, 4294901760
    %5275 = vmatmul.f32.gmra.mxu0 %v5274
    %v5276 = vpop.f32.mrf.mxu0
    %v5277 = vadd.f32 %v5172, %v5276
    %v5278 = vand.u32 %v4858, 4294901760
    %v5279 = vsub.f32 %v4858, %v5278
    %v5280 = vand.u32 %v5279, 4294901760
    %5281 = vmatmul.f32.gmra.mxu0 %v5280
    %v5282 = vpop.f32.mrf.mxu0
    %v5283 = vadd.f32 %v5177, %v5282
    %v5284 = vand.u32 %v4861, 4294901760
    %v5285 = vsub.f32 %v4861, %v5284
    %v5286 = vand.u32 %v5285, 4294901760
    %5287 = vmatmul.f32.gmra.mxu0 %v5286
    %v5288 = vpop.f32.mrf.mxu0
    %v5289 = vadd.f32 %v5182, %v5288
    %v5290 = vand.u32 %v4864, 4294901760
    %v5291 = vsub.f32 %v4864, %v5290
    %v5292 = vand.u32 %v5291, 4294901760
    %5293 = vmatmul.f32.gmra.mxu0 %v5292
    %v5294 = vpop.f32.mrf.mxu0
    %v5295 = vadd.f32 %v5187, %v5294
    %v5296 = vand.u32 %v4867, 4294901760
    %v5297 = vsub.f32 %v4867, %v5296
    %v5298 = vand.u32 %v5297, 4294901760
    %5299 = vmatmul.f32.gmra.mxu0 %v5298
    %v5300 = vpop.f32.mrf.mxu0
    %v5301 = vadd.f32 %v5192, %v5300
    %v5302 = vand.u32 %v4870, 4294901760
    %v5303 = vsub.f32 %v4870, %v5302
    %v5304 = vand.u32 %v5303, 4294901760
    %5305 = vmatmul.f32.gmra.mxu0 %v5304
    %v5306 = vpop.f32.mrf.mxu0
    %v5307 = vadd.f32 %v5197, %v5306
    %v5308 = vand.u32 %v4873, 4294901760
    %v5309 = vsub.f32 %v4873, %v5308
    %v5310 = vand.u32 %v5309, 4294901760
    %5311 = vmatmul.f32.gmra.mxu0 %v5310
    %v5312 = vpop.f32.mrf.mxu0
    %v5313 = vadd.f32 %v5202, %v5312
    %v5314 = vand.u32 %v4876, 4294901760
    %v5315 = vsub.f32 %v4876, %v5314
    %v5316 = vand.u32 %v5315, 4294901760
    %5317 = vmatmul.f32.gmra.mxu0 %v5316
    %v5318 = vpop.f32.mrf.mxu0
    %v5319 = vadd.f32 %v5207, %v5318
    %v5320 = vand.u32 %v4879, 4294901760
    %v5321 = vsub.f32 %v4879, %v5320
    %v5322 = vand.u32 %v5321, 4294901760
    %5323 = vmatmul.f32.gmra.mxu0 %v5322
    %v5324 = vpop.f32.mrf.mxu0
    %v5325 = vadd.f32 %v5212, %v5324
    %v5326 = vand.u32 %v4882, 4294901760
    %v5327 = vsub.f32 %v4882, %v5326
    %v5328 = vand.u32 %v5327, 4294901760
    %5329 = vmatmul.f32.gmra.mxu0 %v5328
    %v5330 = vpop.f32.mrf.mxu0
    %v5331 = vadd.f32 %v5217, %v5330
    %5332 = vdwg.mxu0
    %5333 = vmatpush.msra.mxu0 0.0
    %5334 = vmatpush.msra.mxu0 0.0
    %5335 = vmatpush.msra.mxu0 0.0
    %5336 = vmatpush.msra.mxu0 0.0
    %5337 = vmatpush.msra.mxu0 0.0
    %5338 = vmatpush.msra.mxu0 0.0
    %5339 = vmatpush.msra.mxu0 0.0
    %5340 = vmatpush.msra.mxu0 0.0
    %5341 = vmatpush.msra.mxu0 0.0
    %5342 = vmatpush.msra.mxu0 0.0
    %5343 = vmatpush.msra.mxu0 0.0
    %5344 = vmatpush.msra.mxu0 0.0
    %5345 = vmatpush.msra.mxu0 0.0
    %5346 = vmatpush.msra.mxu0 0.0
    %5347 = vmatpush.msra.mxu0 0.0
    %v5348 = vand.u32 %v4886, 4294901760
    %v5349 = vsub.f32 %v4886, %v5348
    %v5350 = vand.u32 %v5349, 4294901760
    %5351 = vmatpush.msra.mxu0 %v5350
    %v5352 = vand.u32 %v4837, 4294901760
    %5353 = vmatmul.f32.gmra.mxu0 %v5352
    %v5354 = vpop.f32.mrf.mxu0
    %v5355 = vadd.f32 %v5241, %v5354
    %v5356 = vand.u32 %v4840, 4294901760
    %5357 = vmatmul.f32.gmra.mxu0 %v5356
    %v5358 = vpop.f32.mrf.mxu0
    %v5359 = vadd.f32 %v5247, %v5358
    %v5360 = vand.u32 %v4843, 4294901760
    %5361 = vmatmul.f32.gmra.mxu0 %v5360
    %v5362 = vpop.f32.mrf.mxu0
    %v5363 = vadd.f32 %v5253, %v5362
    %v5364 = vand.u32 %v4846, 4294901760
    %5365 = vmatmul.f32.gmra.mxu0 %v5364
    %v5366 = vpop.f32.mrf.mxu0
    %v5367 = vadd.f32 %v5259, %v5366
    %v5368 = vand.u32 %v4849, 4294901760
    %5369 = vmatmul.f32.gmra.mxu0 %v5368
    %v5370 = vpop.f32.mrf.mxu0
    %v5371 = vadd.f32 %v5265, %v5370
    %v5372 = vand.u32 %v4852, 4294901760
    %5373 = vmatmul.f32.gmra.mxu0 %v5372
    %v5374 = vpop.f32.mrf.mxu0
    %v5375 = vadd.f32 %v5271, %v5374
    %v5376 = vand.u32 %v4855, 4294901760
    %5377 = vmatmul.f32.gmra.mxu0 %v5376
    %v5378 = vpop.f32.mrf.mxu0
    %v5379 = vadd.f32 %v5277, %v5378
    %v5380 = vand.u32 %v4858, 4294901760
    %5381 = vmatmul.f32.gmra.mxu0 %v5380
    %v5382 = vpop.f32.mrf.mxu0
    %v5383 = vadd.f32 %v5283, %v5382
    %v5384 = vand.u32 %v4861, 4294901760
    %5385 = vmatmul.f32.gmra.mxu0 %v5384
    %v5386 = vpop.f32.mrf.mxu0
    %v5387 = vadd.f32 %v5289, %v5386
    %v5388 = vand.u32 %v4864, 4294901760
    %5389 = vmatmul.f32.gmra.mxu0 %v5388
    %v5390 = vpop.f32.mrf.mxu0
    %v5391 = vadd.f32 %v5295, %v5390
    %v5392 = vand.u32 %v4867, 4294901760
    %5393 = vmatmul.f32.gmra.mxu0 %v5392
    %v5394 = vpop.f32.mrf.mxu0
    %v5395 = vadd.f32 %v5301, %v5394
    %v5396 = vand.u32 %v4870, 4294901760
    %5397 = vmatmul.f32.gmra.mxu0 %v5396
    %v5398 = vpop.f32.mrf.mxu0
    %v5399 = vadd.f32 %v5307, %v5398
    %v5400 = vand.u32 %v4873, 4294901760
    %5401 = vmatmul.f32.gmra.mxu0 %v5400
    %v5402 = vpop.f32.mrf.mxu0
    %v5403 = vadd.f32 %v5313, %v5402
    %v5404 = vand.u32 %v4876, 4294901760
    %5405 = vmatmul.f32.gmra.mxu0 %v5404
    %v5406 = vpop.f32.mrf.mxu0
    %v5407 = vadd.f32 %v5319, %v5406
    %v5408 = vand.u32 %v4879, 4294901760
    %5409 = vmatmul.f32.gmra.mxu0 %v5408
    %v5410 = vpop.f32.mrf.mxu0
    %v5411 = vadd.f32 %v5325, %v5410
    %v5412 = vand.u32 %v4882, 4294901760
    %5413 = vmatmul.f32.gmra.mxu0 %v5412
    %v5414 = vpop.f32.mrf.mxu0
    %v5415 = vadd.f32 %v5331, %v5414
    %5416 = vdwg.mxu0
    %5417 = vmatpush.msra.mxu0 0.0
    %5418 = vmatpush.msra.mxu0 0.0
    %5419 = vmatpush.msra.mxu0 0.0
    %5420 = vmatpush.msra.mxu0 0.0
    %5421 = vmatpush.msra.mxu0 0.0
    %5422 = vmatpush.msra.mxu0 0.0
    %5423 = vmatpush.msra.mxu0 0.0
    %5424 = vmatpush.msra.mxu0 0.0
    %5425 = vmatpush.msra.mxu0 0.0
    %5426 = vmatpush.msra.mxu0 0.0
    %5427 = vmatpush.msra.mxu0 0.0
    %5428 = vmatpush.msra.mxu0 0.0
    %5429 = vmatpush.msra.mxu0 0.0
    %5430 = vmatpush.msra.mxu0 0.0
    %5431 = vmatpush.msra.mxu0 0.0
    %v5432 = vand.u32 %v4886, 4294901760
    %5433 = vmatpush.msra.mxu0 %v5432
    %v5434 = vand.u32 %v4837, 4294901760
    %5435 = vmatmul.f32.gmra.mxu0 %v5434
    %v5436 = vpop.f32.mrf.mxu0
    %v5437 = vadd.f32 %v5355, %v5436
    %v5438 = vand.u32 %v4840, 4294901760
    %5439 = vmatmul.f32.gmra.mxu0 %v5438
    %v5440 = vpop.f32.mrf.mxu0
    %v5441 = vadd.f32 %v5359, %v5440
    %v5442 = vand.u32 %v4843, 4294901760
    %5443 = vmatmul.f32.gmra.mxu0 %v5442
    %v5444 = vpop.f32.mrf.mxu0
    %v5445 = vadd.f32 %v5363, %v5444
    %v5446 = vand.u32 %v4846, 4294901760
    %5447 = vmatmul.f32.gmra.mxu0 %v5446
    %v5448 = vpop.f32.mrf.mxu0
    %v5449 = vadd.f32 %v5367, %v5448
    %v5450 = vand.u32 %v4849, 4294901760
    %5451 = vmatmul.f32.gmra.mxu0 %v5450
    %v5452 = vpop.f32.mrf.mxu0
    %v5453 = vadd.f32 %v5371, %v5452
    %v5454 = vand.u32 %v4852, 4294901760
    %5455 = vmatmul.f32.gmra.mxu0 %v5454
    %v5456 = vpop.f32.mrf.mxu0
    %v5457 = vadd.f32 %v5375, %v5456
    %v5458 = vand.u32 %v4855, 4294901760
    %5459 = vmatmul.f32.gmra.mxu0 %v5458
    %v5460 = vpop.f32.mrf.mxu0
    %v5461 = vadd.f32 %v5379, %v5460
    %v5462 = vand.u32 %v4858, 4294901760
    %5463 = vmatmul.f32.gmra.mxu0 %v5462
    %v5464 = vpop.f32.mrf.mxu0
    %v5465 = vadd.f32 %v5383, %v5464
    %v5466 = vand.u32 %v4861, 4294901760
    %5467 = vmatmul.f32.gmra.mxu0 %v5466
    %v5468 = vpop.f32.mrf.mxu0
    %v5469 = vadd.f32 %v5387, %v5468
    %v5470 = vand.u32 %v4864, 4294901760
    %5471 = vmatmul.f32.gmra.mxu0 %v5470
    %v5472 = vpop.f32.mrf.mxu0
    %v5473 = vadd.f32 %v5391, %v5472
    %v5474 = vand.u32 %v4867, 4294901760
    %5475 = vmatmul.f32.gmra.mxu0 %v5474
    %v5476 = vpop.f32.mrf.mxu0
    %v5477 = vadd.f32 %v5395, %v5476
    %v5478 = vand.u32 %v4870, 4294901760
    %5479 = vmatmul.f32.gmra.mxu0 %v5478
    %v5480 = vpop.f32.mrf.mxu0
    %v5481 = vadd.f32 %v5399, %v5480
    %v5482 = vand.u32 %v4873, 4294901760
    %5483 = vmatmul.f32.gmra.mxu0 %v5482
    %v5484 = vpop.f32.mrf.mxu0
    %v5485 = vadd.f32 %v5403, %v5484
    %v5486 = vand.u32 %v4876, 4294901760
    %5487 = vmatmul.f32.gmra.mxu0 %v5486
    %v5488 = vpop.f32.mrf.mxu0
    %v5489 = vadd.f32 %v5407, %v5488
    %v5490 = vand.u32 %v4879, 4294901760
    %5491 = vmatmul.f32.gmra.mxu0 %v5490
    %v5492 = vpop.f32.mrf.mxu0
    %v5493 = vadd.f32 %v5411, %v5492
    %v5494 = vand.u32 %v4882, 4294901760
    %5495 = vmatmul.f32.gmra.mxu0 %v5494
    %v5496 = vpop.f32.mrf.mxu0
    %v5497 = vadd.f32 %v5415, %v5496
    %5498 = vdwg.mxu0
    %v5499 = vmul.f32 %v4123, %v2167
    %v5500 = vmul.f32 %v4127, %v2168
    %v5501 = vmul.f32 %v4131, %v2169
    %v5502 = vmul.f32 %v4135, %v2170
    %v5503 = vmul.f32 %v4139, %v2171
    %v5504 = vmul.f32 %v4143, %v2172
    %v5505 = vmul.f32 %v4147, %v2173
    %v5506 = vmul.f32 %v4151, %v2174
    %v5507 = vmul.f32 %v4155, %v2175
    %v5508 = vmul.f32 %v4159, %v2176
    %v5509 = vmul.f32 %v4163, %v2177
    %v5510 = vmul.f32 %v4167, %v2178
    %v5511 = vmul.f32 %v4171, %v2179
    %v5512 = vmul.f32 %v4175, %v2180
    %v5513 = vmul.f32 %v4179, %v2181
    %v5514 = vmul.f32 %v4183, %v2182
    %v5516 = vsel %vm4835, %v5499, 0
    %v5519 = vsel %vm4835, %v5500, 0
    %v5522 = vsel %vm4835, %v5501, 0
    %v5525 = vsel %vm4835, %v5502, 0
    %v5528 = vsel %vm4835, %v5503, 0
    %v5531 = vsel %vm4835, %v5504, 0
    %v5534 = vsel %vm4835, %v5505, 0
    %v5537 = vsel %vm4835, %v5506, 0
    %v5540 = vsel %vm4835, %v5507, 0
    %v5543 = vsel %vm4835, %v5508, 0
    %v5546 = vsel %vm4835, %v5509, 0
    %v5549 = vsel %vm4835, %v5510, 0
    %v5552 = vsel %vm4835, %v5511, 0
    %v5555 = vsel %vm4835, %v5512, 0
    %v5558 = vsel %vm4835, %v5513, 0
    %v5561 = vsel %vm4835, %v5514, 0
    %v5564 = vsel %vm4884, 1.0, 0
    %5566 = vmatpush.msra.mxu0 0.0
    %5567 = vmatpush.msra.mxu0 0.0
    %5568 = vmatpush.msra.mxu0 0.0
    %5569 = vmatpush.msra.mxu0 0.0
    %5570 = vmatpush.msra.mxu0 0.0
    %5571 = vmatpush.msra.mxu0 0.0
    %5572 = vmatpush.msra.mxu0 0.0
    %5573 = vmatpush.msra.mxu0 0.0
    %5574 = vmatpush.msra.mxu0 0.0
    %5575 = vmatpush.msra.mxu0 0.0
    %5576 = vmatpush.msra.mxu0 0.0
    %5577 = vmatpush.msra.mxu0 0.0
    %5578 = vmatpush.msra.mxu0 0.0
    %5579 = vmatpush.msra.mxu0 0.0
    %5580 = vmatpush.msra.mxu0 0.0
    %v5581 = vand.u32 %v5564, 4294901760
    %5582 = vmatpush.msra.mxu0 %v5581
    %v5583 = vand.u32 %v5516, 4294901760
    %v5584 = vsub.f32 %v5516, %v5583
    %v5585 = vand.u32 %v5584, 4294901760
    %v5586 = vsub.f32 %v5584, %v5585
    %v5587 = vand.u32 %v5586, 4294901760
    %5588 = vmatmul.f32.gmra.mxu0 %v5587
    %v5589 = vpop.f32.mrf.mxu0
    %v5590 = vadd.f32 0.0, %v5589
    %v5591 = vand.u32 %v5519, 4294901760
    %v5592 = vsub.f32 %v5519, %v5591
    %v5593 = vand.u32 %v5592, 4294901760
    %v5594 = vsub.f32 %v5592, %v5593
    %v5595 = vand.u32 %v5594, 4294901760
    %5596 = vmatmul.f32.gmra.mxu0 %v5595
    %v5597 = vpop.f32.mrf.mxu0
    %v5598 = vadd.f32 0.0, %v5597
    %v5599 = vand.u32 %v5522, 4294901760
    %v5600 = vsub.f32 %v5522, %v5599
    %v5601 = vand.u32 %v5600, 4294901760
    %v5602 = vsub.f32 %v5600, %v5601
    %v5603 = vand.u32 %v5602, 4294901760
    %5604 = vmatmul.f32.gmra.mxu0 %v5603
    %v5605 = vpop.f32.mrf.mxu0
    %v5606 = vadd.f32 0.0, %v5605
    %v5607 = vand.u32 %v5525, 4294901760
    %v5608 = vsub.f32 %v5525, %v5607
    %v5609 = vand.u32 %v5608, 4294901760
    %v5610 = vsub.f32 %v5608, %v5609
    %v5611 = vand.u32 %v5610, 4294901760
    %5612 = vmatmul.f32.gmra.mxu0 %v5611
    %v5613 = vpop.f32.mrf.mxu0
    %v5614 = vadd.f32 0.0, %v5613
    %v5615 = vand.u32 %v5528, 4294901760
    %v5616 = vsub.f32 %v5528, %v5615
    %v5617 = vand.u32 %v5616, 4294901760
    %v5618 = vsub.f32 %v5616, %v5617
    %v5619 = vand.u32 %v5618, 4294901760
    %5620 = vmatmul.f32.gmra.mxu0 %v5619
    %v5621 = vpop.f32.mrf.mxu0
    %v5622 = vadd.f32 0.0, %v5621
    %v5623 = vand.u32 %v5531, 4294901760
    %v5624 = vsub.f32 %v5531, %v5623
    %v5625 = vand.u32 %v5624, 4294901760
    %v5626 = vsub.f32 %v5624, %v5625
    %v5627 = vand.u32 %v5626, 4294901760
    %5628 = vmatmul.f32.gmra.mxu0 %v5627
    %v5629 = vpop.f32.mrf.mxu0
    %v5630 = vadd.f32 0.0, %v5629
    %v5631 = vand.u32 %v5534, 4294901760
    %v5632 = vsub.f32 %v5534, %v5631
    %v5633 = vand.u32 %v5632, 4294901760
    %v5634 = vsub.f32 %v5632, %v5633
    %v5635 = vand.u32 %v5634, 4294901760
    %5636 = vmatmul.f32.gmra.mxu0 %v5635
    %v5637 = vpop.f32.mrf.mxu0
    %v5638 = vadd.f32 0.0, %v5637
    %v5639 = vand.u32 %v5537, 4294901760
    %v5640 = vsub.f32 %v5537, %v5639
    %v5641 = vand.u32 %v5640, 4294901760
    %v5642 = vsub.f32 %v5640, %v5641
    %v5643 = vand.u32 %v5642, 4294901760
    %5644 = vmatmul.f32.gmra.mxu0 %v5643
    %v5645 = vpop.f32.mrf.mxu0
    %v5646 = vadd.f32 0.0, %v5645
    %v5647 = vand.u32 %v5540, 4294901760
    %v5648 = vsub.f32 %v5540, %v5647
    %v5649 = vand.u32 %v5648, 4294901760
    %v5650 = vsub.f32 %v5648, %v5649
    %v5651 = vand.u32 %v5650, 4294901760
    %5652 = vmatmul.f32.gmra.mxu0 %v5651
    %v5653 = vpop.f32.mrf.mxu0
    %v5654 = vadd.f32 0.0, %v5653
    %v5655 = vand.u32 %v5543, 4294901760
    %v5656 = vsub.f32 %v5543, %v5655
    %v5657 = vand.u32 %v5656, 4294901760
    %v5658 = vsub.f32 %v5656, %v5657
    %v5659 = vand.u32 %v5658, 4294901760
    %5660 = vmatmul.f32.gmra.mxu0 %v5659
    %v5661 = vpop.f32.mrf.mxu0
    %v5662 = vadd.f32 0.0, %v5661
    %v5663 = vand.u32 %v5546, 4294901760
    %v5664 = vsub.f32 %v5546, %v5663
    %v5665 = vand.u32 %v5664, 4294901760
    %v5666 = vsub.f32 %v5664, %v5665
    %v5667 = vand.u32 %v5666, 4294901760
    %5668 = vmatmul.f32.gmra.mxu0 %v5667
    %v5669 = vpop.f32.mrf.mxu0
    %v5670 = vadd.f32 0.0, %v5669
    %v5671 = vand.u32 %v5549, 4294901760
    %v5672 = vsub.f32 %v5549, %v5671
    %v5673 = vand.u32 %v5672, 4294901760
    %v5674 = vsub.f32 %v5672, %v5673
    %v5675 = vand.u32 %v5674, 4294901760
    %5676 = vmatmul.f32.gmra.mxu0 %v5675
    %v5677 = vpop.f32.mrf.mxu0
    %v5678 = vadd.f32 0.0, %v5677
    %v5679 = vand.u32 %v5552, 4294901760
    %v5680 = vsub.f32 %v5552, %v5679
    %v5681 = vand.u32 %v5680, 4294901760
    %v5682 = vsub.f32 %v5680, %v5681
    %v5683 = vand.u32 %v5682, 4294901760
    %5684 = vmatmul.f32.gmra.mxu0 %v5683
    %v5685 = vpop.f32.mrf.mxu0
    %v5686 = vadd.f32 0.0, %v5685
    %v5687 = vand.u32 %v5555, 4294901760
    %v5688 = vsub.f32 %v5555, %v5687
    %v5689 = vand.u32 %v5688, 4294901760
    %v5690 = vsub.f32 %v5688, %v5689
    %v5691 = vand.u32 %v5690, 4294901760
    %5692 = vmatmul.f32.gmra.mxu0 %v5691
    %v5693 = vpop.f32.mrf.mxu0
    %v5694 = vadd.f32 0.0, %v5693
    %v5695 = vand.u32 %v5558, 4294901760
    %v5696 = vsub.f32 %v5558, %v5695
    %v5697 = vand.u32 %v5696, 4294901760
    %v5698 = vsub.f32 %v5696, %v5697
    %v5699 = vand.u32 %v5698, 4294901760
    %5700 = vmatmul.f32.gmra.mxu0 %v5699
    %v5701 = vpop.f32.mrf.mxu0
    %v5702 = vadd.f32 0.0, %v5701
    %v5703 = vand.u32 %v5561, 4294901760
    %v5704 = vsub.f32 %v5561, %v5703
    %v5705 = vand.u32 %v5704, 4294901760
    %v5706 = vsub.f32 %v5704, %v5705
    %v5707 = vand.u32 %v5706, 4294901760
    %5708 = vmatmul.f32.gmra.mxu0 %v5707
    %v5709 = vpop.f32.mrf.mxu0
    %v5710 = vadd.f32 0.0, %v5709
    %5711 = vdwg.mxu0
    %5712 = vmatpush.msra.mxu0 0.0
    %5713 = vmatpush.msra.mxu0 0.0
    %5714 = vmatpush.msra.mxu0 0.0
    %5715 = vmatpush.msra.mxu0 0.0
    %5716 = vmatpush.msra.mxu0 0.0
    %5717 = vmatpush.msra.mxu0 0.0
    %5718 = vmatpush.msra.mxu0 0.0
    %5719 = vmatpush.msra.mxu0 0.0
    %5720 = vmatpush.msra.mxu0 0.0
    %5721 = vmatpush.msra.mxu0 0.0
    %5722 = vmatpush.msra.mxu0 0.0
    %5723 = vmatpush.msra.mxu0 0.0
    %5724 = vmatpush.msra.mxu0 0.0
    %5725 = vmatpush.msra.mxu0 0.0
    %5726 = vmatpush.msra.mxu0 0.0
    %v5727 = vand.u32 %v5564, 4294901760
    %v5728 = vsub.f32 %v5564, %v5727
    %v5729 = vand.u32 %v5728, 4294901760
    %v5730 = vsub.f32 %v5728, %v5729
    %v5731 = vand.u32 %v5730, 4294901760
    %5732 = vmatpush.msra.mxu0 %v5731
    %v5733 = vand.u32 %v5516, 4294901760
    %5734 = vmatmul.f32.gmra.mxu0 %v5733
    %v5735 = vpop.f32.mrf.mxu0
    %v5736 = vadd.f32 %v5590, %v5735
    %v5737 = vand.u32 %v5519, 4294901760
    %5738 = vmatmul.f32.gmra.mxu0 %v5737
    %v5739 = vpop.f32.mrf.mxu0
    %v5740 = vadd.f32 %v5598, %v5739
    %v5741 = vand.u32 %v5522, 4294901760
    %5742 = vmatmul.f32.gmra.mxu0 %v5741
    %v5743 = vpop.f32.mrf.mxu0
    %v5744 = vadd.f32 %v5606, %v5743
    %v5745 = vand.u32 %v5525, 4294901760
    %5746 = vmatmul.f32.gmra.mxu0 %v5745
    %v5747 = vpop.f32.mrf.mxu0
    %v5748 = vadd.f32 %v5614, %v5747
    %v5749 = vand.u32 %v5528, 4294901760
    %5750 = vmatmul.f32.gmra.mxu0 %v5749
    %v5751 = vpop.f32.mrf.mxu0
    %v5752 = vadd.f32 %v5622, %v5751
    %v5753 = vand.u32 %v5531, 4294901760
    %5754 = vmatmul.f32.gmra.mxu0 %v5753
    %v5755 = vpop.f32.mrf.mxu0
    %v5756 = vadd.f32 %v5630, %v5755
    %v5757 = vand.u32 %v5534, 4294901760
    %5758 = vmatmul.f32.gmra.mxu0 %v5757
    %v5759 = vpop.f32.mrf.mxu0
    %v5760 = vadd.f32 %v5638, %v5759
    %v5761 = vand.u32 %v5537, 4294901760
    %5762 = vmatmul.f32.gmra.mxu0 %v5761
    %v5763 = vpop.f32.mrf.mxu0
    %v5764 = vadd.f32 %v5646, %v5763
    %v5765 = vand.u32 %v5540, 4294901760
    %5766 = vmatmul.f32.gmra.mxu0 %v5765
    %v5767 = vpop.f32.mrf.mxu0
    %v5768 = vadd.f32 %v5654, %v5767
    %v5769 = vand.u32 %v5543, 4294901760
    %5770 = vmatmul.f32.gmra.mxu0 %v5769
    %v5771 = vpop.f32.mrf.mxu0
    %v5772 = vadd.f32 %v5662, %v5771
    %v5773 = vand.u32 %v5546, 4294901760
    %5774 = vmatmul.f32.gmra.mxu0 %v5773
    %v5775 = vpop.f32.mrf.mxu0
    %v5776 = vadd.f32 %v5670, %v5775
    %v5777 = vand.u32 %v5549, 4294901760
    %5778 = vmatmul.f32.gmra.mxu0 %v5777
    %v5779 = vpop.f32.mrf.mxu0
    %v5780 = vadd.f32 %v5678, %v5779
    %v5781 = vand.u32 %v5552, 4294901760
    %5782 = vmatmul.f32.gmra.mxu0 %v5781
    %v5783 = vpop.f32.mrf.mxu0
    %v5784 = vadd.f32 %v5686, %v5783
    %v5785 = vand.u32 %v5555, 4294901760
    %5786 = vmatmul.f32.gmra.mxu0 %v5785
    %v5787 = vpop.f32.mrf.mxu0
    %v5788 = vadd.f32 %v5694, %v5787
    %v5789 = vand.u32 %v5558, 4294901760
    %5790 = vmatmul.f32.gmra.mxu0 %v5789
    %v5791 = vpop.f32.mrf.mxu0
    %v5792 = vadd.f32 %v5702, %v5791
    %v5793 = vand.u32 %v5561, 4294901760
    %5794 = vmatmul.f32.gmra.mxu0 %v5793
    %v5795 = vpop.f32.mrf.mxu0
    %v5796 = vadd.f32 %v5710, %v5795
    %5797 = vdwg.mxu0
    %5798 = vmatpush.msra.mxu0 0.0
    %5799 = vmatpush.msra.mxu0 0.0
    %5800 = vmatpush.msra.mxu0 0.0
    %5801 = vmatpush.msra.mxu0 0.0
    %5802 = vmatpush.msra.mxu0 0.0
    %5803 = vmatpush.msra.mxu0 0.0
    %5804 = vmatpush.msra.mxu0 0.0
    %5805 = vmatpush.msra.mxu0 0.0
    %5806 = vmatpush.msra.mxu0 0.0
    %5807 = vmatpush.msra.mxu0 0.0
    %5808 = vmatpush.msra.mxu0 0.0
    %5809 = vmatpush.msra.mxu0 0.0
    %5810 = vmatpush.msra.mxu0 0.0
    %5811 = vmatpush.msra.mxu0 0.0
    %5812 = vmatpush.msra.mxu0 0.0
    %v5813 = vand.u32 %v5564, 4294901760
    %v5814 = vsub.f32 %v5564, %v5813
    %5815 = vmatpush.msra.mxu0 %v5814
    %v5816 = vand.u32 %v5516, 4294901760
    %v5817 = vsub.f32 %v5516, %v5816
    %5818 = vmatmul.f32.gmra.mxu0 %v5817
    %v5819 = vpop.f32.mrf.mxu0
    %v5820 = vadd.f32 %v5736, %v5819
    %v5821 = vand.u32 %v5519, 4294901760
    %v5822 = vsub.f32 %v5519, %v5821
    %5823 = vmatmul.f32.gmra.mxu0 %v5822
    %v5824 = vpop.f32.mrf.mxu0
    %v5825 = vadd.f32 %v5740, %v5824
    %v5826 = vand.u32 %v5522, 4294901760
    %v5827 = vsub.f32 %v5522, %v5826
    %5828 = vmatmul.f32.gmra.mxu0 %v5827
    %v5829 = vpop.f32.mrf.mxu0
    %v5830 = vadd.f32 %v5744, %v5829
    %v5831 = vand.u32 %v5525, 4294901760
    %v5832 = vsub.f32 %v5525, %v5831
    %5833 = vmatmul.f32.gmra.mxu0 %v5832
    %v5834 = vpop.f32.mrf.mxu0
    %v5835 = vadd.f32 %v5748, %v5834
    %v5836 = vand.u32 %v5528, 4294901760
    %v5837 = vsub.f32 %v5528, %v5836
    %5838 = vmatmul.f32.gmra.mxu0 %v5837
    %v5839 = vpop.f32.mrf.mxu0
    %v5840 = vadd.f32 %v5752, %v5839
    %v5841 = vand.u32 %v5531, 4294901760
    %v5842 = vsub.f32 %v5531, %v5841
    %5843 = vmatmul.f32.gmra.mxu0 %v5842
    %v5844 = vpop.f32.mrf.mxu0
    %v5845 = vadd.f32 %v5756, %v5844
    %v5846 = vand.u32 %v5534, 4294901760
    %v5847 = vsub.f32 %v5534, %v5846
    %5848 = vmatmul.f32.gmra.mxu0 %v5847
    %v5849 = vpop.f32.mrf.mxu0
    %v5850 = vadd.f32 %v5760, %v5849
    %v5851 = vand.u32 %v5537, 4294901760
    %v5852 = vsub.f32 %v5537, %v5851
    %5853 = vmatmul.f32.gmra.mxu0 %v5852
    %v5854 = vpop.f32.mrf.mxu0
    %v5855 = vadd.f32 %v5764, %v5854
    %v5856 = vand.u32 %v5540, 4294901760
    %v5857 = vsub.f32 %v5540, %v5856
    %5858 = vmatmul.f32.gmra.mxu0 %v5857
    %v5859 = vpop.f32.mrf.mxu0
    %v5860 = vadd.f32 %v5768, %v5859
    %v5861 = vand.u32 %v5543, 4294901760
    %v5862 = vsub.f32 %v5543, %v5861
    %5863 = vmatmul.f32.gmra.mxu0 %v5862
    %v5864 = vpop.f32.mrf.mxu0
    %v5865 = vadd.f32 %v5772, %v5864
    %v5866 = vand.u32 %v5546, 4294901760
    %v5867 = vsub.f32 %v5546, %v5866
    %5868 = vmatmul.f32.gmra.mxu0 %v5867
    %v5869 = vpop.f32.mrf.mxu0
    %v5870 = vadd.f32 %v5776, %v5869
    %v5871 = vand.u32 %v5549, 4294901760
    %v5872 = vsub.f32 %v5549, %v5871
    %5873 = vmatmul.f32.gmra.mxu0 %v5872
    %v5874 = vpop.f32.mrf.mxu0
    %v5875 = vadd.f32 %v5780, %v5874
    %v5876 = vand.u32 %v5552, 4294901760
    %v5877 = vsub.f32 %v5552, %v5876
    %5878 = vmatmul.f32.gmra.mxu0 %v5877
    %v5879 = vpop.f32.mrf.mxu0
    %v5880 = vadd.f32 %v5784, %v5879
    %v5881 = vand.u32 %v5555, 4294901760
    %v5882 = vsub.f32 %v5555, %v5881
    %5883 = vmatmul.f32.gmra.mxu0 %v5882
    %v5884 = vpop.f32.mrf.mxu0
    %v5885 = vadd.f32 %v5788, %v5884
    %v5886 = vand.u32 %v5558, 4294901760
    %v5887 = vsub.f32 %v5558, %v5886
    %5888 = vmatmul.f32.gmra.mxu0 %v5887
    %v5889 = vpop.f32.mrf.mxu0
    %v5890 = vadd.f32 %v5792, %v5889
    %v5891 = vand.u32 %v5561, 4294901760
    %v5892 = vsub.f32 %v5561, %v5891
    %5893 = vmatmul.f32.gmra.mxu0 %v5892
    %v5894 = vpop.f32.mrf.mxu0
    %v5895 = vadd.f32 %v5796, %v5894
    %5896 = vdwg.mxu0
    %5897 = vmatpush.msra.mxu0 0.0
    %5898 = vmatpush.msra.mxu0 0.0
    %5899 = vmatpush.msra.mxu0 0.0
    %5900 = vmatpush.msra.mxu0 0.0
    %5901 = vmatpush.msra.mxu0 0.0
    %5902 = vmatpush.msra.mxu0 0.0
    %5903 = vmatpush.msra.mxu0 0.0
    %5904 = vmatpush.msra.mxu0 0.0
    %5905 = vmatpush.msra.mxu0 0.0
    %5906 = vmatpush.msra.mxu0 0.0
    %5907 = vmatpush.msra.mxu0 0.0
    %5908 = vmatpush.msra.mxu0 0.0
    %5909 = vmatpush.msra.mxu0 0.0
    %5910 = vmatpush.msra.mxu0 0.0
    %5911 = vmatpush.msra.mxu0 0.0
    %v5912 = vand.u32 %v5564, 4294901760
    %5913 = vmatpush.msra.mxu0 %v5912
    %v5914 = vand.u32 %v5516, 4294901760
    %v5915 = vsub.f32 %v5516, %v5914
    %v5916 = vand.u32 %v5915, 4294901760
    %5917 = vmatmul.f32.gmra.mxu0 %v5916
    %v5918 = vpop.f32.mrf.mxu0
    %v5919 = vadd.f32 %v5820, %v5918
    %v5920 = vand.u32 %v5519, 4294901760
    %v5921 = vsub.f32 %v5519, %v5920
    %v5922 = vand.u32 %v5921, 4294901760
    %5923 = vmatmul.f32.gmra.mxu0 %v5922
    %v5924 = vpop.f32.mrf.mxu0
    %v5925 = vadd.f32 %v5825, %v5924
    %v5926 = vand.u32 %v5522, 4294901760
    %v5927 = vsub.f32 %v5522, %v5926
    %v5928 = vand.u32 %v5927, 4294901760
    %5929 = vmatmul.f32.gmra.mxu0 %v5928
    %v5930 = vpop.f32.mrf.mxu0
    %v5931 = vadd.f32 %v5830, %v5930
    %v5932 = vand.u32 %v5525, 4294901760
    %v5933 = vsub.f32 %v5525, %v5932
    %v5934 = vand.u32 %v5933, 4294901760
    %5935 = vmatmul.f32.gmra.mxu0 %v5934
    %v5936 = vpop.f32.mrf.mxu0
    %v5937 = vadd.f32 %v5835, %v5936
    %v5938 = vand.u32 %v5528, 4294901760
    %v5939 = vsub.f32 %v5528, %v5938
    %v5940 = vand.u32 %v5939, 4294901760
    %5941 = vmatmul.f32.gmra.mxu0 %v5940
    %v5942 = vpop.f32.mrf.mxu0
    %v5943 = vadd.f32 %v5840, %v5942
    %v5944 = vand.u32 %v5531, 4294901760
    %v5945 = vsub.f32 %v5531, %v5944
    %v5946 = vand.u32 %v5945, 4294901760
    %5947 = vmatmul.f32.gmra.mxu0 %v5946
    %v5948 = vpop.f32.mrf.mxu0
    %v5949 = vadd.f32 %v5845, %v5948
    %v5950 = vand.u32 %v5534, 4294901760
    %v5951 = vsub.f32 %v5534, %v5950
    %v5952 = vand.u32 %v5951, 4294901760
    %5953 = vmatmul.f32.gmra.mxu0 %v5952
    %v5954 = vpop.f32.mrf.mxu0
    %v5955 = vadd.f32 %v5850, %v5954
    %v5956 = vand.u32 %v5537, 4294901760
    %v5957 = vsub.f32 %v5537, %v5956
    %v5958 = vand.u32 %v5957, 4294901760
    %5959 = vmatmul.f32.gmra.mxu0 %v5958
    %v5960 = vpop.f32.mrf.mxu0
    %v5961 = vadd.f32 %v5855, %v5960
    %v5962 = vand.u32 %v5540, 4294901760
    %v5963 = vsub.f32 %v5540, %v5962
    %v5964 = vand.u32 %v5963, 4294901760
    %5965 = vmatmul.f32.gmra.mxu0 %v5964
    %v5966 = vpop.f32.mrf.mxu0
    %v5967 = vadd.f32 %v5860, %v5966
    %v5968 = vand.u32 %v5543, 4294901760
    %v5969 = vsub.f32 %v5543, %v5968
    %v5970 = vand.u32 %v5969, 4294901760
    %5971 = vmatmul.f32.gmra.mxu0 %v5970
    %v5972 = vpop.f32.mrf.mxu0
    %v5973 = vadd.f32 %v5865, %v5972
    %v5974 = vand.u32 %v5546, 4294901760
    %v5975 = vsub.f32 %v5546, %v5974
    %v5976 = vand.u32 %v5975, 4294901760
    %5977 = vmatmul.f32.gmra.mxu0 %v5976
    %v5978 = vpop.f32.mrf.mxu0
    %v5979 = vadd.f32 %v5870, %v5978
    %v5980 = vand.u32 %v5549, 4294901760
    %v5981 = vsub.f32 %v5549, %v5980
    %v5982 = vand.u32 %v5981, 4294901760
    %5983 = vmatmul.f32.gmra.mxu0 %v5982
    %v5984 = vpop.f32.mrf.mxu0
    %v5985 = vadd.f32 %v5875, %v5984
    %v5986 = vand.u32 %v5552, 4294901760
    %v5987 = vsub.f32 %v5552, %v5986
    %v5988 = vand.u32 %v5987, 4294901760
    %5989 = vmatmul.f32.gmra.mxu0 %v5988
    %v5990 = vpop.f32.mrf.mxu0
    %v5991 = vadd.f32 %v5880, %v5990
    %v5992 = vand.u32 %v5555, 4294901760
    %v5993 = vsub.f32 %v5555, %v5992
    %v5994 = vand.u32 %v5993, 4294901760
    %5995 = vmatmul.f32.gmra.mxu0 %v5994
    %v5996 = vpop.f32.mrf.mxu0
    %v5997 = vadd.f32 %v5885, %v5996
    %v5998 = vand.u32 %v5558, 4294901760
    %v5999 = vsub.f32 %v5558, %v5998
    %v6000 = vand.u32 %v5999, 4294901760
    %6001 = vmatmul.f32.gmra.mxu0 %v6000
    %v6002 = vpop.f32.mrf.mxu0
    %v6003 = vadd.f32 %v5890, %v6002
    %v6004 = vand.u32 %v5561, 4294901760
    %v6005 = vsub.f32 %v5561, %v6004
    %v6006 = vand.u32 %v6005, 4294901760
    %6007 = vmatmul.f32.gmra.mxu0 %v6006
    %v6008 = vpop.f32.mrf.mxu0
    %v6009 = vadd.f32 %v5895, %v6008
    %6010 = vdwg.mxu0
    %6011 = vmatpush.msra.mxu0 0.0
    %6012 = vmatpush.msra.mxu0 0.0
    %6013 = vmatpush.msra.mxu0 0.0
    %6014 = vmatpush.msra.mxu0 0.0
    %6015 = vmatpush.msra.mxu0 0.0
    %6016 = vmatpush.msra.mxu0 0.0
    %6017 = vmatpush.msra.mxu0 0.0
    %6018 = vmatpush.msra.mxu0 0.0
    %6019 = vmatpush.msra.mxu0 0.0
    %6020 = vmatpush.msra.mxu0 0.0
    %6021 = vmatpush.msra.mxu0 0.0
    %6022 = vmatpush.msra.mxu0 0.0
    %6023 = vmatpush.msra.mxu0 0.0
    %6024 = vmatpush.msra.mxu0 0.0
    %6025 = vmatpush.msra.mxu0 0.0
    %v6026 = vand.u32 %v5564, 4294901760
    %v6027 = vsub.f32 %v5564, %v6026
    %v6028 = vand.u32 %v6027, 4294901760
    %6029 = vmatpush.msra.mxu0 %v6028
    %v6030 = vand.u32 %v5516, 4294901760
    %6031 = vmatmul.f32.gmra.mxu0 %v6030
    %v6032 = vpop.f32.mrf.mxu0
    %v6033 = vadd.f32 %v5919, %v6032
    %v6034 = vand.u32 %v5519, 4294901760
    %6035 = vmatmul.f32.gmra.mxu0 %v6034
    %v6036 = vpop.f32.mrf.mxu0
    %v6037 = vadd.f32 %v5925, %v6036
    %v6038 = vand.u32 %v5522, 4294901760
    %6039 = vmatmul.f32.gmra.mxu0 %v6038
    %v6040 = vpop.f32.mrf.mxu0
    %v6041 = vadd.f32 %v5931, %v6040
    %v6042 = vand.u32 %v5525, 4294901760
    %6043 = vmatmul.f32.gmra.mxu0 %v6042
    %v6044 = vpop.f32.mrf.mxu0
    %v6045 = vadd.f32 %v5937, %v6044
    %v6046 = vand.u32 %v5528, 4294901760
    %6047 = vmatmul.f32.gmra.mxu0 %v6046
    %v6048 = vpop.f32.mrf.mxu0
    %v6049 = vadd.f32 %v5943, %v6048
    %v6050 = vand.u32 %v5531, 4294901760
    %6051 = vmatmul.f32.gmra.mxu0 %v6050
    %v6052 = vpop.f32.mrf.mxu0
    %v6053 = vadd.f32 %v5949, %v6052
    %v6054 = vand.u32 %v5534, 4294901760
    %6055 = vmatmul.f32.gmra.mxu0 %v6054
    %v6056 = vpop.f32.mrf.mxu0
    %v6057 = vadd.f32 %v5955, %v6056
    %v6058 = vand.u32 %v5537, 4294901760
    %6059 = vmatmul.f32.gmra.mxu0 %v6058
    %v6060 = vpop.f32.mrf.mxu0
    %v6061 = vadd.f32 %v5961, %v6060
    %v6062 = vand.u32 %v5540, 4294901760
    %6063 = vmatmul.f32.gmra.mxu0 %v6062
    %v6064 = vpop.f32.mrf.mxu0
    %v6065 = vadd.f32 %v5967, %v6064
    %v6066 = vand.u32 %v5543, 4294901760
    %6067 = vmatmul.f32.gmra.mxu0 %v6066
    %v6068 = vpop.f32.mrf.mxu0
    %v6069 = vadd.f32 %v5973, %v6068
    %v6070 = vand.u32 %v5546, 4294901760
    %6071 = vmatmul.f32.gmra.mxu0 %v6070
    %v6072 = vpop.f32.mrf.mxu0
    %v6073 = vadd.f32 %v5979, %v6072
    %v6074 = vand.u32 %v5549, 4294901760
    %6075 = vmatmul.f32.gmra.mxu0 %v6074
    %v6076 = vpop.f32.mrf.mxu0
    %v6077 = vadd.f32 %v5985, %v6076
    %v6078 = vand.u32 %v5552, 4294901760
    %6079 = vmatmul.f32.gmra.mxu0 %v6078
    %v6080 = vpop.f32.mrf.mxu0
    %v6081 = vadd.f32 %v5991, %v6080
    %v6082 = vand.u32 %v5555, 4294901760
    %6083 = vmatmul.f32.gmra.mxu0 %v6082
    %v6084 = vpop.f32.mrf.mxu0
    %v6085 = vadd.f32 %v5997, %v6084
    %v6086 = vand.u32 %v5558, 4294901760
    %6087 = vmatmul.f32.gmra.mxu0 %v6086
    %v6088 = vpop.f32.mrf.mxu0
    %v6089 = vadd.f32 %v6003, %v6088
    %v6090 = vand.u32 %v5561, 4294901760
    %6091 = vmatmul.f32.gmra.mxu0 %v6090
    %v6092 = vpop.f32.mrf.mxu0
    %v6093 = vadd.f32 %v6009, %v6092
    %6094 = vdwg.mxu0
    %6095 = vmatpush.msra.mxu0 0.0
    %6096 = vmatpush.msra.mxu0 0.0
    %6097 = vmatpush.msra.mxu0 0.0
    %6098 = vmatpush.msra.mxu0 0.0
    %6099 = vmatpush.msra.mxu0 0.0
    %6100 = vmatpush.msra.mxu0 0.0
    %6101 = vmatpush.msra.mxu0 0.0
    %6102 = vmatpush.msra.mxu0 0.0
    %6103 = vmatpush.msra.mxu0 0.0
    %6104 = vmatpush.msra.mxu0 0.0
    %6105 = vmatpush.msra.mxu0 0.0
    %6106 = vmatpush.msra.mxu0 0.0
    %6107 = vmatpush.msra.mxu0 0.0
    %6108 = vmatpush.msra.mxu0 0.0
    %6109 = vmatpush.msra.mxu0 0.0
    %v6110 = vand.u32 %v5564, 4294901760
    %6111 = vmatpush.msra.mxu0 %v6110
    %v6112 = vand.u32 %v5516, 4294901760
    %6113 = vmatmul.f32.gmra.mxu0 %v6112
    %v6114 = vpop.f32.mrf.mxu0
    %v6115 = vadd.f32 %v6033, %v6114
    %v6116 = vand.u32 %v5519, 4294901760
    %6117 = vmatmul.f32.gmra.mxu0 %v6116
    %v6118 = vpop.f32.mrf.mxu0
    %v6119 = vadd.f32 %v6037, %v6118
    %v6120 = vand.u32 %v5522, 4294901760
    %6121 = vmatmul.f32.gmra.mxu0 %v6120
    %v6122 = vpop.f32.mrf.mxu0
    %v6123 = vadd.f32 %v6041, %v6122
    %v6124 = vand.u32 %v5525, 4294901760
    %6125 = vmatmul.f32.gmra.mxu0 %v6124
    %v6126 = vpop.f32.mrf.mxu0
    %v6127 = vadd.f32 %v6045, %v6126
    %v6128 = vand.u32 %v5528, 4294901760
    %6129 = vmatmul.f32.gmra.mxu0 %v6128
    %v6130 = vpop.f32.mrf.mxu0
    %v6131 = vadd.f32 %v6049, %v6130
    %v6132 = vand.u32 %v5531, 4294901760
    %6133 = vmatmul.f32.gmra.mxu0 %v6132
    %v6134 = vpop.f32.mrf.mxu0
    %v6135 = vadd.f32 %v6053, %v6134
    %v6136 = vand.u32 %v5534, 4294901760
    %6137 = vmatmul.f32.gmra.mxu0 %v6136
    %v6138 = vpop.f32.mrf.mxu0
    %v6139 = vadd.f32 %v6057, %v6138
    %v6140 = vand.u32 %v5537, 4294901760
    %6141 = vmatmul.f32.gmra.mxu0 %v6140
    %v6142 = vpop.f32.mrf.mxu0
    %v6143 = vadd.f32 %v6061, %v6142
    %v6144 = vand.u32 %v5540, 4294901760
    %6145 = vmatmul.f32.gmra.mxu0 %v6144
    %v6146 = vpop.f32.mrf.mxu0
    %v6147 = vadd.f32 %v6065, %v6146
    %v6148 = vand.u32 %v5543, 4294901760
    %6149 = vmatmul.f32.gmra.mxu0 %v6148
    %v6150 = vpop.f32.mrf.mxu0
    %v6151 = vadd.f32 %v6069, %v6150
    %v6152 = vand.u32 %v5546, 4294901760
    %6153 = vmatmul.f32.gmra.mxu0 %v6152
    %v6154 = vpop.f32.mrf.mxu0
    %v6155 = vadd.f32 %v6073, %v6154
    %v6156 = vand.u32 %v5549, 4294901760
    %6157 = vmatmul.f32.gmra.mxu0 %v6156
    %v6158 = vpop.f32.mrf.mxu0
    %v6159 = vadd.f32 %v6077, %v6158
    %v6160 = vand.u32 %v5552, 4294901760
    %6161 = vmatmul.f32.gmra.mxu0 %v6160
    %v6162 = vpop.f32.mrf.mxu0
    %v6163 = vadd.f32 %v6081, %v6162
    %v6164 = vand.u32 %v5555, 4294901760
    %6165 = vmatmul.f32.gmra.mxu0 %v6164
    %v6166 = vpop.f32.mrf.mxu0
    %v6167 = vadd.f32 %v6085, %v6166
    %v6168 = vand.u32 %v5558, 4294901760
    %6169 = vmatmul.f32.gmra.mxu0 %v6168
    %v6170 = vpop.f32.mrf.mxu0
    %v6171 = vadd.f32 %v6089, %v6170
    %v6172 = vand.u32 %v5561, 4294901760
    %6173 = vmatmul.f32.gmra.mxu0 %v6172
    %v6174 = vpop.f32.mrf.mxu0
    %v6175 = vadd.f32 %v6093, %v6174
    %6176 = vdwg.mxu0
    %v6177 = vmul.f32 %v4773, %v2167
    %v6178 = vmul.f32 %v4777, %v2168
    %v6179 = vmul.f32 %v4781, %v2169
    %v6180 = vmul.f32 %v4785, %v2170
    %v6181 = vmul.f32 %v4789, %v2171
    %v6182 = vmul.f32 %v4793, %v2172
    %v6183 = vmul.f32 %v4797, %v2173
    %v6184 = vmul.f32 %v4801, %v2174
    %v6185 = vmul.f32 %v4805, %v2175
    %v6186 = vmul.f32 %v4809, %v2176
    %v6187 = vmul.f32 %v4813, %v2177
    %v6188 = vmul.f32 %v4817, %v2178
    %v6189 = vmul.f32 %v4821, %v2179
    %v6190 = vmul.f32 %v4825, %v2180
    %v6191 = vmul.f32 %v4829, %v2181
    %v6192 = vmul.f32 %v4833, %v2182
    %v6194 = vsel %vm4835, %v6177, 0
    %v6197 = vsel %vm4835, %v6178, 0
    %v6200 = vsel %vm4835, %v6179, 0
    %v6203 = vsel %vm4835, %v6180, 0
    %v6206 = vsel %vm4835, %v6181, 0
    %v6209 = vsel %vm4835, %v6182, 0
    %v6212 = vsel %vm4835, %v6183, 0
    %v6215 = vsel %vm4835, %v6184, 0
    %v6218 = vsel %vm4835, %v6185, 0
    %v6221 = vsel %vm4835, %v6186, 0
    %v6224 = vsel %vm4835, %v6187, 0
    %v6227 = vsel %vm4835, %v6188, 0
    %v6230 = vsel %vm4835, %v6189, 0
    %v6233 = vsel %vm4835, %v6190, 0
    %v6236 = vsel %vm4835, %v6191, 0
    %v6239 = vsel %vm4835, %v6192, 0
    %6241 = vmatpush.msra.mxu0 0.0
    %6242 = vmatpush.msra.mxu0 0.0
    %6243 = vmatpush.msra.mxu0 0.0
    %6244 = vmatpush.msra.mxu0 0.0
    %6245 = vmatpush.msra.mxu0 0.0
    %6246 = vmatpush.msra.mxu0 0.0
    %6247 = vmatpush.msra.mxu0 0.0
    %6248 = vmatpush.msra.mxu0 0.0
    %6249 = vmatpush.msra.mxu0 0.0
    %6250 = vmatpush.msra.mxu0 0.0
    %6251 = vmatpush.msra.mxu0 0.0
    %6252 = vmatpush.msra.mxu0 0.0
    %6253 = vmatpush.msra.mxu0 0.0
    %6254 = vmatpush.msra.mxu0 0.0
    %6255 = vmatpush.msra.mxu0 0.0
    %v6256 = vand.u32 %v5564, 4294901760
    %6257 = vmatpush.msra.mxu0 %v6256
    %v6258 = vand.u32 %v6194, 4294901760
    %v6259 = vsub.f32 %v6194, %v6258
    %v6260 = vand.u32 %v6259, 4294901760
    %v6261 = vsub.f32 %v6259, %v6260
    %v6262 = vand.u32 %v6261, 4294901760
    %6263 = vmatmul.f32.gmra.mxu0 %v6262
    %v6264 = vpop.f32.mrf.mxu0
    %v6265 = vadd.f32 0.0, %v6264
    %v6266 = vand.u32 %v6197, 4294901760
    %v6267 = vsub.f32 %v6197, %v6266
    %v6268 = vand.u32 %v6267, 4294901760
    %v6269 = vsub.f32 %v6267, %v6268
    %v6270 = vand.u32 %v6269, 4294901760
    %6271 = vmatmul.f32.gmra.mxu0 %v6270
    %v6272 = vpop.f32.mrf.mxu0
    %v6273 = vadd.f32 0.0, %v6272
    %v6274 = vand.u32 %v6200, 4294901760
    %v6275 = vsub.f32 %v6200, %v6274
    %v6276 = vand.u32 %v6275, 4294901760
    %v6277 = vsub.f32 %v6275, %v6276
    %v6278 = vand.u32 %v6277, 4294901760
    %6279 = vmatmul.f32.gmra.mxu0 %v6278
    %v6280 = vpop.f32.mrf.mxu0
    %v6281 = vadd.f32 0.0, %v6280
    %v6282 = vand.u32 %v6203, 4294901760
    %v6283 = vsub.f32 %v6203, %v6282
    %v6284 = vand.u32 %v6283, 4294901760
    %v6285 = vsub.f32 %v6283, %v6284
    %v6286 = vand.u32 %v6285, 4294901760
    %6287 = vmatmul.f32.gmra.mxu0 %v6286
    %v6288 = vpop.f32.mrf.mxu0
    %v6289 = vadd.f32 0.0, %v6288
    %v6290 = vand.u32 %v6206, 4294901760
    %v6291 = vsub.f32 %v6206, %v6290
    %v6292 = vand.u32 %v6291, 4294901760
    %v6293 = vsub.f32 %v6291, %v6292
    %v6294 = vand.u32 %v6293, 4294901760
    %6295 = vmatmul.f32.gmra.mxu0 %v6294
    %v6296 = vpop.f32.mrf.mxu0
    %v6297 = vadd.f32 0.0, %v6296
    %v6298 = vand.u32 %v6209, 4294901760
    %v6299 = vsub.f32 %v6209, %v6298
    %v6300 = vand.u32 %v6299, 4294901760
    %v6301 = vsub.f32 %v6299, %v6300
    %v6302 = vand.u32 %v6301, 4294901760
    %6303 = vmatmul.f32.gmra.mxu0 %v6302
    %v6304 = vpop.f32.mrf.mxu0
    %v6305 = vadd.f32 0.0, %v6304
    %v6306 = vand.u32 %v6212, 4294901760
    %v6307 = vsub.f32 %v6212, %v6306
    %v6308 = vand.u32 %v6307, 4294901760
    %v6309 = vsub.f32 %v6307, %v6308
    %v6310 = vand.u32 %v6309, 4294901760
    %6311 = vmatmul.f32.gmra.mxu0 %v6310
    %v6312 = vpop.f32.mrf.mxu0
    %v6313 = vadd.f32 0.0, %v6312
    %v6314 = vand.u32 %v6215, 4294901760
    %v6315 = vsub.f32 %v6215, %v6314
    %v6316 = vand.u32 %v6315, 4294901760
    %v6317 = vsub.f32 %v6315, %v6316
    %v6318 = vand.u32 %v6317, 4294901760
    %6319 = vmatmul.f32.gmra.mxu0 %v6318
    %v6320 = vpop.f32.mrf.mxu0
    %v6321 = vadd.f32 0.0, %v6320
    %v6322 = vand.u32 %v6218, 4294901760
    %v6323 = vsub.f32 %v6218, %v6322
    %v6324 = vand.u32 %v6323, 4294901760
    %v6325 = vsub.f32 %v6323, %v6324
    %v6326 = vand.u32 %v6325, 4294901760
    %6327 = vmatmul.f32.gmra.mxu0 %v6326
    %v6328 = vpop.f32.mrf.mxu0
    %v6329 = vadd.f32 0.0, %v6328
    %v6330 = vand.u32 %v6221, 4294901760
    %v6331 = vsub.f32 %v6221, %v6330
    %v6332 = vand.u32 %v6331, 4294901760
    %v6333 = vsub.f32 %v6331, %v6332
    %v6334 = vand.u32 %v6333, 4294901760
    %6335 = vmatmul.f32.gmra.mxu0 %v6334
    %v6336 = vpop.f32.mrf.mxu0
    %v6337 = vadd.f32 0.0, %v6336
    %v6338 = vand.u32 %v6224, 4294901760
    %v6339 = vsub.f32 %v6224, %v6338
    %v6340 = vand.u32 %v6339, 4294901760
    %v6341 = vsub.f32 %v6339, %v6340
    %v6342 = vand.u32 %v6341, 4294901760
    %6343 = vmatmul.f32.gmra.mxu0 %v6342
    %v6344 = vpop.f32.mrf.mxu0
    %v6345 = vadd.f32 0.0, %v6344
    %v6346 = vand.u32 %v6227, 4294901760
    %v6347 = vsub.f32 %v6227, %v6346
    %v6348 = vand.u32 %v6347, 4294901760
    %v6349 = vsub.f32 %v6347, %v6348
    %v6350 = vand.u32 %v6349, 4294901760
    %6351 = vmatmul.f32.gmra.mxu0 %v6350
    %v6352 = vpop.f32.mrf.mxu0
    %v6353 = vadd.f32 0.0, %v6352
    %v6354 = vand.u32 %v6230, 4294901760
    %v6355 = vsub.f32 %v6230, %v6354
    %v6356 = vand.u32 %v6355, 4294901760
    %v6357 = vsub.f32 %v6355, %v6356
    %v6358 = vand.u32 %v6357, 4294901760
    %6359 = vmatmul.f32.gmra.mxu0 %v6358
    %v6360 = vpop.f32.mrf.mxu0
    %v6361 = vadd.f32 0.0, %v6360
    %v6362 = vand.u32 %v6233, 4294901760
    %v6363 = vsub.f32 %v6233, %v6362
    %v6364 = vand.u32 %v6363, 4294901760
    %v6365 = vsub.f32 %v6363, %v6364
    %v6366 = vand.u32 %v6365, 4294901760
    %6367 = vmatmul.f32.gmra.mxu0 %v6366
    %v6368 = vpop.f32.mrf.mxu0
    %v6369 = vadd.f32 0.0, %v6368
    %v6370 = vand.u32 %v6236, 4294901760
    %v6371 = vsub.f32 %v6236, %v6370
    %v6372 = vand.u32 %v6371, 4294901760
    %v6373 = vsub.f32 %v6371, %v6372
    %v6374 = vand.u32 %v6373, 4294901760
    %6375 = vmatmul.f32.gmra.mxu0 %v6374
    %v6376 = vpop.f32.mrf.mxu0
    %v6377 = vadd.f32 0.0, %v6376
    %v6378 = vand.u32 %v6239, 4294901760
    %v6379 = vsub.f32 %v6239, %v6378
    %v6380 = vand.u32 %v6379, 4294901760
    %v6381 = vsub.f32 %v6379, %v6380
    %v6382 = vand.u32 %v6381, 4294901760
    %6383 = vmatmul.f32.gmra.mxu0 %v6382
    %v6384 = vpop.f32.mrf.mxu0
    %v6385 = vadd.f32 0.0, %v6384
    %6386 = vdwg.mxu0
    %6387 = vmatpush.msra.mxu0 0.0
    %6388 = vmatpush.msra.mxu0 0.0
    %6389 = vmatpush.msra.mxu0 0.0
    %6390 = vmatpush.msra.mxu0 0.0
    %6391 = vmatpush.msra.mxu0 0.0
    %6392 = vmatpush.msra.mxu0 0.0
    %6393 = vmatpush.msra.mxu0 0.0
    %6394 = vmatpush.msra.mxu0 0.0
    %6395 = vmatpush.msra.mxu0 0.0
    %6396 = vmatpush.msra.mxu0 0.0
    %6397 = vmatpush.msra.mxu0 0.0
    %6398 = vmatpush.msra.mxu0 0.0
    %6399 = vmatpush.msra.mxu0 0.0
    %6400 = vmatpush.msra.mxu0 0.0
    %6401 = vmatpush.msra.mxu0 0.0
    %v6402 = vand.u32 %v5564, 4294901760
    %v6403 = vsub.f32 %v5564, %v6402
    %v6404 = vand.u32 %v6403, 4294901760
    %v6405 = vsub.f32 %v6403, %v6404
    %v6406 = vand.u32 %v6405, 4294901760
    %6407 = vmatpush.msra.mxu0 %v6406
    %v6408 = vand.u32 %v6194, 4294901760
    %6409 = vmatmul.f32.gmra.mxu0 %v6408
    %v6410 = vpop.f32.mrf.mxu0
    %v6411 = vadd.f32 %v6265, %v6410
    %v6412 = vand.u32 %v6197, 4294901760
    %6413 = vmatmul.f32.gmra.mxu0 %v6412
    %v6414 = vpop.f32.mrf.mxu0
    %v6415 = vadd.f32 %v6273, %v6414
    %v6416 = vand.u32 %v6200, 4294901760
    %6417 = vmatmul.f32.gmra.mxu0 %v6416
    %v6418 = vpop.f32.mrf.mxu0
    %v6419 = vadd.f32 %v6281, %v6418
    %v6420 = vand.u32 %v6203, 4294901760
    %6421 = vmatmul.f32.gmra.mxu0 %v6420
    %v6422 = vpop.f32.mrf.mxu0
    %v6423 = vadd.f32 %v6289, %v6422
    %v6424 = vand.u32 %v6206, 4294901760
    %6425 = vmatmul.f32.gmra.mxu0 %v6424
    %v6426 = vpop.f32.mrf.mxu0
    %v6427 = vadd.f32 %v6297, %v6426
    %v6428 = vand.u32 %v6209, 4294901760
    %6429 = vmatmul.f32.gmra.mxu0 %v6428
    %v6430 = vpop.f32.mrf.mxu0
    %v6431 = vadd.f32 %v6305, %v6430
    %v6432 = vand.u32 %v6212, 4294901760
    %6433 = vmatmul.f32.gmra.mxu0 %v6432
    %v6434 = vpop.f32.mrf.mxu0
    %v6435 = vadd.f32 %v6313, %v6434
    %v6436 = vand.u32 %v6215, 4294901760
    %6437 = vmatmul.f32.gmra.mxu0 %v6436
    %v6438 = vpop.f32.mrf.mxu0
    %v6439 = vadd.f32 %v6321, %v6438
    %v6440 = vand.u32 %v6218, 4294901760
    %6441 = vmatmul.f32.gmra.mxu0 %v6440
    %v6442 = vpop.f32.mrf.mxu0
    %v6443 = vadd.f32 %v6329, %v6442
    %v6444 = vand.u32 %v6221, 4294901760
    %6445 = vmatmul.f32.gmra.mxu0 %v6444
    %v6446 = vpop.f32.mrf.mxu0
    %v6447 = vadd.f32 %v6337, %v6446
    %v6448 = vand.u32 %v6224, 4294901760
    %6449 = vmatmul.f32.gmra.mxu0 %v6448
    %v6450 = vpop.f32.mrf.mxu0
    %v6451 = vadd.f32 %v6345, %v6450
    %v6452 = vand.u32 %v6227, 4294901760
    %6453 = vmatmul.f32.gmra.mxu0 %v6452
    %v6454 = vpop.f32.mrf.mxu0
    %v6455 = vadd.f32 %v6353, %v6454
    %v6456 = vand.u32 %v6230, 4294901760
    %6457 = vmatmul.f32.gmra.mxu0 %v6456
    %v6458 = vpop.f32.mrf.mxu0
    %v6459 = vadd.f32 %v6361, %v6458
    %v6460 = vand.u32 %v6233, 4294901760
    %6461 = vmatmul.f32.gmra.mxu0 %v6460
    %v6462 = vpop.f32.mrf.mxu0
    %v6463 = vadd.f32 %v6369, %v6462
    %v6464 = vand.u32 %v6236, 4294901760
    %6465 = vmatmul.f32.gmra.mxu0 %v6464
    %v6466 = vpop.f32.mrf.mxu0
    %v6467 = vadd.f32 %v6377, %v6466
    %v6468 = vand.u32 %v6239, 4294901760
    %6469 = vmatmul.f32.gmra.mxu0 %v6468
    %v6470 = vpop.f32.mrf.mxu0
    %v6471 = vadd.f32 %v6385, %v6470
    %6472 = vdwg.mxu0
    %6473 = vmatpush.msra.mxu0 0.0
    %6474 = vmatpush.msra.mxu0 0.0
    %6475 = vmatpush.msra.mxu0 0.0
    %6476 = vmatpush.msra.mxu0 0.0
    %6477 = vmatpush.msra.mxu0 0.0
    %6478 = vmatpush.msra.mxu0 0.0
    %6479 = vmatpush.msra.mxu0 0.0
    %6480 = vmatpush.msra.mxu0 0.0
    %6481 = vmatpush.msra.mxu0 0.0
    %6482 = vmatpush.msra.mxu0 0.0
    %6483 = vmatpush.msra.mxu0 0.0
    %6484 = vmatpush.msra.mxu0 0.0
    %6485 = vmatpush.msra.mxu0 0.0
    %6486 = vmatpush.msra.mxu0 0.0
    %6487 = vmatpush.msra.mxu0 0.0
    %v6488 = vand.u32 %v5564, 4294901760
    %v6489 = vsub.f32 %v5564, %v6488
    %6490 = vmatpush.msra.mxu0 %v6489
    %v6491 = vand.u32 %v6194, 4294901760
    %v6492 = vsub.f32 %v6194, %v6491
    %6493 = vmatmul.f32.gmra.mxu0 %v6492
    %v6494 = vpop.f32.mrf.mxu0
    %v6495 = vadd.f32 %v6411, %v6494
    %v6496 = vand.u32 %v6197, 4294901760
    %v6497 = vsub.f32 %v6197, %v6496
    %6498 = vmatmul.f32.gmra.mxu0 %v6497
    %v6499 = vpop.f32.mrf.mxu0
    %v6500 = vadd.f32 %v6415, %v6499
    %v6501 = vand.u32 %v6200, 4294901760
    %v6502 = vsub.f32 %v6200, %v6501
    %6503 = vmatmul.f32.gmra.mxu0 %v6502
    %v6504 = vpop.f32.mrf.mxu0
    %v6505 = vadd.f32 %v6419, %v6504
    %v6506 = vand.u32 %v6203, 4294901760
    %v6507 = vsub.f32 %v6203, %v6506
    %6508 = vmatmul.f32.gmra.mxu0 %v6507
    %v6509 = vpop.f32.mrf.mxu0
    %v6510 = vadd.f32 %v6423, %v6509
    %v6511 = vand.u32 %v6206, 4294901760
    %v6512 = vsub.f32 %v6206, %v6511
    %6513 = vmatmul.f32.gmra.mxu0 %v6512
    %v6514 = vpop.f32.mrf.mxu0
    %v6515 = vadd.f32 %v6427, %v6514
    %v6516 = vand.u32 %v6209, 4294901760
    %v6517 = vsub.f32 %v6209, %v6516
    %6518 = vmatmul.f32.gmra.mxu0 %v6517
    %v6519 = vpop.f32.mrf.mxu0
    %v6520 = vadd.f32 %v6431, %v6519
    %v6521 = vand.u32 %v6212, 4294901760
    %v6522 = vsub.f32 %v6212, %v6521
    %6523 = vmatmul.f32.gmra.mxu0 %v6522
    %v6524 = vpop.f32.mrf.mxu0
    %v6525 = vadd.f32 %v6435, %v6524
    %v6526 = vand.u32 %v6215, 4294901760
    %v6527 = vsub.f32 %v6215, %v6526
    %6528 = vmatmul.f32.gmra.mxu0 %v6527
    %v6529 = vpop.f32.mrf.mxu0
    %v6530 = vadd.f32 %v6439, %v6529
    %v6531 = vand.u32 %v6218, 4294901760
    %v6532 = vsub.f32 %v6218, %v6531
    %6533 = vmatmul.f32.gmra.mxu0 %v6532
    %v6534 = vpop.f32.mrf.mxu0
    %v6535 = vadd.f32 %v6443, %v6534
    %v6536 = vand.u32 %v6221, 4294901760
    %v6537 = vsub.f32 %v6221, %v6536
    %6538 = vmatmul.f32.gmra.mxu0 %v6537
    %v6539 = vpop.f32.mrf.mxu0
    %v6540 = vadd.f32 %v6447, %v6539
    %v6541 = vand.u32 %v6224, 4294901760
    %v6542 = vsub.f32 %v6224, %v6541
    %6543 = vmatmul.f32.gmra.mxu0 %v6542
    %v6544 = vpop.f32.mrf.mxu0
    %v6545 = vadd.f32 %v6451, %v6544
    %v6546 = vand.u32 %v6227, 4294901760
    %v6547 = vsub.f32 %v6227, %v6546
    %6548 = vmatmul.f32.gmra.mxu0 %v6547
    %v6549 = vpop.f32.mrf.mxu0
    %v6550 = vadd.f32 %v6455, %v6549
    %v6551 = vand.u32 %v6230, 4294901760
    %v6552 = vsub.f32 %v6230, %v6551
    %6553 = vmatmul.f32.gmra.mxu0 %v6552
    %v6554 = vpop.f32.mrf.mxu0
    %v6555 = vadd.f32 %v6459, %v6554
    %v6556 = vand.u32 %v6233, 4294901760
    %v6557 = vsub.f32 %v6233, %v6556
    %6558 = vmatmul.f32.gmra.mxu0 %v6557
    %v6559 = vpop.f32.mrf.mxu0
    %v6560 = vadd.f32 %v6463, %v6559
    %v6561 = vand.u32 %v6236, 4294901760
    %v6562 = vsub.f32 %v6236, %v6561
    %6563 = vmatmul.f32.gmra.mxu0 %v6562
    %v6564 = vpop.f32.mrf.mxu0
    %v6565 = vadd.f32 %v6467, %v6564
    %v6566 = vand.u32 %v6239, 4294901760
    %v6567 = vsub.f32 %v6239, %v6566
    %6568 = vmatmul.f32.gmra.mxu0 %v6567
    %v6569 = vpop.f32.mrf.mxu0
    %v6570 = vadd.f32 %v6471, %v6569
    %6571 = vdwg.mxu0
    %6572 = vmatpush.msra.mxu0 0.0
    %6573 = vmatpush.msra.mxu0 0.0
    %6574 = vmatpush.msra.mxu0 0.0
    %6575 = vmatpush.msra.mxu0 0.0
    %6576 = vmatpush.msra.mxu0 0.0
    %6577 = vmatpush.msra.mxu0 0.0
    %6578 = vmatpush.msra.mxu0 0.0
    %6579 = vmatpush.msra.mxu0 0.0
    %6580 = vmatpush.msra.mxu0 0.0
    %6581 = vmatpush.msra.mxu0 0.0
    %6582 = vmatpush.msra.mxu0 0.0
    %6583 = vmatpush.msra.mxu0 0.0
    %6584 = vmatpush.msra.mxu0 0.0
    %6585 = vmatpush.msra.mxu0 0.0
    %6586 = vmatpush.msra.mxu0 0.0
    %v6587 = vand.u32 %v5564, 4294901760
    %6588 = vmatpush.msra.mxu0 %v6587
    %v6589 = vand.u32 %v6194, 4294901760
    %v6590 = vsub.f32 %v6194, %v6589
    %v6591 = vand.u32 %v6590, 4294901760
    %6592 = vmatmul.f32.gmra.mxu0 %v6591
    %v6593 = vpop.f32.mrf.mxu0
    %v6594 = vadd.f32 %v6495, %v6593
    %v6595 = vand.u32 %v6197, 4294901760
    %v6596 = vsub.f32 %v6197, %v6595
    %v6597 = vand.u32 %v6596, 4294901760
    %6598 = vmatmul.f32.gmra.mxu0 %v6597
    %v6599 = vpop.f32.mrf.mxu0
    %v6600 = vadd.f32 %v6500, %v6599
    %v6601 = vand.u32 %v6200, 4294901760
    %v6602 = vsub.f32 %v6200, %v6601
    %v6603 = vand.u32 %v6602, 4294901760
    %6604 = vmatmul.f32.gmra.mxu0 %v6603
    %v6605 = vpop.f32.mrf.mxu0
    %v6606 = vadd.f32 %v6505, %v6605
    %v6607 = vand.u32 %v6203, 4294901760
    %v6608 = vsub.f32 %v6203, %v6607
    %v6609 = vand.u32 %v6608, 4294901760
    %6610 = vmatmul.f32.gmra.mxu0 %v6609
    %v6611 = vpop.f32.mrf.mxu0
    %v6612 = vadd.f32 %v6510, %v6611
    %v6613 = vand.u32 %v6206, 4294901760
    %v6614 = vsub.f32 %v6206, %v6613
    %v6615 = vand.u32 %v6614, 4294901760
    %6616 = vmatmul.f32.gmra.mxu0 %v6615
    %v6617 = vpop.f32.mrf.mxu0
    %v6618 = vadd.f32 %v6515, %v6617
    %v6619 = vand.u32 %v6209, 4294901760
    %v6620 = vsub.f32 %v6209, %v6619
    %v6621 = vand.u32 %v6620, 4294901760
    %6622 = vmatmul.f32.gmra.mxu0 %v6621
    %v6623 = vpop.f32.mrf.mxu0
    %v6624 = vadd.f32 %v6520, %v6623
    %v6625 = vand.u32 %v6212, 4294901760
    %v6626 = vsub.f32 %v6212, %v6625
    %v6627 = vand.u32 %v6626, 4294901760
    %6628 = vmatmul.f32.gmra.mxu0 %v6627
    %v6629 = vpop.f32.mrf.mxu0
    %v6630 = vadd.f32 %v6525, %v6629
    %v6631 = vand.u32 %v6215, 4294901760
    %v6632 = vsub.f32 %v6215, %v6631
    %v6633 = vand.u32 %v6632, 4294901760
    %6634 = vmatmul.f32.gmra.mxu0 %v6633
    %v6635 = vpop.f32.mrf.mxu0
    %v6636 = vadd.f32 %v6530, %v6635
    %v6637 = vand.u32 %v6218, 4294901760
    %v6638 = vsub.f32 %v6218, %v6637
    %v6639 = vand.u32 %v6638, 4294901760
    %6640 = vmatmul.f32.gmra.mxu0 %v6639
    %v6641 = vpop.f32.mrf.mxu0
    %v6642 = vadd.f32 %v6535, %v6641
    %v6643 = vand.u32 %v6221, 4294901760
    %v6644 = vsub.f32 %v6221, %v6643
    %v6645 = vand.u32 %v6644, 4294901760
    %6646 = vmatmul.f32.gmra.mxu0 %v6645
    %v6647 = vpop.f32.mrf.mxu0
    %v6648 = vadd.f32 %v6540, %v6647
    %v6649 = vand.u32 %v6224, 4294901760
    %v6650 = vsub.f32 %v6224, %v6649
    %v6651 = vand.u32 %v6650, 4294901760
    %6652 = vmatmul.f32.gmra.mxu0 %v6651
    %v6653 = vpop.f32.mrf.mxu0
    %v6654 = vadd.f32 %v6545, %v6653
    %v6655 = vand.u32 %v6227, 4294901760
    %v6656 = vsub.f32 %v6227, %v6655
    %v6657 = vand.u32 %v6656, 4294901760
    %6658 = vmatmul.f32.gmra.mxu0 %v6657
    %v6659 = vpop.f32.mrf.mxu0
    %v6660 = vadd.f32 %v6550, %v6659
    %v6661 = vand.u32 %v6230, 4294901760
    %v6662 = vsub.f32 %v6230, %v6661
    %v6663 = vand.u32 %v6662, 4294901760
    %6664 = vmatmul.f32.gmra.mxu0 %v6663
    %v6665 = vpop.f32.mrf.mxu0
    %v6666 = vadd.f32 %v6555, %v6665
    %v6667 = vand.u32 %v6233, 4294901760
    %v6668 = vsub.f32 %v6233, %v6667
    %v6669 = vand.u32 %v6668, 4294901760
    %6670 = vmatmul.f32.gmra.mxu0 %v6669
    %v6671 = vpop.f32.mrf.mxu0
    %v6672 = vadd.f32 %v6560, %v6671
    %v6673 = vand.u32 %v6236, 4294901760
    %v6674 = vsub.f32 %v6236, %v6673
    %v6675 = vand.u32 %v6674, 4294901760
    %6676 = vmatmul.f32.gmra.mxu0 %v6675
    %v6677 = vpop.f32.mrf.mxu0
    %v6678 = vadd.f32 %v6565, %v6677
    %v6679 = vand.u32 %v6239, 4294901760
    %v6680 = vsub.f32 %v6239, %v6679
    %v6681 = vand.u32 %v6680, 4294901760
    %6682 = vmatmul.f32.gmra.mxu0 %v6681
    %v6683 = vpop.f32.mrf.mxu0
    %v6684 = vadd.f32 %v6570, %v6683
    %6685 = vdwg.mxu0
    %6686 = vmatpush.msra.mxu0 0.0
    %6687 = vmatpush.msra.mxu0 0.0
    %6688 = vmatpush.msra.mxu0 0.0
    %6689 = vmatpush.msra.mxu0 0.0
    %6690 = vmatpush.msra.mxu0 0.0
    %6691 = vmatpush.msra.mxu0 0.0
    %6692 = vmatpush.msra.mxu0 0.0
    %6693 = vmatpush.msra.mxu0 0.0
    %6694 = vmatpush.msra.mxu0 0.0
    %6695 = vmatpush.msra.mxu0 0.0
    %6696 = vmatpush.msra.mxu0 0.0
    %6697 = vmatpush.msra.mxu0 0.0
    %6698 = vmatpush.msra.mxu0 0.0
    %6699 = vmatpush.msra.mxu0 0.0
    %6700 = vmatpush.msra.mxu0 0.0
    %v6701 = vand.u32 %v5564, 4294901760
    %v6702 = vsub.f32 %v5564, %v6701
    %v6703 = vand.u32 %v6702, 4294901760
    %6704 = vmatpush.msra.mxu0 %v6703
    %v6705 = vand.u32 %v6194, 4294901760
    %6706 = vmatmul.f32.gmra.mxu0 %v6705
    %v6707 = vpop.f32.mrf.mxu0
    %v6708 = vadd.f32 %v6594, %v6707
    %v6709 = vand.u32 %v6197, 4294901760
    %6710 = vmatmul.f32.gmra.mxu0 %v6709
    %v6711 = vpop.f32.mrf.mxu0
    %v6712 = vadd.f32 %v6600, %v6711
    %v6713 = vand.u32 %v6200, 4294901760
    %6714 = vmatmul.f32.gmra.mxu0 %v6713
    %v6715 = vpop.f32.mrf.mxu0
    %v6716 = vadd.f32 %v6606, %v6715
    %v6717 = vand.u32 %v6203, 4294901760
    %6718 = vmatmul.f32.gmra.mxu0 %v6717
    %v6719 = vpop.f32.mrf.mxu0
    %v6720 = vadd.f32 %v6612, %v6719
    %v6721 = vand.u32 %v6206, 4294901760
    %6722 = vmatmul.f32.gmra.mxu0 %v6721
    %v6723 = vpop.f32.mrf.mxu0
    %v6724 = vadd.f32 %v6618, %v6723
    %v6725 = vand.u32 %v6209, 4294901760
    %6726 = vmatmul.f32.gmra.mxu0 %v6725
    %v6727 = vpop.f32.mrf.mxu0
    %v6728 = vadd.f32 %v6624, %v6727
    %v6729 = vand.u32 %v6212, 4294901760
    %6730 = vmatmul.f32.gmra.mxu0 %v6729
    %v6731 = vpop.f32.mrf.mxu0
    %v6732 = vadd.f32 %v6630, %v6731
    %v6733 = vand.u32 %v6215, 4294901760
    %6734 = vmatmul.f32.gmra.mxu0 %v6733
    %v6735 = vpop.f32.mrf.mxu0
    %v6736 = vadd.f32 %v6636, %v6735
    %v6737 = vand.u32 %v6218, 4294901760
    %6738 = vmatmul.f32.gmra.mxu0 %v6737
    %v6739 = vpop.f32.mrf.mxu0
    %v6740 = vadd.f32 %v6642, %v6739
    %v6741 = vand.u32 %v6221, 4294901760
    %6742 = vmatmul.f32.gmra.mxu0 %v6741
    %v6743 = vpop.f32.mrf.mxu0
    %v6744 = vadd.f32 %v6648, %v6743
    %v6745 = vand.u32 %v6224, 4294901760
    %6746 = vmatmul.f32.gmra.mxu0 %v6745
    %v6747 = vpop.f32.mrf.mxu0
    %v6748 = vadd.f32 %v6654, %v6747
    %v6749 = vand.u32 %v6227, 4294901760
    %6750 = vmatmul.f32.gmra.mxu0 %v6749
    %v6751 = vpop.f32.mrf.mxu0
    %v6752 = vadd.f32 %v6660, %v6751
    %v6753 = vand.u32 %v6230, 4294901760
    %6754 = vmatmul.f32.gmra.mxu0 %v6753
    %v6755 = vpop.f32.mrf.mxu0
    %v6756 = vadd.f32 %v6666, %v6755
    %v6757 = vand.u32 %v6233, 4294901760
    %6758 = vmatmul.f32.gmra.mxu0 %v6757
    %v6759 = vpop.f32.mrf.mxu0
    %v6760 = vadd.f32 %v6672, %v6759
    %v6761 = vand.u32 %v6236, 4294901760
    %6762 = vmatmul.f32.gmra.mxu0 %v6761
    %v6763 = vpop.f32.mrf.mxu0
    %v6764 = vadd.f32 %v6678, %v6763
    %v6765 = vand.u32 %v6239, 4294901760
    %6766 = vmatmul.f32.gmra.mxu0 %v6765
    %v6767 = vpop.f32.mrf.mxu0
    %v6768 = vadd.f32 %v6684, %v6767
    %6769 = vdwg.mxu0
    %6770 = vmatpush.msra.mxu0 0.0
    %6771 = vmatpush.msra.mxu0 0.0
    %6772 = vmatpush.msra.mxu0 0.0
    %6773 = vmatpush.msra.mxu0 0.0
    %6774 = vmatpush.msra.mxu0 0.0
    %6775 = vmatpush.msra.mxu0 0.0
    %6776 = vmatpush.msra.mxu0 0.0
    %6777 = vmatpush.msra.mxu0 0.0
    %6778 = vmatpush.msra.mxu0 0.0
    %6779 = vmatpush.msra.mxu0 0.0
    %6780 = vmatpush.msra.mxu0 0.0
    %6781 = vmatpush.msra.mxu0 0.0
    %6782 = vmatpush.msra.mxu0 0.0
    %6783 = vmatpush.msra.mxu0 0.0
    %6784 = vmatpush.msra.mxu0 0.0
    %v6785 = vand.u32 %v5564, 4294901760
    %6786 = vmatpush.msra.mxu0 %v6785
    %v6787 = vand.u32 %v6194, 4294901760
    %6788 = vmatmul.f32.gmra.mxu0 %v6787
    %v6789 = vpop.f32.mrf.mxu0
    %v6790 = vadd.f32 %v6708, %v6789
    %v6791 = vand.u32 %v6197, 4294901760
    %6792 = vmatmul.f32.gmra.mxu0 %v6791
    %v6793 = vpop.f32.mrf.mxu0
    %v6794 = vadd.f32 %v6712, %v6793
    %v6795 = vand.u32 %v6200, 4294901760
    %6796 = vmatmul.f32.gmra.mxu0 %v6795
    %v6797 = vpop.f32.mrf.mxu0
    %v6798 = vadd.f32 %v6716, %v6797
    %v6799 = vand.u32 %v6203, 4294901760
    %6800 = vmatmul.f32.gmra.mxu0 %v6799
    %v6801 = vpop.f32.mrf.mxu0
    %v6802 = vadd.f32 %v6720, %v6801
    %v6803 = vand.u32 %v6206, 4294901760
    %6804 = vmatmul.f32.gmra.mxu0 %v6803
    %v6805 = vpop.f32.mrf.mxu0
    %v6806 = vadd.f32 %v6724, %v6805
    %v6807 = vand.u32 %v6209, 4294901760
    %6808 = vmatmul.f32.gmra.mxu0 %v6807
    %v6809 = vpop.f32.mrf.mxu0
    %v6810 = vadd.f32 %v6728, %v6809
    %v6811 = vand.u32 %v6212, 4294901760
    %6812 = vmatmul.f32.gmra.mxu0 %v6811
    %v6813 = vpop.f32.mrf.mxu0
    %v6814 = vadd.f32 %v6732, %v6813
    %v6815 = vand.u32 %v6215, 4294901760
    %6816 = vmatmul.f32.gmra.mxu0 %v6815
    %v6817 = vpop.f32.mrf.mxu0
    %v6818 = vadd.f32 %v6736, %v6817
    %v6819 = vand.u32 %v6218, 4294901760
    %6820 = vmatmul.f32.gmra.mxu0 %v6819
    %v6821 = vpop.f32.mrf.mxu0
    %v6822 = vadd.f32 %v6740, %v6821
    %v6823 = vand.u32 %v6221, 4294901760
    %6824 = vmatmul.f32.gmra.mxu0 %v6823
    %v6825 = vpop.f32.mrf.mxu0
    %v6826 = vadd.f32 %v6744, %v6825
    %v6827 = vand.u32 %v6224, 4294901760
    %6828 = vmatmul.f32.gmra.mxu0 %v6827
    %v6829 = vpop.f32.mrf.mxu0
    %v6830 = vadd.f32 %v6748, %v6829
    %v6831 = vand.u32 %v6227, 4294901760
    %6832 = vmatmul.f32.gmra.mxu0 %v6831
    %v6833 = vpop.f32.mrf.mxu0
    %v6834 = vadd.f32 %v6752, %v6833
    %v6835 = vand.u32 %v6230, 4294901760
    %6836 = vmatmul.f32.gmra.mxu0 %v6835
    %v6837 = vpop.f32.mrf.mxu0
    %v6838 = vadd.f32 %v6756, %v6837
    %v6839 = vand.u32 %v6233, 4294901760
    %6840 = vmatmul.f32.gmra.mxu0 %v6839
    %v6841 = vpop.f32.mrf.mxu0
    %v6842 = vadd.f32 %v6760, %v6841
    %v6843 = vand.u32 %v6236, 4294901760
    %6844 = vmatmul.f32.gmra.mxu0 %v6843
    %v6845 = vpop.f32.mrf.mxu0
    %v6846 = vadd.f32 %v6764, %v6845
    %v6847 = vand.u32 %v6239, 4294901760
    %6848 = vmatmul.f32.gmra.mxu0 %v6847
    %v6849 = vpop.f32.mrf.mxu0
    %v6850 = vadd.f32 %v6768, %v6849
    %6851 = vdwg.mxu0
    %v6852 = vmul.f32 %v2819, %v5437
    %v6853 = vmul.f32 %v2823, %v5441
    %v6854 = vmul.f32 %v2827, %v5445
    %v6855 = vmul.f32 %v2831, %v5449
    %v6856 = vmul.f32 %v2835, %v5453
    %v6857 = vmul.f32 %v2839, %v5457
    %v6858 = vmul.f32 %v2843, %v5461
    %v6859 = vmul.f32 %v2847, %v5465
    %v6860 = vmul.f32 %v2851, %v5469
    %v6861 = vmul.f32 %v2855, %v5473
    %v6862 = vmul.f32 %v2859, %v5477
    %v6863 = vmul.f32 %v2863, %v5481
    %v6864 = vmul.f32 %v2867, %v5485
    %v6865 = vmul.f32 %v2871, %v5489
    %v6866 = vmul.f32 %v2875, %v5493
    %v6867 = vmul.f32 %v2879, %v5497
    %v6868 = vmul.f32 %v6852, 1.442695
    %v6869 = vpow.pop %v6868
    %v6870 = vmul.f32 %v6853, 1.442695
    %v6871 = vpow.pop %v6870
    %v6872 = vmul.f32 %v6854, 1.442695
    %v6873 = vpow.pop %v6872
    %v6874 = vmul.f32 %v6855, 1.442695
    %v6875 = vpow.pop %v6874
    %v6876 = vmul.f32 %v6856, 1.442695
    %v6877 = vpow.pop %v6876
    %v6878 = vmul.f32 %v6857, 1.442695
    %v6879 = vpow.pop %v6878
    %v6880 = vmul.f32 %v6858, 1.442695
    %v6881 = vpow.pop %v6880
    %v6882 = vmul.f32 %v6859, 1.442695
    %v6883 = vpow.pop %v6882
    %v6884 = vmul.f32 %v6860, 1.442695
    %v6885 = vpow.pop %v6884
    %v6886 = vmul.f32 %v6861, 1.442695
    %v6887 = vpow.pop %v6886
    %v6888 = vmul.f32 %v6862, 1.442695
    %v6889 = vpow.pop %v6888
    %v6890 = vmul.f32 %v6863, 1.442695
    %v6891 = vpow.pop %v6890
    %v6892 = vmul.f32 %v6864, 1.442695
    %v6893 = vpow.pop %v6892
    %v6894 = vmul.f32 %v6865, 1.442695
    %v6895 = vpow.pop %v6894
    %v6896 = vmul.f32 %v6866, 1.442695
    %v6897 = vpow.pop %v6896
    %v6898 = vmul.f32 %v6867, 1.442695
    %v6899 = vpow.pop %v6898
    %v6900 = vmul.f32 %v6115, %v3473
    %v6901 = vmul.f32 %v6119, %v3477
    %v6902 = vmul.f32 %v6123, %v3481
    %v6903 = vmul.f32 %v6127, %v3485
    %v6904 = vmul.f32 %v6131, %v3489
    %v6905 = vmul.f32 %v6135, %v3493
    %v6906 = vmul.f32 %v6139, %v3497
    %v6907 = vmul.f32 %v6143, %v3501
    %v6908 = vmul.f32 %v6147, %v3505
    %v6909 = vmul.f32 %v6151, %v3509
    %v6910 = vmul.f32 %v6155, %v3513
    %v6911 = vmul.f32 %v6159, %v3517
    %v6912 = vmul.f32 %v6163, %v3521
    %v6913 = vmul.f32 %v6167, %v3525
    %v6914 = vmul.f32 %v6171, %v3529
    %v6915 = vmul.f32 %v6175, %v3533
    %v6916 = vmul.f32 %v6869, 0.0
    %v6917 = vmul.f32 %v6871, 0.0
    %v6918 = vadd.f32 %v6916, %v6900
    %v6919 = vadd.f32 %v6917, %v6901
    %v6920 = vmul.f32 %v6873, %v6918
    %v6921 = vmul.f32 %v6875, %v6919
    %v6922 = vadd.f32 %v6920, %v6902
    %v6923 = vadd.f32 %v6921, %v6903
    %v6924 = vmul.f32 %v6877, %v6922
    %v6925 = vmul.f32 %v6879, %v6923
    %v6926 = vadd.f32 %v6924, %v6904
    %v6927 = vadd.f32 %v6925, %v6905
    %v6928 = vmul.f32 %v6881, %v6926
    %v6929 = vmul.f32 %v6883, %v6927
    %v6930 = vadd.f32 %v6928, %v6906
    %v6931 = vadd.f32 %v6929, %v6907
    %v6932 = vmul.f32 %v6885, %v6930
    %v6933 = vmul.f32 %v6887, %v6931
    %v6934 = vadd.f32 %v6932, %v6908
    %v6935 = vadd.f32 %v6933, %v6909
    %v6936 = vmul.f32 %v6889, %v6934
    %v6937 = vmul.f32 %v6891, %v6935
    %v6938 = vadd.f32 %v6936, %v6910
    %v6939 = vadd.f32 %v6937, %v6911
    %v6940 = vmul.f32 %v6893, %v6938
    %v6941 = vmul.f32 %v6895, %v6939
    %v6942 = vadd.f32 %v6940, %v6912
    %v6943 = vadd.f32 %v6941, %v6913
    %v6944 = vmul.f32 %v6897, %v6942
    %v6945 = vmul.f32 %v6899, %v6943
    %v6946 = vadd.f32 %v6944, %v6914
    %v6947 = vadd.f32 %v6945, %v6915
    %v6948 = vmul.f32 %v6790, %v6918
    %v6949 = vmul.f32 %v6794, %v6919
    %v6950 = vmul.f32 %v6798, %v6922
    %v6951 = vmul.f32 %v6802, %v6923
    %v6952 = vmul.f32 %v6806, %v6926
    %v6953 = vmul.f32 %v6810, %v6927
    %v6954 = vmul.f32 %v6814, %v6930
    %v6955 = vmul.f32 %v6818, %v6931
    %v6956 = vmul.f32 %v6822, %v6934
    %v6957 = vmul.f32 %v6826, %v6935
    %v6958 = vmul.f32 %v6830, %v6938
    %v6959 = vmul.f32 %v6834, %v6939
    %v6960 = vmul.f32 %v6838, %v6942
    %v6961 = vmul.f32 %v6842, %v6943
    %v6962 = vmul.f32 %v6846, %v6946
    %v6963 = vmul.f32 %v6850, %v6947
    %v6964 = vperm.slane %v20, 0
    %v6965 = vmul.f32 %v6964, %v1080
    %v6966 = vmul.f32 %v6964, %v1081
    %v6967 = vmul.f32 %v6964, %v1082
    %v6968 = vmul.f32 %v6964, %v1083
    %v6969 = vand.u32 %v6963, 4294901760
    %6970 = vmatpush.msra.mxu0 %v6969
    %v6971 = vand.u32 %v6962, 4294901760
    %6972 = vmatpush.msra.mxu0 %v6971
    %v6973 = vand.u32 %v6961, 4294901760
    %6974 = vmatpush.msra.mxu0 %v6973
    %v6975 = vand.u32 %v6960, 4294901760
    %6976 = vmatpush.msra.mxu0 %v6975
    %v6977 = vand.u32 %v6959, 4294901760
    %6978 = vmatpush.msra.mxu0 %v6977
    %v6979 = vand.u32 %v6958, 4294901760
    %6980 = vmatpush.msra.mxu0 %v6979
    %v6981 = vand.u32 %v6957, 4294901760
    %6982 = vmatpush.msra.mxu0 %v6981
    %v6983 = vand.u32 %v6956, 4294901760
    %6984 = vmatpush.msra.mxu0 %v6983
    %v6985 = vand.u32 %v6955, 4294901760
    %6986 = vmatpush.msra.mxu0 %v6985
    %v6987 = vand.u32 %v6954, 4294901760
    %6988 = vmatpush.msra.mxu0 %v6987
    %v6989 = vand.u32 %v6953, 4294901760
    %6990 = vmatpush.msra.mxu0 %v6989
    %v6991 = vand.u32 %v6952, 4294901760
    %6992 = vmatpush.msra.mxu0 %v6991
    %v6993 = vand.u32 %v6951, 4294901760
    %6994 = vmatpush.msra.mxu0 %v6993
    %v6995 = vand.u32 %v6950, 4294901760
    %6996 = vmatpush.msra.mxu0 %v6995
    %v6997 = vand.u32 %v6949, 4294901760
    %6998 = vmatpush.msra.mxu0 %v6997
    %v6999 = vand.u32 %v6948, 4294901760
    %7000 = vmatpush.msra.mxu0 %v6999
    %v7001 = vsub.f32 %v2131, %v2131
    %v7002 = vand.u32 %v7001, 4294901760
    %v7003 = vsub.f32 %v7001, %v7002
    %v7004 = vand.u32 %v7003, 4294901760
    %7005 = vmatmul.f32.gmra.mxu0 %v7004
    %v7006 = vpop.f32.mrf.mxu0
    %v7007 = vadd.f32 %v6965, %v7006
    %v7008 = vsub.f32 %v2132, %v2132
    %v7009 = vand.u32 %v7008, 4294901760
    %v7010 = vsub.f32 %v7008, %v7009
    %v7011 = vand.u32 %v7010, 4294901760
    %7012 = vmatmul.f32.gmra.mxu0 %v7011
    %v7013 = vpop.f32.mrf.mxu0
    %v7014 = vadd.f32 %v6966, %v7013
    %v7015 = vsub.f32 %v2133, %v2133
    %v7016 = vand.u32 %v7015, 4294901760
    %v7017 = vsub.f32 %v7015, %v7016
    %v7018 = vand.u32 %v7017, 4294901760
    %7019 = vmatmul.f32.gmra.mxu0 %v7018
    %v7020 = vpop.f32.mrf.mxu0
    %v7021 = vadd.f32 %v6967, %v7020
    %v7022 = vsub.f32 %v2134, %v2134
    %v7023 = vand.u32 %v7022, 4294901760
    %v7024 = vsub.f32 %v7022, %v7023
    %v7025 = vand.u32 %v7024, 4294901760
    %7026 = vmatmul.f32.gmra.mxu0 %v7025
    %v7027 = vpop.f32.mrf.mxu0
    %v7028 = vadd.f32 %v6968, %v7027
    %7029 = vdwg.mxu0
    %v7030 = vand.u32 %v6963, 4294901760
    %v7031 = vsub.f32 %v6963, %v7030
    %v7032 = vand.u32 %v7031, 4294901760
    %v7033 = vsub.f32 %v7031, %v7032
    %v7034 = vand.u32 %v7033, 4294901760
    %7035 = vmatpush.msra.mxu0 %v7034
    %v7036 = vand.u32 %v6962, 4294901760
    %v7037 = vsub.f32 %v6962, %v7036
    %v7038 = vand.u32 %v7037, 4294901760
    %v7039 = vsub.f32 %v7037, %v7038
    %v7040 = vand.u32 %v7039, 4294901760
    %7041 = vmatpush.msra.mxu0 %v7040
    %v7042 = vand.u32 %v6961, 4294901760
    %v7043 = vsub.f32 %v6961, %v7042
    %v7044 = vand.u32 %v7043, 4294901760
    %v7045 = vsub.f32 %v7043, %v7044
    %v7046 = vand.u32 %v7045, 4294901760
    %7047 = vmatpush.msra.mxu0 %v7046
    %v7048 = vand.u32 %v6960, 4294901760
    %v7049 = vsub.f32 %v6960, %v7048
    %v7050 = vand.u32 %v7049, 4294901760
    %v7051 = vsub.f32 %v7049, %v7050
    %v7052 = vand.u32 %v7051, 4294901760
    %7053 = vmatpush.msra.mxu0 %v7052
    %v7054 = vand.u32 %v6959, 4294901760
    %v7055 = vsub.f32 %v6959, %v7054
    %v7056 = vand.u32 %v7055, 4294901760
    %v7057 = vsub.f32 %v7055, %v7056
    %v7058 = vand.u32 %v7057, 4294901760
    %7059 = vmatpush.msra.mxu0 %v7058
    %v7060 = vand.u32 %v6958, 4294901760
    %v7061 = vsub.f32 %v6958, %v7060
    %v7062 = vand.u32 %v7061, 4294901760
    %v7063 = vsub.f32 %v7061, %v7062
    %v7064 = vand.u32 %v7063, 4294901760
    %7065 = vmatpush.msra.mxu0 %v7064
    %v7066 = vand.u32 %v6957, 4294901760
    %v7067 = vsub.f32 %v6957, %v7066
    %v7068 = vand.u32 %v7067, 4294901760
    %v7069 = vsub.f32 %v7067, %v7068
    %v7070 = vand.u32 %v7069, 4294901760
    %7071 = vmatpush.msra.mxu0 %v7070
    %v7072 = vand.u32 %v6956, 4294901760
    %v7073 = vsub.f32 %v6956, %v7072
    %v7074 = vand.u32 %v7073, 4294901760
    %v7075 = vsub.f32 %v7073, %v7074
    %v7076 = vand.u32 %v7075, 4294901760
    %7077 = vmatpush.msra.mxu0 %v7076
    %v7078 = vand.u32 %v6955, 4294901760
    %v7079 = vsub.f32 %v6955, %v7078
    %v7080 = vand.u32 %v7079, 4294901760
    %v7081 = vsub.f32 %v7079, %v7080
    %v7082 = vand.u32 %v7081, 4294901760
    %7083 = vmatpush.msra.mxu0 %v7082
    %v7084 = vand.u32 %v6954, 4294901760
    %v7085 = vsub.f32 %v6954, %v7084
    %v7086 = vand.u32 %v7085, 4294901760
    %v7087 = vsub.f32 %v7085, %v7086
    %v7088 = vand.u32 %v7087, 4294901760
    %7089 = vmatpush.msra.mxu0 %v7088
    %v7090 = vand.u32 %v6953, 4294901760
    %v7091 = vsub.f32 %v6953, %v7090
    %v7092 = vand.u32 %v7091, 4294901760
    %v7093 = vsub.f32 %v7091, %v7092
    %v7094 = vand.u32 %v7093, 4294901760
    %7095 = vmatpush.msra.mxu0 %v7094
    %v7096 = vand.u32 %v6952, 4294901760
    %v7097 = vsub.f32 %v6952, %v7096
    %v7098 = vand.u32 %v7097, 4294901760
    %v7099 = vsub.f32 %v7097, %v7098
    %v7100 = vand.u32 %v7099, 4294901760
    %7101 = vmatpush.msra.mxu0 %v7100
    %v7102 = vand.u32 %v6951, 4294901760
    %v7103 = vsub.f32 %v6951, %v7102
    %v7104 = vand.u32 %v7103, 4294901760
    %v7105 = vsub.f32 %v7103, %v7104
    %v7106 = vand.u32 %v7105, 4294901760
    %7107 = vmatpush.msra.mxu0 %v7106
    %v7108 = vand.u32 %v6950, 4294901760
    %v7109 = vsub.f32 %v6950, %v7108
    %v7110 = vand.u32 %v7109, 4294901760
    %v7111 = vsub.f32 %v7109, %v7110
    %v7112 = vand.u32 %v7111, 4294901760
    %7113 = vmatpush.msra.mxu0 %v7112
    %v7114 = vand.u32 %v6949, 4294901760
    %v7115 = vsub.f32 %v6949, %v7114
    %v7116 = vand.u32 %v7115, 4294901760
    %v7117 = vsub.f32 %v7115, %v7116
    %v7118 = vand.u32 %v7117, 4294901760
    %7119 = vmatpush.msra.mxu0 %v7118
    %v7120 = vand.u32 %v6948, 4294901760
    %v7121 = vsub.f32 %v6948, %v7120
    %v7122 = vand.u32 %v7121, 4294901760
    %v7123 = vsub.f32 %v7121, %v7122
    %v7124 = vand.u32 %v7123, 4294901760
    %7125 = vmatpush.msra.mxu0 %v7124
    %7126 = vmatmul.f32.gmra.mxu0 %v2131
    %v7127 = vpop.f32.mrf.mxu0
    %v7128 = vadd.f32 %v7007, %v7127
    %7129 = vmatmul.f32.gmra.mxu0 %v2132
    %v7130 = vpop.f32.mrf.mxu0
    %v7131 = vadd.f32 %v7014, %v7130
    %7132 = vmatmul.f32.gmra.mxu0 %v2133
    %v7133 = vpop.f32.mrf.mxu0
    %v7134 = vadd.f32 %v7021, %v7133
    %7135 = vmatmul.f32.gmra.mxu0 %v2134
    %v7136 = vpop.f32.mrf.mxu0
    %v7137 = vadd.f32 %v7028, %v7136
    %7138 = vdwg.mxu0
    %v7139 = vand.u32 %v6963, 4294901760
    %v7140 = vsub.f32 %v6963, %v7139
    %7141 = vmatpush.msra.mxu0 %v7140
    %v7142 = vand.u32 %v6962, 4294901760
    %v7143 = vsub.f32 %v6962, %v7142
    %7144 = vmatpush.msra.mxu0 %v7143
    %v7145 = vand.u32 %v6961, 4294901760
    %v7146 = vsub.f32 %v6961, %v7145
    %7147 = vmatpush.msra.mxu0 %v7146
    %v7148 = vand.u32 %v6960, 4294901760
    %v7149 = vsub.f32 %v6960, %v7148
    %7150 = vmatpush.msra.mxu0 %v7149
    %v7151 = vand.u32 %v6959, 4294901760
    %v7152 = vsub.f32 %v6959, %v7151
    %7153 = vmatpush.msra.mxu0 %v7152
    %v7154 = vand.u32 %v6958, 4294901760
    %v7155 = vsub.f32 %v6958, %v7154
    %7156 = vmatpush.msra.mxu0 %v7155
    %v7157 = vand.u32 %v6957, 4294901760
    %v7158 = vsub.f32 %v6957, %v7157
    %7159 = vmatpush.msra.mxu0 %v7158
    %v7160 = vand.u32 %v6956, 4294901760
    %v7161 = vsub.f32 %v6956, %v7160
    %7162 = vmatpush.msra.mxu0 %v7161
    %v7163 = vand.u32 %v6955, 4294901760
    %v7164 = vsub.f32 %v6955, %v7163
    %7165 = vmatpush.msra.mxu0 %v7164
    %v7166 = vand.u32 %v6954, 4294901760
    %v7167 = vsub.f32 %v6954, %v7166
    %7168 = vmatpush.msra.mxu0 %v7167
    %v7169 = vand.u32 %v6953, 4294901760
    %v7170 = vsub.f32 %v6953, %v7169
    %7171 = vmatpush.msra.mxu0 %v7170
    %v7172 = vand.u32 %v6952, 4294901760
    %v7173 = vsub.f32 %v6952, %v7172
    %7174 = vmatpush.msra.mxu0 %v7173
    %v7175 = vand.u32 %v6951, 4294901760
    %v7176 = vsub.f32 %v6951, %v7175
    %7177 = vmatpush.msra.mxu0 %v7176
    %v7178 = vand.u32 %v6950, 4294901760
    %v7179 = vsub.f32 %v6950, %v7178
    %7180 = vmatpush.msra.mxu0 %v7179
    %v7181 = vand.u32 %v6949, 4294901760
    %v7182 = vsub.f32 %v6949, %v7181
    %7183 = vmatpush.msra.mxu0 %v7182
    %v7184 = vand.u32 %v6948, 4294901760
    %v7185 = vsub.f32 %v6948, %v7184
    %7186 = vmatpush.msra.mxu0 %v7185
    %v7187 = vsub.f32 %v2131, %v2131
    %7188 = vmatmul.f32.gmra.mxu0 %v7187
    %v7189 = vpop.f32.mrf.mxu0
    %v7190 = vadd.f32 %v7128, %v7189
    %v7191 = vsub.f32 %v2132, %v2132
    %7192 = vmatmul.f32.gmra.mxu0 %v7191
    %v7193 = vpop.f32.mrf.mxu0
    %v7194 = vadd.f32 %v7131, %v7193
    %v7195 = vsub.f32 %v2133, %v2133
    %7196 = vmatmul.f32.gmra.mxu0 %v7195
    %v7197 = vpop.f32.mrf.mxu0
    %v7198 = vadd.f32 %v7134, %v7197
    %v7199 = vsub.f32 %v2134, %v2134
    %7200 = vmatmul.f32.gmra.mxu0 %v7199
    %v7201 = vpop.f32.mrf.mxu0
    %v7202 = vadd.f32 %v7137, %v7201
    %7203 = vdwg.mxu0
    %v7204 = vand.u32 %v6963, 4294901760
    %7205 = vmatpush.msra.mxu0 %v7204
    %v7206 = vand.u32 %v6962, 4294901760
    %7207 = vmatpush.msra.mxu0 %v7206
    %v7208 = vand.u32 %v6961, 4294901760
    %7209 = vmatpush.msra.mxu0 %v7208
    %v7210 = vand.u32 %v6960, 4294901760
    %7211 = vmatpush.msra.mxu0 %v7210
    %v7212 = vand.u32 %v6959, 4294901760
    %7213 = vmatpush.msra.mxu0 %v7212
    %v7214 = vand.u32 %v6958, 4294901760
    %7215 = vmatpush.msra.mxu0 %v7214
    %v7216 = vand.u32 %v6957, 4294901760
    %7217 = vmatpush.msra.mxu0 %v7216
    %v7218 = vand.u32 %v6956, 4294901760
    %7219 = vmatpush.msra.mxu0 %v7218
    %v7220 = vand.u32 %v6955, 4294901760
    %7221 = vmatpush.msra.mxu0 %v7220
    %v7222 = vand.u32 %v6954, 4294901760
    %7223 = vmatpush.msra.mxu0 %v7222
    %v7224 = vand.u32 %v6953, 4294901760
    %7225 = vmatpush.msra.mxu0 %v7224
    %v7226 = vand.u32 %v6952, 4294901760
    %7227 = vmatpush.msra.mxu0 %v7226
    %v7228 = vand.u32 %v6951, 4294901760
    %7229 = vmatpush.msra.mxu0 %v7228
    %v7230 = vand.u32 %v6950, 4294901760
    %7231 = vmatpush.msra.mxu0 %v7230
    %v7232 = vand.u32 %v6949, 4294901760
    %7233 = vmatpush.msra.mxu0 %v7232
    %v7234 = vand.u32 %v6948, 4294901760
    %7235 = vmatpush.msra.mxu0 %v7234
    %v7236 = vsub.f32 %v2131, %v2131
    %v7237 = vand.u32 %v7236, 4294901760
    %7238 = vmatmul.f32.gmra.mxu0 %v7237
    %v7239 = vpop.f32.mrf.mxu0
    %v7240 = vadd.f32 %v7190, %v7239
    %v7241 = vsub.f32 %v2132, %v2132
    %v7242 = vand.u32 %v7241, 4294901760
    %7243 = vmatmul.f32.gmra.mxu0 %v7242
    %v7244 = vpop.f32.mrf.mxu0
    %v7245 = vadd.f32 %v7194, %v7244
    %v7246 = vsub.f32 %v2133, %v2133
    %v7247 = vand.u32 %v7246, 4294901760
    %7248 = vmatmul.f32.gmra.mxu0 %v7247
    %v7249 = vpop.f32.mrf.mxu0
    %v7250 = vadd.f32 %v7198, %v7249
    %v7251 = vsub.f32 %v2134, %v2134
    %v7252 = vand.u32 %v7251, 4294901760
    %7253 = vmatmul.f32.gmra.mxu0 %v7252
    %v7254 = vpop.f32.mrf.mxu0
    %v7255 = vadd.f32 %v7202, %v7254
    %7256 = vdwg.mxu0
    %v7257 = vand.u32 %v6963, 4294901760
    %v7258 = vsub.f32 %v6963, %v7257
    %v7259 = vand.u32 %v7258, 4294901760
    %7260 = vmatpush.msra.mxu0 %v7259
    %v7261 = vand.u32 %v6962, 4294901760
    %v7262 = vsub.f32 %v6962, %v7261
    %v7263 = vand.u32 %v7262, 4294901760
    %7264 = vmatpush.msra.mxu0 %v7263
    %v7265 = vand.u32 %v6961, 4294901760
    %v7266 = vsub.f32 %v6961, %v7265
    %v7267 = vand.u32 %v7266, 4294901760
    %7268 = vmatpush.msra.mxu0 %v7267
    %v7269 = vand.u32 %v6960, 4294901760
    %v7270 = vsub.f32 %v6960, %v7269
    %v7271 = vand.u32 %v7270, 4294901760
    %7272 = vmatpush.msra.mxu0 %v7271
    %v7273 = vand.u32 %v6959, 4294901760
    %v7274 = vsub.f32 %v6959, %v7273
    %v7275 = vand.u32 %v7274, 4294901760
    %7276 = vmatpush.msra.mxu0 %v7275
    %v7277 = vand.u32 %v6958, 4294901760
    %v7278 = vsub.f32 %v6958, %v7277
    %v7279 = vand.u32 %v7278, 4294901760
    %7280 = vmatpush.msra.mxu0 %v7279
    %v7281 = vand.u32 %v6957, 4294901760
    %v7282 = vsub.f32 %v6957, %v7281
    %v7283 = vand.u32 %v7282, 4294901760
    %7284 = vmatpush.msra.mxu0 %v7283
    %v7285 = vand.u32 %v6956, 4294901760
    %v7286 = vsub.f32 %v6956, %v7285
    %v7287 = vand.u32 %v7286, 4294901760
    %7288 = vmatpush.msra.mxu0 %v7287
    %v7289 = vand.u32 %v6955, 4294901760
    %v7290 = vsub.f32 %v6955, %v7289
    %v7291 = vand.u32 %v7290, 4294901760
    %7292 = vmatpush.msra.mxu0 %v7291
    %v7293 = vand.u32 %v6954, 4294901760
    %v7294 = vsub.f32 %v6954, %v7293
    %v7295 = vand.u32 %v7294, 4294901760
    %7296 = vmatpush.msra.mxu0 %v7295
    %v7297 = vand.u32 %v6953, 4294901760
    %v7298 = vsub.f32 %v6953, %v7297
    %v7299 = vand.u32 %v7298, 4294901760
    %7300 = vmatpush.msra.mxu0 %v7299
    %v7301 = vand.u32 %v6952, 4294901760
    %v7302 = vsub.f32 %v6952, %v7301
    %v7303 = vand.u32 %v7302, 4294901760
    %7304 = vmatpush.msra.mxu0 %v7303
    %v7305 = vand.u32 %v6951, 4294901760
    %v7306 = vsub.f32 %v6951, %v7305
    %v7307 = vand.u32 %v7306, 4294901760
    %7308 = vmatpush.msra.mxu0 %v7307
    %v7309 = vand.u32 %v6950, 4294901760
    %v7310 = vsub.f32 %v6950, %v7309
    %v7311 = vand.u32 %v7310, 4294901760
    %7312 = vmatpush.msra.mxu0 %v7311
    %v7313 = vand.u32 %v6949, 4294901760
    %v7314 = vsub.f32 %v6949, %v7313
    %v7315 = vand.u32 %v7314, 4294901760
    %7316 = vmatpush.msra.mxu0 %v7315
    %v7317 = vand.u32 %v6948, 4294901760
    %v7318 = vsub.f32 %v6948, %v7317
    %v7319 = vand.u32 %v7318, 4294901760
    %7320 = vmatpush.msra.mxu0 %v7319
    %7321 = vmatmul.f32.gmra.mxu0 %v2131
    %v7322 = vpop.f32.mrf.mxu0
    %v7323 = vadd.f32 %v7240, %v7322
    %7324 = vmatmul.f32.gmra.mxu0 %v2132
    %v7325 = vpop.f32.mrf.mxu0
    %v7326 = vadd.f32 %v7245, %v7325
    %7327 = vmatmul.f32.gmra.mxu0 %v2133
    %v7328 = vpop.f32.mrf.mxu0
    %v7329 = vadd.f32 %v7250, %v7328
    %7330 = vmatmul.f32.gmra.mxu0 %v2134
    %v7331 = vpop.f32.mrf.mxu0
    %v7332 = vadd.f32 %v7255, %v7331
    %7333 = vdwg.mxu0
    %v7334 = vand.u32 %v6963, 4294901760
    %7335 = vmatpush.msra.mxu0 %v7334
    %v7336 = vand.u32 %v6962, 4294901760
    %7337 = vmatpush.msra.mxu0 %v7336
    %v7338 = vand.u32 %v6961, 4294901760
    %7339 = vmatpush.msra.mxu0 %v7338
    %v7340 = vand.u32 %v6960, 4294901760
    %7341 = vmatpush.msra.mxu0 %v7340
    %v7342 = vand.u32 %v6959, 4294901760
    %7343 = vmatpush.msra.mxu0 %v7342
    %v7344 = vand.u32 %v6958, 4294901760
    %7345 = vmatpush.msra.mxu0 %v7344
    %v7346 = vand.u32 %v6957, 4294901760
    %7347 = vmatpush.msra.mxu0 %v7346
    %v7348 = vand.u32 %v6956, 4294901760
    %7349 = vmatpush.msra.mxu0 %v7348
    %v7350 = vand.u32 %v6955, 4294901760
    %7351 = vmatpush.msra.mxu0 %v7350
    %v7352 = vand.u32 %v6954, 4294901760
    %7353 = vmatpush.msra.mxu0 %v7352
    %v7354 = vand.u32 %v6953, 4294901760
    %7355 = vmatpush.msra.mxu0 %v7354
    %v7356 = vand.u32 %v6952, 4294901760
    %7357 = vmatpush.msra.mxu0 %v7356
    %v7358 = vand.u32 %v6951, 4294901760
    %7359 = vmatpush.msra.mxu0 %v7358
    %v7360 = vand.u32 %v6950, 4294901760
    %7361 = vmatpush.msra.mxu0 %v7360
    %v7362 = vand.u32 %v6949, 4294901760
    %7363 = vmatpush.msra.mxu0 %v7362
    %v7364 = vand.u32 %v6948, 4294901760
    %7365 = vmatpush.msra.mxu0 %v7364
    %7366 = vmatmul.f32.gmra.mxu0 %v2131
    %v7367 = vpop.f32.mrf.mxu0
    %v7368 = vadd.f32 %v7323, %v7367
    %7369 = vmatmul.f32.gmra.mxu0 %v2132
    %v7370 = vpop.f32.mrf.mxu0
    %v7371 = vadd.f32 %v7326, %v7370
    %7372 = vmatmul.f32.gmra.mxu0 %v2133
    %v7373 = vpop.f32.mrf.mxu0
    %v7374 = vadd.f32 %v7329, %v7373
    %7375 = vmatmul.f32.gmra.mxu0 %v2134
    %v7376 = vpop.f32.mrf.mxu0
    %v7377 = vadd.f32 %v7332, %v7376
    %7378 = vdwg.mxu0
    %v7379 = vsub.f32 0.0, %v877
    %v7380 = vsub.f32 0.0, %v881
    %v7381 = vsub.f32 0.0, %v885
    %v7382 = vsub.f32 0.0, %v889
    %v7383 = vmul.f32 %v7379, 1.442695
    %v7384 = vpow.pop %v7383
    %v7385 = vmul.f32 %v7380, 1.442695
    %v7386 = vpow.pop %v7385
    %v7387 = vmul.f32 %v7381, 1.442695
    %v7388 = vpow.pop %v7387
    %v7389 = vmul.f32 %v7382, 1.442695
    %v7390 = vpow.pop %v7389
    %v7391 = vadd.f32 %v7384, 1.0
    %v7392 = vadd.f32 %v7386, 1.0
    %v7393 = vadd.f32 %v7388, 1.0
    %v7394 = vadd.f32 %v7390, 1.0
    %v7395 = vrcp.pop %v7391
    %v7396 = vmul.f32 %v7391, %v7395
    %v7397 = vsub.f32 1.0, %v7396
    %v7398 = vmul.f32 %v7395, %v7397
    %v7399 = vadd.f32 %v7395, %v7398
    %vm7400 = vweird.f32 %v7391
    %vm7401 = vweird.f32 %v7395
    %vm7402 = vmor %vm7400, %vm7401
    %v7403 = vsel %vm7402, %v7395, %v7399
    %v7404 = vand.u32 2147483647, %v7391
    %vm7405 = vcmp.eq.f32.partialorder %v7404, 8.507059e+37
    %v7406 = vand.u32 %v7391, 2147483648
    %v7407 = vor.u32 1.1754944e-38, %v7406
    %v7408 = vsel %vm7405, %v7407, %v7403
    %v7409 = vmul.f32 1.0, %v7408
    %v7410 = vrcp.pop %v7392
    %v7411 = vmul.f32 %v7392, %v7410
    %v7412 = vsub.f32 1.0, %v7411
    %v7413 = vmul.f32 %v7410, %v7412
    %v7414 = vadd.f32 %v7410, %v7413
    %vm7415 = vweird.f32 %v7392
    %vm7416 = vweird.f32 %v7410
    %vm7417 = vmor %vm7415, %vm7416
    %v7418 = vsel %vm7417, %v7410, %v7414
    %v7419 = vand.u32 2147483647, %v7392
    %vm7420 = vcmp.eq.f32.partialorder %v7419, 8.507059e+37
    %v7421 = vand.u32 %v7392, 2147483648
    %v7422 = vor.u32 1.1754944e-38, %v7421
    %v7423 = vsel %vm7420, %v7422, %v7418
    %v7424 = vmul.f32 1.0, %v7423
    %v7425 = vrcp.pop %v7393
    %v7426 = vmul.f32 %v7393, %v7425
    %v7427 = vsub.f32 1.0, %v7426
    %v7428 = vmul.f32 %v7425, %v7427
    %v7429 = vadd.f32 %v7425, %v7428
    %vm7430 = vweird.f32 %v7393
    %vm7431 = vweird.f32 %v7425
    %vm7432 = vmor %vm7430, %vm7431
    %v7433 = vsel %vm7432, %v7425, %v7429
    %v7434 = vand.u32 2147483647, %v7393
    %vm7435 = vcmp.eq.f32.partialorder %v7434, 8.507059e+37
    %v7436 = vand.u32 %v7393, 2147483648
    %v7437 = vor.u32 1.1754944e-38, %v7436
    %v7438 = vsel %vm7435, %v7437, %v7433
    %v7439 = vmul.f32 1.0, %v7438
    %v7440 = vrcp.pop %v7394
    %v7441 = vmul.f32 %v7394, %v7440
    %v7442 = vsub.f32 1.0, %v7441
    %v7443 = vmul.f32 %v7440, %v7442
    %v7444 = vadd.f32 %v7440, %v7443
    %vm7445 = vweird.f32 %v7394
    %vm7446 = vweird.f32 %v7440
    %vm7447 = vmor %vm7445, %vm7446
    %v7448 = vsel %vm7447, %v7440, %v7444
    %v7449 = vand.u32 2147483647, %v7394
    %vm7450 = vcmp.eq.f32.partialorder %v7449, 8.507059e+37
    %v7451 = vand.u32 %v7394, 2147483648
    %v7452 = vor.u32 1.1754944e-38, %v7451
    %v7453 = vsel %vm7450, %v7452, %v7448
    %v7454 = vmul.f32 1.0, %v7453
    %v7455 = vmul.f32 %v877, %v7409
    %v7456 = vmul.f32 %v881, %v7424
    %v7457 = vmul.f32 %v885, %v7439
    %v7458 = vmul.f32 %v889, %v7454
    %v7459 = vmul.f32 %v7368, %v7455
    %v7460 = vmul.f32 %v7371, %v7456
    %v7461 = vmul.f32 %v7374, %v7457
    %v7462 = vmul.f32 %v7377, %v7458
    %v7464 = vsel %vm1085, %v7459, 0
    %v7467 = vsel %vm1085, %v7460, 0
    %v7470 = vsel %vm1085, %v7461, 0
    %v7473 = vsel %vm1085, %v7462, 0
    %7475 = vmatpush.msra.mxu0 0.0
    %7476 = vmatpush.msra.mxu0 0.0
    %7477 = vmatpush.msra.mxu0 0.0
    %7478 = vmatpush.msra.mxu0 0.0
    %7479 = vmatpush.msra.mxu0 0.0
    %7480 = vmatpush.msra.mxu0 0.0
    %7481 = vmatpush.msra.mxu0 0.0
    %7482 = vmatpush.msra.mxu0 0.0
    %7483 = vmatpush.msra.mxu0 0.0
    %7484 = vmatpush.msra.mxu0 0.0
    %7485 = vmatpush.msra.mxu0 0.0
    %7486 = vmatpush.msra.mxu0 0.0
    %v7487 = vand.u32 %v36, 4294901760
    %7488 = vmatpush.msra.mxu0 %v7487
    %v7489 = vand.u32 %v35, 4294901760
    %7490 = vmatpush.msra.mxu0 %v7489
    %v7491 = vand.u32 %v34, 4294901760
    %7492 = vmatpush.msra.mxu0 %v7491
    %v7493 = vand.u32 %v33, 4294901760
    %7494 = vmatpush.msra.mxu0 %v7493
    %v7495 = vand.u32 %v7464, 4294901760
    %v7496 = vsub.f32 %v7464, %v7495
    %v7497 = vand.u32 %v7496, 4294901760
    %v7498 = vsub.f32 %v7496, %v7497
    %v7499 = vand.u32 %v7498, 4294901760
    %7500 = vmatmul.f32.gmra.mxu0 %v7499
    %v7501 = vpop.f32.mrf.mxu0
    %v7502 = vadd.f32 0.0, %v7501
    %v7503 = vand.u32 %v7467, 4294901760
    %v7504 = vsub.f32 %v7467, %v7503
    %v7505 = vand.u32 %v7504, 4294901760
    %v7506 = vsub.f32 %v7504, %v7505
    %v7507 = vand.u32 %v7506, 4294901760
    %7508 = vmatmul.f32.gmra.mxu0 %v7507
    %v7509 = vpop.f32.mrf.mxu0
    %v7510 = vadd.f32 0.0, %v7509
    %v7511 = vand.u32 %v7470, 4294901760
    %v7512 = vsub.f32 %v7470, %v7511
    %v7513 = vand.u32 %v7512, 4294901760
    %v7514 = vsub.f32 %v7512, %v7513
    %v7515 = vand.u32 %v7514, 4294901760
    %7516 = vmatmul.f32.gmra.mxu0 %v7515
    %v7517 = vpop.f32.mrf.mxu0
    %v7518 = vadd.f32 0.0, %v7517
    %v7519 = vand.u32 %v7473, 4294901760
    %v7520 = vsub.f32 %v7473, %v7519
    %v7521 = vand.u32 %v7520, 4294901760
    %v7522 = vsub.f32 %v7520, %v7521
    %v7523 = vand.u32 %v7522, 4294901760
    %7524 = vmatmul.f32.gmra.mxu0 %v7523
    %v7525 = vpop.f32.mrf.mxu0
    %v7526 = vadd.f32 0.0, %v7525
    %7527 = vdwg.mxu0
    %7528 = vmatpush.msra.mxu0 0.0
    %7529 = vmatpush.msra.mxu0 0.0
    %7530 = vmatpush.msra.mxu0 0.0
    %7531 = vmatpush.msra.mxu0 0.0
    %7532 = vmatpush.msra.mxu0 0.0
    %7533 = vmatpush.msra.mxu0 0.0
    %7534 = vmatpush.msra.mxu0 0.0
    %7535 = vmatpush.msra.mxu0 0.0
    %7536 = vmatpush.msra.mxu0 0.0
    %7537 = vmatpush.msra.mxu0 0.0
    %7538 = vmatpush.msra.mxu0 0.0
    %7539 = vmatpush.msra.mxu0 0.0
    %v7540 = vand.u32 %v36, 4294901760
    %v7541 = vsub.f32 %v36, %v7540
    %v7542 = vand.u32 %v7541, 4294901760
    %v7543 = vsub.f32 %v7541, %v7542
    %v7544 = vand.u32 %v7543, 4294901760
    %7545 = vmatpush.msra.mxu0 %v7544
    %v7546 = vand.u32 %v35, 4294901760
    %v7547 = vsub.f32 %v35, %v7546
    %v7548 = vand.u32 %v7547, 4294901760
    %v7549 = vsub.f32 %v7547, %v7548
    %v7550 = vand.u32 %v7549, 4294901760
    %7551 = vmatpush.msra.mxu0 %v7550
    %v7552 = vand.u32 %v34, 4294901760
    %v7553 = vsub.f32 %v34, %v7552
    %v7554 = vand.u32 %v7553, 4294901760
    %v7555 = vsub.f32 %v7553, %v7554
    %v7556 = vand.u32 %v7555, 4294901760
    %7557 = vmatpush.msra.mxu0 %v7556
    %v7558 = vand.u32 %v33, 4294901760
    %v7559 = vsub.f32 %v33, %v7558
    %v7560 = vand.u32 %v7559, 4294901760
    %v7561 = vsub.f32 %v7559, %v7560
    %v7562 = vand.u32 %v7561, 4294901760
    %7563 = vmatpush.msra.mxu0 %v7562
    %v7564 = vand.u32 %v7464, 4294901760
    %7565 = vmatmul.f32.gmra.mxu0 %v7564
    %v7566 = vpop.f32.mrf.mxu0
    %v7567 = vadd.f32 %v7502, %v7566
    %v7568 = vand.u32 %v7467, 4294901760
    %7569 = vmatmul.f32.gmra.mxu0 %v7568
    %v7570 = vpop.f32.mrf.mxu0
    %v7571 = vadd.f32 %v7510, %v7570
    %v7572 = vand.u32 %v7470, 4294901760
    %7573 = vmatmul.f32.gmra.mxu0 %v7572
    %v7574 = vpop.f32.mrf.mxu0
    %v7575 = vadd.f32 %v7518, %v7574
    %v7576 = vand.u32 %v7473, 4294901760
    %7577 = vmatmul.f32.gmra.mxu0 %v7576
    %v7578 = vpop.f32.mrf.mxu0
    %v7579 = vadd.f32 %v7526, %v7578
    %7580 = vdwg.mxu0
    %7581 = vmatpush.msra.mxu0 0.0
    %7582 = vmatpush.msra.mxu0 0.0
    %7583 = vmatpush.msra.mxu0 0.0
    %7584 = vmatpush.msra.mxu0 0.0
    %7585 = vmatpush.msra.mxu0 0.0
    %7586 = vmatpush.msra.mxu0 0.0
    %7587 = vmatpush.msra.mxu0 0.0
    %7588 = vmatpush.msra.mxu0 0.0
    %7589 = vmatpush.msra.mxu0 0.0
    %7590 = vmatpush.msra.mxu0 0.0
    %7591 = vmatpush.msra.mxu0 0.0
    %7592 = vmatpush.msra.mxu0 0.0
    %v7593 = vand.u32 %v36, 4294901760
    %v7594 = vsub.f32 %v36, %v7593
    %7595 = vmatpush.msra.mxu0 %v7594
    %v7596 = vand.u32 %v35, 4294901760
    %v7597 = vsub.f32 %v35, %v7596
    %7598 = vmatpush.msra.mxu0 %v7597
    %v7599 = vand.u32 %v34, 4294901760
    %v7600 = vsub.f32 %v34, %v7599
    %7601 = vmatpush.msra.mxu0 %v7600
    %v7602 = vand.u32 %v33, 4294901760
    %v7603 = vsub.f32 %v33, %v7602
    %7604 = vmatpush.msra.mxu0 %v7603
    %v7605 = vand.u32 %v7464, 4294901760
    %v7606 = vsub.f32 %v7464, %v7605
    %7607 = vmatmul.f32.gmra.mxu0 %v7606
    %v7608 = vpop.f32.mrf.mxu0
    %v7609 = vadd.f32 %v7567, %v7608
    %v7610 = vand.u32 %v7467, 4294901760
    %v7611 = vsub.f32 %v7467, %v7610
    %7612 = vmatmul.f32.gmra.mxu0 %v7611
    %v7613 = vpop.f32.mrf.mxu0
    %v7614 = vadd.f32 %v7571, %v7613
    %v7615 = vand.u32 %v7470, 4294901760
    %v7616 = vsub.f32 %v7470, %v7615
    %7617 = vmatmul.f32.gmra.mxu0 %v7616
    %v7618 = vpop.f32.mrf.mxu0
    %v7619 = vadd.f32 %v7575, %v7618
    %v7620 = vand.u32 %v7473, 4294901760
    %v7621 = vsub.f32 %v7473, %v7620
    %7622 = vmatmul.f32.gmra.mxu0 %v7621
    %v7623 = vpop.f32.mrf.mxu0
    %v7624 = vadd.f32 %v7579, %v7623
    %7625 = vdwg.mxu0
    %7626 = vmatpush.msra.mxu0 0.0
    %7627 = vmatpush.msra.mxu0 0.0
    %7628 = vmatpush.msra.mxu0 0.0
    %7629 = vmatpush.msra.mxu0 0.0
    %7630 = vmatpush.msra.mxu0 0.0
    %7631 = vmatpush.msra.mxu0 0.0
    %7632 = vmatpush.msra.mxu0 0.0
    %7633 = vmatpush.msra.mxu0 0.0
    %7634 = vmatpush.msra.mxu0 0.0
    %7635 = vmatpush.msra.mxu0 0.0
    %7636 = vmatpush.msra.mxu0 0.0
    %7637 = vmatpush.msra.mxu0 0.0
    %v7638 = vand.u32 %v36, 4294901760
    %7639 = vmatpush.msra.mxu0 %v7638
    %v7640 = vand.u32 %v35, 4294901760
    %7641 = vmatpush.msra.mxu0 %v7640
    %v7642 = vand.u32 %v34, 4294901760
    %7643 = vmatpush.msra.mxu0 %v7642
    %v7644 = vand.u32 %v33, 4294901760
    %7645 = vmatpush.msra.mxu0 %v7644
    %v7646 = vand.u32 %v7464, 4294901760
    %v7647 = vsub.f32 %v7464, %v7646
    %v7648 = vand.u32 %v7647, 4294901760
    %7649 = vmatmul.f32.gmra.mxu0 %v7648
    %v7650 = vpop.f32.mrf.mxu0
    %v7651 = vadd.f32 %v7609, %v7650
    %v7652 = vand.u32 %v7467, 4294901760
    %v7653 = vsub.f32 %v7467, %v7652
    %v7654 = vand.u32 %v7653, 4294901760
    %7655 = vmatmul.f32.gmra.mxu0 %v7654
    %v7656 = vpop.f32.mrf.mxu0
    %v7657 = vadd.f32 %v7614, %v7656
    %v7658 = vand.u32 %v7470, 4294901760
    %v7659 = vsub.f32 %v7470, %v7658
    %v7660 = vand.u32 %v7659, 4294901760
    %7661 = vmatmul.f32.gmra.mxu0 %v7660
    %v7662 = vpop.f32.mrf.mxu0
    %v7663 = vadd.f32 %v7619, %v7662
    %v7664 = vand.u32 %v7473, 4294901760
    %v7665 = vsub.f32 %v7473, %v7664
    %v7666 = vand.u32 %v7665, 4294901760
    %7667 = vmatmul.f32.gmra.mxu0 %v7666
    %v7668 = vpop.f32.mrf.mxu0
    %v7669 = vadd.f32 %v7624, %v7668
    %7670 = vdwg.mxu0
    %7671 = vmatpush.msra.mxu0 0.0
    %7672 = vmatpush.msra.mxu0 0.0
    %7673 = vmatpush.msra.mxu0 0.0
    %7674 = vmatpush.msra.mxu0 0.0
    %7675 = vmatpush.msra.mxu0 0.0
    %7676 = vmatpush.msra.mxu0 0.0
    %7677 = vmatpush.msra.mxu0 0.0
    %7678 = vmatpush.msra.mxu0 0.0
    %7679 = vmatpush.msra.mxu0 0.0
    %7680 = vmatpush.msra.mxu0 0.0
    %7681 = vmatpush.msra.mxu0 0.0
    %7682 = vmatpush.msra.mxu0 0.0
    %v7683 = vand.u32 %v36, 4294901760
    %v7684 = vsub.f32 %v36, %v7683
    %v7685 = vand.u32 %v7684, 4294901760
    %7686 = vmatpush.msra.mxu0 %v7685
    %v7687 = vand.u32 %v35, 4294901760
    %v7688 = vsub.f32 %v35, %v7687
    %v7689 = vand.u32 %v7688, 4294901760
    %7690 = vmatpush.msra.mxu0 %v7689
    %v7691 = vand.u32 %v34, 4294901760
    %v7692 = vsub.f32 %v34, %v7691
    %v7693 = vand.u32 %v7692, 4294901760
    %7694 = vmatpush.msra.mxu0 %v7693
    %v7695 = vand.u32 %v33, 4294901760
    %v7696 = vsub.f32 %v33, %v7695
    %v7697 = vand.u32 %v7696, 4294901760
    %7698 = vmatpush.msra.mxu0 %v7697
    %v7699 = vand.u32 %v7464, 4294901760
    %7700 = vmatmul.f32.gmra.mxu0 %v7699
    %v7701 = vpop.f32.mrf.mxu0
    %v7702 = vadd.f32 %v7651, %v7701
    %v7703 = vand.u32 %v7467, 4294901760
    %7704 = vmatmul.f32.gmra.mxu0 %v7703
    %v7705 = vpop.f32.mrf.mxu0
    %v7706 = vadd.f32 %v7657, %v7705
    %v7707 = vand.u32 %v7470, 4294901760
    %7708 = vmatmul.f32.gmra.mxu0 %v7707
    %v7709 = vpop.f32.mrf.mxu0
    %v7710 = vadd.f32 %v7663, %v7709
    %v7711 = vand.u32 %v7473, 4294901760
    %7712 = vmatmul.f32.gmra.mxu0 %v7711
    %v7713 = vpop.f32.mrf.mxu0
    %v7714 = vadd.f32 %v7669, %v7713
    %7715 = vdwg.mxu0
    %7716 = vmatpush.msra.mxu0 0.0
    %7717 = vmatpush.msra.mxu0 0.0
    %7718 = vmatpush.msra.mxu0 0.0
    %7719 = vmatpush.msra.mxu0 0.0
    %7720 = vmatpush.msra.mxu0 0.0
    %7721 = vmatpush.msra.mxu0 0.0
    %7722 = vmatpush.msra.mxu0 0.0
    %7723 = vmatpush.msra.mxu0 0.0
    %7724 = vmatpush.msra.mxu0 0.0
    %7725 = vmatpush.msra.mxu0 0.0
    %7726 = vmatpush.msra.mxu0 0.0
    %7727 = vmatpush.msra.mxu0 0.0
    %v7728 = vand.u32 %v36, 4294901760
    %7729 = vmatpush.msra.mxu0 %v7728
    %v7730 = vand.u32 %v35, 4294901760
    %7731 = vmatpush.msra.mxu0 %v7730
    %v7732 = vand.u32 %v34, 4294901760
    %7733 = vmatpush.msra.mxu0 %v7732
    %v7734 = vand.u32 %v33, 4294901760
    %7735 = vmatpush.msra.mxu0 %v7734
    %v7736 = vand.u32 %v7464, 4294901760
    %7737 = vmatmul.f32.gmra.mxu0 %v7736
    %v7738 = vpop.f32.mrf.mxu0
    %v7739 = vadd.f32 %v7702, %v7738
    %v7740 = vand.u32 %v7467, 4294901760
    %7741 = vmatmul.f32.gmra.mxu0 %v7740
    %v7742 = vpop.f32.mrf.mxu0
    %v7743 = vadd.f32 %v7706, %v7742
    %v7744 = vand.u32 %v7470, 4294901760
    %7745 = vmatmul.f32.gmra.mxu0 %v7744
    %v7746 = vpop.f32.mrf.mxu0
    %v7747 = vadd.f32 %v7710, %v7746
    %v7748 = vand.u32 %v7473, 4294901760
    %7749 = vmatmul.f32.gmra.mxu0 %v7748
    %v7750 = vpop.f32.mrf.mxu0
    %v7751 = vadd.f32 %v7714, %v7750
    %7752 = vdwg.mxu0
    %v7754 = vsel %vm1085, %v51, 0
    %v7757 = vsel %vm1085, %v52, 0
    %7759 = vmatpush.msra.mxu0 0.0
    %7760 = vmatpush.msra.mxu0 0.0
    %7761 = vmatpush.msra.mxu0 0.0
    %7762 = vmatpush.msra.mxu0 0.0
    %7763 = vmatpush.msra.mxu0 0.0
    %7764 = vmatpush.msra.mxu0 0.0
    %7765 = vmatpush.msra.mxu0 0.0
    %7766 = vmatpush.msra.mxu0 0.0
    %7767 = vmatpush.msra.mxu0 0.0
    %7768 = vmatpush.msra.mxu0 0.0
    %7769 = vmatpush.msra.mxu0 0.0
    %7770 = vmatpush.msra.mxu0 0.0
    %v7771 = vand.u32 %v7751, 4294901760
    %7772 = vmatpush.msra.mxu0 %v7771
    %v7773 = vand.u32 %v7747, 4294901760
    %7774 = vmatpush.msra.mxu0 %v7773
    %v7775 = vand.u32 %v7743, 4294901760
    %7776 = vmatpush.msra.mxu0 %v7775
    %v7777 = vand.u32 %v7739, 4294901760
    %7778 = vmatpush.msra.mxu0 %v7777
    %v7779 = vand.u32 %v7754, 4294901760
    %v7780 = vsub.f32 %v7754, %v7779
    %v7781 = vand.u32 %v7780, 4294901760
    %v7782 = vsub.f32 %v7780, %v7781
    %v7783 = vand.u32 %v7782, 4294901760
    %7784 = vmatmul.f32.gmra.mxu0 %v7783
    %v7785 = vpop.f32.mrf.mxu0
    %v7786 = vadd.f32 0.0, %v7785
    %v7787 = vand.u32 %v7757, 4294901760
    %v7788 = vsub.f32 %v7757, %v7787
    %v7789 = vand.u32 %v7788, 4294901760
    %v7790 = vsub.f32 %v7788, %v7789
    %v7791 = vand.u32 %v7790, 4294901760
    %7792 = vmatmul.f32.gmra.mxu0 %v7791
    %v7793 = vpop.f32.mrf.mxu0
    %v7794 = vadd.f32 0.0, %v7793
    %7795 = vdwg.mxu0
    %7796 = vmatpush.msra.mxu0 0.0
    %7797 = vmatpush.msra.mxu0 0.0
    %7798 = vmatpush.msra.mxu0 0.0
    %7799 = vmatpush.msra.mxu0 0.0
    %7800 = vmatpush.msra.mxu0 0.0
    %7801 = vmatpush.msra.mxu0 0.0
    %7802 = vmatpush.msra.mxu0 0.0
    %7803 = vmatpush.msra.mxu0 0.0
    %7804 = vmatpush.msra.mxu0 0.0
    %7805 = vmatpush.msra.mxu0 0.0
    %7806 = vmatpush.msra.mxu0 0.0
    %7807 = vmatpush.msra.mxu0 0.0
    %v7808 = vand.u32 %v7751, 4294901760
    %v7809 = vsub.f32 %v7751, %v7808
    %v7810 = vand.u32 %v7809, 4294901760
    %v7811 = vsub.f32 %v7809, %v7810
    %v7812 = vand.u32 %v7811, 4294901760
    %7813 = vmatpush.msra.mxu0 %v7812
    %v7814 = vand.u32 %v7747, 4294901760
    %v7815 = vsub.f32 %v7747, %v7814
    %v7816 = vand.u32 %v7815, 4294901760
    %v7817 = vsub.f32 %v7815, %v7816
    %v7818 = vand.u32 %v7817, 4294901760
    %7819 = vmatpush.msra.mxu0 %v7818
    %v7820 = vand.u32 %v7743, 4294901760
    %v7821 = vsub.f32 %v7743, %v7820
    %v7822 = vand.u32 %v7821, 4294901760
    %v7823 = vsub.f32 %v7821, %v7822
    %v7824 = vand.u32 %v7823, 4294901760
    %7825 = vmatpush.msra.mxu0 %v7824
    %v7826 = vand.u32 %v7739, 4294901760
    %v7827 = vsub.f32 %v7739, %v7826
    %v7828 = vand.u32 %v7827, 4294901760
    %v7829 = vsub.f32 %v7827, %v7828
    %v7830 = vand.u32 %v7829, 4294901760
    %7831 = vmatpush.msra.mxu0 %v7830
    %v7832 = vand.u32 %v7754, 4294901760
    %7833 = vmatmul.f32.gmra.mxu0 %v7832
    %v7834 = vpop.f32.mrf.mxu0
    %v7835 = vadd.f32 %v7786, %v7834
    %v7836 = vand.u32 %v7757, 4294901760
    %7837 = vmatmul.f32.gmra.mxu0 %v7836
    %v7838 = vpop.f32.mrf.mxu0
    %v7839 = vadd.f32 %v7794, %v7838
    %7840 = vdwg.mxu0
    %7841 = vmatpush.msra.mxu0 0.0
    %7842 = vmatpush.msra.mxu0 0.0
    %7843 = vmatpush.msra.mxu0 0.0
    %7844 = vmatpush.msra.mxu0 0.0
    %7845 = vmatpush.msra.mxu0 0.0
    %7846 = vmatpush.msra.mxu0 0.0
    %7847 = vmatpush.msra.mxu0 0.0
    %7848 = vmatpush.msra.mxu0 0.0
    %7849 = vmatpush.msra.mxu0 0.0
    %7850 = vmatpush.msra.mxu0 0.0
    %7851 = vmatpush.msra.mxu0 0.0
    %7852 = vmatpush.msra.mxu0 0.0
    %v7853 = vand.u32 %v7751, 4294901760
    %v7854 = vsub.f32 %v7751, %v7853
    %7855 = vmatpush.msra.mxu0 %v7854
    %v7856 = vand.u32 %v7747, 4294901760
    %v7857 = vsub.f32 %v7747, %v7856
    %7858 = vmatpush.msra.mxu0 %v7857
    %v7859 = vand.u32 %v7743, 4294901760
    %v7860 = vsub.f32 %v7743, %v7859
    %7861 = vmatpush.msra.mxu0 %v7860
    %v7862 = vand.u32 %v7739, 4294901760
    %v7863 = vsub.f32 %v7739, %v7862
    %7864 = vmatpush.msra.mxu0 %v7863
    %v7865 = vand.u32 %v7754, 4294901760
    %v7866 = vsub.f32 %v7754, %v7865
    %7867 = vmatmul.f32.gmra.mxu0 %v7866
    %v7868 = vpop.f32.mrf.mxu0
    %v7869 = vadd.f32 %v7835, %v7868
    %v7870 = vand.u32 %v7757, 4294901760
    %v7871 = vsub.f32 %v7757, %v7870
    %7872 = vmatmul.f32.gmra.mxu0 %v7871
    %v7873 = vpop.f32.mrf.mxu0
    %v7874 = vadd.f32 %v7839, %v7873
    %7875 = vdwg.mxu0
    %7876 = vmatpush.msra.mxu0 0.0
    %7877 = vmatpush.msra.mxu0 0.0
    %7878 = vmatpush.msra.mxu0 0.0
    %7879 = vmatpush.msra.mxu0 0.0
    %7880 = vmatpush.msra.mxu0 0.0
    %7881 = vmatpush.msra.mxu0 0.0
    %7882 = vmatpush.msra.mxu0 0.0
    %7883 = vmatpush.msra.mxu0 0.0
    %7884 = vmatpush.msra.mxu0 0.0
    %7885 = vmatpush.msra.mxu0 0.0
    %7886 = vmatpush.msra.mxu0 0.0
    %7887 = vmatpush.msra.mxu0 0.0
    %v7888 = vand.u32 %v7751, 4294901760
    %7889 = vmatpush.msra.mxu0 %v7888
    %v7890 = vand.u32 %v7747, 4294901760
    %7891 = vmatpush.msra.mxu0 %v7890
    %v7892 = vand.u32 %v7743, 4294901760
    %7893 = vmatpush.msra.mxu0 %v7892
    %v7894 = vand.u32 %v7739, 4294901760
    %7895 = vmatpush.msra.mxu0 %v7894
    %v7896 = vand.u32 %v7754, 4294901760
    %v7897 = vsub.f32 %v7754, %v7896
    %v7898 = vand.u32 %v7897, 4294901760
    %7899 = vmatmul.f32.gmra.mxu0 %v7898
    %v7900 = vpop.f32.mrf.mxu0
    %v7901 = vadd.f32 %v7869, %v7900
    %v7902 = vand.u32 %v7757, 4294901760
    %v7903 = vsub.f32 %v7757, %v7902
    %v7904 = vand.u32 %v7903, 4294901760
    %7905 = vmatmul.f32.gmra.mxu0 %v7904
    %v7906 = vpop.f32.mrf.mxu0
    %v7907 = vadd.f32 %v7874, %v7906
    %7908 = vdwg.mxu0
    %7909 = vmatpush.msra.mxu0 0.0
    %7910 = vmatpush.msra.mxu0 0.0
    %7911 = vmatpush.msra.mxu0 0.0
    %7912 = vmatpush.msra.mxu0 0.0
    %7913 = vmatpush.msra.mxu0 0.0
    %7914 = vmatpush.msra.mxu0 0.0
    %7915 = vmatpush.msra.mxu0 0.0
    %7916 = vmatpush.msra.mxu0 0.0
    %7917 = vmatpush.msra.mxu0 0.0
    %7918 = vmatpush.msra.mxu0 0.0
    %7919 = vmatpush.msra.mxu0 0.0
    %7920 = vmatpush.msra.mxu0 0.0
    %v7921 = vand.u32 %v7751, 4294901760
    %v7922 = vsub.f32 %v7751, %v7921
    %v7923 = vand.u32 %v7922, 4294901760
    %7924 = vmatpush.msra.mxu0 %v7923
    %v7925 = vand.u32 %v7747, 4294901760
    %v7926 = vsub.f32 %v7747, %v7925
    %v7927 = vand.u32 %v7926, 4294901760
    %7928 = vmatpush.msra.mxu0 %v7927
    %v7929 = vand.u32 %v7743, 4294901760
    %v7930 = vsub.f32 %v7743, %v7929
    %v7931 = vand.u32 %v7930, 4294901760
    %7932 = vmatpush.msra.mxu0 %v7931
    %v7933 = vand.u32 %v7739, 4294901760
    %v7934 = vsub.f32 %v7739, %v7933
    %v7935 = vand.u32 %v7934, 4294901760
    %7936 = vmatpush.msra.mxu0 %v7935
    %v7937 = vand.u32 %v7754, 4294901760
    %7938 = vmatmul.f32.gmra.mxu0 %v7937
    %v7939 = vpop.f32.mrf.mxu0
    %v7940 = vadd.f32 %v7901, %v7939
    %v7941 = vand.u32 %v7757, 4294901760
    %7942 = vmatmul.f32.gmra.mxu0 %v7941
    %v7943 = vpop.f32.mrf.mxu0
    %v7944 = vadd.f32 %v7907, %v7943
    %7945 = vdwg.mxu0
    %7946 = vmatpush.msra.mxu0 0.0
    %7947 = vmatpush.msra.mxu0 0.0
    %7948 = vmatpush.msra.mxu0 0.0
    %7949 = vmatpush.msra.mxu0 0.0
    %7950 = vmatpush.msra.mxu0 0.0
    %7951 = vmatpush.msra.mxu0 0.0
    %7952 = vmatpush.msra.mxu0 0.0
    %7953 = vmatpush.msra.mxu0 0.0
    %7954 = vmatpush.msra.mxu0 0.0
    %7955 = vmatpush.msra.mxu0 0.0
    %7956 = vmatpush.msra.mxu0 0.0
    %7957 = vmatpush.msra.mxu0 0.0
    %v7958 = vand.u32 %v7751, 4294901760
    %7959 = vmatpush.msra.mxu0 %v7958
    %v7960 = vand.u32 %v7747, 4294901760
    %7961 = vmatpush.msra.mxu0 %v7960
    %v7962 = vand.u32 %v7743, 4294901760
    %7963 = vmatpush.msra.mxu0 %v7962
    %v7964 = vand.u32 %v7739, 4294901760
    %7965 = vmatpush.msra.mxu0 %v7964
    %v7966 = vand.u32 %v7754, 4294901760
    %7967 = vmatmul.f32.gmra.mxu0 %v7966
    %v7968 = vpop.f32.mrf.mxu0
    %v7969 = vadd.f32 %v7940, %v7968
    %v7970 = vand.u32 %v7757, 4294901760
    %7971 = vmatmul.f32.gmra.mxu0 %v7970
    %v7972 = vpop.f32.mrf.mxu0
    %v7973 = vadd.f32 %v7944, %v7972
    %7974 = vdwg.mxu0
    %v7975 = vsel %vm53, %v7969, 0.0
    %7976 = vadd.xlane.f32.xlu0 %v7975
    %v7977 = vpop.xlane.xlu0 %7976
    %v7978 = vsel %vm53, %v7973, 0.0
    %7979 = vadd.xlane.f32.xlu0 %v7978
    %v7980 = vpop.xlane.xlu0 %7979
    %v7981 = vmul.f32 %v7977, %v66
    %v7982 = vmul.f32 %v7980, %v66
    %v7983 = vsub.f32 %v7969, %v7981
    %v7984 = vsub.f32 %v7973, %v7982
    %v7985 = vmul.f32 %v7983, %v7983
    %v7986 = vmul.f32 %v7984, %v7984
    %v7987 = vsel %vm53, %v7985, 0.0
    %7988 = vadd.xlane.f32.xlu0 %v7987
    %v7989 = vpop.xlane.xlu0 %7988
    %v7990 = vsel %vm53, %v7986, 0.0
    %7991 = vadd.xlane.f32.xlu0 %v7990
    %v7992 = vpop.xlane.xlu0 %7991
    %v7993 = vmul.f32 %v7989, %v66
    %v7994 = vmul.f32 %v7992, %v66
    %v7995 = vadd.f32 %v7993, 1e-05
    %v7996 = vadd.f32 %v7994, 1e-05
    %v7997 = vrsqrt.pop %v7995
    %v7998 = vmul.f32 %v7997, %v7995
    %v7999 = vmul.f32 %v7998, %v7997
    %v8000 = vmul.f32 0.5, %v7999
    %v8001 = vsub.f32 1.5, %v8000
    %v8002 = vmul.f32 %v7997, %v8001
    %vm8003 = vweird.f32 %v7995
    %vm8004 = vweird.f32 %v7997
    %vm8005 = vmor %vm8003, %vm8004
    %v8006 = vsel %vm8005, %v7997, %v8002
    %v8007 = vrsqrt.pop %v7996
    %v8008 = vmul.f32 %v8007, %v7996
    %v8009 = vmul.f32 %v8008, %v8007
    %v8010 = vmul.f32 0.5, %v8009
    %v8011 = vsub.f32 1.5, %v8010
    %v8012 = vmul.f32 %v8007, %v8011
    %vm8013 = vweird.f32 %v7996
    %vm8014 = vweird.f32 %v8007
    %vm8015 = vmor %vm8013, %vm8014
    %v8016 = vsel %vm8015, %v8007, %v8012
    %v8017 = vmul.f32 %v7983, %v8006
    %v8018 = vmul.f32 %v7984, %v8016
    %v8019 = vperm.slane %v16, 0
    %v8020 = vmul.f32 %v8017, %v8019
    %v8021 = vmul.f32 %v8018, %v8019
    %v8022 = vperm.slane %v17, 0
    %v8023 = vadd.f32 %v8020, %v8022
    %v8024 = vadd.f32 %v8021, %v8022
    %v8025 = vperm.slane %v22, 0
    %v8027 = vsel %vm53, %v8023, 0
    %v8030 = vsel %vm53, %v8024, 0
    %8032 = vmatpush.msra.mxu0 0.0
    %8033 = vmatpush.msra.mxu0 0.0
    %8034 = vmatpush.msra.mxu0 0.0
    %8035 = vmatpush.msra.mxu0 0.0
    %8036 = vmatpush.msra.mxu0 0.0
    %8037 = vmatpush.msra.mxu0 0.0
    %8038 = vmatpush.msra.mxu0 0.0
    %8039 = vmatpush.msra.mxu0 0.0
    %8040 = vmatpush.msra.mxu0 0.0
    %8041 = vmatpush.msra.mxu0 0.0
    %8042 = vmatpush.msra.mxu0 0.0
    %8043 = vmatpush.msra.mxu0 0.0
    %8044 = vmatpush.msra.mxu0 0.0
    %8045 = vmatpush.msra.mxu0 0.0
    %v8046 = vand.u32 %v38, 4294901760
    %8047 = vmatpush.msra.mxu0 %v8046
    %v8048 = vand.u32 %v37, 4294901760
    %8049 = vmatpush.msra.mxu0 %v8048
    %v8050 = vand.u32 %v8027, 4294901760
    %v8051 = vsub.f32 %v8027, %v8050
    %v8052 = vand.u32 %v8051, 4294901760
    %v8053 = vsub.f32 %v8051, %v8052
    %v8054 = vand.u32 %v8053, 4294901760
    %8055 = vmatmul.f32.gmra.mxu0 %v8054
    %v8056 = vpop.f32.mrf.mxu0
    %v8057 = vadd.f32 %v8025, %v8056
    %v8058 = vand.u32 %v8030, 4294901760
    %v8059 = vsub.f32 %v8030, %v8058
    %v8060 = vand.u32 %v8059, 4294901760
    %v8061 = vsub.f32 %v8059, %v8060
    %v8062 = vand.u32 %v8061, 4294901760
    %8063 = vmatmul.f32.gmra.mxu0 %v8062
    %v8064 = vpop.f32.mrf.mxu0
    %v8065 = vadd.f32 %v8025, %v8064
    %8066 = vdwg.mxu0
    %8067 = vmatpush.msra.mxu0 0.0
    %8068 = vmatpush.msra.mxu0 0.0
    %8069 = vmatpush.msra.mxu0 0.0
    %8070 = vmatpush.msra.mxu0 0.0
    %8071 = vmatpush.msra.mxu0 0.0
    %8072 = vmatpush.msra.mxu0 0.0
    %8073 = vmatpush.msra.mxu0 0.0
    %8074 = vmatpush.msra.mxu0 0.0
    %8075 = vmatpush.msra.mxu0 0.0
    %8076 = vmatpush.msra.mxu0 0.0
    %8077 = vmatpush.msra.mxu0 0.0
    %8078 = vmatpush.msra.mxu0 0.0
    %8079 = vmatpush.msra.mxu0 0.0
    %8080 = vmatpush.msra.mxu0 0.0
    %v8081 = vand.u32 %v38, 4294901760
    %v8082 = vsub.f32 %v38, %v8081
    %v8083 = vand.u32 %v8082, 4294901760
    %v8084 = vsub.f32 %v8082, %v8083
    %v8085 = vand.u32 %v8084, 4294901760
    %8086 = vmatpush.msra.mxu0 %v8085
    %v8087 = vand.u32 %v37, 4294901760
    %v8088 = vsub.f32 %v37, %v8087
    %v8089 = vand.u32 %v8088, 4294901760
    %v8090 = vsub.f32 %v8088, %v8089
    %v8091 = vand.u32 %v8090, 4294901760
    %8092 = vmatpush.msra.mxu0 %v8091
    %v8093 = vand.u32 %v8027, 4294901760
    %8094 = vmatmul.f32.gmra.mxu0 %v8093
    %v8095 = vpop.f32.mrf.mxu0
    %v8096 = vadd.f32 %v8057, %v8095
    %v8097 = vand.u32 %v8030, 4294901760
    %8098 = vmatmul.f32.gmra.mxu0 %v8097
    %v8099 = vpop.f32.mrf.mxu0
    %v8100 = vadd.f32 %v8065, %v8099
    %8101 = vdwg.mxu0
    %8102 = vmatpush.msra.mxu0 0.0
    %8103 = vmatpush.msra.mxu0 0.0
    %8104 = vmatpush.msra.mxu0 0.0
    %8105 = vmatpush.msra.mxu0 0.0
    %8106 = vmatpush.msra.mxu0 0.0
    %8107 = vmatpush.msra.mxu0 0.0
    %8108 = vmatpush.msra.mxu0 0.0
    %8109 = vmatpush.msra.mxu0 0.0
    %8110 = vmatpush.msra.mxu0 0.0
    %8111 = vmatpush.msra.mxu0 0.0
    %8112 = vmatpush.msra.mxu0 0.0
    %8113 = vmatpush.msra.mxu0 0.0
    %8114 = vmatpush.msra.mxu0 0.0
    %8115 = vmatpush.msra.mxu0 0.0
    %v8116 = vand.u32 %v38, 4294901760
    %v8117 = vsub.f32 %v38, %v8116
    %8118 = vmatpush.msra.mxu0 %v8117
    %v8119 = vand.u32 %v37, 4294901760
    %v8120 = vsub.f32 %v37, %v8119
    %8121 = vmatpush.msra.mxu0 %v8120
    %v8122 = vand.u32 %v8027, 4294901760
    %v8123 = vsub.f32 %v8027, %v8122
    %8124 = vmatmul.f32.gmra.mxu0 %v8123
    %v8125 = vpop.f32.mrf.mxu0
    %v8126 = vadd.f32 %v8096, %v8125
    %v8127 = vand.u32 %v8030, 4294901760
    %v8128 = vsub.f32 %v8030, %v8127
    %8129 = vmatmul.f32.gmra.mxu0 %v8128
    %v8130 = vpop.f32.mrf.mxu0
    %v8131 = vadd.f32 %v8100, %v8130
    %8132 = vdwg.mxu0
    %8133 = vmatpush.msra.mxu0 0.0
    %8134 = vmatpush.msra.mxu0 0.0
    %8135 = vmatpush.msra.mxu0 0.0
    %8136 = vmatpush.msra.mxu0 0.0
    %8137 = vmatpush.msra.mxu0 0.0
    %8138 = vmatpush.msra.mxu0 0.0
    %8139 = vmatpush.msra.mxu0 0.0
    %8140 = vmatpush.msra.mxu0 0.0
    %8141 = vmatpush.msra.mxu0 0.0
    %8142 = vmatpush.msra.mxu0 0.0
    %8143 = vmatpush.msra.mxu0 0.0
    %8144 = vmatpush.msra.mxu0 0.0
    %8145 = vmatpush.msra.mxu0 0.0
    %8146 = vmatpush.msra.mxu0 0.0
    %v8147 = vand.u32 %v38, 4294901760
    %8148 = vmatpush.msra.mxu0 %v8147
    %v8149 = vand.u32 %v37, 4294901760
    %8150 = vmatpush.msra.mxu0 %v8149
    %v8151 = vand.u32 %v8027, 4294901760
    %v8152 = vsub.f32 %v8027, %v8151
    %v8153 = vand.u32 %v8152, 4294901760
    %8154 = vmatmul.f32.gmra.mxu0 %v8153
    %v8155 = vpop.f32.mrf.mxu0
    %v8156 = vadd.f32 %v8126, %v8155
    %v8157 = vand.u32 %v8030, 4294901760
    %v8158 = vsub.f32 %v8030, %v8157
    %v8159 = vand.u32 %v8158, 4294901760
    %8160 = vmatmul.f32.gmra.mxu0 %v8159
    %v8161 = vpop.f32.mrf.mxu0
    %v8162 = vadd.f32 %v8131, %v8161
    %8163 = vdwg.mxu0
    %8164 = vmatpush.msra.mxu0 0.0
    %8165 = vmatpush.msra.mxu0 0.0
    %8166 = vmatpush.msra.mxu0 0.0
    %8167 = vmatpush.msra.mxu0 0.0
    %8168 = vmatpush.msra.mxu0 0.0
    %8169 = vmatpush.msra.mxu0 0.0
    %8170 = vmatpush.msra.mxu0 0.0
    %8171 = vmatpush.msra.mxu0 0.0
    %8172 = vmatpush.msra.mxu0 0.0
    %8173 = vmatpush.msra.mxu0 0.0
    %8174 = vmatpush.msra.mxu0 0.0
    %8175 = vmatpush.msra.mxu0 0.0
    %8176 = vmatpush.msra.mxu0 0.0
    %8177 = vmatpush.msra.mxu0 0.0
    %v8178 = vand.u32 %v38, 4294901760
    %v8179 = vsub.f32 %v38, %v8178
    %v8180 = vand.u32 %v8179, 4294901760
    %8181 = vmatpush.msra.mxu0 %v8180
    %v8182 = vand.u32 %v37, 4294901760
    %v8183 = vsub.f32 %v37, %v8182
    %v8184 = vand.u32 %v8183, 4294901760
    %8185 = vmatpush.msra.mxu0 %v8184
    %v8186 = vand.u32 %v8027, 4294901760
    %8187 = vmatmul.f32.gmra.mxu0 %v8186
    %v8188 = vpop.f32.mrf.mxu0
    %v8189 = vadd.f32 %v8156, %v8188
    %v8190 = vand.u32 %v8030, 4294901760
    %8191 = vmatmul.f32.gmra.mxu0 %v8190
    %v8192 = vpop.f32.mrf.mxu0
    %v8193 = vadd.f32 %v8162, %v8192
    %8194 = vdwg.mxu0
    %8195 = vmatpush.msra.mxu0 0.0
    %8196 = vmatpush.msra.mxu0 0.0
    %8197 = vmatpush.msra.mxu0 0.0
    %8198 = vmatpush.msra.mxu0 0.0
    %8199 = vmatpush.msra.mxu0 0.0
    %8200 = vmatpush.msra.mxu0 0.0
    %8201 = vmatpush.msra.mxu0 0.0
    %8202 = vmatpush.msra.mxu0 0.0
    %8203 = vmatpush.msra.mxu0 0.0
    %8204 = vmatpush.msra.mxu0 0.0
    %8205 = vmatpush.msra.mxu0 0.0
    %8206 = vmatpush.msra.mxu0 0.0
    %8207 = vmatpush.msra.mxu0 0.0
    %8208 = vmatpush.msra.mxu0 0.0
    %v8209 = vand.u32 %v38, 4294901760
    %8210 = vmatpush.msra.mxu0 %v8209
    %v8211 = vand.u32 %v37, 4294901760
    %8212 = vmatpush.msra.mxu0 %v8211
    %v8213 = vand.u32 %v8027, 4294901760
    %8214 = vmatmul.f32.gmra.mxu0 %v8213
    %v8215 = vpop.f32.mrf.mxu0
    %v8216 = vadd.f32 %v8189, %v8215
    %v8217 = vand.u32 %v8030, 4294901760
    %8218 = vmatmul.f32.gmra.mxu0 %v8217
    %v8219 = vpop.f32.mrf.mxu0
    %v8220 = vadd.f32 %v8193, %v8219
    %8221 = vdwg.mxu0
    %v8222 = vmul.f32 %v8216, 0.5
    %v8223 = vmul.f32 %v8220, 0.5
    %v8224 = vmul.f32 %v8216, 0.044715
    %v8225 = vmul.f32 %v8220, 0.044715
    %v8226 = vmul.f32 %v8224, %v8216
    %v8227 = vmul.f32 %v8225, %v8220
    %v8228 = vmul.f32 %v8226, %v8216
    %v8229 = vmul.f32 %v8227, %v8220
    %v8230 = vadd.f32 %v8216, %v8228
    %v8231 = vadd.f32 %v8220, %v8229
    %v8232 = vmul.f32 %v8230, 0.7978846
    %v8233 = vmul.f32 %v8231, 0.7978846
    %v8234 = vtanh.pop %v8232
    %v8235 = vtanh.pop %v8233
    %v8236 = vadd.f32 %v8234, 1.0
    %v8237 = vadd.f32 %v8235, 1.0
    %v8238 = vmul.f32 %v8222, %v8236
    %v8239 = vmul.f32 %v8223, %v8237
    %v8240 = vperm.slane %v21, 0
    %vm8241 = vcmask 523264
    %v8243 = vsel %vm8241, %v8238, 0
    %v8246 = vsel %vm8241, %v8239, 0
    %8248 = vmatpush.msra.mxu0 0.0
    %8249 = vmatpush.msra.mxu0 0.0
    %8250 = vmatpush.msra.mxu0 0.0
    %8251 = vmatpush.msra.mxu0 0.0
    %8252 = vmatpush.msra.mxu0 0.0
    %8253 = vmatpush.msra.mxu0 0.0
    %8254 = vmatpush.msra.mxu0 0.0
    %8255 = vmatpush.msra.mxu0 0.0
    %v8256 = vand.u32 %v46, 4294901760
    %8257 = vmatpush.msra.mxu0 %v8256
    %v8258 = vand.u32 %v45, 4294901760
    %8259 = vmatpush.msra.mxu0 %v8258
    %v8260 = vand.u32 %v44, 4294901760
    %8261 = vmatpush.msra.mxu0 %v8260
    %v8262 = vand.u32 %v43, 4294901760
    %8263 = vmatpush.msra.mxu0 %v8262
    %v8264 = vand.u32 %v42, 4294901760
    %8265 = vmatpush.msra.mxu0 %v8264
    %v8266 = vand.u32 %v41, 4294901760
    %8267 = vmatpush.msra.mxu0 %v8266
    %v8268 = vand.u32 %v40, 4294901760
    %8269 = vmatpush.msra.mxu0 %v8268
    %v8270 = vand.u32 %v39, 4294901760
    %8271 = vmatpush.msra.mxu0 %v8270
    %v8272 = vand.u32 %v8243, 4294901760
    %v8273 = vsub.f32 %v8243, %v8272
    %v8274 = vand.u32 %v8273, 4294901760
    %v8275 = vsub.f32 %v8273, %v8274
    %v8276 = vand.u32 %v8275, 4294901760
    %8277 = vmatmul.f32.gmra.mxu0 %v8276
    %v8278 = vpop.f32.mrf.mxu0
    %v8279 = vadd.f32 %v8240, %v8278
    %v8280 = vand.u32 %v8246, 4294901760
    %v8281 = vsub.f32 %v8246, %v8280
    %v8282 = vand.u32 %v8281, 4294901760
    %v8283 = vsub.f32 %v8281, %v8282
    %v8284 = vand.u32 %v8283, 4294901760
    %8285 = vmatmul.f32.gmra.mxu0 %v8284
    %v8286 = vpop.f32.mrf.mxu0
    %v8287 = vadd.f32 %v8240, %v8286
    %8288 = vdwg.mxu0
    %8289 = vmatpush.msra.mxu0 0.0
    %8290 = vmatpush.msra.mxu0 0.0
    %8291 = vmatpush.msra.mxu0 0.0
    %8292 = vmatpush.msra.mxu0 0.0
    %8293 = vmatpush.msra.mxu0 0.0
    %8294 = vmatpush.msra.mxu0 0.0
    %8295 = vmatpush.msra.mxu0 0.0
    %8296 = vmatpush.msra.mxu0 0.0
    %v8297 = vand.u32 %v46, 4294901760
    %v8298 = vsub.f32 %v46, %v8297
    %v8299 = vand.u32 %v8298, 4294901760
    %v8300 = vsub.f32 %v8298, %v8299
    %v8301 = vand.u32 %v8300, 4294901760
    %8302 = vmatpush.msra.mxu0 %v8301
    %v8303 = vand.u32 %v45, 4294901760
    %v8304 = vsub.f32 %v45, %v8303
    %v8305 = vand.u32 %v8304, 4294901760
    %v8306 = vsub.f32 %v8304, %v8305
    %v8307 = vand.u32 %v8306, 4294901760
    %8308 = vmatpush.msra.mxu0 %v8307
    %v8309 = vand.u32 %v44, 4294901760
    %v8310 = vsub.f32 %v44, %v8309
    %v8311 = vand.u32 %v8310, 4294901760
    %v8312 = vsub.f32 %v8310, %v8311
    %v8313 = vand.u32 %v8312, 4294901760
    %8314 = vmatpush.msra.mxu0 %v8313
    %v8315 = vand.u32 %v43, 4294901760
    %v8316 = vsub.f32 %v43, %v8315
    %v8317 = vand.u32 %v8316, 4294901760
    %v8318 = vsub.f32 %v8316, %v8317
    %v8319 = vand.u32 %v8318, 4294901760
    %8320 = vmatpush.msra.mxu0 %v8319
    %v8321 = vand.u32 %v42, 4294901760
    %v8322 = vsub.f32 %v42, %v8321
    %v8323 = vand.u32 %v8322, 4294901760
    %v8324 = vsub.f32 %v8322, %v8323
    %v8325 = vand.u32 %v8324, 4294901760
    %8326 = vmatpush.msra.mxu0 %v8325
    %v8327 = vand.u32 %v41, 4294901760
    %v8328 = vsub.f32 %v41, %v8327
    %v8329 = vand.u32 %v8328, 4294901760
    %v8330 = vsub.f32 %v8328, %v8329
    %v8331 = vand.u32 %v8330, 4294901760
    %8332 = vmatpush.msra.mxu0 %v8331
    %v8333 = vand.u32 %v40, 4294901760
    %v8334 = vsub.f32 %v40, %v8333
    %v8335 = vand.u32 %v8334, 4294901760
    %v8336 = vsub.f32 %v8334, %v8335
    %v8337 = vand.u32 %v8336, 4294901760
    %8338 = vmatpush.msra.mxu0 %v8337
    %v8339 = vand.u32 %v39, 4294901760
    %v8340 = vsub.f32 %v39, %v8339
    %v8341 = vand.u32 %v8340, 4294901760
    %v8342 = vsub.f32 %v8340, %v8341
    %v8343 = vand.u32 %v8342, 4294901760
    %8344 = vmatpush.msra.mxu0 %v8343
    %v8345 = vand.u32 %v8243, 4294901760
    %8346 = vmatmul.f32.gmra.mxu0 %v8345
    %v8347 = vpop.f32.mrf.mxu0
    %v8348 = vadd.f32 %v8279, %v8347
    %v8349 = vand.u32 %v8246, 4294901760
    %8350 = vmatmul.f32.gmra.mxu0 %v8349
    %v8351 = vpop.f32.mrf.mxu0
    %v8352 = vadd.f32 %v8287, %v8351
    %8353 = vdwg.mxu0
    %8354 = vmatpush.msra.mxu0 0.0
    %8355 = vmatpush.msra.mxu0 0.0
    %8356 = vmatpush.msra.mxu0 0.0
    %8357 = vmatpush.msra.mxu0 0.0
    %8358 = vmatpush.msra.mxu0 0.0
    %8359 = vmatpush.msra.mxu0 0.0
    %8360 = vmatpush.msra.mxu0 0.0
    %8361 = vmatpush.msra.mxu0 0.0
    %v8362 = vand.u32 %v46, 4294901760
    %v8363 = vsub.f32 %v46, %v8362
    %8364 = vmatpush.msra.mxu0 %v8363
    %v8365 = vand.u32 %v45, 4294901760
    %v8366 = vsub.f32 %v45, %v8365
    %8367 = vmatpush.msra.mxu0 %v8366
    %v8368 = vand.u32 %v44, 4294901760
    %v8369 = vsub.f32 %v44, %v8368
    %8370 = vmatpush.msra.mxu0 %v8369
    %v8371 = vand.u32 %v43, 4294901760
    %v8372 = vsub.f32 %v43, %v8371
    %8373 = vmatpush.msra.mxu0 %v8372
    %v8374 = vand.u32 %v42, 4294901760
    %v8375 = vsub.f32 %v42, %v8374
    %8376 = vmatpush.msra.mxu0 %v8375
    %v8377 = vand.u32 %v41, 4294901760
    %v8378 = vsub.f32 %v41, %v8377
    %8379 = vmatpush.msra.mxu0 %v8378
    %v8380 = vand.u32 %v40, 4294901760
    %v8381 = vsub.f32 %v40, %v8380
    %8382 = vmatpush.msra.mxu0 %v8381
    %v8383 = vand.u32 %v39, 4294901760
    %v8384 = vsub.f32 %v39, %v8383
    %8385 = vmatpush.msra.mxu0 %v8384
    %v8386 = vand.u32 %v8243, 4294901760
    %v8387 = vsub.f32 %v8243, %v8386
    %8388 = vmatmul.f32.gmra.mxu0 %v8387
    %v8389 = vpop.f32.mrf.mxu0
    %v8390 = vadd.f32 %v8348, %v8389
    %v8391 = vand.u32 %v8246, 4294901760
    %v8392 = vsub.f32 %v8246, %v8391
    %8393 = vmatmul.f32.gmra.mxu0 %v8392
    %v8394 = vpop.f32.mrf.mxu0
    %v8395 = vadd.f32 %v8352, %v8394
    %8396 = vdwg.mxu0
    %8397 = vmatpush.msra.mxu0 0.0
    %8398 = vmatpush.msra.mxu0 0.0
    %8399 = vmatpush.msra.mxu0 0.0
    %8400 = vmatpush.msra.mxu0 0.0
    %8401 = vmatpush.msra.mxu0 0.0
    %8402 = vmatpush.msra.mxu0 0.0
    %8403 = vmatpush.msra.mxu0 0.0
    %8404 = vmatpush.msra.mxu0 0.0
    %v8405 = vand.u32 %v46, 4294901760
    %8406 = vmatpush.msra.mxu0 %v8405
    %v8407 = vand.u32 %v45, 4294901760
    %8408 = vmatpush.msra.mxu0 %v8407
    %v8409 = vand.u32 %v44, 4294901760
    %8410 = vmatpush.msra.mxu0 %v8409
    %v8411 = vand.u32 %v43, 4294901760
    %8412 = vmatpush.msra.mxu0 %v8411
    %v8413 = vand.u32 %v42, 4294901760
    %8414 = vmatpush.msra.mxu0 %v8413
    %v8415 = vand.u32 %v41, 4294901760
    %8416 = vmatpush.msra.mxu0 %v8415
    %v8417 = vand.u32 %v40, 4294901760
    %8418 = vmatpush.msra.mxu0 %v8417
    %v8419 = vand.u32 %v39, 4294901760
    %8420 = vmatpush.msra.mxu0 %v8419
    %v8421 = vand.u32 %v8243, 4294901760
    %v8422 = vsub.f32 %v8243, %v8421
    %v8423 = vand.u32 %v8422, 4294901760
    %8424 = vmatmul.f32.gmra.mxu0 %v8423
    %v8425 = vpop.f32.mrf.mxu0
    %v8426 = vadd.f32 %v8390, %v8425
    %v8427 = vand.u32 %v8246, 4294901760
    %v8428 = vsub.f32 %v8246, %v8427
    %v8429 = vand.u32 %v8428, 4294901760
    %8430 = vmatmul.f32.gmra.mxu0 %v8429
    %v8431 = vpop.f32.mrf.mxu0
    %v8432 = vadd.f32 %v8395, %v8431
    %8433 = vdwg.mxu0
    %8434 = vmatpush.msra.mxu0 0.0
    %8435 = vmatpush.msra.mxu0 0.0
    %8436 = vmatpush.msra.mxu0 0.0
    %8437 = vmatpush.msra.mxu0 0.0
    %8438 = vmatpush.msra.mxu0 0.0
    %8439 = vmatpush.msra.mxu0 0.0
    %8440 = vmatpush.msra.mxu0 0.0
    %8441 = vmatpush.msra.mxu0 0.0
    %v8442 = vand.u32 %v46, 4294901760
    %v8443 = vsub.f32 %v46, %v8442
    %v8444 = vand.u32 %v8443, 4294901760
    %8445 = vmatpush.msra.mxu0 %v8444
    %v8446 = vand.u32 %v45, 4294901760
    %v8447 = vsub.f32 %v45, %v8446
    %v8448 = vand.u32 %v8447, 4294901760
    %8449 = vmatpush.msra.mxu0 %v8448
    %v8450 = vand.u32 %v44, 4294901760
    %v8451 = vsub.f32 %v44, %v8450
    %v8452 = vand.u32 %v8451, 4294901760
    %8453 = vmatpush.msra.mxu0 %v8452
    %v8454 = vand.u32 %v43, 4294901760
    %v8455 = vsub.f32 %v43, %v8454
    %v8456 = vand.u32 %v8455, 4294901760
    %8457 = vmatpush.msra.mxu0 %v8456
    %v8458 = vand.u32 %v42, 4294901760
    %v8459 = vsub.f32 %v42, %v8458
    %v8460 = vand.u32 %v8459, 4294901760
    %8461 = vmatpush.msra.mxu0 %v8460
    %v8462 = vand.u32 %v41, 4294901760
    %v8463 = vsub.f32 %v41, %v8462
    %v8464 = vand.u32 %v8463, 4294901760
    %8465 = vmatpush.msra.mxu0 %v8464
    %v8466 = vand.u32 %v40, 4294901760
    %v8467 = vsub.f32 %v40, %v8466
    %v8468 = vand.u32 %v8467, 4294901760
    %8469 = vmatpush.msra.mxu0 %v8468
    %v8470 = vand.u32 %v39, 4294901760
    %v8471 = vsub.f32 %v39, %v8470
    %v8472 = vand.u32 %v8471, 4294901760
    %8473 = vmatpush.msra.mxu0 %v8472
    %v8474 = vand.u32 %v8243, 4294901760
    %8475 = vmatmul.f32.gmra.mxu0 %v8474
    %v8476 = vpop.f32.mrf.mxu0
    %v8477 = vadd.f32 %v8426, %v8476
    %v8478 = vand.u32 %v8246, 4294901760
    %8479 = vmatmul.f32.gmra.mxu0 %v8478
    %v8480 = vpop.f32.mrf.mxu0
    %v8481 = vadd.f32 %v8432, %v8480
    %8482 = vdwg.mxu0
    %8483 = vmatpush.msra.mxu0 0.0
    %8484 = vmatpush.msra.mxu0 0.0
    %8485 = vmatpush.msra.mxu0 0.0
    %8486 = vmatpush.msra.mxu0 0.0
    %8487 = vmatpush.msra.mxu0 0.0
    %8488 = vmatpush.msra.mxu0 0.0
    %8489 = vmatpush.msra.mxu0 0.0
    %8490 = vmatpush.msra.mxu0 0.0
    %v8491 = vand.u32 %v46, 4294901760
    %8492 = vmatpush.msra.mxu0 %v8491
    %v8493 = vand.u32 %v45, 4294901760
    %8494 = vmatpush.msra.mxu0 %v8493
    %v8495 = vand.u32 %v44, 4294901760
    %8496 = vmatpush.msra.mxu0 %v8495
    %v8497 = vand.u32 %v43, 4294901760
    %8498 = vmatpush.msra.mxu0 %v8497
    %v8499 = vand.u32 %v42, 4294901760
    %8500 = vmatpush.msra.mxu0 %v8499
    %v8501 = vand.u32 %v41, 4294901760
    %8502 = vmatpush.msra.mxu0 %v8501
    %v8503 = vand.u32 %v40, 4294901760
    %8504 = vmatpush.msra.mxu0 %v8503
    %v8505 = vand.u32 %v39, 4294901760
    %8506 = vmatpush.msra.mxu0 %v8505
    %v8507 = vand.u32 %v8243, 4294901760
    %8508 = vmatmul.f32.gmra.mxu0 %v8507
    %v8509 = vpop.f32.mrf.mxu0
    %v8510 = vadd.f32 %v8477, %v8509
    %v8511 = vand.u32 %v8246, 4294901760
    %8512 = vmatmul.f32.gmra.mxu0 %v8511
    %v8513 = vpop.f32.mrf.mxu0
    %v8514 = vadd.f32 %v8481, %v8513
    %8515 = vdwg.mxu0
    %v8516 = vadd.f32 %v8510, %v12
    %v8517 = vadd.f32 %v8514, %v13
    %8518 = vst.msk [vmem:[#allocation2] sm:$0xff] %vm53, %v8516
    %8519 = vst.msk [vmem:[#allocation2 + $0x8] sm:$0xff] %vm53, %v8517
    // Predicated region
    $region10: #{bimamba_block.1} parent=1 // pred_check
      _
    $region11: #{bimamba_block.1} parent=1 // pred_check_branch
      %8521 = sbr.rel (0) target = $region13
    $region12: #{bimamba_block.1} parent=1 // pred_region
      %8523 = vsyncadd [#allocation3], 0
      %s8524 = sshll.u32 [#allocation2], 4
      %s8525 = int_to_ptr.vmem [resolvable:$true] %s8524
      %s8526 = sshll.u32 %s2, 4
      %s8527 = int_to_ptr.hbm [resolvable:$true] %s8526
      %8532 = dma.vmem_to_hbm [thread:$0]  %s8525, 256, %s8527, [#allocation3], 128, 128, 8
    $region13: #{bimamba_block.1} parent=1 // pred_fallthru
      _
    // Predicated region
    $region14: #{bimamba_block.1} parent=1 // pred_check
      _
    $region15: #{bimamba_block.1} parent=1 // pred_check_branch
      %8534 = sbr.rel (0) target = $region17
    $region16: #{bimamba_block.1} parent=1 // pred_region
      %8536 = dma.done [#allocation3], 256
    $region17: #{bimamba_block.1} parent=1 // pred_fallthru
      _
    %8537 = vsyncpa [#allocation3], 1

</llo_original>
